<compile_context>
chip_gen: v5e
topology: v5e:2x2
jax: 0.10.0
libtpu: 0.0.40
codegen_flags: <defaults>
</compile_context>

<pallas_src>
import functools

import jax
import jax.numpy as jnp
from jax import lax
from jax.experimental import pallas as pl
from jax.experimental.pallas import tpu as pltpu

# f32 matmul accuracy everywhere (reference and interpret-mode kernel eval).
jax.config.update("jax_default_matmul_precision", "float32")

# Order of the prepared-parameter inputs fed to the kernel (after x).
_P_ORDER = ('wt', 'we', 'w0', 'b0', 'w1', 'b1', 'w2', 'b2', 'w3', 'b3',
            'wp', 'bp', 'wp_sa', 'rs')


def mea_kernel(x_ref, wt_ref, we_ref, w0_ref, b0_ref, w1_ref, b1_ref,
               w2_ref, b2_ref, w3_ref, b3_ref, wp_ref, bp_ref,
               wpsa_ref, rs_ref, out_ref, *, num_heads, rpd):
    N, C = x_ref.shape
    H = num_heads
    D = C // H
    half = wp_ref.shape[1]

    x = x_ref[...]
    # trans_dims (bias=False) and E (qkv_bias=False)
    xt = jnp.dot(x, wt_ref[...], preferred_element_type=jnp.float32)        # (N, C)
    q = jnp.dot(xt, we_ref[...], preferred_element_type=jnp.float32)        # (N, C)

    w0 = w0_ref[...]; b0 = b0_ref[...]
    w1 = w1_ref[...]; b1 = b1_ref[...]
    w2 = w2_ref[...]; b2 = b2_ref[...]
    w3 = w3_ref[...]; b3 = b3_ref[...]
    wp = wp_ref[...]; bp = bp_ref[...]

    ca_acc = jnp.zeros((N, half), jnp.float32)
    sa_acc = jnp.zeros((N, half), jnp.float32)

    for h in range(H):                       # tiny static unroll over heads
        lo = h * D

        # ---------------- channel attention (CA) head -----------------------
        xh = xt[:, lo:lo + D]                                                # (N, D)
        a = jnp.dot(xh, w0, preferred_element_type=jnp.float32) + b0        # (N, 2C)
        a = a - jnp.max(a, axis=0, keepdims=True)                           # softmax over tokens
        e = jnp.exp(a)
        s = e / jnp.sum(e, axis=0, keepdims=True)
        s = s / (1e-9 + jnp.sum(s, axis=1, keepdims=True))                  # norm over 2C
        xca = jnp.dot(s, w1, preferred_element_type=jnp.float32) + b1       # (N, D)
        # permute(0,2,1,3).reshape: head h occupies channels [h*D,(h+1)*D) -> per-head proj
        ca_acc = ca_acc + jnp.dot(xca, wp[lo:lo + D, :],
                                  preferred_element_type=jnp.float32)       # (N, half)

        # ---------------- spatial attention (SA) head -----------------------
        qh = q[:, lo:lo + D]                                                 # (N, D)
        # q_h^T @ W2 (contract the token axis, no explicit transpose)
        a = lax.dot_general(qh, w2, (((0,), (0,)), ((), ())),
                            preferred_element_type=jnp.float32) + b2         # (D, P)
        a = a - jnp.max(a, axis=0, keepdims=True)                           # softmax over head dim
        e = jnp.exp(a)
        s = e / jnp.sum(e, axis=0, keepdims=True)
        s = s / (1e-9 + jnp.sum(s, axis=1, keepdims=True))                  # norm over P
        pre = jnp.dot(s, w3, preferred_element_type=jnp.float32) + b3       # (D, N)
        # permute(0,2,3,1).reshape(B,N,C): output row n' = d*rpd + r takes
        # pre[d, r*D:(r+1)*D]; rs[r] is an exact 0/1 scatter matrix and
        # wp_sa[h] holds the proj rows (m*H + h).
        blk = jnp.zeros((N, D), jnp.float32)
        for r in range(rpd):
            blk = blk + jnp.dot(rs_ref[r], pre[:, r * D:(r + 1) * D],
                                preferred_element_type=jnp.float32)          # (N, D)
        sa_acc = sa_acc + jnp.dot(blk, wpsa_ref[h],
                                  preferred_element_type=jnp.float32)        # (N, half)

    # proj bias + single lane-dense store: [CA | SA] along channels
    out_ref[...] = jnp.concatenate([ca_acc + bp, sa_acc + bp], axis=1)       # (N, C)


def prepare_params(params, num_heads):
    """Exact (indexing-only) host-side prep: no host matmuls, no precision loss."""
    C, half = params['wp'].shape
    H = num_heads
    D = C // H
    N = params['w3'].shape[1]
    assert N % D == 0, "scatter fold assumes head_dim divides input_size"
    rpd = N // D
    kp = dict(params)
    # proj rows reordered per SA head: wp_sa[h, m, :] = wp[m*H + h, :]
    kp['wp_sa'] = params['wp'].reshape(D, H, half).transpose(1, 0, 2)        # (H, D, half)
    # 0/1 scatter matrices implementing the (B,H,D,N)->(B,N,C) row map n' = d*rpd + r
    n_idx = jnp.arange(N)[:, None]
    d_idx = jnp.arange(D)[None, :]
    kp['rs'] = jnp.stack([(n_idx == d_idx * rpd + r).astype(jnp.float32)
                          for r in range(rpd)])                              # (rpd, N, D)
    return kp


def mul_external_attention(x, kp, num_heads):
    B, N, C = x.shape
    rpd = kp['rs'].shape[0]

    def fullspec(arr):
        nd = arr.ndim
        return pl.BlockSpec(arr.shape, lambda b, _nd=nd: (0,) * _nd)

    return pl.pallas_call(
        functools.partial(mea_kernel, num_heads=num_heads, rpd=rpd),
        grid=(B,),
        in_specs=[pl.BlockSpec((None, N, C), lambda b: (b, 0, 0))]
                 + [fullspec(kp[k]) for k in _P_ORDER],
        out_specs=pl.BlockSpec((None, N, C), lambda b: (b, 0, 0)),
        out_shape=jax.ShapeDtypeStruct((B, N, C), jnp.float32),
        compiler_params=pltpu.CompilerParams(dimension_semantics=("parallel",)),
    )(x, *[kp[k] for k in _P_ORDER])


def reference(x, params, num_heads):
    """Pure-JAX replica of the PyTorch forward for validation."""
    B, N, C = x.shape
    H = num_heads
    D = C // H
    with jax.default_matmul_precision('float32'):
        xt = x @ params['wt']
        x_s = xt
        xh = xt.reshape(B, N, H, D).transpose(0, 2, 1, 3)
        attn = xh @ params['w0'] + params['b0']
        attn = jax.nn.softmax(attn, axis=-2)
        attn = attn / (1e-9 + attn.sum(-1, keepdims=True))
        x_ca = (attn @ params['w1'] + params['b1']).transpose(0, 2, 1, 3).reshape(B, N, C)
        x_ca = x_ca @ params['wp'] + params['bp']
        q = (x_s @ params['we']).reshape(B, N, H, D).transpose(0, 2, 3, 1)
        attn = q @ params['w2'] + params['b2']
        attn = jax.nn.softmax(attn, axis=-2)
        attn = attn / (1e-9 + attn.sum(-1, keepdims=True))
        x_sa = (attn @ params['w3'] + params['b3']).transpose(0, 2, 3, 1).reshape(B, N, C)
        x_sa = x_sa @ params['wp'] + params['bp']
        return jnp.concatenate([x_ca, x_sa], axis=2)


if __name__ == "__main__":
    # Module config: input_size=N=16, dim=C=32, proj_size=P=8, num_heads=4
    B, N, C, H, P = 2, 16, 32, 4, 8
    D = C // H

    key = jax.random.PRNGKey(0)
    ks = jax.random.split(key, 16)

    def lin_w(k, out_f, in_f):
        # PyTorch nn.Linear weight is (out, in); kernel wants (in, out)
        w = jax.random.normal(k, (out_f, in_f), jnp.float32) / jnp.sqrt(float(in_f))
        return w.T

    def lin_b(k, out_f):
        return jax.random.normal(k, (1, out_f), jnp.float32) * 0.02

    params = {
        'wt': lin_w(ks[0], C, C),                                     # trans_dims (no bias)
        'we': lin_w(ks[1], C, C),                                     # E (qkv_bias=False)
        'w0': lin_w(ks[2], 2 * C, D), 'b0': lin_b(ks[3], 2 * C),      # linear_0
        'w1': lin_w(ks[4], D, 2 * C), 'b1': lin_b(ks[5], D),          # linear_1
        'w2': lin_w(ks[6], P, N),     'b2': lin_b(ks[7], P),          # linear_2
        'w3': lin_w(ks[8], N, P),     'b3': lin_b(ks[9], N),          # linear_3
        'wp': lin_w(ks[10], C // 2, C), 'bp': lin_b(ks[11], C // 2),  # proj
    }
    x = jax.random.normal(ks[12], (B, N, C), jnp.float32)

    # TODO(synk): attn_drop / proj_drop are nn.Dropout(p=0.0) -> identity; omitted.
    kp = prepare_params(params, num_heads=H)                          # exact host-side prep
    fn = jax.jit(functools.partial(mul_external_attention, num_heads=H))
    out = jax.block_until_ready(fn(x, kp))

    ref = reference(x, params, H)
    assert out.shape == (B, N, C)
    err = float(jnp.max(jnp.abs(out - ref)))
    assert err < 1e-3, f"max abs err {err}"
    print("KERNEL_OK")
</pallas_src>

<mosaic_0001>
module attributes {stable_mosaic.version = 11 : i64} {
  func.func @mea_kernel(%arg0: i32, %arg1: memref<1x16x32xf32, #tpu.memory_space<vmem>>, %arg2: memref<32x32xf32, #tpu.memory_space<vmem>>, %arg3: memref<32x32xf32, #tpu.memory_space<vmem>>, %arg4: memref<8x64xf32, #tpu.memory_space<vmem>>, %arg5: memref<1x64xf32, #tpu.memory_space<vmem>>, %arg6: memref<64x8xf32, #tpu.memory_space<vmem>>, %arg7: memref<1x8xf32, #tpu.memory_space<vmem>>, %arg8: memref<16x8xf32, #tpu.memory_space<vmem>>, %arg9: memref<1x8xf32, #tpu.memory_space<vmem>>, %arg10: memref<8x16xf32, #tpu.memory_space<vmem>>, %arg11: memref<1x16xf32, #tpu.memory_space<vmem>>, %arg12: memref<32x16xf32, #tpu.memory_space<vmem>>, %arg13: memref<1x16xf32, #tpu.memory_space<vmem>>, %arg14: memref<4x8x16xf32, #tpu.memory_space<vmem>>, %arg15: memref<2x16x8xf32, #tpu.memory_space<vmem>>, %arg16: memref<1x16x32xf32, #tpu.memory_space<vmem>>) attributes {dimension_semantics = [#tpu.dimension_semantics<parallel>], iteration_bounds = array<i64: 2>, scalar_prefetch = 0 : i64, scratch_operands = 0 : i64, tpu.core_type = #tpu.core_type<tc>, window_params = [{transform_indices = @transform_0, window_bounds = array<i64: 1, 16, 32>}, {pipeline_mode = #tpu.pipeline_mode<synchronous>, transform_indices = @transform_1, window_bounds = array<i64: 32, 32>}, {pipeline_mode = #tpu.pipeline_mode<synchronous>, transform_indices = @transform_2, window_bounds = array<i64: 32, 32>}, {pipeline_mode = #tpu.pipeline_mode<synchronous>, transform_indices = @transform_3, window_bounds = array<i64: 8, 64>}, {pipeline_mode = #tpu.pipeline_mode<synchronous>, transform_indices = @transform_4, window_bounds = array<i64: 1, 64>}, {pipeline_mode = #tpu.pipeline_mode<synchronous>, transform_indices = @transform_5, window_bounds = array<i64: 64, 8>}, {pipeline_mode = #tpu.pipeline_mode<synchronous>, transform_indices = @transform_6, window_bounds = array<i64: 1, 8>}, {pipeline_mode = #tpu.pipeline_mode<synchronous>, transform_indices = @transform_7, window_bounds = array<i64: 16, 8>}, {pipeline_mode = #tpu.pipeline_mode<synchronous>, transform_indices = @transform_8, window_bounds = array<i64: 1, 8>}, {pipeline_mode = #tpu.pipeline_mode<synchronous>, transform_indices = @transform_9, window_bounds = array<i64: 8, 16>}, {pipeline_mode = #tpu.pipeline_mode<synchronous>, transform_indices = @transform_10, window_bounds = array<i64: 1, 16>}, {pipeline_mode = #tpu.pipeline_mode<synchronous>, transform_indices = @transform_11, window_bounds = array<i64: 32, 16>}, {pipeline_mode = #tpu.pipeline_mode<synchronous>, transform_indices = @transform_12, window_bounds = array<i64: 1, 16>}, {pipeline_mode = #tpu.pipeline_mode<synchronous>, transform_indices = @transform_13, window_bounds = array<i64: 4, 8, 16>}, {pipeline_mode = #tpu.pipeline_mode<synchronous>, transform_indices = @transform_14, window_bounds = array<i64: 2, 16, 8>}, {transform_indices = @transform_15, window_bounds = array<i64: 1, 16, 32>}]} {
    %c0 = arith.constant 0 : index
    %c0_0 = arith.constant 0 : index
    %c0_1 = arith.constant 0 : index
    %0 = vector.load %arg1[%c0, %c0_0, %c0_1] : memref<1x16x32xf32, #tpu.memory_space<vmem>>, vector<1x16x32xf32>
    %1 = vector.shape_cast %0 : vector<1x16x32xf32> to vector<16x32xf32>
    %c0_2 = arith.constant 0 : index
    %c0_3 = arith.constant 0 : index
    %2 = vector.load %arg2[%c0_2, %c0_3] : memref<32x32xf32, #tpu.memory_space<vmem>>, vector<32x32xf32>
    %cst = arith.constant dense<0.000000e+00> : vector<16x32xf32>
    %3 = tpu.matmul %1, %2, %cst {dimension_numbers = #tpu.dot_dimension_numbers<[1], [0], [0], [1], [0, 0, 1, 1], [], []>, precision = #tpu.contract_precision<fp32>} : vector<16x32xf32>, vector<32x32xf32>, vector<16x32xf32> -> vector<16x32xf32>
    %c0_4 = arith.constant 0 : index
    %c0_5 = arith.constant 0 : index
    %4 = vector.load %arg3[%c0_4, %c0_5] : memref<32x32xf32, #tpu.memory_space<vmem>>, vector<32x32xf32>
    %cst_6 = arith.constant dense<0.000000e+00> : vector<16x32xf32>
    %5 = tpu.matmul %3, %4, %cst_6 {dimension_numbers = #tpu.dot_dimension_numbers<[1], [0], [0], [1], [0, 0, 1, 1], [], []>, precision = #tpu.contract_precision<fp32>} : vector<16x32xf32>, vector<32x32xf32>, vector<16x32xf32> -> vector<16x32xf32>
    %c0_7 = arith.constant 0 : index
    %c0_8 = arith.constant 0 : index
    %6 = vector.load %arg4[%c0_7, %c0_8] : memref<8x64xf32, #tpu.memory_space<vmem>>, vector<8x64xf32>
    %c0_9 = arith.constant 0 : index
    %c0_10 = arith.constant 0 : index
    %7 = vector.load %arg5[%c0_9, %c0_10] : memref<1x64xf32, #tpu.memory_space<vmem>>, vector<1x64xf32>
    %c0_11 = arith.constant 0 : index
    %c0_12 = arith.constant 0 : index
    %8 = vector.load %arg6[%c0_11, %c0_12] : memref<64x8xf32, #tpu.memory_space<vmem>>, vector<64x8xf32>
    %c0_13 = arith.constant 0 : index
    %c0_14 = arith.constant 0 : index
    %9 = vector.load %arg7[%c0_13, %c0_14] : memref<1x8xf32, #tpu.memory_space<vmem>>, vector<1x8xf32>
    %c0_15 = arith.constant 0 : index
    %c0_16 = arith.constant 0 : index
    %10 = vector.load %arg8[%c0_15, %c0_16] : memref<16x8xf32, #tpu.memory_space<vmem>>, vector<16x8xf32>
    %c0_17 = arith.constant 0 : index
    %c0_18 = arith.constant 0 : index
    %11 = vector.load %arg9[%c0_17, %c0_18] : memref<1x8xf32, #tpu.memory_space<vmem>>, vector<1x8xf32>
    %c0_19 = arith.constant 0 : index
    %c0_20 = arith.constant 0 : index
    %12 = vector.load %arg10[%c0_19, %c0_20] : memref<8x16xf32, #tpu.memory_space<vmem>>, vector<8x16xf32>
    %c0_21 = arith.constant 0 : index
    %c0_22 = arith.constant 0 : index
    %13 = vector.load %arg11[%c0_21, %c0_22] : memref<1x16xf32, #tpu.memory_space<vmem>>, vector<1x16xf32>
    %c0_23 = arith.constant 0 : index
    %c0_24 = arith.constant 0 : index
    %14 = vector.load %arg12[%c0_23, %c0_24] : memref<32x16xf32, #tpu.memory_space<vmem>>, vector<32x16xf32>
    %c0_25 = arith.constant 0 : index
    %c0_26 = arith.constant 0 : index
    %15 = vector.load %arg13[%c0_25, %c0_26] : memref<1x16xf32, #tpu.memory_space<vmem>>, vector<1x16xf32>
    %cst_27 = arith.constant 0.000000e+00 : f32
    %16 = vector.broadcast %cst_27 : f32 to vector<16x16xf32>
    %cst_28 = arith.constant 0.000000e+00 : f32
    %17 = vector.broadcast %cst_28 : f32 to vector<16x16xf32>
    %18 = vector.extract_strided_slice %3 {offsets = [0, 0], sizes = [16, 8], strides = [1, 1]} : vector<16x32xf32> to vector<16x8xf32>
    %cst_29 = arith.constant dense<0.000000e+00> : vector<16x64xf32>
    %19 = tpu.matmul %18, %6, %cst_29 {dimension_numbers = #tpu.dot_dimension_numbers<[1], [0], [0], [1], [0, 0, 1, 1], [], []>, precision = #tpu.contract_precision<fp32>} : vector<16x8xf32>, vector<8x64xf32>, vector<16x64xf32> -> vector<16x64xf32>
    %20 = vector.broadcast %7 : vector<1x64xf32> to vector<16x64xf32>
    %21 = arith.addf %19, %20 : vector<16x64xf32>
    %cst_30 = arith.constant dense<0xFF800000> : vector<64xf32>
    %22 = vector.multi_reduction <maximumf>, %21, %cst_30 [0] : vector<16x64xf32> to vector<64xf32>
    %23 = vector.shape_cast %22 : vector<64xf32> to vector<1x64xf32>
    %24 = vector.broadcast %23 : vector<1x64xf32> to vector<16x64xf32>
    %25 = arith.subf %21, %24 : vector<16x64xf32>
    %26 = math.exp %25 : vector<16x64xf32>
    %cst_31 = arith.constant dense<0.000000e+00> : vector<64xf32>
    %27 = vector.multi_reduction <add>, %26, %cst_31 [0] : vector<16x64xf32> to vector<64xf32>
    %28 = vector.shape_cast %27 : vector<64xf32> to vector<1x64xf32>
    %29 = vector.broadcast %28 : vector<1x64xf32> to vector<16x64xf32>
    %30 = arith.divf %26, %29 : vector<16x64xf32>
    %cst_32 = arith.constant dense<0.000000e+00> : vector<16xf32>
    %31 = vector.multi_reduction <add>, %30, %cst_32 [1] : vector<16x64xf32> to vector<16xf32>
    %32 = vector.shape_cast %31 : vector<16xf32> to vector<16x1xf32>
    %cst_33 = arith.constant 9.99999971E-10 : f32
    %33 = vector.broadcast %cst_33 : f32 to vector<16x1xf32>
    %34 = arith.addf %33, %32 : vector<16x1xf32>
    %35 = vector.broadcast %34 : vector<16x1xf32> to vector<16x64xf32>
    %36 = arith.divf %30, %35 : vector<16x64xf32>
    %cst_34 = arith.constant dense<0.000000e+00> : vector<16x8xf32>
    %37 = tpu.matmul %36, %8, %cst_34 {dimension_numbers = #tpu.dot_dimension_numbers<[1], [0], [0], [1], [0, 0, 1, 1], [], []>, precision = #tpu.contract_precision<fp32>} : vector<16x64xf32>, vector<64x8xf32>, vector<16x8xf32> -> vector<16x8xf32>
    %38 = vector.broadcast %9 : vector<1x8xf32> to vector<16x8xf32>
    %39 = arith.addf %37, %38 : vector<16x8xf32>
    %40 = vector.extract_strided_slice %14 {offsets = [0, 0], sizes = [8, 16], strides = [1, 1]} : vector<32x16xf32> to vector<8x16xf32>
    %cst_35 = arith.constant dense<0.000000e+00> : vector<16x16xf32>
    %41 = tpu.matmul %39, %40, %cst_35 {dimension_numbers = #tpu.dot_dimension_numbers<[1], [0], [0], [1], [0, 0, 1, 1], [], []>, precision = #tpu.contract_precision<fp32>} : vector<16x8xf32>, vector<8x16xf32>, vector<16x16xf32> -> vector<16x16xf32>
    %42 = arith.addf %16, %41 : vector<16x16xf32>
    %43 = vector.extract_strided_slice %5 {offsets = [0, 0], sizes = [16, 8], strides = [1, 1]} : vector<16x32xf32> to vector<16x8xf32>
    %cst_36 = arith.constant dense<0.000000e+00> : vector<8x8xf32>
    %44 = tpu.matmul %43, %10, %cst_36 {dimension_numbers = #tpu.dot_dimension_numbers<[0], [0], [1], [1], [0, 1, 1, 1], [], []>, precision = #tpu.contract_precision<fp32>} : vector<16x8xf32>, vector<16x8xf32>, vector<8x8xf32> -> vector<8x8xf32>
    %45 = vector.broadcast %11 : vector<1x8xf32> to vector<8x8xf32>
    %46 = arith.addf %44, %45 : vector<8x8xf32>
    %cst_37 = arith.constant dense<0xFF800000> : vector<8xf32>
    %47 = vector.multi_reduction <maximumf>, %46, %cst_37 [0] : vector<8x8xf32> to vector<8xf32>
    %48 = vector.shape_cast %47 : vector<8xf32> to vector<1x8xf32>
    %49 = vector.broadcast %48 : vector<1x8xf32> to vector<8x8xf32>
    %50 = arith.subf %46, %49 : vector<8x8xf32>
    %51 = math.exp %50 : vector<8x8xf32>
    %cst_38 = arith.constant dense<0.000000e+00> : vector<8xf32>
    %52 = vector.multi_reduction <add>, %51, %cst_38 [0] : vector<8x8xf32> to vector<8xf32>
    %53 = vector.shape_cast %52 : vector<8xf32> to vector<1x8xf32>
    %54 = vector.broadcast %53 : vector<1x8xf32> to vector<8x8xf32>
    %55 = arith.divf %51, %54 : vector<8x8xf32>
    %cst_39 = arith.constant dense<0.000000e+00> : vector<8xf32>
    %56 = vector.multi_reduction <add>, %55, %cst_39 [1] : vector<8x8xf32> to vector<8xf32>
    %57 = vector.shape_cast %56 : vector<8xf32> to vector<8x1xf32>
    %cst_40 = arith.constant 9.99999971E-10 : f32
    %58 = vector.broadcast %cst_40 : f32 to vector<8x1xf32>
    %59 = arith.addf %58, %57 : vector<8x1xf32>
    %60 = vector.broadcast %59 : vector<8x1xf32> to vector<8x8xf32>
    %61 = arith.divf %55, %60 : vector<8x8xf32>
    %cst_41 = arith.constant dense<0.000000e+00> : vector<8x16xf32>
    %62 = tpu.matmul %61, %12, %cst_41 {dimension_numbers = #tpu.dot_dimension_numbers<[1], [0], [0], [1], [0, 0, 1, 1], [], []>, precision = #tpu.contract_precision<fp32>} : vector<8x8xf32>, vector<8x16xf32>, vector<8x16xf32> -> vector<8x16xf32>
    %63 = vector.broadcast %13 : vector<1x16xf32> to vector<8x16xf32>
    %64 = arith.addf %62, %63 : vector<8x16xf32>
    %cst_42 = arith.constant 0.000000e+00 : f32
    %65 = vector.broadcast %cst_42 : f32 to vector<16x8xf32>
    %c0_43 = arith.constant 0 : index
    %c0_44 = arith.constant 0 : index
    %c0_45 = arith.constant 0 : index
    %66 = vector.load %arg15[%c0_43, %c0_44, %c0_45] : memref<2x16x8xf32, #tpu.memory_space<vmem>>, vector<1x16x8xf32>
    %67 = vector.shape_cast %66 : vector<1x16x8xf32> to vector<16x8xf32>
    %68 = vector.extract_strided_slice %64 {offsets = [0, 0], sizes = [8, 8], strides = [1, 1]} : vector<8x16xf32> to vector<8x8xf32>
    %cst_46 = arith.constant dense<0.000000e+00> : vector<16x8xf32>
    %69 = tpu.matmul %67, %68, %cst_46 {dimension_numbers = #tpu.dot_dimension_numbers<[1], [0], [0], [1], [0, 0, 1, 1], [], []>, precision = #tpu.contract_precision<fp32>} : vector<16x8xf32>, vector<8x8xf32>, vector<16x8xf32> -> vector<16x8xf32>
    %70 = arith.addf %65, %69 : vector<16x8xf32>
    %c1 = arith.constant 1 : index
    %c0_47 = arith.constant 0 : index
    %c0_48 = arith.constant 0 : index
    %71 = vector.load %arg15[%c1, %c0_47, %c0_48] : memref<2x16x8xf32, #tpu.memory_space<vmem>>, vector<1x16x8xf32>
    %72 = vector.shape_cast %71 : vector<1x16x8xf32> to vector<16x8xf32>
    %73 = vector.extract_strided_slice %64 {offsets = [0, 8], sizes = [8, 8], strides = [1, 1]} : vector<8x16xf32> to vector<8x8xf32>
    %cst_49 = arith.constant dense<0.000000e+00> : vector<16x8xf32>
    %74 = tpu.matmul %72, %73, %cst_49 {dimension_numbers = #tpu.dot_dimension_numbers<[1], [0], [0], [1], [0, 0, 1, 1], [], []>, precision = #tpu.contract_precision<fp32>} : vector<16x8xf32>, vector<8x8xf32>, vector<16x8xf32> -> vector<16x8xf32>
    %75 = arith.addf %70, %74 : vector<16x8xf32>
    %c0_50 = arith.constant 0 : index
    %c0_51 = arith.constant 0 : index
    %c0_52 = arith.constant 0 : index
    %76 = vector.load %arg14[%c0_50, %c0_51, %c0_52] : memref<4x8x16xf32, #tpu.memory_space<vmem>>, vector<1x8x16xf32>
    %77 = vector.shape_cast %76 : vector<1x8x16xf32> to vector<8x16xf32>
    %cst_53 = arith.constant dense<0.000000e+00> : vector<16x16xf32>
    %78 = tpu.matmul %75, %77, %cst_53 {dimension_numbers = #tpu.dot_dimension_numbers<[1], [0], [0], [1], [0, 0, 1, 1], [], []>, precision = #tpu.contract_precision<fp32>} : vector<16x8xf32>, vector<8x16xf32>, vector<16x16xf32> -> vector<16x16xf32>
    %79 = arith.addf %17, %78 : vector<16x16xf32>
    %80 = vector.extract_strided_slice %3 {offsets = [0, 8], sizes = [16, 8], strides = [1, 1]} : vector<16x32xf32> to vector<16x8xf32>
    %cst_54 = arith.constant dense<0.000000e+00> : vector<16x64xf32>
    %81 = tpu.matmul %80, %6, %cst_54 {dimension_numbers = #tpu.dot_dimension_numbers<[1], [0], [0], [1], [0, 0, 1, 1], [], []>, precision = #tpu.contract_precision<fp32>} : vector<16x8xf32>, vector<8x64xf32>, vector<16x64xf32> -> vector<16x64xf32>
    %82 = vector.broadcast %7 : vector<1x64xf32> to vector<16x64xf32>
    %83 = arith.addf %81, %82 : vector<16x64xf32>
    %cst_55 = arith.constant dense<0xFF800000> : vector<64xf32>
    %84 = vector.multi_reduction <maximumf>, %83, %cst_55 [0] : vector<16x64xf32> to vector<64xf32>
    %85 = vector.shape_cast %84 : vector<64xf32> to vector<1x64xf32>
    %86 = vector.broadcast %85 : vector<1x64xf32> to vector<16x64xf32>
    %87 = arith.subf %83, %86 : vector<16x64xf32>
    %88 = math.exp %87 : vector<16x64xf32>
    %cst_56 = arith.constant dense<0.000000e+00> : vector<64xf32>
    %89 = vector.multi_reduction <add>, %88, %cst_56 [0] : vector<16x64xf32> to vector<64xf32>
    %90 = vector.shape_cast %89 : vector<64xf32> to vector<1x64xf32>
    %91 = vector.broadcast %90 : vector<1x64xf32> to vector<16x64xf32>
    %92 = arith.divf %88, %91 : vector<16x64xf32>
    %cst_57 = arith.constant dense<0.000000e+00> : vector<16xf32>
    %93 = vector.multi_reduction <add>, %92, %cst_57 [1] : vector<16x64xf32> to vector<16xf32>
    %94 = vector.shape_cast %93 : vector<16xf32> to vector<16x1xf32>
    %cst_58 = arith.constant 9.99999971E-10 : f32
    %95 = vector.broadcast %cst_58 : f32 to vector<16x1xf32>
    %96 = arith.addf %95, %94 : vector<16x1xf32>
    %97 = vector.broadcast %96 : vector<16x1xf32> to vector<16x64xf32>
    %98 = arith.divf %92, %97 : vector<16x64xf32>
    %cst_59 = arith.constant dense<0.000000e+00> : vector<16x8xf32>
    %99 = tpu.matmul %98, %8, %cst_59 {dimension_numbers = #tpu.dot_dimension_numbers<[1], [0], [0], [1], [0, 0, 1, 1], [], []>, precision = #tpu.contract_precision<fp32>} : vector<16x64xf32>, vector<64x8xf32>, vector<16x8xf32> -> vector<16x8xf32>
    %100 = vector.broadcast %9 : vector<1x8xf32> to vector<16x8xf32>
    %101 = arith.addf %99, %100 : vector<16x8xf32>
    %102 = vector.extract_strided_slice %14 {offsets = [8, 0], sizes = [8, 16], strides = [1, 1]} : vector<32x16xf32> to vector<8x16xf32>
    %cst_60 = arith.constant dense<0.000000e+00> : vector<16x16xf32>
    %103 = tpu.matmul %101, %102, %cst_60 {dimension_numbers = #tpu.dot_dimension_numbers<[1], [0], [0], [1], [0, 0, 1, 1], [], []>, precision = #tpu.contract_precision<fp32>} : vector<16x8xf32>, vector<8x16xf32>, vector<16x16xf32> -> vector<16x16xf32>
    %104 = arith.addf %42, %103 : vector<16x16xf32>
    %105 = vector.extract_strided_slice %5 {offsets = [0, 8], sizes = [16, 8], strides = [1, 1]} : vector<16x32xf32> to vector<16x8xf32>
    %cst_61 = arith.constant dense<0.000000e+00> : vector<8x8xf32>
    %106 = tpu.matmul %105, %10, %cst_61 {dimension_numbers = #tpu.dot_dimension_numbers<[0], [0], [1], [1], [0, 1, 1, 1], [], []>, precision = #tpu.contract_precision<fp32>} : vector<16x8xf32>, vector<16x8xf32>, vector<8x8xf32> -> vector<8x8xf32>
    %107 = vector.broadcast %11 : vector<1x8xf32> to vector<8x8xf32>
    %108 = arith.addf %106, %107 : vector<8x8xf32>
    %cst_62 = arith.constant dense<0xFF800000> : vector<8xf32>
    %109 = vector.multi_reduction <maximumf>, %108, %cst_62 [0] : vector<8x8xf32> to vector<8xf32>
    %110 = vector.shape_cast %109 : vector<8xf32> to vector<1x8xf32>
    %111 = vector.broadcast %110 : vector<1x8xf32> to vector<8x8xf32>
    %112 = arith.subf %108, %111 : vector<8x8xf32>
    %113 = math.exp %112 : vector<8x8xf32>
    %cst_63 = arith.constant dense<0.000000e+00> : vector<8xf32>
    %114 = vector.multi_reduction <add>, %113, %cst_63 [0] : vector<8x8xf32> to vector<8xf32>
    %115 = vector.shape_cast %114 : vector<8xf32> to vector<1x8xf32>
    %116 = vector.broadcast %115 : vector<1x8xf32> to vector<8x8xf32>
    %117 = arith.divf %113, %116 : vector<8x8xf32>
    %cst_64 = arith.constant dense<0.000000e+00> : vector<8xf32>
    %118 = vector.multi_reduction <add>, %117, %cst_64 [1] : vector<8x8xf32> to vector<8xf32>
    %119 = vector.shape_cast %118 : vector<8xf32> to vector<8x1xf32>
    %cst_65 = arith.constant 9.99999971E-10 : f32
    %120 = vector.broadcast %cst_65 : f32 to vector<8x1xf32>
    %121 = arith.addf %120, %119 : vector<8x1xf32>
    %122 = vector.broadcast %121 : vector<8x1xf32> to vector<8x8xf32>
    %123 = arith.divf %117, %122 : vector<8x8xf32>
    %cst_66 = arith.constant dense<0.000000e+00> : vector<8x16xf32>
    %124 = tpu.matmul %123, %12, %cst_66 {dimension_numbers = #tpu.dot_dimension_numbers<[1], [0], [0], [1], [0, 0, 1, 1], [], []>, precision = #tpu.contract_precision<fp32>} : vector<8x8xf32>, vector<8x16xf32>, vector<8x16xf32> -> vector<8x16xf32>
    %125 = vector.broadcast %13 : vector<1x16xf32> to vector<8x16xf32>
    %126 = arith.addf %124, %125 : vector<8x16xf32>
    %cst_67 = arith.constant 0.000000e+00 : f32
    %127 = vector.broadcast %cst_67 : f32 to vector<16x8xf32>
    %c0_68 = arith.constant 0 : index
    %c0_69 = arith.constant 0 : index
    %c0_70 = arith.constant 0 : index
    %128 = vector.load %arg15[%c0_68, %c0_69, %c0_70] : memref<2x16x8xf32, #tpu.memory_space<vmem>>, vector<1x16x8xf32>
    %129 = vector.shape_cast %128 : vector<1x16x8xf32> to vector<16x8xf32>
    %130 = vector.extract_strided_slice %126 {offsets = [0, 0], sizes = [8, 8], strides = [1, 1]} : vector<8x16xf32> to vector<8x8xf32>
    %cst_71 = arith.constant dense<0.000000e+00> : vector<16x8xf32>
    %131 = tpu.matmul %129, %130, %cst_71 {dimension_numbers = #tpu.dot_dimension_numbers<[1], [0], [0], [1], [0, 0, 1, 1], [], []>, precision = #tpu.contract_precision<fp32>} : vector<16x8xf32>, vector<8x8xf32>, vector<16x8xf32> -> vector<16x8xf32>
    %132 = arith.addf %127, %131 : vector<16x8xf32>
    %c1_72 = arith.constant 1 : index
    %c0_73 = arith.constant 0 : index
    %c0_74 = arith.constant 0 : index
    %133 = vector.load %arg15[%c1_72, %c0_73, %c0_74] : memref<2x16x8xf32, #tpu.memory_space<vmem>>, vector<1x16x8xf32>
    %134 = vector.shape_cast %133 : vector<1x16x8xf32> to vector<16x8xf32>
    %135 = vector.extract_strided_slice %126 {offsets = [0, 8], sizes = [8, 8], strides = [1, 1]} : vector<8x16xf32> to vector<8x8xf32>
    %cst_75 = arith.constant dense<0.000000e+00> : vector<16x8xf32>
    %136 = tpu.matmul %134, %135, %cst_75 {dimension_numbers = #tpu.dot_dimension_numbers<[1], [0], [0], [1], [0, 0, 1, 1], [], []>, precision = #tpu.contract_precision<fp32>} : vector<16x8xf32>, vector<8x8xf32>, vector<16x8xf32> -> vector<16x8xf32>
    %137 = arith.addf %132, %136 : vector<16x8xf32>
    %c1_76 = arith.constant 1 : index
    %c0_77 = arith.constant 0 : index
    %c0_78 = arith.constant 0 : index
    %138 = vector.load %arg14[%c1_76, %c0_77, %c0_78] : memref<4x8x16xf32, #tpu.memory_space<vmem>>, vector<1x8x16xf32>
    %139 = vector.shape_cast %138 : vector<1x8x16xf32> to vector<8x16xf32>
    %cst_79 = arith.constant dense<0.000000e+00> : vector<16x16xf32>
    %140 = tpu.matmul %137, %139, %cst_79 {dimension_numbers = #tpu.dot_dimension_numbers<[1], [0], [0], [1], [0, 0, 1, 1], [], []>, precision = #tpu.contract_precision<fp32>} : vector<16x8xf32>, vector<8x16xf32>, vector<16x16xf32> -> vector<16x16xf32>
    %141 = arith.addf %79, %140 : vector<16x16xf32>
    %142 = vector.extract_strided_slice %3 {offsets = [0, 16], sizes = [16, 8], strides = [1, 1]} : vector<16x32xf32> to vector<16x8xf32>
    %cst_80 = arith.constant dense<0.000000e+00> : vector<16x64xf32>
    %143 = tpu.matmul %142, %6, %cst_80 {dimension_numbers = #tpu.dot_dimension_numbers<[1], [0], [0], [1], [0, 0, 1, 1], [], []>, precision = #tpu.contract_precision<fp32>} : vector<16x8xf32>, vector<8x64xf32>, vector<16x64xf32> -> vector<16x64xf32>
    %144 = vector.broadcast %7 : vector<1x64xf32> to vector<16x64xf32>
    %145 = arith.addf %143, %144 : vector<16x64xf32>
    %cst_81 = arith.constant dense<0xFF800000> : vector<64xf32>
    %146 = vector.multi_reduction <maximumf>, %145, %cst_81 [0] : vector<16x64xf32> to vector<64xf32>
    %147 = vector.shape_cast %146 : vector<64xf32> to vector<1x64xf32>
    %148 = vector.broadcast %147 : vector<1x64xf32> to vector<16x64xf32>
    %149 = arith.subf %145, %148 : vector<16x64xf32>
    %150 = math.exp %149 : vector<16x64xf32>
    %cst_82 = arith.constant dense<0.000000e+00> : vector<64xf32>
    %151 = vector.multi_reduction <add>, %150, %cst_82 [0] : vector<16x64xf32> to vector<64xf32>
    %152 = vector.shape_cast %151 : vector<64xf32> to vector<1x64xf32>
    %153 = vector.broadcast %152 : vector<1x64xf32> to vector<16x64xf32>
    %154 = arith.divf %150, %153 : vector<16x64xf32>
    %cst_83 = arith.constant dense<0.000000e+00> : vector<16xf32>
    %155 = vector.multi_reduction <add>, %154, %cst_83 [1] : vector<16x64xf32> to vector<16xf32>
    %156 = vector.shape_cast %155 : vector<16xf32> to vector<16x1xf32>
    %cst_84 = arith.constant 9.99999971E-10 : f32
    %157 = vector.broadcast %cst_84 : f32 to vector<16x1xf32>
    %158 = arith.addf %157, %156 : vector<16x1xf32>
    %159 = vector.broadcast %158 : vector<16x1xf32> to vector<16x64xf32>
    %160 = arith.divf %154, %159 : vector<16x64xf32>
    %cst_85 = arith.constant dense<0.000000e+00> : vector<16x8xf32>
    %161 = tpu.matmul %160, %8, %cst_85 {dimension_numbers = #tpu.dot_dimension_numbers<[1], [0], [0], [1], [0, 0, 1, 1], [], []>, precision = #tpu.contract_precision<fp32>} : vector<16x64xf32>, vector<64x8xf32>, vector<16x8xf32> -> vector<16x8xf32>
    %162 = vector.broadcast %9 : vector<1x8xf32> to vector<16x8xf32>
    %163 = arith.addf %161, %162 : vector<16x8xf32>
    %164 = vector.extract_strided_slice %14 {offsets = [16, 0], sizes = [8, 16], strides = [1, 1]} : vector<32x16xf32> to vector<8x16xf32>
    %cst_86 = arith.constant dense<0.000000e+00> : vector<16x16xf32>
    %165 = tpu.matmul %163, %164, %cst_86 {dimension_numbers = #tpu.dot_dimension_numbers<[1], [0], [0], [1], [0, 0, 1, 1], [], []>, precision = #tpu.contract_precision<fp32>} : vector<16x8xf32>, vector<8x16xf32>, vector<16x16xf32> -> vector<16x16xf32>
    %166 = arith.addf %104, %165 : vector<16x16xf32>
    %167 = vector.extract_strided_slice %5 {offsets = [0, 16], sizes = [16, 8], strides = [1, 1]} : vector<16x32xf32> to vector<16x8xf32>
    %cst_87 = arith.constant dense<0.000000e+00> : vector<8x8xf32>
    %168 = tpu.matmul %167, %10, %cst_87 {dimension_numbers = #tpu.dot_dimension_numbers<[0], [0], [1], [1], [0, 1, 1, 1], [], []>, precision = #tpu.contract_precision<fp32>} : vector<16x8xf32>, vector<16x8xf32>, vector<8x8xf32> -> vector<8x8xf32>
    %169 = vector.broadcast %11 : vector<1x8xf32> to vector<8x8xf32>
    %170 = arith.addf %168, %169 : vector<8x8xf32>
    %cst_88 = arith.constant dense<0xFF800000> : vector<8xf32>
    %171 = vector.multi_reduction <maximumf>, %170, %cst_88 [0] : vector<8x8xf32> to vector<8xf32>
    %172 = vector.shape_cast %171 : vector<8xf32> to vector<1x8xf32>
    %173 = vector.broadcast %172 : vector<1x8xf32> to vector<8x8xf32>
    %174 = arith.subf %170, %173 : vector<8x8xf32>
    %175 = math.exp %174 : vector<8x8xf32>
    %cst_89 = arith.constant dense<0.000000e+00> : vector<8xf32>
    %176 = vector.multi_reduction <add>, %175, %cst_89 [0] : vector<8x8xf32> to vector<8xf32>
    %177 = vector.shape_cast %176 : vector<8xf32> to vector<1x8xf32>
    %178 = vector.broadcast %177 : vector<1x8xf32> to vector<8x8xf32>
    %179 = arith.divf %175, %178 : vector<8x8xf32>
    %cst_90 = arith.constant dense<0.000000e+00> : vector<8xf32>
    %180 = vector.multi_reduction <add>, %179, %cst_90 [1] : vector<8x8xf32> to vector<8xf32>
    %181 = vector.shape_cast %180 : vector<8xf32> to vector<8x1xf32>
    %cst_91 = arith.constant 9.99999971E-10 : f32
    %182 = vector.broadcast %cst_91 : f32 to vector<8x1xf32>
    %183 = arith.addf %182, %181 : vector<8x1xf32>
    %184 = vector.broadcast %183 : vector<8x1xf32> to vector<8x8xf32>
    %185 = arith.divf %179, %184 : vector<8x8xf32>
    %cst_92 = arith.constant dense<0.000000e+00> : vector<8x16xf32>
    %186 = tpu.matmul %185, %12, %cst_92 {dimension_numbers = #tpu.dot_dimension_numbers<[1], [0], [0], [1], [0, 0, 1, 1], [], []>, precision = #tpu.contract_precision<fp32>} : vector<8x8xf32>, vector<8x16xf32>, vector<8x16xf32> -> vector<8x16xf32>
    %187 = vector.broadcast %13 : vector<1x16xf32> to vector<8x16xf32>
    %188 = arith.addf %186, %187 : vector<8x16xf32>
    %cst_93 = arith.constant 0.000000e+00 : f32
    %189 = vector.broadcast %cst_93 : f32 to vector<16x8xf32>
    %c0_94 = arith.constant 0 : index
    %c0_95 = arith.constant 0 : index
    %c0_96 = arith.constant 0 : index
    %190 = vector.load %arg15[%c0_94, %c0_95, %c0_96] : memref<2x16x8xf32, #tpu.memory_space<vmem>>, vector<1x16x8xf32>
    %191 = vector.shape_cast %190 : vector<1x16x8xf32> to vector<16x8xf32>
    %192 = vector.extract_strided_slice %188 {offsets = [0, 0], sizes = [8, 8], strides = [1, 1]} : vector<8x16xf32> to vector<8x8xf32>
    %cst_97 = arith.constant dense<0.000000e+00> : vector<16x8xf32>
    %193 = tpu.matmul %191, %192, %cst_97 {dimension_numbers = #tpu.dot_dimension_numbers<[1], [0], [0], [1], [0, 0, 1, 1], [], []>, precision = #tpu.contract_precision<fp32>} : vector<16x8xf32>, vector<8x8xf32>, vector<16x8xf32> -> vector<16x8xf32>
    %194 = arith.addf %189, %193 : vector<16x8xf32>
    %c1_98 = arith.constant 1 : index
    %c0_99 = arith.constant 0 : index
    %c0_100 = arith.constant 0 : index
    %195 = vector.load %arg15[%c1_98, %c0_99, %c0_100] : memref<2x16x8xf32, #tpu.memory_space<vmem>>, vector<1x16x8xf32>
    %196 = vector.shape_cast %195 : vector<1x16x8xf32> to vector<16x8xf32>
    %197 = vector.extract_strided_slice %188 {offsets = [0, 8], sizes = [8, 8], strides = [1, 1]} : vector<8x16xf32> to vector<8x8xf32>
    %cst_101 = arith.constant dense<0.000000e+00> : vector<16x8xf32>
    %198 = tpu.matmul %196, %197, %cst_101 {dimension_numbers = #tpu.dot_dimension_numbers<[1], [0], [0], [1], [0, 0, 1, 1], [], []>, precision = #tpu.contract_precision<fp32>} : vector<16x8xf32>, vector<8x8xf32>, vector<16x8xf32> -> vector<16x8xf32>
    %199 = arith.addf %194, %198 : vector<16x8xf32>
    %c2 = arith.constant 2 : index
    %c0_102 = arith.constant 0 : index
    %c0_103 = arith.constant 0 : index
    %200 = vector.load %arg14[%c2, %c0_102, %c0_103] : memref<4x8x16xf32, #tpu.memory_space<vmem>>, vector<1x8x16xf32>
    %201 = vector.shape_cast %200 : vector<1x8x16xf32> to vector<8x16xf32>
    %cst_104 = arith.constant dense<0.000000e+00> : vector<16x16xf32>
    %202 = tpu.matmul %199, %201, %cst_104 {dimension_numbers = #tpu.dot_dimension_numbers<[1], [0], [0], [1], [0, 0, 1, 1], [], []>, precision = #tpu.contract_precision<fp32>} : vector<16x8xf32>, vector<8x16xf32>, vector<16x16xf32> -> vector<16x16xf32>
    %203 = arith.addf %141, %202 : vector<16x16xf32>
    %204 = vector.extract_strided_slice %3 {offsets = [0, 24], sizes = [16, 8], strides = [1, 1]} : vector<16x32xf32> to vector<16x8xf32>
    %cst_105 = arith.constant dense<0.000000e+00> : vector<16x64xf32>
    %205 = tpu.matmul %204, %6, %cst_105 {dimension_numbers = #tpu.dot_dimension_numbers<[1], [0], [0], [1], [0, 0, 1, 1], [], []>, precision = #tpu.contract_precision<fp32>} : vector<16x8xf32>, vector<8x64xf32>, vector<16x64xf32> -> vector<16x64xf32>
    %206 = vector.broadcast %7 : vector<1x64xf32> to vector<16x64xf32>
    %207 = arith.addf %205, %206 : vector<16x64xf32>
    %cst_106 = arith.constant dense<0xFF800000> : vector<64xf32>
    %208 = vector.multi_reduction <maximumf>, %207, %cst_106 [0] : vector<16x64xf32> to vector<64xf32>
    %209 = vector.shape_cast %208 : vector<64xf32> to vector<1x64xf32>
    %210 = vector.broadcast %209 : vector<1x64xf32> to vector<16x64xf32>
    %211 = arith.subf %207, %210 : vector<16x64xf32>
    %212 = math.exp %211 : vector<16x64xf32>
    %cst_107 = arith.constant dense<0.000000e+00> : vector<64xf32>
    %213 = vector.multi_reduction <add>, %212, %cst_107 [0] : vector<16x64xf32> to vector<64xf32>
    %214 = vector.shape_cast %213 : vector<64xf32> to vector<1x64xf32>
    %215 = vector.broadcast %214 : vector<1x64xf32> to vector<16x64xf32>
    %216 = arith.divf %212, %215 : vector<16x64xf32>
    %cst_108 = arith.constant dense<0.000000e+00> : vector<16xf32>
    %217 = vector.multi_reduction <add>, %216, %cst_108 [1] : vector<16x64xf32> to vector<16xf32>
    %218 = vector.shape_cast %217 : vector<16xf32> to vector<16x1xf32>
    %cst_109 = arith.constant 9.99999971E-10 : f32
    %219 = vector.broadcast %cst_109 : f32 to vector<16x1xf32>
    %220 = arith.addf %219, %218 : vector<16x1xf32>
    %221 = vector.broadcast %220 : vector<16x1xf32> to vector<16x64xf32>
    %222 = arith.divf %216, %221 : vector<16x64xf32>
    %cst_110 = arith.constant dense<0.000000e+00> : vector<16x8xf32>
    %223 = tpu.matmul %222, %8, %cst_110 {dimension_numbers = #tpu.dot_dimension_numbers<[1], [0], [0], [1], [0, 0, 1, 1], [], []>, precision = #tpu.contract_precision<fp32>} : vector<16x64xf32>, vector<64x8xf32>, vector<16x8xf32> -> vector<16x8xf32>
    %224 = vector.broadcast %9 : vector<1x8xf32> to vector<16x8xf32>
    %225 = arith.addf %223, %224 : vector<16x8xf32>
    %226 = vector.extract_strided_slice %14 {offsets = [24, 0], sizes = [8, 16], strides = [1, 1]} : vector<32x16xf32> to vector<8x16xf32>
    %cst_111 = arith.constant dense<0.000000e+00> : vector<16x16xf32>
    %227 = tpu.matmul %225, %226, %cst_111 {dimension_numbers = #tpu.dot_dimension_numbers<[1], [0], [0], [1], [0, 0, 1, 1], [], []>, precision = #tpu.contract_precision<fp32>} : vector<16x8xf32>, vector<8x16xf32>, vector<16x16xf32> -> vector<16x16xf32>
    %228 = arith.addf %166, %227 : vector<16x16xf32>
    %229 = vector.extract_strided_slice %5 {offsets = [0, 24], sizes = [16, 8], strides = [1, 1]} : vector<16x32xf32> to vector<16x8xf32>
    %cst_112 = arith.constant dense<0.000000e+00> : vector<8x8xf32>
    %230 = tpu.matmul %229, %10, %cst_112 {dimension_numbers = #tpu.dot_dimension_numbers<[0], [0], [1], [1], [0, 1, 1, 1], [], []>, precision = #tpu.contract_precision<fp32>} : vector<16x8xf32>, vector<16x8xf32>, vector<8x8xf32> -> vector<8x8xf32>
    %231 = vector.broadcast %11 : vector<1x8xf32> to vector<8x8xf32>
    %232 = arith.addf %230, %231 : vector<8x8xf32>
    %cst_113 = arith.constant dense<0xFF800000> : vector<8xf32>
    %233 = vector.multi_reduction <maximumf>, %232, %cst_113 [0] : vector<8x8xf32> to vector<8xf32>
    %234 = vector.shape_cast %233 : vector<8xf32> to vector<1x8xf32>
    %235 = vector.broadcast %234 : vector<1x8xf32> to vector<8x8xf32>
    %236 = arith.subf %232, %235 : vector<8x8xf32>
    %237 = math.exp %236 : vector<8x8xf32>
    %cst_114 = arith.constant dense<0.000000e+00> : vector<8xf32>
    %238 = vector.multi_reduction <add>, %237, %cst_114 [0] : vector<8x8xf32> to vector<8xf32>
    %239 = vector.shape_cast %238 : vector<8xf32> to vector<1x8xf32>
    %240 = vector.broadcast %239 : vector<1x8xf32> to vector<8x8xf32>
    %241 = arith.divf %237, %240 : vector<8x8xf32>
    %cst_115 = arith.constant dense<0.000000e+00> : vector<8xf32>
    %242 = vector.multi_reduction <add>, %241, %cst_115 [1] : vector<8x8xf32> to vector<8xf32>
    %243 = vector.shape_cast %242 : vector<8xf32> to vector<8x1xf32>
    %cst_116 = arith.constant 9.99999971E-10 : f32
    %244 = vector.broadcast %cst_116 : f32 to vector<8x1xf32>
    %245 = arith.addf %244, %243 : vector<8x1xf32>
    %246 = vector.broadcast %245 : vector<8x1xf32> to vector<8x8xf32>
    %247 = arith.divf %241, %246 : vector<8x8xf32>
    %cst_117 = arith.constant dense<0.000000e+00> : vector<8x16xf32>
    %248 = tpu.matmul %247, %12, %cst_117 {dimension_numbers = #tpu.dot_dimension_numbers<[1], [0], [0], [1], [0, 0, 1, 1], [], []>, precision = #tpu.contract_precision<fp32>} : vector<8x8xf32>, vector<8x16xf32>, vector<8x16xf32> -> vector<8x16xf32>
    %249 = vector.broadcast %13 : vector<1x16xf32> to vector<8x16xf32>
    %250 = arith.addf %248, %249 : vector<8x16xf32>
    %cst_118 = arith.constant 0.000000e+00 : f32
    %251 = vector.broadcast %cst_118 : f32 to vector<16x8xf32>
    %c0_119 = arith.constant 0 : index
    %c0_120 = arith.constant 0 : index
    %c0_121 = arith.constant 0 : index
    %252 = vector.load %arg15[%c0_119, %c0_120, %c0_121] : memref<2x16x8xf32, #tpu.memory_space<vmem>>, vector<1x16x8xf32>
    %253 = vector.shape_cast %252 : vector<1x16x8xf32> to vector<16x8xf32>
    %254 = vector.extract_strided_slice %250 {offsets = [0, 0], sizes = [8, 8], strides = [1, 1]} : vector<8x16xf32> to vector<8x8xf32>
    %cst_122 = arith.constant dense<0.000000e+00> : vector<16x8xf32>
    %255 = tpu.matmul %253, %254, %cst_122 {dimension_numbers = #tpu.dot_dimension_numbers<[1], [0], [0], [1], [0, 0, 1, 1], [], []>, precision = #tpu.contract_precision<fp32>} : vector<16x8xf32>, vector<8x8xf32>, vector<16x8xf32> -> vector<16x8xf32>
    %256 = arith.addf %251, %255 : vector<16x8xf32>
    %c1_123 = arith.constant 1 : index
    %c0_124 = arith.constant 0 : index
    %c0_125 = arith.constant 0 : index
    %257 = vector.load %arg15[%c1_123, %c0_124, %c0_125] : memref<2x16x8xf32, #tpu.memory_space<vmem>>, vector<1x16x8xf32>
    %258 = vector.shape_cast %257 : vector<1x16x8xf32> to vector<16x8xf32>
    %259 = vector.extract_strided_slice %250 {offsets = [0, 8], sizes = [8, 8], strides = [1, 1]} : vector<8x16xf32> to vector<8x8xf32>
    %cst_126 = arith.constant dense<0.000000e+00> : vector<16x8xf32>
    %260 = tpu.matmul %258, %259, %cst_126 {dimension_numbers = #tpu.dot_dimension_numbers<[1], [0], [0], [1], [0, 0, 1, 1], [], []>, precision = #tpu.contract_precision<fp32>} : vector<16x8xf32>, vector<8x8xf32>, vector<16x8xf32> -> vector<16x8xf32>
    %261 = arith.addf %256, %260 : vector<16x8xf32>
    %c3 = arith.constant 3 : index
    %c0_127 = arith.constant 0 : index
    %c0_128 = arith.constant 0 : index
    %262 = vector.load %arg14[%c3, %c0_127, %c0_128] : memref<4x8x16xf32, #tpu.memory_space<vmem>>, vector<1x8x16xf32>
    %263 = vector.shape_cast %262 : vector<1x8x16xf32> to vector<8x16xf32>
    %cst_129 = arith.constant dense<0.000000e+00> : vector<16x16xf32>
    %264 = tpu.matmul %261, %263, %cst_129 {dimension_numbers = #tpu.dot_dimension_numbers<[1], [0], [0], [1], [0, 0, 1, 1], [], []>, precision = #tpu.contract_precision<fp32>} : vector<16x8xf32>, vector<8x16xf32>, vector<16x16xf32> -> vector<16x16xf32>
    %265 = arith.addf %203, %264 : vector<16x16xf32>
    %266 = vector.broadcast %15 : vector<1x16xf32> to vector<16x16xf32>
    %267 = arith.addf %228, %266 : vector<16x16xf32>
    %268 = vector.broadcast %15 : vector<1x16xf32> to vector<16x16xf32>
    %269 = arith.addf %265, %268 : vector<16x16xf32>
    %270 = tpu.concatenate %267, %269 in 1 : vector<16x16xf32>, vector<16x16xf32> -> vector<16x32xf32>
    %c0_130 = arith.constant 0 : index
    %c0_131 = arith.constant 0 : index
    %c0_132 = arith.constant 0 : index
    %271 = vector.load %arg16[%c0_130, %c0_131, %c0_132] : memref<1x16x32xf32, #tpu.memory_space<vmem>>, vector<1x16x32xf32>
    %272 = vector.shape_cast %271 : vector<1x16x32xf32> to vector<16x32xf32>
    %273 = vector.shape_cast %270 : vector<16x32xf32> to vector<1x16x32xf32>
    tpu.vector_store %arg16[%c0_130, %c0_131, %c0_132], %273 {strides = array<i32>} : memref<1x16x32xf32, #tpu.memory_space<vmem>>, vector<1x16x32xf32>,
    return
  }
  func.func @transform_0(%arg0: i32) -> (i32, i32, i32) {
    %c0_i32 = arith.constant 0 : i32
    %c0_i32_0 = arith.constant 0 : i32
    %c0_i32_1 = arith.constant 0 : i32
    return %arg0, %c0_i32, %c0_i32_0 : i32, i32, i32
  }
  func.func @transform_1(%arg0: i32) -> (i32, i32) {
    %c0_i32 = arith.constant 0 : i32
    %c0_i32_0 = arith.constant 0 : i32
    %c0_i32_1 = arith.constant 0 : i32
    return %c0_i32, %c0_i32_0 : i32, i32
  }
  func.func @transform_2(%arg0: i32) -> (i32, i32) {
    %c0_i32 = arith.constant 0 : i32
    %c0_i32_0 = arith.constant 0 : i32
    %c0_i32_1 = arith.constant 0 : i32
    return %c0_i32, %c0_i32_0 : i32, i32
  }
  func.func @transform_3(%arg0: i32) -> (i32, i32) {
    %c0_i32 = arith.constant 0 : i32
    %c0_i32_0 = arith.constant 0 : i32
    %c0_i32_1 = arith.constant 0 : i32
    return %c0_i32, %c0_i32_0 : i32, i32
  }
  func.func @transform_4(%arg0: i32) -> (i32, i32) {
    %c0_i32 = arith.constant 0 : i32
    %c0_i32_0 = arith.constant 0 : i32
    %c0_i32_1 = arith.constant 0 : i32
    return %c0_i32, %c0_i32_0 : i32, i32
  }
  func.func @transform_5(%arg0: i32) -> (i32, i32) {
    %c0_i32 = arith.constant 0 : i32
    %c0_i32_0 = arith.constant 0 : i32
    %c0_i32_1 = arith.constant 0 : i32
    return %c0_i32, %c0_i32_0 : i32, i32
  }
  func.func @transform_6(%arg0: i32) -> (i32, i32) {
    %c0_i32 = arith.constant 0 : i32
    %c0_i32_0 = arith.constant 0 : i32
    %c0_i32_1 = arith.constant 0 : i32
    return %c0_i32, %c0_i32_0 : i32, i32
  }
  func.func @transform_7(%arg0: i32) -> (i32, i32) {
    %c0_i32 = arith.constant 0 : i32
    %c0_i32_0 = arith.constant 0 : i32
    %c0_i32_1 = arith.constant 0 : i32
    return %c0_i32, %c0_i32_0 : i32, i32
  }
  func.func @transform_8(%arg0: i32) -> (i32, i32) {
    %c0_i32 = arith.constant 0 : i32
    %c0_i32_0 = arith.constant 0 : i32
    %c0_i32_1 = arith.constant 0 : i32
    return %c0_i32, %c0_i32_0 : i32, i32
  }
  func.func @transform_9(%arg0: i32) -> (i32, i32) {
    %c0_i32 = arith.constant 0 : i32
    %c0_i32_0 = arith.constant 0 : i32
    %c0_i32_1 = arith.constant 0 : i32
    return %c0_i32, %c0_i32_0 : i32, i32
  }
  func.func @transform_10(%arg0: i32) -> (i32, i32) {
    %c0_i32 = arith.constant 0 : i32
    %c0_i32_0 = arith.constant 0 : i32
    %c0_i32_1 = arith.constant 0 : i32
    return %c0_i32, %c0_i32_0 : i32, i32
  }
  func.func @transform_11(%arg0: i32) -> (i32, i32) {
    %c0_i32 = arith.constant 0 : i32
    %c0_i32_0 = arith.constant 0 : i32
    %c0_i32_1 = arith.constant 0 : i32
    return %c0_i32, %c0_i32_0 : i32, i32
  }
  func.func @transform_12(%arg0: i32) -> (i32, i32) {
    %c0_i32 = arith.constant 0 : i32
    %c0_i32_0 = arith.constant 0 : i32
    %c0_i32_1 = arith.constant 0 : i32
    return %c0_i32, %c0_i32_0 : i32, i32
  }
  func.func @transform_13(%arg0: i32) -> (i32, i32, i32) {
    %c0_i32 = arith.constant 0 : i32
    %c0_i32_0 = arith.constant 0 : i32
    %c0_i32_1 = arith.constant 0 : i32
    %c0_i32_2 = arith.constant 0 : i32
    return %c0_i32, %c0_i32_0, %c0_i32_1 : i32, i32, i32
  }
  func.func @transform_14(%arg0: i32) -> (i32, i32, i32) {
    %c0_i32 = arith.constant 0 : i32
    %c0_i32_0 = arith.constant 0 : i32
    %c0_i32_1 = arith.constant 0 : i32
    %c0_i32_2 = arith.constant 0 : i32
    return %c0_i32, %c0_i32_0, %c0_i32_1 : i32, i32, i32
  }
  func.func @transform_15(%arg0: i32) -> (i32, i32, i32) {
    %c0_i32 = arith.constant 0 : i32
    %c0_i32_0 = arith.constant 0 : i32
    %c0_i32_1 = arith.constant 0 : i32
    return %arg0, %c0_i32, %c0_i32_0 : i32, i32, i32
  }
}

</mosaic_0001>

<llo_original>
// kernel: mul_external_attention.1
$region0: #{mul_external_attention.1}
  #allocation0 [shape = 'u32[]', space=smem, size = 0x4, offset = 0x4, fixed_abs, tag = 'smem constant byte address 0x4 - core index']
  #allocation1 [shape = 'u32[72,128]{1,0:T(1,128)}', space=vmem, size = 0x9000, scoped, tag = 'internal scratch']
  %s0 = inlined_call_operand.vmem [shape: f32[2,16,32], index: 0, kind: input, shape index: {}]
  %s1 = inlined_call_operand.vmem [shape: f32[32,32], index: 1, kind: input, shape index: {}]
  %s2 = inlined_call_operand.vmem [shape: f32[32,32], index: 2, kind: input, shape index: {}]
  %s3 = inlined_call_operand.vmem [shape: f32[8,64], index: 3, kind: input, shape index: {}]
  %s4 = inlined_call_operand.vmem [shape: f32[1,64], index: 4, kind: input, shape index: {}]
  %s5 = inlined_call_operand.vmem [shape: f32[64,8], index: 5, kind: input, shape index: {}]
  %s6 = inlined_call_operand.vmem [shape: f32[1,8], index: 6, kind: input, shape index: {}]
  %s7 = inlined_call_operand.vmem [shape: f32[16,8], index: 7, kind: input, shape index: {}]
  %s8 = inlined_call_operand.vmem [shape: f32[1,8], index: 8, kind: input, shape index: {}]
  %s9 = inlined_call_operand.vmem [shape: f32[8,16], index: 9, kind: input, shape index: {}]
  %s10 = inlined_call_operand.vmem [shape: f32[1,16], index: 10, kind: input, shape index: {}]
  %s11 = inlined_call_operand.vmem [shape: f32[32,16], index: 11, kind: input, shape index: {}]
  %s12 = inlined_call_operand.vmem [shape: f32[1,16], index: 12, kind: input, shape index: {}]
  %s13 = inlined_call_operand.vmem [shape: f32[4,8,16], index: 13, kind: input, shape index: {}]
  %s14 = inlined_call_operand.vmem [shape: f32[2,16,8], index: 14, kind: input, shape index: {}]
  %s15 = inlined_call_operand.hbm [shape: f32[2,16,32], index: 15, kind: output, shape index: {}]
  %s16 = sld [smem:[#allocation0]]
  $region93: #{mul_external_attention.1} parent=0
    _
  %s18 = ssub.s32 1, %s16
  %s19 = scalar_select 0, %s18, %s16
  $region1: #{mul_external_attention.1} parent=0
    #allocation2 [shape = 'u8[16384]{0}', space=vmem, size = 0x4000, scoped, tag = 'output window, operand 0']
    #allocation3 [shape = 's32[2]{0}', space=sflag, size = 0x8, scoped, tag = 'scoped memory for mul_external_attention.1']
    %20 = vsyncpa [#allocation3], 0
    %s21 = scalar_lea.sflag [#allocation3], 1
    %22 = vsyncpa %s21, 0
    loop: start=0, step=1, limit=4
    $region2: #{mul_external_attention.1} parent=1 // loop_pre_header
      _
    $region3: #{mul_external_attention.1} parent=1 // loop_header
      %s24 = sphi 0, %s28
      %p25 = scmp.ge.s32.totalorder %s24, 4
      %s34 = sphi 0, %s36
      %s37 = sphi 0, %s34
      %s38 = sphi 0, %s37
      %s54 = sphi 0, %s38
      %s58 = sphi 0, %s58
      %s60 = sphi 0, %s58
      %s61 = sphi 0, %s60
      %s75 = sphi 0, %s61
      %s79 = sphi 0, %s79
      %s81 = sphi 0, %s79
      %s82 = sphi 0, %s81
      %s96 = sphi 0, %s82
      %s100 = sphi 0, %s100
      %s102 = sphi 0, %s100
      %s103 = sphi 0, %s102
      %s117 = sphi 0, %s103
      %s121 = sphi 0, %s121
      %s123 = sphi 0, %s121
      %s124 = sphi 0, %s123
      %s138 = sphi 0, %s124
      %s142 = sphi 0, %s142
      %s144 = sphi 0, %s142
      %s145 = sphi 0, %s144
      %s159 = sphi 0, %s145
      %s163 = sphi 0, %s163
      %s165 = sphi 0, %s163
      %s166 = sphi 0, %s165
      %s180 = sphi 0, %s166
      %s184 = sphi 0, %s184
      %s186 = sphi 0, %s184
      %s187 = sphi 0, %s186
      %s201 = sphi 0, %s187
      %s205 = sphi 0, %s205
      %s207 = sphi 0, %s205
      %s208 = sphi 0, %s207
      %s222 = sphi 0, %s208
      %s226 = sphi 0, %s226
      %s228 = sphi 0, %s226
      %s229 = sphi 0, %s228
      %s243 = sphi 0, %s229
      %s247 = sphi 0, %s247
      %s249 = sphi 0, %s247
      %s250 = sphi 0, %s249
      %s264 = sphi 0, %s250
      %s268 = sphi 0, %s268
      %s270 = sphi 0, %s268
      %s271 = sphi 0, %s270
      %s285 = sphi 0, %s271
      %s289 = sphi 0, %s289
      %s291 = sphi 0, %s289
      %s292 = sphi 0, %s291
      %s306 = sphi 0, %s292
      %s310 = sphi 0, %s310
      %s312 = sphi 0, %s310
      %s313 = sphi 0, %s312
      %s327 = sphi 0, %s313
      %s331 = sphi 0, %s331
      %s333 = sphi 0, %s331
      %s334 = sphi 0, %s333
      %s348 = sphi 0, %s334
      %s354 = sphi 0, %s356
      %s357 = sphi 0, %s354
      %s358 = sphi 0, %s357
      %s374 = sphi 0, %s358
    $region4: #{mul_external_attention.1} parent=1 // loop_header_branch
      %27 = sbr.rel (%p25) target = $region8
    $region5: #{mul_external_attention.1} parent=1 // loop_body
      %s29 = ssub.s32 %s24, 1
      %s30 = ssub.s32 %s24, 2
      %s31 = sadd.s32 %s24, 1
      %s32 = ssub.s32 %s24, %s31
      %p33 = scmp.eq.s32.totalorder %s32, 0
      %s35 = sadd.s32 %s34, 1
      %s36 = scalar_select %p33, %s34, %s35
      %p39 = pneg %p33
      %p40 = scmp.eq.s32.totalorder %s24, 1
      %p41 = por %p39, %p40
      %p42 = scmp.ne.s32.totalorder %s34, %s37
      %p43 = scmp.eq.s32.totalorder %s24, 0
      %p44 = por %p42, %p43
      %p45 = scmp.ne.s32.totalorder %s34, %s37
      %p46 = scmp.eq.s32.totalorder %s29, 1
      %p47 = por %p45, %p46
      %p48 = scmp.ne.s32.totalorder %s37, %s38
      %p49 = scmp.eq.s32.totalorder %s29, 0
      %p50 = por %p48, %p49
      %p51 = scmp.ne.s32.totalorder %s37, %s38
      %p52 = scmp.eq.s32.totalorder %s30, 1
      %p53 = por %p51, %p52
      %p55 = scmp.ne.s32.totalorder %s38, %s54
      %p56 = scmp.eq.s32.totalorder %s30, 0
      %p57 = por %p55, %p56
      %s59 = sadd.s32 %s58, 1
      %p62 = scmp.eq.s32.totalorder %s24, 1
      %p63 = scmp.ne.s32.totalorder %s58, %s60
      %p64 = scmp.eq.s32.totalorder %s24, 0
      %p65 = por %p63, %p64
      %p66 = scmp.ne.s32.totalorder %s58, %s60
      %p67 = scmp.eq.s32.totalorder %s29, 1
      %p68 = por %p66, %p67
      %p69 = scmp.ne.s32.totalorder %s60, %s61
      %p70 = scmp.eq.s32.totalorder %s29, 0
      %p71 = por %p69, %p70
      %p72 = scmp.ne.s32.totalorder %s60, %s61
      %p73 = scmp.eq.s32.totalorder %s30, 1
      %p74 = por %p72, %p73
      %p76 = scmp.ne.s32.totalorder %s61, %s75
      %p77 = scmp.eq.s32.totalorder %s30, 0
      %p78 = por %p76, %p77
      %s80 = sadd.s32 %s79, 1
      %p83 = scmp.eq.s32.totalorder %s24, 1
      %p84 = scmp.ne.s32.totalorder %s79, %s81
      %p85 = scmp.eq.s32.totalorder %s24, 0
      %p86 = por %p84, %p85
      %p87 = scmp.ne.s32.totalorder %s79, %s81
      %p88 = scmp.eq.s32.totalorder %s29, 1
      %p89 = por %p87, %p88
      %p90 = scmp.ne.s32.totalorder %s81, %s82
      %p91 = scmp.eq.s32.totalorder %s29, 0
      %p92 = por %p90, %p91
      %p93 = scmp.ne.s32.totalorder %s81, %s82
      %p94 = scmp.eq.s32.totalorder %s30, 1
      %p95 = por %p93, %p94
      %p97 = scmp.ne.s32.totalorder %s82, %s96
      %p98 = scmp.eq.s32.totalorder %s30, 0
      %p99 = por %p97, %p98
      %s101 = sadd.s32 %s100, 1
      %p104 = scmp.eq.s32.totalorder %s24, 1
      %p105 = scmp.ne.s32.totalorder %s100, %s102
      %p106 = scmp.eq.s32.totalorder %s24, 0
      %p107 = por %p105, %p106
      %p108 = scmp.ne.s32.totalorder %s100, %s102
      %p109 = scmp.eq.s32.totalorder %s29, 1
      %p110 = por %p108, %p109
      %p111 = scmp.ne.s32.totalorder %s102, %s103
      %p112 = scmp.eq.s32.totalorder %s29, 0
      %p113 = por %p111, %p112
      %p114 = scmp.ne.s32.totalorder %s102, %s103
      %p115 = scmp.eq.s32.totalorder %s30, 1
      %p116 = por %p114, %p115
      %p118 = scmp.ne.s32.totalorder %s103, %s117
      %p119 = scmp.eq.s32.totalorder %s30, 0
      %p120 = por %p118, %p119
      %s122 = sadd.s32 %s121, 1
      %p125 = scmp.eq.s32.totalorder %s24, 1
      %p126 = scmp.ne.s32.totalorder %s121, %s123
      %p127 = scmp.eq.s32.totalorder %s24, 0
      %p128 = por %p126, %p127
      %p129 = scmp.ne.s32.totalorder %s121, %s123
      %p130 = scmp.eq.s32.totalorder %s29, 1
      %p131 = por %p129, %p130
      %p132 = scmp.ne.s32.totalorder %s123, %s124
      %p133 = scmp.eq.s32.totalorder %s29, 0
      %p134 = por %p132, %p133
      %p135 = scmp.ne.s32.totalorder %s123, %s124
      %p136 = scmp.eq.s32.totalorder %s30, 1
      %p137 = por %p135, %p136
      %p139 = scmp.ne.s32.totalorder %s124, %s138
      %p140 = scmp.eq.s32.totalorder %s30, 0
      %p141 = por %p139, %p140
      %s143 = sadd.s32 %s142, 1
      %p146 = scmp.eq.s32.totalorder %s24, 1
      %p147 = scmp.ne.s32.totalorder %s142, %s144
      %p148 = scmp.eq.s32.totalorder %s24, 0
      %p149 = por %p147, %p148
      %p150 = scmp.ne.s32.totalorder %s142, %s144
      %p151 = scmp.eq.s32.totalorder %s29, 1
      %p152 = por %p150, %p151
      %p153 = scmp.ne.s32.totalorder %s144, %s145
      %p154 = scmp.eq.s32.totalorder %s29, 0
      %p155 = por %p153, %p154
      %p156 = scmp.ne.s32.totalorder %s144, %s145
      %p157 = scmp.eq.s32.totalorder %s30, 1
      %p158 = por %p156, %p157
      %p160 = scmp.ne.s32.totalorder %s145, %s159
      %p161 = scmp.eq.s32.totalorder %s30, 0
      %p162 = por %p160, %p161
      %s164 = sadd.s32 %s163, 1
      %p167 = scmp.eq.s32.totalorder %s24, 1
      %p168 = scmp.ne.s32.totalorder %s163, %s165
      %p169 = scmp.eq.s32.totalorder %s24, 0
      %p170 = por %p168, %p169
      %p171 = scmp.ne.s32.totalorder %s163, %s165
      %p172 = scmp.eq.s32.totalorder %s29, 1
      %p173 = por %p171, %p172
      %p174 = scmp.ne.s32.totalorder %s165, %s166
      %p175 = scmp.eq.s32.totalorder %s29, 0
      %p176 = por %p174, %p175
      %p177 = scmp.ne.s32.totalorder %s165, %s166
      %p178 = scmp.eq.s32.totalorder %s30, 1
      %p179 = por %p177, %p178
      %p181 = scmp.ne.s32.totalorder %s166, %s180
      %p182 = scmp.eq.s32.totalorder %s30, 0
      %p183 = por %p181, %p182
      %s185 = sadd.s32 %s184, 1
      %p188 = scmp.eq.s32.totalorder %s24, 1
      %p189 = scmp.ne.s32.totalorder %s184, %s186
      %p190 = scmp.eq.s32.totalorder %s24, 0
      %p191 = por %p189, %p190
      %p192 = scmp.ne.s32.totalorder %s184, %s186
      %p193 = scmp.eq.s32.totalorder %s29, 1
      %p194 = por %p192, %p193
      %p195 = scmp.ne.s32.totalorder %s186, %s187
      %p196 = scmp.eq.s32.totalorder %s29, 0
      %p197 = por %p195, %p196
      %p198 = scmp.ne.s32.totalorder %s186, %s187
      %p199 = scmp.eq.s32.totalorder %s30, 1
      %p200 = por %p198, %p199
      %p202 = scmp.ne.s32.totalorder %s187, %s201
      %p203 = scmp.eq.s32.totalorder %s30, 0
      %p204 = por %p202, %p203
      %s206 = sadd.s32 %s205, 1
      %p209 = scmp.eq.s32.totalorder %s24, 1
      %p210 = scmp.ne.s32.totalorder %s205, %s207
      %p211 = scmp.eq.s32.totalorder %s24, 0
      %p212 = por %p210, %p211
      %p213 = scmp.ne.s32.totalorder %s205, %s207
      %p214 = scmp.eq.s32.totalorder %s29, 1
      %p215 = por %p213, %p214
      %p216 = scmp.ne.s32.totalorder %s207, %s208
      %p217 = scmp.eq.s32.totalorder %s29, 0
      %p218 = por %p216, %p217
      %p219 = scmp.ne.s32.totalorder %s207, %s208
      %p220 = scmp.eq.s32.totalorder %s30, 1
      %p221 = por %p219, %p220
      %p223 = scmp.ne.s32.totalorder %s208, %s222
      %p224 = scmp.eq.s32.totalorder %s30, 0
      %p225 = por %p223, %p224
      %s227 = sadd.s32 %s226, 1
      %p230 = scmp.eq.s32.totalorder %s24, 1
      %p231 = scmp.ne.s32.totalorder %s226, %s228
      %p232 = scmp.eq.s32.totalorder %s24, 0
      %p233 = por %p231, %p232
      %p234 = scmp.ne.s32.totalorder %s226, %s228
      %p235 = scmp.eq.s32.totalorder %s29, 1
      %p236 = por %p234, %p235
      %p237 = scmp.ne.s32.totalorder %s228, %s229
      %p238 = scmp.eq.s32.totalorder %s29, 0
      %p239 = por %p237, %p238
      %p240 = scmp.ne.s32.totalorder %s228, %s229
      %p241 = scmp.eq.s32.totalorder %s30, 1
      %p242 = por %p240, %p241
      %p244 = scmp.ne.s32.totalorder %s229, %s243
      %p245 = scmp.eq.s32.totalorder %s30, 0
      %p246 = por %p244, %p245
      %s248 = sadd.s32 %s247, 1
      %p251 = scmp.eq.s32.totalorder %s24, 1
      %p252 = scmp.ne.s32.totalorder %s247, %s249
      %p253 = scmp.eq.s32.totalorder %s24, 0
      %p254 = por %p252, %p253
      %p255 = scmp.ne.s32.totalorder %s247, %s249
      %p256 = scmp.eq.s32.totalorder %s29, 1
      %p257 = por %p255, %p256
      %p258 = scmp.ne.s32.totalorder %s249, %s250
      %p259 = scmp.eq.s32.totalorder %s29, 0
      %p260 = por %p258, %p259
      %p261 = scmp.ne.s32.totalorder %s249, %s250
      %p262 = scmp.eq.s32.totalorder %s30, 1
      %p263 = por %p261, %p262
      %p265 = scmp.ne.s32.totalorder %s250, %s264
      %p266 = scmp.eq.s32.totalorder %s30, 0
      %p267 = por %p265, %p266
      %s269 = sadd.s32 %s268, 1
      %p272 = scmp.eq.s32.totalorder %s24, 1
      %p273 = scmp.ne.s32.totalorder %s268, %s270
      %p274 = scmp.eq.s32.totalorder %s24, 0
      %p275 = por %p273, %p274
      %p276 = scmp.ne.s32.totalorder %s268, %s270
      %p277 = scmp.eq.s32.totalorder %s29, 1
      %p278 = por %p276, %p277
      %p279 = scmp.ne.s32.totalorder %s270, %s271
      %p280 = scmp.eq.s32.totalorder %s29, 0
      %p281 = por %p279, %p280
      %p282 = scmp.ne.s32.totalorder %s270, %s271
      %p283 = scmp.eq.s32.totalorder %s30, 1
      %p284 = por %p282, %p283
      %p286 = scmp.ne.s32.totalorder %s271, %s285
      %p287 = scmp.eq.s32.totalorder %s30, 0
      %p288 = por %p286, %p287
      %s290 = sadd.s32 %s289, 1
      %p293 = scmp.eq.s32.totalorder %s24, 1
      %p294 = scmp.ne.s32.totalorder %s289, %s291
      %p295 = scmp.eq.s32.totalorder %s24, 0
      %p296 = por %p294, %p295
      %p297 = scmp.ne.s32.totalorder %s289, %s291
      %p298 = scmp.eq.s32.totalorder %s29, 1
      %p299 = por %p297, %p298
      %p300 = scmp.ne.s32.totalorder %s291, %s292
      %p301 = scmp.eq.s32.totalorder %s29, 0
      %p302 = por %p300, %p301
      %p303 = scmp.ne.s32.totalorder %s291, %s292
      %p304 = scmp.eq.s32.totalorder %s30, 1
      %p305 = por %p303, %p304
      %p307 = scmp.ne.s32.totalorder %s292, %s306
      %p308 = scmp.eq.s32.totalorder %s30, 0
      %p309 = por %p307, %p308
      %s311 = sadd.s32 %s310, 1
      %p314 = scmp.eq.s32.totalorder %s24, 1
      %p315 = scmp.ne.s32.totalorder %s310, %s312
      %p316 = scmp.eq.s32.totalorder %s24, 0
      %p317 = por %p315, %p316
      %p318 = scmp.ne.s32.totalorder %s310, %s312
      %p319 = scmp.eq.s32.totalorder %s29, 1
      %p320 = por %p318, %p319
      %p321 = scmp.ne.s32.totalorder %s312, %s313
      %p322 = scmp.eq.s32.totalorder %s29, 0
      %p323 = por %p321, %p322
      %p324 = scmp.ne.s32.totalorder %s312, %s313
      %p325 = scmp.eq.s32.totalorder %s30, 1
      %p326 = por %p324, %p325
      %p328 = scmp.ne.s32.totalorder %s313, %s327
      %p329 = scmp.eq.s32.totalorder %s30, 0
      %p330 = por %p328, %p329
      %s332 = sadd.s32 %s331, 1
      %p335 = scmp.eq.s32.totalorder %s24, 1
      %p336 = scmp.ne.s32.totalorder %s331, %s333
      %p337 = scmp.eq.s32.totalorder %s24, 0
      %p338 = por %p336, %p337
      %p339 = scmp.ne.s32.totalorder %s331, %s333
      %p340 = scmp.eq.s32.totalorder %s29, 1
      %p341 = por %p339, %p340
      %p342 = scmp.ne.s32.totalorder %s333, %s334
      %p343 = scmp.eq.s32.totalorder %s29, 0
      %p344 = por %p342, %p343
      %p345 = scmp.ne.s32.totalorder %s333, %s334
      %p346 = scmp.eq.s32.totalorder %s30, 1
      %p347 = por %p345, %p346
      %p349 = scmp.ne.s32.totalorder %s334, %s348
      %p350 = scmp.eq.s32.totalorder %s30, 0
      %p351 = por %p349, %p350
      %s352 = ssub.s32 %s24, %s31
      %p353 = scmp.eq.s32.totalorder %s352, 0
      %s355 = sadd.s32 %s354, 1
      %s356 = scalar_select %p353, %s354, %s355
      %p359 = pneg %p353
      %p360 = scmp.eq.s32.totalorder %s24, 1
      %p361 = por %p359, %p360
      %p362 = scmp.ne.s32.totalorder %s354, %s357
      %p363 = scmp.eq.s32.totalorder %s24, 0
      %p364 = por %p362, %p363
      %p365 = scmp.ne.s32.totalorder %s354, %s357
      %p366 = scmp.eq.s32.totalorder %s29, 1
      %p367 = por %p365, %p366
      %p368 = scmp.ne.s32.totalorder %s357, %s358
      %p369 = scmp.eq.s32.totalorder %s29, 0
      %p370 = por %p368, %p369
      %p371 = scmp.ne.s32.totalorder %s357, %s358
      %p372 = scmp.eq.s32.totalorder %s30, 1
      %p373 = por %p371, %p372
      %p375 = scmp.ne.s32.totalorder %s358, %s374
      %p376 = scmp.eq.s32.totalorder %s30, 0
      %p377 = por %p375, %p376
      %p378 = scmp.le.s32.totalorder 1, %s24
      %p379 = scmp.lt.s32.totalorder %s24, 3
      %p380 = pnand %p378, %p379
      %p381 = pneg %p380
      // Predicated region
      $region9: #{mul_external_attention.1} parent=5 // pred_check
        _
      $region10: #{mul_external_attention.1} parent=5 // pred_check_branch
        %383 = sbr.rel (%p380) target = $region12
      $region11: #{mul_external_attention.1} parent=5 // pred_region
        %s384 = ssub.s32 %s24, 1
        // Predicated region
        $region13: #{mul_external_attention.1} parent=11 // pred_check
          %p385 = pneg %p71
        $region14: #{mul_external_attention.1} parent=11 // pred_check_branch
          %387 = sbr.rel (%p385) target = $region16
        $region15: #{mul_external_attention.1} parent=11 // pred_region
          _
        $region16: #{mul_external_attention.1} parent=11 // pred_fallthru
          _
        // Predicated region
        $region17: #{mul_external_attention.1} parent=11 // pred_check
          %p388 = pneg %p92
        $region18: #{mul_external_attention.1} parent=11 // pred_check_branch
          %390 = sbr.rel (%p388) target = $region20
        $region19: #{mul_external_attention.1} parent=11 // pred_region
          _
        $region20: #{mul_external_attention.1} parent=11 // pred_fallthru
          _
        // Predicated region
        $region21: #{mul_external_attention.1} parent=11 // pred_check
          %p391 = pneg %p113
        $region22: #{mul_external_attention.1} parent=11 // pred_check_branch
          %393 = sbr.rel (%p391) target = $region24
        $region23: #{mul_external_attention.1} parent=11 // pred_region
          _
        $region24: #{mul_external_attention.1} parent=11 // pred_fallthru
          _
        // Predicated region
        $region25: #{mul_external_attention.1} parent=11 // pred_check
          %p394 = pneg %p134
        $region26: #{mul_external_attention.1} parent=11 // pred_check_branch
          %396 = sbr.rel (%p394) target = $region28
        $region27: #{mul_external_attention.1} parent=11 // pred_region
          _
        $region28: #{mul_external_attention.1} parent=11 // pred_fallthru
          _
        // Predicated region
        $region29: #{mul_external_attention.1} parent=11 // pred_check
          %p397 = pneg %p155
        $region30: #{mul_external_attention.1} parent=11 // pred_check_branch
          %399 = sbr.rel (%p397) target = $region32
        $region31: #{mul_external_attention.1} parent=11 // pred_region
          _
        $region32: #{mul_external_attention.1} parent=11 // pred_fallthru
          _
        // Predicated region
        $region33: #{mul_external_attention.1} parent=11 // pred_check
          %p400 = pneg %p176
        $region34: #{mul_external_attention.1} parent=11 // pred_check_branch
          %402 = sbr.rel (%p400) target = $region36
        $region35: #{mul_external_attention.1} parent=11 // pred_region
          _
        $region36: #{mul_external_attention.1} parent=11 // pred_fallthru
          _
        // Predicated region
        $region37: #{mul_external_attention.1} parent=11 // pred_check
          %p403 = pneg %p197
        $region38: #{mul_external_attention.1} parent=11 // pred_check_branch
          %405 = sbr.rel (%p403) target = $region40
        $region39: #{mul_external_attention.1} parent=11 // pred_region
          _
        $region40: #{mul_external_attention.1} parent=11 // pred_fallthru
          _
        // Predicated region
        $region41: #{mul_external_attention.1} parent=11 // pred_check
          %p406 = pneg %p218
        $region42: #{mul_external_attention.1} parent=11 // pred_check_branch
          %408 = sbr.rel (%p406) target = $region44
        $region43: #{mul_external_attention.1} parent=11 // pred_region
          _
        $region44: #{mul_external_attention.1} parent=11 // pred_fallthru
          _
        // Predicated region
        $region45: #{mul_external_attention.1} parent=11 // pred_check
          %p409 = pneg %p239
        $region46: #{mul_external_attention.1} parent=11 // pred_check_branch
          %411 = sbr.rel (%p409) target = $region48
        $region47: #{mul_external_attention.1} parent=11 // pred_region
          _
        $region48: #{mul_external_attention.1} parent=11 // pred_fallthru
          _
        // Predicated region
        $region49: #{mul_external_attention.1} parent=11 // pred_check
          %p412 = pneg %p260
        $region50: #{mul_external_attention.1} parent=11 // pred_check_branch
          %414 = sbr.rel (%p412) target = $region52
        $region51: #{mul_external_attention.1} parent=11 // pred_region
          _
        $region52: #{mul_external_attention.1} parent=11 // pred_fallthru
          _
        // Predicated region
        $region53: #{mul_external_attention.1} parent=11 // pred_check
          %p415 = pneg %p281
        $region54: #{mul_external_attention.1} parent=11 // pred_check_branch
          %417 = sbr.rel (%p415) target = $region56
        $region55: #{mul_external_attention.1} parent=11 // pred_region
          _
        $region56: #{mul_external_attention.1} parent=11 // pred_fallthru
          _
        // Predicated region
        $region57: #{mul_external_attention.1} parent=11 // pred_check
          %p418 = pneg %p302
        $region58: #{mul_external_attention.1} parent=11 // pred_check_branch
          %420 = sbr.rel (%p418) target = $region60
        $region59: #{mul_external_attention.1} parent=11 // pred_region
          _
        $region60: #{mul_external_attention.1} parent=11 // pred_fallthru
          _
        // Predicated region
        $region61: #{mul_external_attention.1} parent=11 // pred_check
          %p421 = pneg %p323
        $region62: #{mul_external_attention.1} parent=11 // pred_check_branch
          %423 = sbr.rel (%p421) target = $region64
        $region63: #{mul_external_attention.1} parent=11 // pred_region
          _
        $region64: #{mul_external_attention.1} parent=11 // pred_fallthru
          _
        // Predicated region
        $region65: #{mul_external_attention.1} parent=11 // pred_check
          %p424 = pneg %p344
        $region66: #{mul_external_attention.1} parent=11 // pred_check_branch
          %426 = sbr.rel (%p424) target = $region68
        $region67: #{mul_external_attention.1} parent=11 // pred_region
          _
        $region68: #{mul_external_attention.1} parent=11 // pred_fallthru
          _
      $region12: #{mul_external_attention.1} parent=5 // pred_fallthru
        _
      %p427 = scmp.lt.s32.totalorder %s24, 2
      // Predicated region
      $region69: #{mul_external_attention.1} parent=5 // pred_check
        %p428 = pneg %p427
      $region70: #{mul_external_attention.1} parent=5 // pred_check_branch
        %430 = sbr.rel (%p428) target = $region72
      $region71: #{mul_external_attention.1} parent=5 // pred_region
        // Predicated region
        $region73: #{mul_external_attention.1} parent=71 // pred_check
          %p431 = pneg %p44
        $region74: #{mul_external_attention.1} parent=71 // pred_check_branch
          %433 = sbr.rel (%p431) target = $region76
        $region75: #{mul_external_attention.1} parent=71 // pred_region
          %p434 = scmp.lt.s32.totalorder %s24, 1
          %s435 = scalar_select %p434, %s24, 1
          %s436 = smul.addr %s435, 2
          %s437 = smul.addr %s436, 8
          %s438 = scalar_lea.vmem %s0, %s437
        $region76: #{mul_external_attention.1} parent=71 // pred_fallthru
          _
      $region72: #{mul_external_attention.1} parent=5 // pred_fallthru
        _
      %p439 = scmp.le.s32.totalorder 1, %s24
      %p440 = scmp.lt.s32.totalorder %s24, 3
      %p441 = pnand %p439, %p440
      %p442 = pneg %p441
      // Predicated region
      $region77: #{mul_external_attention.1} parent=5 // pred_check
        _
      $region78: #{mul_external_attention.1} parent=5 // pred_check_branch
        %444 = sbr.rel (%p441) target = $region80
      $region79: #{mul_external_attention.1} parent=5 // pred_region
        %s445 = ssub.s32 %s24, 1
        %p446 = scmp.lt.s32.totalorder %s29, 1
        %s447 = scalar_select %p446, %s29, 1
        %s448 = smul.addr %s447, 2
        %s449 = smul.addr %s448, 8
        %s450 = scalar_lea.vmem %s0, %s449
        %p451 = pneg %p50
        %p452 = pneg %p47
        %p453 = pneg %p71
        %p454 = pneg %p68
        %p455 = pneg %p92
        %p456 = pneg %p89
        %p457 = pneg %p113
        %p458 = pneg %p110
        %p459 = pneg %p134
        %p460 = pneg %p131
        %p461 = pneg %p155
        %p462 = pneg %p152
        %p463 = pneg %p176
        %p464 = pneg %p173
        %p465 = pneg %p197
        %p466 = pneg %p194
        %p467 = pneg %p218
        %p468 = pneg %p215
        %p469 = pneg %p239
        %p470 = pneg %p236
        %p471 = pneg %p260
        %p472 = pneg %p257
        %p473 = pneg %p281
        %p474 = pneg %p278
        %p475 = pneg %p302
        %p476 = pneg %p299
        %p477 = pneg %p323
        %p478 = pneg %p320
        %p479 = pneg %p344
        %p480 = pneg %p341
        %p481 = pneg %p370
        %p482 = pneg %p367
        %s483 = sand.u32 %s357, 1
        %s484 = scalar_lea.sflag [#allocation3], %s483
        %s485 = sand.u32 %s357, 1
        %s486 = smul.addr %s485, 16
        %s487 = scalar_lea.vmem [#allocation2], %s486
        %p488 = scmp.lt.s32.totalorder %s29, 1
        %s489 = scalar_select %p488, %s29, 1
        %s490 = smul.addr %s489, 2
        %s491 = smul.addr %s490, 8
        %s492 = scalar_lea.vmem %s0, %s491
        %v493 = vld [vmem:[%s492] sm:$0xff]
        %v494 = vld [vmem:[%s492 + $0x8] sm:$0xff]
        %v495 = vld [vmem:[%s1] sm:$0xff]
        %v496 = vld [vmem:[%s1 + $0x8] sm:$0xff]
        %v497 = vld [vmem:[%s1 + $0x10] sm:$0xff]
        %v498 = vld [vmem:[%s1 + $0x18] sm:$0xff]
        %vm499 = vcmask 261120
        %v501 = vsel %vm499, %v493, 0
        %v504 = vsel %vm499, %v494, 0
        %506 = vmatpush.msra.mxu0 0.0
        %507 = vmatpush.msra.mxu0 0.0
        %508 = vmatpush.msra.mxu0 0.0
        %509 = vmatpush.msra.mxu0 0.0
        %510 = vmatpush.msra.mxu0 0.0
        %511 = vmatpush.msra.mxu0 0.0
        %512 = vmatpush.msra.mxu0 0.0
        %513 = vmatpush.msra.mxu0 0.0
        %514 = vmatpush.msra.mxu0 0.0
        %515 = vmatpush.msra.mxu0 0.0
        %516 = vmatpush.msra.mxu0 0.0
        %517 = vmatpush.msra.mxu0 0.0
        %v518 = vand.u32 %v498, 4294901760
        %519 = vmatpush.msra.mxu0 %v518
        %v520 = vand.u32 %v497, 4294901760
        %521 = vmatpush.msra.mxu0 %v520
        %v522 = vand.u32 %v496, 4294901760
        %523 = vmatpush.msra.mxu0 %v522
        %v524 = vand.u32 %v495, 4294901760
        %525 = vmatpush.msra.mxu0 %v524
        %v526 = vand.u32 %v501, 4294901760
        %v527 = vsub.f32 %v501, %v526
        %v528 = vand.u32 %v527, 4294901760
        %v529 = vsub.f32 %v527, %v528
        %v530 = vand.u32 %v529, 4294901760
        %531 = vmatmul.f32.gmra.mxu0 %v530
        %v532 = vpop.f32.mrf.mxu0
        %v533 = vadd.f32 0.0, %v532
        %v534 = vand.u32 %v504, 4294901760
        %v535 = vsub.f32 %v504, %v534
        %v536 = vand.u32 %v535, 4294901760
        %v537 = vsub.f32 %v535, %v536
        %v538 = vand.u32 %v537, 4294901760
        %539 = vmatmul.f32.gmra.mxu0 %v538
        %v540 = vpop.f32.mrf.mxu0
        %v541 = vadd.f32 0.0, %v540
        %542 = vdwg.mxu0
        %543 = vmatpush.msra.mxu0 0.0
        %544 = vmatpush.msra.mxu0 0.0
        %545 = vmatpush.msra.mxu0 0.0
        %546 = vmatpush.msra.mxu0 0.0
        %547 = vmatpush.msra.mxu0 0.0
        %548 = vmatpush.msra.mxu0 0.0
        %549 = vmatpush.msra.mxu0 0.0
        %550 = vmatpush.msra.mxu0 0.0
        %551 = vmatpush.msra.mxu0 0.0
        %552 = vmatpush.msra.mxu0 0.0
        %553 = vmatpush.msra.mxu0 0.0
        %554 = vmatpush.msra.mxu0 0.0
        %v555 = vand.u32 %v498, 4294901760
        %v556 = vsub.f32 %v498, %v555
        %v557 = vand.u32 %v556, 4294901760
        %v558 = vsub.f32 %v556, %v557
        %v559 = vand.u32 %v558, 4294901760
        %560 = vmatpush.msra.mxu0 %v559
        %v561 = vand.u32 %v497, 4294901760
        %v562 = vsub.f32 %v497, %v561
        %v563 = vand.u32 %v562, 4294901760
        %v564 = vsub.f32 %v562, %v563
        %v565 = vand.u32 %v564, 4294901760
        %566 = vmatpush.msra.mxu0 %v565
        %v567 = vand.u32 %v496, 4294901760
        %v568 = vsub.f32 %v496, %v567
        %v569 = vand.u32 %v568, 4294901760
        %v570 = vsub.f32 %v568, %v569
        %v571 = vand.u32 %v570, 4294901760
        %572 = vmatpush.msra.mxu0 %v571
        %v573 = vand.u32 %v495, 4294901760
        %v574 = vsub.f32 %v495, %v573
        %v575 = vand.u32 %v574, 4294901760
        %v576 = vsub.f32 %v574, %v575
        %v577 = vand.u32 %v576, 4294901760
        %578 = vmatpush.msra.mxu0 %v577
        %v579 = vand.u32 %v501, 4294901760
        %580 = vmatmul.f32.gmra.mxu0 %v579
        %v581 = vpop.f32.mrf.mxu0
        %v582 = vadd.f32 %v533, %v581
        %v583 = vand.u32 %v504, 4294901760
        %584 = vmatmul.f32.gmra.mxu0 %v583
        %v585 = vpop.f32.mrf.mxu0
        %v586 = vadd.f32 %v541, %v585
        %587 = vdwg.mxu0
        %588 = vmatpush.msra.mxu0 0.0
        %589 = vmatpush.msra.mxu0 0.0
        %590 = vmatpush.msra.mxu0 0.0
        %591 = vmatpush.msra.mxu0 0.0
        %592 = vmatpush.msra.mxu0 0.0
        %593 = vmatpush.msra.mxu0 0.0
        %594 = vmatpush.msra.mxu0 0.0
        %595 = vmatpush.msra.mxu0 0.0
        %596 = vmatpush.msra.mxu0 0.0
        %597 = vmatpush.msra.mxu0 0.0
        %598 = vmatpush.msra.mxu0 0.0
        %599 = vmatpush.msra.mxu0 0.0
        %v600 = vand.u32 %v498, 4294901760
        %v601 = vsub.f32 %v498, %v600
        %602 = vmatpush.msra.mxu0 %v601
        %v603 = vand.u32 %v497, 4294901760
        %v604 = vsub.f32 %v497, %v603
        %605 = vmatpush.msra.mxu0 %v604
        %v606 = vand.u32 %v496, 4294901760
        %v607 = vsub.f32 %v496, %v606
        %608 = vmatpush.msra.mxu0 %v607
        %v609 = vand.u32 %v495, 4294901760
        %v610 = vsub.f32 %v495, %v609
        %611 = vmatpush.msra.mxu0 %v610
        %v612 = vand.u32 %v501, 4294901760
        %v613 = vsub.f32 %v501, %v612
        %614 = vmatmul.f32.gmra.mxu0 %v613
        %v615 = vpop.f32.mrf.mxu0
        %v616 = vadd.f32 %v582, %v615
        %v617 = vand.u32 %v504, 4294901760
        %v618 = vsub.f32 %v504, %v617
        %619 = vmatmul.f32.gmra.mxu0 %v618
        %v620 = vpop.f32.mrf.mxu0
        %v621 = vadd.f32 %v586, %v620
        %622 = vdwg.mxu0
        %623 = vmatpush.msra.mxu0 0.0
        %624 = vmatpush.msra.mxu0 0.0
        %625 = vmatpush.msra.mxu0 0.0
        %626 = vmatpush.msra.mxu0 0.0
        %627 = vmatpush.msra.mxu0 0.0
        %628 = vmatpush.msra.mxu0 0.0
        %629 = vmatpush.msra.mxu0 0.0
        %630 = vmatpush.msra.mxu0 0.0
        %631 = vmatpush.msra.mxu0 0.0
        %632 = vmatpush.msra.mxu0 0.0
        %633 = vmatpush.msra.mxu0 0.0
        %634 = vmatpush.msra.mxu0 0.0
        %v635 = vand.u32 %v498, 4294901760
        %636 = vmatpush.msra.mxu0 %v635
        %v637 = vand.u32 %v497, 4294901760
        %638 = vmatpush.msra.mxu0 %v637
        %v639 = vand.u32 %v496, 4294901760
        %640 = vmatpush.msra.mxu0 %v639
        %v641 = vand.u32 %v495, 4294901760
        %642 = vmatpush.msra.mxu0 %v641
        %v643 = vand.u32 %v501, 4294901760
        %v644 = vsub.f32 %v501, %v643
        %v645 = vand.u32 %v644, 4294901760
        %646 = vmatmul.f32.gmra.mxu0 %v645
        %v647 = vpop.f32.mrf.mxu0
        %v648 = vadd.f32 %v616, %v647
        %v649 = vand.u32 %v504, 4294901760
        %v650 = vsub.f32 %v504, %v649
        %v651 = vand.u32 %v650, 4294901760
        %652 = vmatmul.f32.gmra.mxu0 %v651
        %v653 = vpop.f32.mrf.mxu0
        %v654 = vadd.f32 %v621, %v653
        %655 = vdwg.mxu0
        %656 = vmatpush.msra.mxu0 0.0
        %657 = vmatpush.msra.mxu0 0.0
        %658 = vmatpush.msra.mxu0 0.0
        %659 = vmatpush.msra.mxu0 0.0
        %660 = vmatpush.msra.mxu0 0.0
        %661 = vmatpush.msra.mxu0 0.0
        %662 = vmatpush.msra.mxu0 0.0
        %663 = vmatpush.msra.mxu0 0.0
        %664 = vmatpush.msra.mxu0 0.0
        %665 = vmatpush.msra.mxu0 0.0
        %666 = vmatpush.msra.mxu0 0.0
        %667 = vmatpush.msra.mxu0 0.0
        %v668 = vand.u32 %v498, 4294901760
        %v669 = vsub.f32 %v498, %v668
        %v670 = vand.u32 %v669, 4294901760
        %671 = vmatpush.msra.mxu0 %v670
        %v672 = vand.u32 %v497, 4294901760
        %v673 = vsub.f32 %v497, %v672
        %v674 = vand.u32 %v673, 4294901760
        %675 = vmatpush.msra.mxu0 %v674
        %v676 = vand.u32 %v496, 4294901760
        %v677 = vsub.f32 %v496, %v676
        %v678 = vand.u32 %v677, 4294901760
        %679 = vmatpush.msra.mxu0 %v678
        %v680 = vand.u32 %v495, 4294901760
        %v681 = vsub.f32 %v495, %v680
        %v682 = vand.u32 %v681, 4294901760
        %683 = vmatpush.msra.mxu0 %v682
        %v684 = vand.u32 %v501, 4294901760
        %685 = vmatmul.f32.gmra.mxu0 %v684
        %v686 = vpop.f32.mrf.mxu0
        %v687 = vadd.f32 %v648, %v686
        %v688 = vand.u32 %v504, 4294901760
        %689 = vmatmul.f32.gmra.mxu0 %v688
        %v690 = vpop.f32.mrf.mxu0
        %v691 = vadd.f32 %v654, %v690
        %692 = vdwg.mxu0
        %693 = vmatpush.msra.mxu0 0.0
        %694 = vmatpush.msra.mxu0 0.0
        %695 = vmatpush.msra.mxu0 0.0
        %696 = vmatpush.msra.mxu0 0.0
        %697 = vmatpush.msra.mxu0 0.0
        %698 = vmatpush.msra.mxu0 0.0
        %699 = vmatpush.msra.mxu0 0.0
        %700 = vmatpush.msra.mxu0 0.0
        %701 = vmatpush.msra.mxu0 0.0
        %702 = vmatpush.msra.mxu0 0.0
        %703 = vmatpush.msra.mxu0 0.0
        %704 = vmatpush.msra.mxu0 0.0
        %v705 = vand.u32 %v498, 4294901760
        %706 = vmatpush.msra.mxu0 %v705
        %v707 = vand.u32 %v497, 4294901760
        %708 = vmatpush.msra.mxu0 %v707
        %v709 = vand.u32 %v496, 4294901760
        %710 = vmatpush.msra.mxu0 %v709
        %v711 = vand.u32 %v495, 4294901760
        %712 = vmatpush.msra.mxu0 %v711
        %v713 = vand.u32 %v501, 4294901760
        %714 = vmatmul.f32.gmra.mxu0 %v713
        %v715 = vpop.f32.mrf.mxu0
        %v716 = vadd.f32 %v687, %v715
        %v717 = vand.u32 %v504, 4294901760
        %718 = vmatmul.f32.gmra.mxu0 %v717
        %v719 = vpop.f32.mrf.mxu0
        %v720 = vadd.f32 %v691, %v719
        %721 = vdwg.mxu0
        %v722 = vld [vmem:[%s2] sm:$0xff]
        %v723 = vld [vmem:[%s2 + $0x8] sm:$0xff]
        %v724 = vld [vmem:[%s2 + $0x10] sm:$0xff]
        %v725 = vld [vmem:[%s2 + $0x18] sm:$0xff]
        %v727 = vsel %vm499, %v716, 0
        %v730 = vsel %vm499, %v720, 0
        %732 = vmatpush.msra.mxu0 0.0
        %733 = vmatpush.msra.mxu0 0.0
        %734 = vmatpush.msra.mxu0 0.0
        %735 = vmatpush.msra.mxu0 0.0
        %736 = vmatpush.msra.mxu0 0.0
        %737 = vmatpush.msra.mxu0 0.0
        %738 = vmatpush.msra.mxu0 0.0
        %739 = vmatpush.msra.mxu0 0.0
        %740 = vmatpush.msra.mxu0 0.0
        %741 = vmatpush.msra.mxu0 0.0
        %742 = vmatpush.msra.mxu0 0.0
        %743 = vmatpush.msra.mxu0 0.0
        %v744 = vand.u32 %v725, 4294901760
        %745 = vmatpush.msra.mxu0 %v744
        %v746 = vand.u32 %v724, 4294901760
        %747 = vmatpush.msra.mxu0 %v746
        %v748 = vand.u32 %v723, 4294901760
        %749 = vmatpush.msra.mxu0 %v748
        %v750 = vand.u32 %v722, 4294901760
        %751 = vmatpush.msra.mxu0 %v750
        %v752 = vand.u32 %v727, 4294901760
        %v753 = vsub.f32 %v727, %v752
        %v754 = vand.u32 %v753, 4294901760
        %v755 = vsub.f32 %v753, %v754
        %v756 = vand.u32 %v755, 4294901760
        %757 = vmatmul.f32.gmra.mxu0 %v756
        %v758 = vpop.f32.mrf.mxu0
        %v759 = vadd.f32 0.0, %v758
        %v760 = vand.u32 %v730, 4294901760
        %v761 = vsub.f32 %v730, %v760
        %v762 = vand.u32 %v761, 4294901760
        %v763 = vsub.f32 %v761, %v762
        %v764 = vand.u32 %v763, 4294901760
        %765 = vmatmul.f32.gmra.mxu0 %v764
        %v766 = vpop.f32.mrf.mxu0
        %v767 = vadd.f32 0.0, %v766
        %768 = vdwg.mxu0
        %769 = vmatpush.msra.mxu0 0.0
        %770 = vmatpush.msra.mxu0 0.0
        %771 = vmatpush.msra.mxu0 0.0
        %772 = vmatpush.msra.mxu0 0.0
        %773 = vmatpush.msra.mxu0 0.0
        %774 = vmatpush.msra.mxu0 0.0
        %775 = vmatpush.msra.mxu0 0.0
        %776 = vmatpush.msra.mxu0 0.0
        %777 = vmatpush.msra.mxu0 0.0
        %778 = vmatpush.msra.mxu0 0.0
        %779 = vmatpush.msra.mxu0 0.0
        %780 = vmatpush.msra.mxu0 0.0
        %v781 = vand.u32 %v725, 4294901760
        %v782 = vsub.f32 %v725, %v781
        %v783 = vand.u32 %v782, 4294901760
        %v784 = vsub.f32 %v782, %v783
        %v785 = vand.u32 %v784, 4294901760
        %786 = vmatpush.msra.mxu0 %v785
        %v787 = vand.u32 %v724, 4294901760
        %v788 = vsub.f32 %v724, %v787
        %v789 = vand.u32 %v788, 4294901760
        %v790 = vsub.f32 %v788, %v789
        %v791 = vand.u32 %v790, 4294901760
        %792 = vmatpush.msra.mxu0 %v791
        %v793 = vand.u32 %v723, 4294901760
        %v794 = vsub.f32 %v723, %v793
        %v795 = vand.u32 %v794, 4294901760
        %v796 = vsub.f32 %v794, %v795
        %v797 = vand.u32 %v796, 4294901760
        %798 = vmatpush.msra.mxu0 %v797
        %v799 = vand.u32 %v722, 4294901760
        %v800 = vsub.f32 %v722, %v799
        %v801 = vand.u32 %v800, 4294901760
        %v802 = vsub.f32 %v800, %v801
        %v803 = vand.u32 %v802, 4294901760
        %804 = vmatpush.msra.mxu0 %v803
        %v805 = vand.u32 %v727, 4294901760
        %806 = vmatmul.f32.gmra.mxu0 %v805
        %v807 = vpop.f32.mrf.mxu0
        %v808 = vadd.f32 %v759, %v807
        %v809 = vand.u32 %v730, 4294901760
        %810 = vmatmul.f32.gmra.mxu0 %v809
        %v811 = vpop.f32.mrf.mxu0
        %v812 = vadd.f32 %v767, %v811
        %813 = vdwg.mxu0
        %814 = vmatpush.msra.mxu0 0.0
        %815 = vmatpush.msra.mxu0 0.0
        %816 = vmatpush.msra.mxu0 0.0
        %817 = vmatpush.msra.mxu0 0.0
        %818 = vmatpush.msra.mxu0 0.0
        %819 = vmatpush.msra.mxu0 0.0
        %820 = vmatpush.msra.mxu0 0.0
        %821 = vmatpush.msra.mxu0 0.0
        %822 = vmatpush.msra.mxu0 0.0
        %823 = vmatpush.msra.mxu0 0.0
        %824 = vmatpush.msra.mxu0 0.0
        %825 = vmatpush.msra.mxu0 0.0
        %v826 = vand.u32 %v725, 4294901760
        %v827 = vsub.f32 %v725, %v826
        %828 = vmatpush.msra.mxu0 %v827
        %v829 = vand.u32 %v724, 4294901760
        %v830 = vsub.f32 %v724, %v829
        %831 = vmatpush.msra.mxu0 %v830
        %v832 = vand.u32 %v723, 4294901760
        %v833 = vsub.f32 %v723, %v832
        %834 = vmatpush.msra.mxu0 %v833
        %v835 = vand.u32 %v722, 4294901760
        %v836 = vsub.f32 %v722, %v835
        %837 = vmatpush.msra.mxu0 %v836
        %v838 = vand.u32 %v727, 4294901760
        %v839 = vsub.f32 %v727, %v838
        %840 = vmatmul.f32.gmra.mxu0 %v839
        %v841 = vpop.f32.mrf.mxu0
        %v842 = vadd.f32 %v808, %v841
        %v843 = vand.u32 %v730, 4294901760
        %v844 = vsub.f32 %v730, %v843
        %845 = vmatmul.f32.gmra.mxu0 %v844
        %v846 = vpop.f32.mrf.mxu0
        %v847 = vadd.f32 %v812, %v846
        %848 = vdwg.mxu0
        %849 = vmatpush.msra.mxu0 0.0
        %850 = vmatpush.msra.mxu0 0.0
        %851 = vmatpush.msra.mxu0 0.0
        %852 = vmatpush.msra.mxu0 0.0
        %853 = vmatpush.msra.mxu0 0.0
        %854 = vmatpush.msra.mxu0 0.0
        %855 = vmatpush.msra.mxu0 0.0
        %856 = vmatpush.msra.mxu0 0.0
        %857 = vmatpush.msra.mxu0 0.0
        %858 = vmatpush.msra.mxu0 0.0
        %859 = vmatpush.msra.mxu0 0.0
        %860 = vmatpush.msra.mxu0 0.0
        %v861 = vand.u32 %v725, 4294901760
        %862 = vmatpush.msra.mxu0 %v861
        %v863 = vand.u32 %v724, 4294901760
        %864 = vmatpush.msra.mxu0 %v863
        %v865 = vand.u32 %v723, 4294901760
        %866 = vmatpush.msra.mxu0 %v865
        %v867 = vand.u32 %v722, 4294901760
        %868 = vmatpush.msra.mxu0 %v867
        %v869 = vand.u32 %v727, 4294901760
        %v870 = vsub.f32 %v727, %v869
        %v871 = vand.u32 %v870, 4294901760
        %872 = vmatmul.f32.gmra.mxu0 %v871
        %v873 = vpop.f32.mrf.mxu0
        %v874 = vadd.f32 %v842, %v873
        %v875 = vand.u32 %v730, 4294901760
        %v876 = vsub.f32 %v730, %v875
        %v877 = vand.u32 %v876, 4294901760
        %878 = vmatmul.f32.gmra.mxu0 %v877
        %v879 = vpop.f32.mrf.mxu0
        %v880 = vadd.f32 %v847, %v879
        %881 = vdwg.mxu0
        %882 = vmatpush.msra.mxu0 0.0
        %883 = vmatpush.msra.mxu0 0.0
        %884 = vmatpush.msra.mxu0 0.0
        %885 = vmatpush.msra.mxu0 0.0
        %886 = vmatpush.msra.mxu0 0.0
        %887 = vmatpush.msra.mxu0 0.0
        %888 = vmatpush.msra.mxu0 0.0
        %889 = vmatpush.msra.mxu0 0.0
        %890 = vmatpush.msra.mxu0 0.0
        %891 = vmatpush.msra.mxu0 0.0
        %892 = vmatpush.msra.mxu0 0.0
        %893 = vmatpush.msra.mxu0 0.0
        %v894 = vand.u32 %v725, 4294901760
        %v895 = vsub.f32 %v725, %v894
        %v896 = vand.u32 %v895, 4294901760
        %897 = vmatpush.msra.mxu0 %v896
        %v898 = vand.u32 %v724, 4294901760
        %v899 = vsub.f32 %v724, %v898
        %v900 = vand.u32 %v899, 4294901760
        %901 = vmatpush.msra.mxu0 %v900
        %v902 = vand.u32 %v723, 4294901760
        %v903 = vsub.f32 %v723, %v902
        %v904 = vand.u32 %v903, 4294901760
        %905 = vmatpush.msra.mxu0 %v904
        %v906 = vand.u32 %v722, 4294901760
        %v907 = vsub.f32 %v722, %v906
        %v908 = vand.u32 %v907, 4294901760
        %909 = vmatpush.msra.mxu0 %v908
        %v910 = vand.u32 %v727, 4294901760
        %911 = vmatmul.f32.gmra.mxu0 %v910
        %v912 = vpop.f32.mrf.mxu0
        %v913 = vadd.f32 %v874, %v912
        %v914 = vand.u32 %v730, 4294901760
        %915 = vmatmul.f32.gmra.mxu0 %v914
        %v916 = vpop.f32.mrf.mxu0
        %v917 = vadd.f32 %v880, %v916
        %918 = vdwg.mxu0
        %919 = vmatpush.msra.mxu0 0.0
        %920 = vmatpush.msra.mxu0 0.0
        %921 = vmatpush.msra.mxu0 0.0
        %922 = vmatpush.msra.mxu0 0.0
        %923 = vmatpush.msra.mxu0 0.0
        %924 = vmatpush.msra.mxu0 0.0
        %925 = vmatpush.msra.mxu0 0.0
        %926 = vmatpush.msra.mxu0 0.0
        %927 = vmatpush.msra.mxu0 0.0
        %928 = vmatpush.msra.mxu0 0.0
        %929 = vmatpush.msra.mxu0 0.0
        %930 = vmatpush.msra.mxu0 0.0
        %v931 = vand.u32 %v725, 4294901760
        %932 = vmatpush.msra.mxu0 %v931
        %v933 = vand.u32 %v724, 4294901760
        %934 = vmatpush.msra.mxu0 %v933
        %v935 = vand.u32 %v723, 4294901760
        %936 = vmatpush.msra.mxu0 %v935
        %v937 = vand.u32 %v722, 4294901760
        %938 = vmatpush.msra.mxu0 %v937
        %v939 = vand.u32 %v727, 4294901760
        %940 = vmatmul.f32.gmra.mxu0 %v939
        %v941 = vpop.f32.mrf.mxu0
        %v942 = vadd.f32 %v913, %v941
        %v943 = vand.u32 %v730, 4294901760
        %944 = vmatmul.f32.gmra.mxu0 %v943
        %v945 = vpop.f32.mrf.mxu0
        %v946 = vadd.f32 %v917, %v945
        %947 = vdwg.mxu0
        %v948 = vld [vmem:[%s3] sm:$0xff]
        %v949 = vld [vmem:[%s4] sm:$0x1]
        %v950 = vld [vmem:[%s5] sm:$0xff]
        %v951 = vld [vmem:[%s5 + $0x8] sm:$0xff]
        %v952 = vld [vmem:[%s5 + $0x10] sm:$0xff]
        %v953 = vld [vmem:[%s5 + $0x18] sm:$0xff]
        %v954 = vld [vmem:[%s5 + $0x20] sm:$0xff]
        %v955 = vld [vmem:[%s5 + $0x28] sm:$0xff]
        %v956 = vld [vmem:[%s5 + $0x30] sm:$0xff]
        %v957 = vld [vmem:[%s5 + $0x38] sm:$0xff]
        %v958 = vld [vmem:[%s6] sm:$0x1]
        %v959 = vld [vmem:[%s7] sm:$0xff]
        %v960 = vld [vmem:[%s7 + $0x8] sm:$0xff]
        %v961 = vld [vmem:[%s8] sm:$0x1]
        %v962 = vld [vmem:[%s9] sm:$0xff]
        %v963 = vld [vmem:[%s10] sm:$0x1]
        %v964 = vld [vmem:[%s11] sm:$0xff]
        %v965 = vld [vmem:[%s11 + $0x8] sm:$0xff]
        %v966 = vld [vmem:[%s11 + $0x10] sm:$0xff]
        %v967 = vld [vmem:[%s11 + $0x18] sm:$0xff]
        %v968 = vld [vmem:[%s12] sm:$0x1]
        %v970 = vperm.slane %v949, 0
        %vm972 = vcmask 64512
        %v973 = vsel %vm972, %v716, 0
        %v975 = vsel %vm972, %v720, 0
        %977 = vmatpush.msra.mxu0 0.0
        %978 = vmatpush.msra.mxu0 0.0
        %979 = vmatpush.msra.mxu0 0.0
        %980 = vmatpush.msra.mxu0 0.0
        %981 = vmatpush.msra.mxu0 0.0
        %982 = vmatpush.msra.mxu0 0.0
        %983 = vmatpush.msra.mxu0 0.0
        %984 = vmatpush.msra.mxu0 0.0
        %985 = vmatpush.msra.mxu0 0.0
        %986 = vmatpush.msra.mxu0 0.0
        %987 = vmatpush.msra.mxu0 0.0
        %988 = vmatpush.msra.mxu0 0.0
        %989 = vmatpush.msra.mxu0 0.0
        %990 = vmatpush.msra.mxu0 0.0
        %991 = vmatpush.msra.mxu0 0.0
        %v992 = vand.u32 %v948, 4294901760
        %993 = vmatpush.msra.mxu0 %v992
        %v994 = vand.u32 %v973, 4294901760
        %v995 = vsub.f32 %v973, %v994
        %v996 = vand.u32 %v995, 4294901760
        %v997 = vsub.f32 %v995, %v996
        %v998 = vand.u32 %v997, 4294901760
        %999 = vmatmul.f32.gmra.mxu0 %v998
        %v1000 = vpop.f32.mrf.mxu0
        %v1001 = vadd.f32 %v970, %v1000
        %v1002 = vand.u32 %v975, 4294901760
        %v1003 = vsub.f32 %v975, %v1002
        %v1004 = vand.u32 %v1003, 4294901760
        %v1005 = vsub.f32 %v1003, %v1004
        %v1006 = vand.u32 %v1005, 4294901760
        %1007 = vmatmul.f32.gmra.mxu0 %v1006
        %v1008 = vpop.f32.mrf.mxu0
        %v1009 = vadd.f32 %v970, %v1008
        %1010 = vdwg.mxu0
        %1011 = vmatpush.msra.mxu0 0.0
        %1012 = vmatpush.msra.mxu0 0.0
        %1013 = vmatpush.msra.mxu0 0.0
        %1014 = vmatpush.msra.mxu0 0.0
        %1015 = vmatpush.msra.mxu0 0.0
        %1016 = vmatpush.msra.mxu0 0.0
        %1017 = vmatpush.msra.mxu0 0.0
        %1018 = vmatpush.msra.mxu0 0.0
        %1019 = vmatpush.msra.mxu0 0.0
        %1020 = vmatpush.msra.mxu0 0.0
        %1021 = vmatpush.msra.mxu0 0.0
        %1022 = vmatpush.msra.mxu0 0.0
        %1023 = vmatpush.msra.mxu0 0.0
        %1024 = vmatpush.msra.mxu0 0.0
        %1025 = vmatpush.msra.mxu0 0.0
        %v1026 = vand.u32 %v948, 4294901760
        %v1027 = vsub.f32 %v948, %v1026
        %v1028 = vand.u32 %v1027, 4294901760
        %v1029 = vsub.f32 %v1027, %v1028
        %v1030 = vand.u32 %v1029, 4294901760
        %1031 = vmatpush.msra.mxu0 %v1030
        %v1032 = vand.u32 %v973, 4294901760
        %1033 = vmatmul.f32.gmra.mxu0 %v1032
        %v1034 = vpop.f32.mrf.mxu0
        %v1035 = vadd.f32 %v1001, %v1034
        %v1036 = vand.u32 %v975, 4294901760
        %1037 = vmatmul.f32.gmra.mxu0 %v1036
        %v1038 = vpop.f32.mrf.mxu0
        %v1039 = vadd.f32 %v1009, %v1038
        %1040 = vdwg.mxu0
        %1041 = vmatpush.msra.mxu0 0.0
        %1042 = vmatpush.msra.mxu0 0.0
        %1043 = vmatpush.msra.mxu0 0.0
        %1044 = vmatpush.msra.mxu0 0.0
        %1045 = vmatpush.msra.mxu0 0.0
        %1046 = vmatpush.msra.mxu0 0.0
        %1047 = vmatpush.msra.mxu0 0.0
        %1048 = vmatpush.msra.mxu0 0.0
        %1049 = vmatpush.msra.mxu0 0.0
        %1050 = vmatpush.msra.mxu0 0.0
        %1051 = vmatpush.msra.mxu0 0.0
        %1052 = vmatpush.msra.mxu0 0.0
        %1053 = vmatpush.msra.mxu0 0.0
        %1054 = vmatpush.msra.mxu0 0.0
        %1055 = vmatpush.msra.mxu0 0.0
        %v1056 = vand.u32 %v948, 4294901760
        %v1057 = vsub.f32 %v948, %v1056
        %1058 = vmatpush.msra.mxu0 %v1057
        %v1059 = vand.u32 %v973, 4294901760
        %v1060 = vsub.f32 %v973, %v1059
        %1061 = vmatmul.f32.gmra.mxu0 %v1060
        %v1062 = vpop.f32.mrf.mxu0
        %v1063 = vadd.f32 %v1035, %v1062
        %v1064 = vand.u32 %v975, 4294901760
        %v1065 = vsub.f32 %v975, %v1064
        %1066 = vmatmul.f32.gmra.mxu0 %v1065
        %v1067 = vpop.f32.mrf.mxu0
        %v1068 = vadd.f32 %v1039, %v1067
        %1069 = vdwg.mxu0
        %1070 = vmatpush.msra.mxu0 0.0
        %1071 = vmatpush.msra.mxu0 0.0
        %1072 = vmatpush.msra.mxu0 0.0
        %1073 = vmatpush.msra.mxu0 0.0
        %1074 = vmatpush.msra.mxu0 0.0
        %1075 = vmatpush.msra.mxu0 0.0
        %1076 = vmatpush.msra.mxu0 0.0
        %1077 = vmatpush.msra.mxu0 0.0
        %1078 = vmatpush.msra.mxu0 0.0
        %1079 = vmatpush.msra.mxu0 0.0
        %1080 = vmatpush.msra.mxu0 0.0
        %1081 = vmatpush.msra.mxu0 0.0
        %1082 = vmatpush.msra.mxu0 0.0
        %1083 = vmatpush.msra.mxu0 0.0
        %1084 = vmatpush.msra.mxu0 0.0
        %v1085 = vand.u32 %v948, 4294901760
        %1086 = vmatpush.msra.mxu0 %v1085
        %v1087 = vand.u32 %v973, 4294901760
        %v1088 = vsub.f32 %v973, %v1087
        %v1089 = vand.u32 %v1088, 4294901760
        %1090 = vmatmul.f32.gmra.mxu0 %v1089
        %v1091 = vpop.f32.mrf.mxu0
        %v1092 = vadd.f32 %v1063, %v1091
        %v1093 = vand.u32 %v975, 4294901760
        %v1094 = vsub.f32 %v975, %v1093
        %v1095 = vand.u32 %v1094, 4294901760
        %1096 = vmatmul.f32.gmra.mxu0 %v1095
        %v1097 = vpop.f32.mrf.mxu0
        %v1098 = vadd.f32 %v1068, %v1097
        %1099 = vdwg.mxu0
        %1100 = vmatpush.msra.mxu0 0.0
        %1101 = vmatpush.msra.mxu0 0.0
        %1102 = vmatpush.msra.mxu0 0.0
        %1103 = vmatpush.msra.mxu0 0.0
        %1104 = vmatpush.msra.mxu0 0.0
        %1105 = vmatpush.msra.mxu0 0.0
        %1106 = vmatpush.msra.mxu0 0.0
        %1107 = vmatpush.msra.mxu0 0.0
        %1108 = vmatpush.msra.mxu0 0.0
        %1109 = vmatpush.msra.mxu0 0.0
        %1110 = vmatpush.msra.mxu0 0.0
        %1111 = vmatpush.msra.mxu0 0.0
        %1112 = vmatpush.msra.mxu0 0.0
        %1113 = vmatpush.msra.mxu0 0.0
        %1114 = vmatpush.msra.mxu0 0.0
        %v1115 = vand.u32 %v948, 4294901760
        %v1116 = vsub.f32 %v948, %v1115
        %v1117 = vand.u32 %v1116, 4294901760
        %1118 = vmatpush.msra.mxu0 %v1117
        %v1119 = vand.u32 %v973, 4294901760
        %1120 = vmatmul.f32.gmra.mxu0 %v1119
        %v1121 = vpop.f32.mrf.mxu0
        %v1122 = vadd.f32 %v1092, %v1121
        %v1123 = vand.u32 %v975, 4294901760
        %1124 = vmatmul.f32.gmra.mxu0 %v1123
        %v1125 = vpop.f32.mrf.mxu0
        %v1126 = vadd.f32 %v1098, %v1125
        %1127 = vdwg.mxu0
        %1128 = vmatpush.msra.mxu0 0.0
        %1129 = vmatpush.msra.mxu0 0.0
        %1130 = vmatpush.msra.mxu0 0.0
        %1131 = vmatpush.msra.mxu0 0.0
        %1132 = vmatpush.msra.mxu0 0.0
        %1133 = vmatpush.msra.mxu0 0.0
        %1134 = vmatpush.msra.mxu0 0.0
        %1135 = vmatpush.msra.mxu0 0.0
        %1136 = vmatpush.msra.mxu0 0.0
        %1137 = vmatpush.msra.mxu0 0.0
        %1138 = vmatpush.msra.mxu0 0.0
        %1139 = vmatpush.msra.mxu0 0.0
        %1140 = vmatpush.msra.mxu0 0.0
        %1141 = vmatpush.msra.mxu0 0.0
        %1142 = vmatpush.msra.mxu0 0.0
        %v1143 = vand.u32 %v948, 4294901760
        %1144 = vmatpush.msra.mxu0 %v1143
        %v1145 = vand.u32 %v973, 4294901760
        %1146 = vmatmul.f32.gmra.mxu0 %v1145
        %v1147 = vpop.f32.mrf.mxu0
        %v1148 = vadd.f32 %v1122, %v1147
        %v1149 = vand.u32 %v975, 4294901760
        %1150 = vmatmul.f32.gmra.mxu0 %v1149
        %v1151 = vpop.f32.mrf.mxu0
        %v1152 = vadd.f32 %v1126, %v1151
        %1153 = vdwg.mxu0
        %vm1154 = vcmask 523264
        %v1155 = vsel %vm1154, %v1148, -inf
        %v1156 = vsel %vm1154, %v1152, -inf
        %v1157 = vmax.f32 %v1155, %v1156
        %v1158 = vrot.slane %v1157, 4
        %v1159 = vmax.f32 %v1157, %v1158
        %v1160 = vrot.slane %v1159, 2
        %v1161 = vmax.f32 %v1159, %v1160
        %v1162 = vrot.slane %v1161, 1
        %v1163 = vmax.f32 %v1161, %v1162
        %v1164 = vsub.f32 %v1148, %v1163
        %v1165 = vsub.f32 %v1152, %v1163
        %v1166 = vmul.f32 %v1164, 1.442695
        %v1167 = vpow.pop %v1166
        %v1168 = vmul.f32 %v1165, 1.442695
        %v1169 = vpow.pop %v1168
        %v1170 = vsel %vm1154, %v1167, 0.0
        %v1171 = vsel %vm1154, %v1169, 0.0
        %v1172 = vadd.f32 %v1170, %v1171
        %v1173 = vrot.slane %v1172, 4
        %v1174 = vadd.f32 %v1172, %v1173
        %v1175 = vrot.slane %v1174, 2
        %v1176 = vadd.f32 %v1174, %v1175
        %v1177 = vrot.slane %v1176, 1
        %v1178 = vadd.f32 %v1176, %v1177
        %v1179 = vrcp.pop %v1178
        %v1180 = vmul.f32 %v1178, %v1179
        %v1181 = vsub.f32 1.0, %v1180
        %v1182 = vmul.f32 %v1179, %v1181
        %v1183 = vadd.f32 %v1179, %v1182
        %vm1184 = vweird.f32 %v1178
        %vm1185 = vweird.f32 %v1179
        %vm1186 = vmor %vm1184, %vm1185
        %v1187 = vsel %vm1186, %v1179, %v1183
        %v1188 = vand.u32 2147483647, %v1178
        %vm1189 = vcmp.eq.f32.partialorder %v1188, 8.507059e+37
        %v1190 = vand.u32 %v1178, 2147483648
        %v1191 = vor.u32 1.1754944e-38, %v1190
        %v1192 = vsel %vm1189, %v1191, %v1187
        %v1193 = vmul.f32 %v1167, %v1192
        %v1194 = vmul.f32 %v1169, %v1192
        %v1195 = vsel %vm1154, %v1193, 0.0
        %1196 = vadd.xlane.f32.xlu0 %v1195
        %v1197 = vpop.xlane.xlu0 %1196
        %v1198 = vsel %vm1154, %v1194, 0.0
        %1199 = vadd.xlane.f32.xlu0 %v1198
        %v1200 = vpop.xlane.xlu0 %1199
        %v1201 = vadd.f32 %v1197, 1e-09
        %v1202 = vadd.f32 %v1200, 1e-09
        %v1203 = vrcp.pop %v1201
        %v1204 = vmul.f32 %v1201, %v1203
        %v1205 = vsub.f32 1.0, %v1204
        %v1206 = vmul.f32 %v1203, %v1205
        %v1207 = vadd.f32 %v1203, %v1206
        %vm1208 = vweird.f32 %v1201
        %vm1209 = vweird.f32 %v1203
        %vm1210 = vmor %vm1208, %vm1209
        %v1211 = vsel %vm1210, %v1203, %v1207
        %v1212 = vand.u32 2147483647, %v1201
        %vm1213 = vcmp.eq.f32.partialorder %v1212, 8.507059e+37
        %v1214 = vand.u32 %v1201, 2147483648
        %v1215 = vor.u32 1.1754944e-38, %v1214
        %v1216 = vsel %vm1213, %v1215, %v1211
        %v1217 = vmul.f32 %v1193, %v1216
        %v1218 = vrcp.pop %v1202
        %v1219 = vmul.f32 %v1202, %v1218
        %v1220 = vsub.f32 1.0, %v1219
        %v1221 = vmul.f32 %v1218, %v1220
        %v1222 = vadd.f32 %v1218, %v1221
        %vm1223 = vweird.f32 %v1202
        %vm1224 = vweird.f32 %v1218
        %vm1225 = vmor %vm1223, %vm1224
        %v1226 = vsel %vm1225, %v1218, %v1222
        %v1227 = vand.u32 2147483647, %v1202
        %vm1228 = vcmp.eq.f32.partialorder %v1227, 8.507059e+37
        %v1229 = vand.u32 %v1202, 2147483648
        %v1230 = vor.u32 1.1754944e-38, %v1229
        %v1231 = vsel %vm1228, %v1230, %v1226
        %v1232 = vmul.f32 %v1194, %v1231
        %v1234 = vperm.slane %v958, 0
        %v1237 = vsel %vm1154, %v1217, 0
        %v1240 = vsel %vm1154, %v1232, 0
        %1242 = vmatpush.msra.mxu0 0.0
        %1243 = vmatpush.msra.mxu0 0.0
        %1244 = vmatpush.msra.mxu0 0.0
        %1245 = vmatpush.msra.mxu0 0.0
        %1246 = vmatpush.msra.mxu0 0.0
        %1247 = vmatpush.msra.mxu0 0.0
        %1248 = vmatpush.msra.mxu0 0.0
        %1249 = vmatpush.msra.mxu0 0.0
        %v1250 = vand.u32 %v957, 4294901760
        %1251 = vmatpush.msra.mxu0 %v1250
        %v1252 = vand.u32 %v956, 4294901760
        %1253 = vmatpush.msra.mxu0 %v1252
        %v1254 = vand.u32 %v955, 4294901760
        %1255 = vmatpush.msra.mxu0 %v1254
        %v1256 = vand.u32 %v954, 4294901760
        %1257 = vmatpush.msra.mxu0 %v1256
        %v1258 = vand.u32 %v953, 4294901760
        %1259 = vmatpush.msra.mxu0 %v1258
        %v1260 = vand.u32 %v952, 4294901760
        %1261 = vmatpush.msra.mxu0 %v1260
        %v1262 = vand.u32 %v951, 4294901760
        %1263 = vmatpush.msra.mxu0 %v1262
        %v1264 = vand.u32 %v950, 4294901760
        %1265 = vmatpush.msra.mxu0 %v1264
        %v1266 = vand.u32 %v1237, 4294901760
        %v1267 = vsub.f32 %v1237, %v1266
        %v1268 = vand.u32 %v1267, 4294901760
        %v1269 = vsub.f32 %v1267, %v1268
        %v1270 = vand.u32 %v1269, 4294901760
        %1271 = vmatmul.f32.gmra.mxu0 %v1270
        %v1272 = vpop.f32.mrf.mxu0
        %v1273 = vadd.f32 %v1234, %v1272
        %v1274 = vand.u32 %v1240, 4294901760
        %v1275 = vsub.f32 %v1240, %v1274
        %v1276 = vand.u32 %v1275, 4294901760
        %v1277 = vsub.f32 %v1275, %v1276
        %v1278 = vand.u32 %v1277, 4294901760
        %1279 = vmatmul.f32.gmra.mxu0 %v1278
        %v1280 = vpop.f32.mrf.mxu0
        %v1281 = vadd.f32 %v1234, %v1280
        %1282 = vdwg.mxu0
        %1283 = vmatpush.msra.mxu0 0.0
        %1284 = vmatpush.msra.mxu0 0.0
        %1285 = vmatpush.msra.mxu0 0.0
        %1286 = vmatpush.msra.mxu0 0.0
        %1287 = vmatpush.msra.mxu0 0.0
        %1288 = vmatpush.msra.mxu0 0.0
        %1289 = vmatpush.msra.mxu0 0.0
        %1290 = vmatpush.msra.mxu0 0.0
        %v1291 = vand.u32 %v957, 4294901760
        %v1292 = vsub.f32 %v957, %v1291
        %v1293 = vand.u32 %v1292, 4294901760
        %v1294 = vsub.f32 %v1292, %v1293
        %v1295 = vand.u32 %v1294, 4294901760
        %1296 = vmatpush.msra.mxu0 %v1295
        %v1297 = vand.u32 %v956, 4294901760
        %v1298 = vsub.f32 %v956, %v1297
        %v1299 = vand.u32 %v1298, 4294901760
        %v1300 = vsub.f32 %v1298, %v1299
        %v1301 = vand.u32 %v1300, 4294901760
        %1302 = vmatpush.msra.mxu0 %v1301
        %v1303 = vand.u32 %v955, 4294901760
        %v1304 = vsub.f32 %v955, %v1303
        %v1305 = vand.u32 %v1304, 4294901760
        %v1306 = vsub.f32 %v1304, %v1305
        %v1307 = vand.u32 %v1306, 4294901760
        %1308 = vmatpush.msra.mxu0 %v1307
        %v1309 = vand.u32 %v954, 4294901760
        %v1310 = vsub.f32 %v954, %v1309
        %v1311 = vand.u32 %v1310, 4294901760
        %v1312 = vsub.f32 %v1310, %v1311
        %v1313 = vand.u32 %v1312, 4294901760
        %1314 = vmatpush.msra.mxu0 %v1313
        %v1315 = vand.u32 %v953, 4294901760
        %v1316 = vsub.f32 %v953, %v1315
        %v1317 = vand.u32 %v1316, 4294901760
        %v1318 = vsub.f32 %v1316, %v1317
        %v1319 = vand.u32 %v1318, 4294901760
        %1320 = vmatpush.msra.mxu0 %v1319
        %v1321 = vand.u32 %v952, 4294901760
        %v1322 = vsub.f32 %v952, %v1321
        %v1323 = vand.u32 %v1322, 4294901760
        %v1324 = vsub.f32 %v1322, %v1323
        %v1325 = vand.u32 %v1324, 4294901760
        %1326 = vmatpush.msra.mxu0 %v1325
        %v1327 = vand.u32 %v951, 4294901760
        %v1328 = vsub.f32 %v951, %v1327
        %v1329 = vand.u32 %v1328, 4294901760
        %v1330 = vsub.f32 %v1328, %v1329
        %v1331 = vand.u32 %v1330, 4294901760
        %1332 = vmatpush.msra.mxu0 %v1331
        %v1333 = vand.u32 %v950, 4294901760
        %v1334 = vsub.f32 %v950, %v1333
        %v1335 = vand.u32 %v1334, 4294901760
        %v1336 = vsub.f32 %v1334, %v1335
        %v1337 = vand.u32 %v1336, 4294901760
        %1338 = vmatpush.msra.mxu0 %v1337
        %v1339 = vand.u32 %v1237, 4294901760
        %1340 = vmatmul.f32.gmra.mxu0 %v1339
        %v1341 = vpop.f32.mrf.mxu0
        %v1342 = vadd.f32 %v1273, %v1341
        %v1343 = vand.u32 %v1240, 4294901760
        %1344 = vmatmul.f32.gmra.mxu0 %v1343
        %v1345 = vpop.f32.mrf.mxu0
        %v1346 = vadd.f32 %v1281, %v1345
        %1347 = vdwg.mxu0
        %1348 = vmatpush.msra.mxu0 0.0
        %1349 = vmatpush.msra.mxu0 0.0
        %1350 = vmatpush.msra.mxu0 0.0
        %1351 = vmatpush.msra.mxu0 0.0
        %1352 = vmatpush.msra.mxu0 0.0
        %1353 = vmatpush.msra.mxu0 0.0
        %1354 = vmatpush.msra.mxu0 0.0
        %1355 = vmatpush.msra.mxu0 0.0
        %v1356 = vand.u32 %v957, 4294901760
        %v1357 = vsub.f32 %v957, %v1356
        %1358 = vmatpush.msra.mxu0 %v1357
        %v1359 = vand.u32 %v956, 4294901760
        %v1360 = vsub.f32 %v956, %v1359
        %1361 = vmatpush.msra.mxu0 %v1360
        %v1362 = vand.u32 %v955, 4294901760
        %v1363 = vsub.f32 %v955, %v1362
        %1364 = vmatpush.msra.mxu0 %v1363
        %v1365 = vand.u32 %v954, 4294901760
        %v1366 = vsub.f32 %v954, %v1365
        %1367 = vmatpush.msra.mxu0 %v1366
        %v1368 = vand.u32 %v953, 4294901760
        %v1369 = vsub.f32 %v953, %v1368
        %1370 = vmatpush.msra.mxu0 %v1369
        %v1371 = vand.u32 %v952, 4294901760
        %v1372 = vsub.f32 %v952, %v1371
        %1373 = vmatpush.msra.mxu0 %v1372
        %v1374 = vand.u32 %v951, 4294901760
        %v1375 = vsub.f32 %v951, %v1374
        %1376 = vmatpush.msra.mxu0 %v1375
        %v1377 = vand.u32 %v950, 4294901760
        %v1378 = vsub.f32 %v950, %v1377
        %1379 = vmatpush.msra.mxu0 %v1378
        %v1380 = vand.u32 %v1237, 4294901760
        %v1381 = vsub.f32 %v1237, %v1380
        %1382 = vmatmul.f32.gmra.mxu0 %v1381
        %v1383 = vpop.f32.mrf.mxu0
        %v1384 = vadd.f32 %v1342, %v1383
        %v1385 = vand.u32 %v1240, 4294901760
        %v1386 = vsub.f32 %v1240, %v1385
        %1387 = vmatmul.f32.gmra.mxu0 %v1386
        %v1388 = vpop.f32.mrf.mxu0
        %v1389 = vadd.f32 %v1346, %v1388
        %1390 = vdwg.mxu0
        %1391 = vmatpush.msra.mxu0 0.0
        %1392 = vmatpush.msra.mxu0 0.0
        %1393 = vmatpush.msra.mxu0 0.0
        %1394 = vmatpush.msra.mxu0 0.0
        %1395 = vmatpush.msra.mxu0 0.0
        %1396 = vmatpush.msra.mxu0 0.0
        %1397 = vmatpush.msra.mxu0 0.0
        %1398 = vmatpush.msra.mxu0 0.0
        %v1399 = vand.u32 %v957, 4294901760
        %1400 = vmatpush.msra.mxu0 %v1399
        %v1401 = vand.u32 %v956, 4294901760
        %1402 = vmatpush.msra.mxu0 %v1401
        %v1403 = vand.u32 %v955, 4294901760
        %1404 = vmatpush.msra.mxu0 %v1403
        %v1405 = vand.u32 %v954, 4294901760
        %1406 = vmatpush.msra.mxu0 %v1405
        %v1407 = vand.u32 %v953, 4294901760
        %1408 = vmatpush.msra.mxu0 %v1407
        %v1409 = vand.u32 %v952, 4294901760
        %1410 = vmatpush.msra.mxu0 %v1409
        %v1411 = vand.u32 %v951, 4294901760
        %1412 = vmatpush.msra.mxu0 %v1411
        %v1413 = vand.u32 %v950, 4294901760
        %1414 = vmatpush.msra.mxu0 %v1413
        %v1415 = vand.u32 %v1237, 4294901760
        %v1416 = vsub.f32 %v1237, %v1415
        %v1417 = vand.u32 %v1416, 4294901760
        %1418 = vmatmul.f32.gmra.mxu0 %v1417
        %v1419 = vpop.f32.mrf.mxu0
        %v1420 = vadd.f32 %v1384, %v1419
        %v1421 = vand.u32 %v1240, 4294901760
        %v1422 = vsub.f32 %v1240, %v1421
        %v1423 = vand.u32 %v1422, 4294901760
        %1424 = vmatmul.f32.gmra.mxu0 %v1423
        %v1425 = vpop.f32.mrf.mxu0
        %v1426 = vadd.f32 %v1389, %v1425
        %1427 = vdwg.mxu0
        %1428 = vmatpush.msra.mxu0 0.0
        %1429 = vmatpush.msra.mxu0 0.0
        %1430 = vmatpush.msra.mxu0 0.0
        %1431 = vmatpush.msra.mxu0 0.0
        %1432 = vmatpush.msra.mxu0 0.0
        %1433 = vmatpush.msra.mxu0 0.0
        %1434 = vmatpush.msra.mxu0 0.0
        %1435 = vmatpush.msra.mxu0 0.0
        %v1436 = vand.u32 %v957, 4294901760
        %v1437 = vsub.f32 %v957, %v1436
        %v1438 = vand.u32 %v1437, 4294901760
        %1439 = vmatpush.msra.mxu0 %v1438
        %v1440 = vand.u32 %v956, 4294901760
        %v1441 = vsub.f32 %v956, %v1440
        %v1442 = vand.u32 %v1441, 4294901760
        %1443 = vmatpush.msra.mxu0 %v1442
        %v1444 = vand.u32 %v955, 4294901760
        %v1445 = vsub.f32 %v955, %v1444
        %v1446 = vand.u32 %v1445, 4294901760
        %1447 = vmatpush.msra.mxu0 %v1446
        %v1448 = vand.u32 %v954, 4294901760
        %v1449 = vsub.f32 %v954, %v1448
        %v1450 = vand.u32 %v1449, 4294901760
        %1451 = vmatpush.msra.mxu0 %v1450
        %v1452 = vand.u32 %v953, 4294901760
        %v1453 = vsub.f32 %v953, %v1452
        %v1454 = vand.u32 %v1453, 4294901760
        %1455 = vmatpush.msra.mxu0 %v1454
        %v1456 = vand.u32 %v952, 4294901760
        %v1457 = vsub.f32 %v952, %v1456
        %v1458 = vand.u32 %v1457, 4294901760
        %1459 = vmatpush.msra.mxu0 %v1458
        %v1460 = vand.u32 %v951, 4294901760
        %v1461 = vsub.f32 %v951, %v1460
        %v1462 = vand.u32 %v1461, 4294901760
        %1463 = vmatpush.msra.mxu0 %v1462
        %v1464 = vand.u32 %v950, 4294901760
        %v1465 = vsub.f32 %v950, %v1464
        %v1466 = vand.u32 %v1465, 4294901760
        %1467 = vmatpush.msra.mxu0 %v1466
        %v1468 = vand.u32 %v1237, 4294901760
        %1469 = vmatmul.f32.gmra.mxu0 %v1468
        %v1470 = vpop.f32.mrf.mxu0
        %v1471 = vadd.f32 %v1420, %v1470
        %v1472 = vand.u32 %v1240, 4294901760
        %1473 = vmatmul.f32.gmra.mxu0 %v1472
        %v1474 = vpop.f32.mrf.mxu0
        %v1475 = vadd.f32 %v1426, %v1474
        %1476 = vdwg.mxu0
        %1477 = vmatpush.msra.mxu0 0.0
        %1478 = vmatpush.msra.mxu0 0.0
        %1479 = vmatpush.msra.mxu0 0.0
        %1480 = vmatpush.msra.mxu0 0.0
        %1481 = vmatpush.msra.mxu0 0.0
        %1482 = vmatpush.msra.mxu0 0.0
        %1483 = vmatpush.msra.mxu0 0.0
        %1484 = vmatpush.msra.mxu0 0.0
        %v1485 = vand.u32 %v957, 4294901760
        %1486 = vmatpush.msra.mxu0 %v1485
        %v1487 = vand.u32 %v956, 4294901760
        %1488 = vmatpush.msra.mxu0 %v1487
        %v1489 = vand.u32 %v955, 4294901760
        %1490 = vmatpush.msra.mxu0 %v1489
        %v1491 = vand.u32 %v954, 4294901760
        %1492 = vmatpush.msra.mxu0 %v1491
        %v1493 = vand.u32 %v953, 4294901760
        %1494 = vmatpush.msra.mxu0 %v1493
        %v1495 = vand.u32 %v952, 4294901760
        %1496 = vmatpush.msra.mxu0 %v1495
        %v1497 = vand.u32 %v951, 4294901760
        %1498 = vmatpush.msra.mxu0 %v1497
        %v1499 = vand.u32 %v950, 4294901760
        %1500 = vmatpush.msra.mxu0 %v1499
        %v1501 = vand.u32 %v1237, 4294901760
        %1502 = vmatmul.f32.gmra.mxu0 %v1501
        %v1503 = vpop.f32.mrf.mxu0
        %v1504 = vadd.f32 %v1471, %v1503
        %v1505 = vand.u32 %v1240, 4294901760
        %1506 = vmatmul.f32.gmra.mxu0 %v1505
        %v1507 = vpop.f32.mrf.mxu0
        %v1508 = vadd.f32 %v1475, %v1507
        %1509 = vdwg.mxu0
        %v1511 = vperm.slane %v961, 0
        %1513 = vxpose.xlu0.b32.start [1/16] %v942, 128
        %1514 = vxpose.xlu0.b32.cont [2/16] %v946, 128
        %1515 = vxpose.xlu0.b32.cont [3/16] 0.0, 128
        %1516 = vxpose.xlu0.b32.cont [4/16] 0.0, 128
        %1517 = vxpose.xlu0.b32.cont [5/16] 0.0, 128
        %1518 = vxpose.xlu0.b32.cont [6/16] 0.0, 128
        %1519 = vxpose.xlu0.b32.cont [7/16] 0.0, 128
        %1520 = vxpose.xlu0.b32.cont [8/16] 0.0, 128
        %1521 = vxpose.xlu0.b32.cont [9/16] 0.0, 128
        %1522 = vxpose.xlu0.b32.cont [10/16] 0.0, 128
        %1523 = vxpose.xlu0.b32.cont [11/16] 0.0, 128
        %1524 = vxpose.xlu0.b32.cont [12/16] 0.0, 128
        %1525 = vxpose.xlu0.b32.cont [13/16] 0.0, 128
        %1526 = vxpose.xlu0.b32.cont [14/16] 0.0, 128
        %1527 = vxpose.xlu0.b32.cont [15/16] 0.0, 128
        %1528 = vxpose.xlu0.b32.end [16/16] 0.0, 128
        %v1529 = vpop.trf.xlu0
        %v1530 = vpop.trf.xlu0
        %v1531 = vpop.trf.xlu0
        %v1532 = vpop.trf.xlu0
        %v1533 = vpop.trf.xlu0
        %v1534 = vpop.trf.xlu0
        %v1535 = vpop.trf.xlu0
        %v1536 = vpop.trf.xlu0
        %v1537 = vpop.trf.xlu0
        %v1538 = vpop.trf.xlu0
        %v1539 = vpop.trf.xlu0
        %v1540 = vpop.trf.xlu0
        %v1541 = vpop.trf.xlu0
        %v1542 = vpop.trf.xlu0
        %v1543 = vpop.trf.xlu0
        %v1544 = vpop.trf.xlu0
        %vm1545 = vcmask 130048
        %v1547 = vsel %vm1545, %v1529, 0
        %1549 = vmatpush.msra.mxu0 0.0
        %1550 = vmatpush.msra.mxu0 0.0
        %1551 = vmatpush.msra.mxu0 0.0
        %1552 = vmatpush.msra.mxu0 0.0
        %1553 = vmatpush.msra.mxu0 0.0
        %1554 = vmatpush.msra.mxu0 0.0
        %1555 = vmatpush.msra.mxu0 0.0
        %1556 = vmatpush.msra.mxu0 0.0
        %1557 = vmatpush.msra.mxu0 0.0
        %1558 = vmatpush.msra.mxu0 0.0
        %1559 = vmatpush.msra.mxu0 0.0
        %1560 = vmatpush.msra.mxu0 0.0
        %1561 = vmatpush.msra.mxu0 0.0
        %1562 = vmatpush.msra.mxu0 0.0
        %v1563 = vand.u32 %v960, 4294901760
        %1564 = vmatpush.msra.mxu0 %v1563
        %v1565 = vand.u32 %v959, 4294901760
        %1566 = vmatpush.msra.mxu0 %v1565
        %v1567 = vand.u32 %v1547, 4294901760
        %v1568 = vsub.f32 %v1547, %v1567
        %v1569 = vand.u32 %v1568, 4294901760
        %v1570 = vsub.f32 %v1568, %v1569
        %v1571 = vand.u32 %v1570, 4294901760
        %1572 = vmatmul.f32.gmra.mxu0 %v1571
        %v1573 = vpop.f32.mrf.mxu0
        %v1574 = vadd.f32 %v1511, %v1573
        %1575 = vdwg.mxu0
        %1576 = vmatpush.msra.mxu0 0.0
        %1577 = vmatpush.msra.mxu0 0.0
        %1578 = vmatpush.msra.mxu0 0.0
        %1579 = vmatpush.msra.mxu0 0.0
        %1580 = vmatpush.msra.mxu0 0.0
        %1581 = vmatpush.msra.mxu0 0.0
        %1582 = vmatpush.msra.mxu0 0.0
        %1583 = vmatpush.msra.mxu0 0.0
        %1584 = vmatpush.msra.mxu0 0.0
        %1585 = vmatpush.msra.mxu0 0.0
        %1586 = vmatpush.msra.mxu0 0.0
        %1587 = vmatpush.msra.mxu0 0.0
        %1588 = vmatpush.msra.mxu0 0.0
        %1589 = vmatpush.msra.mxu0 0.0
        %v1590 = vand.u32 %v960, 4294901760
        %v1591 = vsub.f32 %v960, %v1590
        %v1592 = vand.u32 %v1591, 4294901760
        %v1593 = vsub.f32 %v1591, %v1592
        %v1594 = vand.u32 %v1593, 4294901760
        %1595 = vmatpush.msra.mxu0 %v1594
        %v1596 = vand.u32 %v959, 4294901760
        %v1597 = vsub.f32 %v959, %v1596
        %v1598 = vand.u32 %v1597, 4294901760
        %v1599 = vsub.f32 %v1597, %v1598
        %v1600 = vand.u32 %v1599, 4294901760
        %1601 = vmatpush.msra.mxu0 %v1600
        %v1602 = vand.u32 %v1547, 4294901760
        %1603 = vmatmul.f32.gmra.mxu0 %v1602
        %v1604 = vpop.f32.mrf.mxu0
        %v1605 = vadd.f32 %v1574, %v1604
        %1606 = vdwg.mxu0
        %1607 = vmatpush.msra.mxu0 0.0
        %1608 = vmatpush.msra.mxu0 0.0
        %1609 = vmatpush.msra.mxu0 0.0
        %1610 = vmatpush.msra.mxu0 0.0
        %1611 = vmatpush.msra.mxu0 0.0
        %1612 = vmatpush.msra.mxu0 0.0
        %1613 = vmatpush.msra.mxu0 0.0
        %1614 = vmatpush.msra.mxu0 0.0
        %1615 = vmatpush.msra.mxu0 0.0
        %1616 = vmatpush.msra.mxu0 0.0
        %1617 = vmatpush.msra.mxu0 0.0
        %1618 = vmatpush.msra.mxu0 0.0
        %1619 = vmatpush.msra.mxu0 0.0
        %1620 = vmatpush.msra.mxu0 0.0
        %v1621 = vand.u32 %v960, 4294901760
        %v1622 = vsub.f32 %v960, %v1621
        %1623 = vmatpush.msra.mxu0 %v1622
        %v1624 = vand.u32 %v959, 4294901760
        %v1625 = vsub.f32 %v959, %v1624
        %1626 = vmatpush.msra.mxu0 %v1625
        %v1627 = vand.u32 %v1547, 4294901760
        %v1628 = vsub.f32 %v1547, %v1627
        %1629 = vmatmul.f32.gmra.mxu0 %v1628
        %v1630 = vpop.f32.mrf.mxu0
        %v1631 = vadd.f32 %v1605, %v1630
        %1632 = vdwg.mxu0
        %1633 = vmatpush.msra.mxu0 0.0
        %1634 = vmatpush.msra.mxu0 0.0
        %1635 = vmatpush.msra.mxu0 0.0
        %1636 = vmatpush.msra.mxu0 0.0
        %1637 = vmatpush.msra.mxu0 0.0
        %1638 = vmatpush.msra.mxu0 0.0
        %1639 = vmatpush.msra.mxu0 0.0
        %1640 = vmatpush.msra.mxu0 0.0
        %1641 = vmatpush.msra.mxu0 0.0
        %1642 = vmatpush.msra.mxu0 0.0
        %1643 = vmatpush.msra.mxu0 0.0
        %1644 = vmatpush.msra.mxu0 0.0
        %1645 = vmatpush.msra.mxu0 0.0
        %1646 = vmatpush.msra.mxu0 0.0
        %v1647 = vand.u32 %v960, 4294901760
        %1648 = vmatpush.msra.mxu0 %v1647
        %v1649 = vand.u32 %v959, 4294901760
        %1650 = vmatpush.msra.mxu0 %v1649
        %v1651 = vand.u32 %v1547, 4294901760
        %v1652 = vsub.f32 %v1547, %v1651
        %v1653 = vand.u32 %v1652, 4294901760
        %1654 = vmatmul.f32.gmra.mxu0 %v1653
        %v1655 = vpop.f32.mrf.mxu0
        %v1656 = vadd.f32 %v1631, %v1655
        %1657 = vdwg.mxu0
        %1658 = vmatpush.msra.mxu0 0.0
        %1659 = vmatpush.msra.mxu0 0.0
        %1660 = vmatpush.msra.mxu0 0.0
        %1661 = vmatpush.msra.mxu0 0.0
        %1662 = vmatpush.msra.mxu0 0.0
        %1663 = vmatpush.msra.mxu0 0.0
        %1664 = vmatpush.msra.mxu0 0.0
        %1665 = vmatpush.msra.mxu0 0.0
        %1666 = vmatpush.msra.mxu0 0.0
        %1667 = vmatpush.msra.mxu0 0.0
        %1668 = vmatpush.msra.mxu0 0.0
        %1669 = vmatpush.msra.mxu0 0.0
        %1670 = vmatpush.msra.mxu0 0.0
        %1671 = vmatpush.msra.mxu0 0.0
        %v1672 = vand.u32 %v960, 4294901760
        %v1673 = vsub.f32 %v960, %v1672
        %v1674 = vand.u32 %v1673, 4294901760
        %1675 = vmatpush.msra.mxu0 %v1674
        %v1676 = vand.u32 %v959, 4294901760
        %v1677 = vsub.f32 %v959, %v1676
        %v1678 = vand.u32 %v1677, 4294901760
        %1679 = vmatpush.msra.mxu0 %v1678
        %v1680 = vand.u32 %v1547, 4294901760
        %1681 = vmatmul.f32.gmra.mxu0 %v1680
        %v1682 = vpop.f32.mrf.mxu0
        %v1683 = vadd.f32 %v1656, %v1682
        %1684 = vdwg.mxu0
        %1685 = vmatpush.msra.mxu0 0.0
        %1686 = vmatpush.msra.mxu0 0.0
        %1687 = vmatpush.msra.mxu0 0.0
        %1688 = vmatpush.msra.mxu0 0.0
        %1689 = vmatpush.msra.mxu0 0.0
        %1690 = vmatpush.msra.mxu0 0.0
        %1691 = vmatpush.msra.mxu0 0.0
        %1692 = vmatpush.msra.mxu0 0.0
        %1693 = vmatpush.msra.mxu0 0.0
        %1694 = vmatpush.msra.mxu0 0.0
        %1695 = vmatpush.msra.mxu0 0.0
        %1696 = vmatpush.msra.mxu0 0.0
        %1697 = vmatpush.msra.mxu0 0.0
        %1698 = vmatpush.msra.mxu0 0.0
        %v1699 = vand.u32 %v960, 4294901760
        %1700 = vmatpush.msra.mxu0 %v1699
        %v1701 = vand.u32 %v959, 4294901760
        %1702 = vmatpush.msra.mxu0 %v1701
        %v1703 = vand.u32 %v1547, 4294901760
        %1704 = vmatmul.f32.gmra.mxu0 %v1703
        %v1705 = vpop.f32.mrf.mxu0
        %v1706 = vadd.f32 %v1683, %v1705
        %1707 = vdwg.mxu0
        %v1708 = vsel %vm972, %v1706, -inf
        %v1709 = vrot.slane %v1708, 4
        %v1710 = vmax.f32 %v1708, %v1709
        %v1711 = vrot.slane %v1710, 2
        %v1712 = vmax.f32 %v1710, %v1711
        %v1713 = vrot.slane %v1712, 1
        %v1714 = vmax.f32 %v1712, %v1713
        %v1715 = vsub.f32 %v1706, %v1714
        %v1716 = vmul.f32 %v1715, 1.442695
        %v1717 = vpow.pop %v1716
        %v1718 = vsel %vm972, %v1717, 0.0
        %v1719 = vrot.slane %v1718, 4
        %v1720 = vadd.f32 %v1718, %v1719
        %v1721 = vrot.slane %v1720, 2
        %v1722 = vadd.f32 %v1720, %v1721
        %v1723 = vrot.slane %v1722, 1
        %v1724 = vadd.f32 %v1722, %v1723
        %v1725 = vrcp.pop %v1724
        %v1726 = vmul.f32 %v1724, %v1725
        %v1727 = vsub.f32 1.0, %v1726
        %v1728 = vmul.f32 %v1725, %v1727
        %v1729 = vadd.f32 %v1725, %v1728
        %vm1730 = vweird.f32 %v1724
        %vm1731 = vweird.f32 %v1725
        %vm1732 = vmor %vm1730, %vm1731
        %v1733 = vsel %vm1732, %v1725, %v1729
        %v1734 = vand.u32 2147483647, %v1724
        %vm1735 = vcmp.eq.f32.partialorder %v1734, 8.507059e+37
        %v1736 = vand.u32 %v1724, 2147483648
        %v1737 = vor.u32 1.1754944e-38, %v1736
        %v1738 = vsel %vm1735, %v1737, %v1733
        %v1739 = vmul.f32 %v1717, %v1738
        %v1740 = vsel %vm972, %v1739, 0.0
        %1741 = vadd.xlane.f32.xlu0 %v1740
        %v1742 = vpop.xlane.xlu0 %1741
        %v1743 = vadd.f32 %v1742, 1e-09
        %v1744 = vrcp.pop %v1743
        %v1745 = vmul.f32 %v1743, %v1744
        %v1746 = vsub.f32 1.0, %v1745
        %v1747 = vmul.f32 %v1744, %v1746
        %v1748 = vadd.f32 %v1744, %v1747
        %vm1749 = vweird.f32 %v1743
        %vm1750 = vweird.f32 %v1744
        %vm1751 = vmor %vm1749, %vm1750
        %v1752 = vsel %vm1751, %v1744, %v1748
        %v1753 = vand.u32 2147483647, %v1743
        %vm1754 = vcmp.eq.f32.partialorder %v1753, 8.507059e+37
        %v1755 = vand.u32 %v1743, 2147483648
        %v1756 = vor.u32 1.1754944e-38, %v1755
        %v1757 = vsel %vm1754, %v1756, %v1752
        %v1758 = vmul.f32 %v1739, %v1757
        %v1760 = vperm.slane %v963, 0
        %v1763 = vsel %vm972, %v1758, 0
        %1765 = vmatpush.msra.mxu0 0.0
        %1766 = vmatpush.msra.mxu0 0.0
        %1767 = vmatpush.msra.mxu0 0.0
        %1768 = vmatpush.msra.mxu0 0.0
        %1769 = vmatpush.msra.mxu0 0.0
        %1770 = vmatpush.msra.mxu0 0.0
        %1771 = vmatpush.msra.mxu0 0.0
        %1772 = vmatpush.msra.mxu0 0.0
        %1773 = vmatpush.msra.mxu0 0.0
        %1774 = vmatpush.msra.mxu0 0.0
        %1775 = vmatpush.msra.mxu0 0.0
        %1776 = vmatpush.msra.mxu0 0.0
        %1777 = vmatpush.msra.mxu0 0.0
        %1778 = vmatpush.msra.mxu0 0.0
        %1779 = vmatpush.msra.mxu0 0.0
        %v1780 = vand.u32 %v962, 4294901760
        %1781 = vmatpush.msra.mxu0 %v1780
        %v1782 = vand.u32 %v1763, 4294901760
        %v1783 = vsub.f32 %v1763, %v1782
        %v1784 = vand.u32 %v1783, 4294901760
        %v1785 = vsub.f32 %v1783, %v1784
        %v1786 = vand.u32 %v1785, 4294901760
        %1787 = vmatmul.f32.gmra.mxu0 %v1786
        %v1788 = vpop.f32.mrf.mxu0
        %v1789 = vadd.f32 %v1760, %v1788
        %1790 = vdwg.mxu0
        %1791 = vmatpush.msra.mxu0 0.0
        %1792 = vmatpush.msra.mxu0 0.0
        %1793 = vmatpush.msra.mxu0 0.0
        %1794 = vmatpush.msra.mxu0 0.0
        %1795 = vmatpush.msra.mxu0 0.0
        %1796 = vmatpush.msra.mxu0 0.0
        %1797 = vmatpush.msra.mxu0 0.0
        %1798 = vmatpush.msra.mxu0 0.0
        %1799 = vmatpush.msra.mxu0 0.0
        %1800 = vmatpush.msra.mxu0 0.0
        %1801 = vmatpush.msra.mxu0 0.0
        %1802 = vmatpush.msra.mxu0 0.0
        %1803 = vmatpush.msra.mxu0 0.0
        %1804 = vmatpush.msra.mxu0 0.0
        %1805 = vmatpush.msra.mxu0 0.0
        %v1806 = vand.u32 %v962, 4294901760
        %v1807 = vsub.f32 %v962, %v1806
        %v1808 = vand.u32 %v1807, 4294901760
        %v1809 = vsub.f32 %v1807, %v1808
        %v1810 = vand.u32 %v1809, 4294901760
        %1811 = vmatpush.msra.mxu0 %v1810
        %v1812 = vand.u32 %v1763, 4294901760
        %1813 = vmatmul.f32.gmra.mxu0 %v1812
        %v1814 = vpop.f32.mrf.mxu0
        %v1815 = vadd.f32 %v1789, %v1814
        %1816 = vdwg.mxu0
        %1817 = vmatpush.msra.mxu0 0.0
        %1818 = vmatpush.msra.mxu0 0.0
        %1819 = vmatpush.msra.mxu0 0.0
        %1820 = vmatpush.msra.mxu0 0.0
        %1821 = vmatpush.msra.mxu0 0.0
        %1822 = vmatpush.msra.mxu0 0.0
        %1823 = vmatpush.msra.mxu0 0.0
        %1824 = vmatpush.msra.mxu0 0.0
        %1825 = vmatpush.msra.mxu0 0.0
        %1826 = vmatpush.msra.mxu0 0.0
        %1827 = vmatpush.msra.mxu0 0.0
        %1828 = vmatpush.msra.mxu0 0.0
        %1829 = vmatpush.msra.mxu0 0.0
        %1830 = vmatpush.msra.mxu0 0.0
        %1831 = vmatpush.msra.mxu0 0.0
        %v1832 = vand.u32 %v962, 4294901760
        %v1833 = vsub.f32 %v962, %v1832
        %1834 = vmatpush.msra.mxu0 %v1833
        %v1835 = vand.u32 %v1763, 4294901760
        %v1836 = vsub.f32 %v1763, %v1835
        %1837 = vmatmul.f32.gmra.mxu0 %v1836
        %v1838 = vpop.f32.mrf.mxu0
        %v1839 = vadd.f32 %v1815, %v1838
        %1840 = vdwg.mxu0
        %1841 = vmatpush.msra.mxu0 0.0
        %1842 = vmatpush.msra.mxu0 0.0
        %1843 = vmatpush.msra.mxu0 0.0
        %1844 = vmatpush.msra.mxu0 0.0
        %1845 = vmatpush.msra.mxu0 0.0
        %1846 = vmatpush.msra.mxu0 0.0
        %1847 = vmatpush.msra.mxu0 0.0
        %1848 = vmatpush.msra.mxu0 0.0
        %1849 = vmatpush.msra.mxu0 0.0
        %1850 = vmatpush.msra.mxu0 0.0
        %1851 = vmatpush.msra.mxu0 0.0
        %1852 = vmatpush.msra.mxu0 0.0
        %1853 = vmatpush.msra.mxu0 0.0
        %1854 = vmatpush.msra.mxu0 0.0
        %1855 = vmatpush.msra.mxu0 0.0
        %v1856 = vand.u32 %v962, 4294901760
        %1857 = vmatpush.msra.mxu0 %v1856
        %v1858 = vand.u32 %v1763, 4294901760
        %v1859 = vsub.f32 %v1763, %v1858
        %v1860 = vand.u32 %v1859, 4294901760
        %1861 = vmatmul.f32.gmra.mxu0 %v1860
        %v1862 = vpop.f32.mrf.mxu0
        %v1863 = vadd.f32 %v1839, %v1862
        %1864 = vdwg.mxu0
        %1865 = vmatpush.msra.mxu0 0.0
        %1866 = vmatpush.msra.mxu0 0.0
        %1867 = vmatpush.msra.mxu0 0.0
        %1868 = vmatpush.msra.mxu0 0.0
        %1869 = vmatpush.msra.mxu0 0.0
        %1870 = vmatpush.msra.mxu0 0.0
        %1871 = vmatpush.msra.mxu0 0.0
        %1872 = vmatpush.msra.mxu0 0.0
        %1873 = vmatpush.msra.mxu0 0.0
        %1874 = vmatpush.msra.mxu0 0.0
        %1875 = vmatpush.msra.mxu0 0.0
        %1876 = vmatpush.msra.mxu0 0.0
        %1877 = vmatpush.msra.mxu0 0.0
        %1878 = vmatpush.msra.mxu0 0.0
        %1879 = vmatpush.msra.mxu0 0.0
        %v1880 = vand.u32 %v962, 4294901760
        %v1881 = vsub.f32 %v962, %v1880
        %v1882 = vand.u32 %v1881, 4294901760
        %1883 = vmatpush.msra.mxu0 %v1882
        %v1884 = vand.u32 %v1763, 4294901760
        %1885 = vmatmul.f32.gmra.mxu0 %v1884
        %v1886 = vpop.f32.mrf.mxu0
        %v1887 = vadd.f32 %v1863, %v1886
        %1888 = vdwg.mxu0
        %1889 = vmatpush.msra.mxu0 0.0
        %1890 = vmatpush.msra.mxu0 0.0
        %1891 = vmatpush.msra.mxu0 0.0
        %1892 = vmatpush.msra.mxu0 0.0
        %1893 = vmatpush.msra.mxu0 0.0
        %1894 = vmatpush.msra.mxu0 0.0
        %1895 = vmatpush.msra.mxu0 0.0
        %1896 = vmatpush.msra.mxu0 0.0
        %1897 = vmatpush.msra.mxu0 0.0
        %1898 = vmatpush.msra.mxu0 0.0
        %1899 = vmatpush.msra.mxu0 0.0
        %1900 = vmatpush.msra.mxu0 0.0
        %1901 = vmatpush.msra.mxu0 0.0
        %1902 = vmatpush.msra.mxu0 0.0
        %1903 = vmatpush.msra.mxu0 0.0
        %v1904 = vand.u32 %v962, 4294901760
        %1905 = vmatpush.msra.mxu0 %v1904
        %v1906 = vand.u32 %v1763, 4294901760
        %1907 = vmatmul.f32.gmra.mxu0 %v1906
        %v1908 = vpop.f32.mrf.mxu0
        %v1909 = vadd.f32 %v1887, %v1908
        %1910 = vdwg.mxu0
        %v1911 = vld [vmem:[%s14] sm:$0xff]
        %v1912 = vld [vmem:[%s14 + $0x8] sm:$0xff]
        %s1913 = scalar_lea.vmem %s14, 16
        %v1914 = vld [vmem:[%s1913] sm:$0xff]
        %v1915 = vld [vmem:[%s1913 + $0x8] sm:$0xff]
        %1917 = vrot.lane.b32.xlu0 %v1909, 120
        %v1918 = vpop.permute.xlu0 %1917
        %v1921 = vsel %vm972, %v1914, 0
        %v1924 = vsel %vm972, %v1915, 0
        %1926 = vmatpush.msra.mxu0 0.0
        %1927 = vmatpush.msra.mxu0 0.0
        %1928 = vmatpush.msra.mxu0 0.0
        %1929 = vmatpush.msra.mxu0 0.0
        %1930 = vmatpush.msra.mxu0 0.0
        %1931 = vmatpush.msra.mxu0 0.0
        %1932 = vmatpush.msra.mxu0 0.0
        %1933 = vmatpush.msra.mxu0 0.0
        %1934 = vmatpush.msra.mxu0 0.0
        %1935 = vmatpush.msra.mxu0 0.0
        %1936 = vmatpush.msra.mxu0 0.0
        %1937 = vmatpush.msra.mxu0 0.0
        %1938 = vmatpush.msra.mxu0 0.0
        %1939 = vmatpush.msra.mxu0 0.0
        %1940 = vmatpush.msra.mxu0 0.0
        %v1941 = vand.u32 %v1918, 4294901760
        %1942 = vmatpush.msra.mxu0 %v1941
        %v1943 = vand.u32 %v1921, 4294901760
        %v1944 = vsub.f32 %v1921, %v1943
        %v1945 = vand.u32 %v1944, 4294901760
        %v1946 = vsub.f32 %v1944, %v1945
        %v1947 = vand.u32 %v1946, 4294901760
        %1948 = vmatmul.f32.gmra.mxu0 %v1947
        %v1949 = vpop.f32.mrf.mxu0
        %v1950 = vadd.f32 0.0, %v1949
        %v1951 = vand.u32 %v1924, 4294901760
        %v1952 = vsub.f32 %v1924, %v1951
        %v1953 = vand.u32 %v1952, 4294901760
        %v1954 = vsub.f32 %v1952, %v1953
        %v1955 = vand.u32 %v1954, 4294901760
        %1956 = vmatmul.f32.gmra.mxu0 %v1955
        %v1957 = vpop.f32.mrf.mxu0
        %v1958 = vadd.f32 0.0, %v1957
        %1959 = vdwg.mxu0
        %1960 = vmatpush.msra.mxu0 0.0
        %1961 = vmatpush.msra.mxu0 0.0
        %1962 = vmatpush.msra.mxu0 0.0
        %1963 = vmatpush.msra.mxu0 0.0
        %1964 = vmatpush.msra.mxu0 0.0
        %1965 = vmatpush.msra.mxu0 0.0
        %1966 = vmatpush.msra.mxu0 0.0
        %1967 = vmatpush.msra.mxu0 0.0
        %1968 = vmatpush.msra.mxu0 0.0
        %1969 = vmatpush.msra.mxu0 0.0
        %1970 = vmatpush.msra.mxu0 0.0
        %1971 = vmatpush.msra.mxu0 0.0
        %1972 = vmatpush.msra.mxu0 0.0
        %1973 = vmatpush.msra.mxu0 0.0
        %1974 = vmatpush.msra.mxu0 0.0
        %v1975 = vand.u32 %v1918, 4294901760
        %v1976 = vsub.f32 %v1918, %v1975
        %v1977 = vand.u32 %v1976, 4294901760
        %v1978 = vsub.f32 %v1976, %v1977
        %v1979 = vand.u32 %v1978, 4294901760
        %1980 = vmatpush.msra.mxu0 %v1979
        %v1981 = vand.u32 %v1921, 4294901760
        %1982 = vmatmul.f32.gmra.mxu0 %v1981
        %v1983 = vpop.f32.mrf.mxu0
        %v1984 = vadd.f32 %v1950, %v1983
        %v1985 = vand.u32 %v1924, 4294901760
        %1986 = vmatmul.f32.gmra.mxu0 %v1985
        %v1987 = vpop.f32.mrf.mxu0
        %v1988 = vadd.f32 %v1958, %v1987
        %1989 = vdwg.mxu0
        %1990 = vmatpush.msra.mxu0 0.0
        %1991 = vmatpush.msra.mxu0 0.0
        %1992 = vmatpush.msra.mxu0 0.0
        %1993 = vmatpush.msra.mxu0 0.0
        %1994 = vmatpush.msra.mxu0 0.0
        %1995 = vmatpush.msra.mxu0 0.0
        %1996 = vmatpush.msra.mxu0 0.0
        %1997 = vmatpush.msra.mxu0 0.0
        %1998 = vmatpush.msra.mxu0 0.0
        %1999 = vmatpush.msra.mxu0 0.0
        %2000 = vmatpush.msra.mxu0 0.0
        %2001 = vmatpush.msra.mxu0 0.0
        %2002 = vmatpush.msra.mxu0 0.0
        %2003 = vmatpush.msra.mxu0 0.0
        %2004 = vmatpush.msra.mxu0 0.0
        %v2005 = vand.u32 %v1918, 4294901760
        %v2006 = vsub.f32 %v1918, %v2005
        %2007 = vmatpush.msra.mxu0 %v2006
        %v2008 = vand.u32 %v1921, 4294901760
        %v2009 = vsub.f32 %v1921, %v2008
        %2010 = vmatmul.f32.gmra.mxu0 %v2009
        %v2011 = vpop.f32.mrf.mxu0
        %v2012 = vadd.f32 %v1984, %v2011
        %v2013 = vand.u32 %v1924, 4294901760
        %v2014 = vsub.f32 %v1924, %v2013
        %2015 = vmatmul.f32.gmra.mxu0 %v2014
        %v2016 = vpop.f32.mrf.mxu0
        %v2017 = vadd.f32 %v1988, %v2016
        %2018 = vdwg.mxu0
        %2019 = vmatpush.msra.mxu0 0.0
        %2020 = vmatpush.msra.mxu0 0.0
        %2021 = vmatpush.msra.mxu0 0.0
        %2022 = vmatpush.msra.mxu0 0.0
        %2023 = vmatpush.msra.mxu0 0.0
        %2024 = vmatpush.msra.mxu0 0.0
        %2025 = vmatpush.msra.mxu0 0.0
        %2026 = vmatpush.msra.mxu0 0.0
        %2027 = vmatpush.msra.mxu0 0.0
        %2028 = vmatpush.msra.mxu0 0.0
        %2029 = vmatpush.msra.mxu0 0.0
        %2030 = vmatpush.msra.mxu0 0.0
        %2031 = vmatpush.msra.mxu0 0.0
        %2032 = vmatpush.msra.mxu0 0.0
        %2033 = vmatpush.msra.mxu0 0.0
        %v2034 = vand.u32 %v1918, 4294901760
        %2035 = vmatpush.msra.mxu0 %v2034
        %v2036 = vand.u32 %v1921, 4294901760
        %v2037 = vsub.f32 %v1921, %v2036
        %v2038 = vand.u32 %v2037, 4294901760
        %2039 = vmatmul.f32.gmra.mxu0 %v2038
        %v2040 = vpop.f32.mrf.mxu0
        %v2041 = vadd.f32 %v2012, %v2040
        %v2042 = vand.u32 %v1924, 4294901760
        %v2043 = vsub.f32 %v1924, %v2042
        %v2044 = vand.u32 %v2043, 4294901760
        %2045 = vmatmul.f32.gmra.mxu0 %v2044
        %v2046 = vpop.f32.mrf.mxu0
        %v2047 = vadd.f32 %v2017, %v2046
        %2048 = vdwg.mxu0
        %2049 = vmatpush.msra.mxu0 0.0
        %2050 = vmatpush.msra.mxu0 0.0
        %2051 = vmatpush.msra.mxu0 0.0
        %2052 = vmatpush.msra.mxu0 0.0
        %2053 = vmatpush.msra.mxu0 0.0
        %2054 = vmatpush.msra.mxu0 0.0
        %2055 = vmatpush.msra.mxu0 0.0
        %2056 = vmatpush.msra.mxu0 0.0
        %2057 = vmatpush.msra.mxu0 0.0
        %2058 = vmatpush.msra.mxu0 0.0
        %2059 = vmatpush.msra.mxu0 0.0
        %2060 = vmatpush.msra.mxu0 0.0
        %2061 = vmatpush.msra.mxu0 0.0
        %2062 = vmatpush.msra.mxu0 0.0
        %2063 = vmatpush.msra.mxu0 0.0
        %v2064 = vand.u32 %v1918, 4294901760
        %v2065 = vsub.f32 %v1918, %v2064
        %v2066 = vand.u32 %v2065, 4294901760
        %2067 = vmatpush.msra.mxu0 %v2066
        %v2068 = vand.u32 %v1921, 4294901760
        %2069 = vmatmul.f32.gmra.mxu0 %v2068
        %v2070 = vpop.f32.mrf.mxu0
        %v2071 = vadd.f32 %v2041, %v2070
        %v2072 = vand.u32 %v1924, 4294901760
        %2073 = vmatmul.f32.gmra.mxu0 %v2072
        %v2074 = vpop.f32.mrf.mxu0
        %v2075 = vadd.f32 %v2047, %v2074
        %2076 = vdwg.mxu0
        %2077 = vmatpush.msra.mxu0 0.0
        %2078 = vmatpush.msra.mxu0 0.0
        %2079 = vmatpush.msra.mxu0 0.0
        %2080 = vmatpush.msra.mxu0 0.0
        %2081 = vmatpush.msra.mxu0 0.0
        %2082 = vmatpush.msra.mxu0 0.0
        %2083 = vmatpush.msra.mxu0 0.0
        %2084 = vmatpush.msra.mxu0 0.0
        %2085 = vmatpush.msra.mxu0 0.0
        %2086 = vmatpush.msra.mxu0 0.0
        %2087 = vmatpush.msra.mxu0 0.0
        %2088 = vmatpush.msra.mxu0 0.0
        %2089 = vmatpush.msra.mxu0 0.0
        %2090 = vmatpush.msra.mxu0 0.0
        %2091 = vmatpush.msra.mxu0 0.0
        %v2092 = vand.u32 %v1918, 4294901760
        %2093 = vmatpush.msra.mxu0 %v2092
        %v2094 = vand.u32 %v1921, 4294901760
        %2095 = vmatmul.f32.gmra.mxu0 %v2094
        %v2096 = vpop.f32.mrf.mxu0
        %v2097 = vadd.f32 %v2071, %v2096
        %v2098 = vand.u32 %v1924, 4294901760
        %2099 = vmatmul.f32.gmra.mxu0 %v2098
        %v2100 = vpop.f32.mrf.mxu0
        %v2101 = vadd.f32 %v2075, %v2100
        %2102 = vdwg.mxu0
        %v2104 = vsel %vm972, %v1911, 0
        %v2107 = vsel %vm972, %v1912, 0
        %2109 = vmatpush.msra.mxu0 0.0
        %2110 = vmatpush.msra.mxu0 0.0
        %2111 = vmatpush.msra.mxu0 0.0
        %2112 = vmatpush.msra.mxu0 0.0
        %2113 = vmatpush.msra.mxu0 0.0
        %2114 = vmatpush.msra.mxu0 0.0
        %2115 = vmatpush.msra.mxu0 0.0
        %2116 = vmatpush.msra.mxu0 0.0
        %2117 = vmatpush.msra.mxu0 0.0
        %2118 = vmatpush.msra.mxu0 0.0
        %2119 = vmatpush.msra.mxu0 0.0
        %2120 = vmatpush.msra.mxu0 0.0
        %2121 = vmatpush.msra.mxu0 0.0
        %2122 = vmatpush.msra.mxu0 0.0
        %2123 = vmatpush.msra.mxu0 0.0
        %v2124 = vand.u32 %v1909, 4294901760
        %2125 = vmatpush.msra.mxu0 %v2124
        %v2126 = vand.u32 %v2104, 4294901760
        %v2127 = vsub.f32 %v2104, %v2126
        %v2128 = vand.u32 %v2127, 4294901760
        %v2129 = vsub.f32 %v2127, %v2128
        %v2130 = vand.u32 %v2129, 4294901760
        %2131 = vmatmul.f32.gmra.mxu0 %v2130
        %v2132 = vpop.f32.mrf.mxu0
        %v2133 = vadd.f32 %v2097, %v2132
        %v2134 = vand.u32 %v2107, 4294901760
        %v2135 = vsub.f32 %v2107, %v2134
        %v2136 = vand.u32 %v2135, 4294901760
        %v2137 = vsub.f32 %v2135, %v2136
        %v2138 = vand.u32 %v2137, 4294901760
        %2139 = vmatmul.f32.gmra.mxu0 %v2138
        %v2140 = vpop.f32.mrf.mxu0
        %v2141 = vadd.f32 %v2101, %v2140
        %2142 = vdwg.mxu0
        %2143 = vmatpush.msra.mxu0 0.0
        %2144 = vmatpush.msra.mxu0 0.0
        %2145 = vmatpush.msra.mxu0 0.0
        %2146 = vmatpush.msra.mxu0 0.0
        %2147 = vmatpush.msra.mxu0 0.0
        %2148 = vmatpush.msra.mxu0 0.0
        %2149 = vmatpush.msra.mxu0 0.0
        %2150 = vmatpush.msra.mxu0 0.0
        %2151 = vmatpush.msra.mxu0 0.0
        %2152 = vmatpush.msra.mxu0 0.0
        %2153 = vmatpush.msra.mxu0 0.0
        %2154 = vmatpush.msra.mxu0 0.0
        %2155 = vmatpush.msra.mxu0 0.0
        %2156 = vmatpush.msra.mxu0 0.0
        %2157 = vmatpush.msra.mxu0 0.0
        %v2158 = vand.u32 %v1909, 4294901760
        %v2159 = vsub.f32 %v1909, %v2158
        %v2160 = vand.u32 %v2159, 4294901760
        %v2161 = vsub.f32 %v2159, %v2160
        %v2162 = vand.u32 %v2161, 4294901760
        %2163 = vmatpush.msra.mxu0 %v2162
        %v2164 = vand.u32 %v2104, 4294901760
        %2165 = vmatmul.f32.gmra.mxu0 %v2164
        %v2166 = vpop.f32.mrf.mxu0
        %v2167 = vadd.f32 %v2133, %v2166
        %v2168 = vand.u32 %v2107, 4294901760
        %2169 = vmatmul.f32.gmra.mxu0 %v2168
        %v2170 = vpop.f32.mrf.mxu0
        %v2171 = vadd.f32 %v2141, %v2170
        %2172 = vdwg.mxu0
        %2173 = vmatpush.msra.mxu0 0.0
        %2174 = vmatpush.msra.mxu0 0.0
        %2175 = vmatpush.msra.mxu0 0.0
        %2176 = vmatpush.msra.mxu0 0.0
        %2177 = vmatpush.msra.mxu0 0.0
        %2178 = vmatpush.msra.mxu0 0.0
        %2179 = vmatpush.msra.mxu0 0.0
        %2180 = vmatpush.msra.mxu0 0.0
        %2181 = vmatpush.msra.mxu0 0.0
        %2182 = vmatpush.msra.mxu0 0.0
        %2183 = vmatpush.msra.mxu0 0.0
        %2184 = vmatpush.msra.mxu0 0.0
        %2185 = vmatpush.msra.mxu0 0.0
        %2186 = vmatpush.msra.mxu0 0.0
        %2187 = vmatpush.msra.mxu0 0.0
        %v2188 = vand.u32 %v1909, 4294901760
        %v2189 = vsub.f32 %v1909, %v2188
        %2190 = vmatpush.msra.mxu0 %v2189
        %v2191 = vand.u32 %v2104, 4294901760
        %v2192 = vsub.f32 %v2104, %v2191
        %2193 = vmatmul.f32.gmra.mxu0 %v2192
        %v2194 = vpop.f32.mrf.mxu0
        %v2195 = vadd.f32 %v2167, %v2194
        %v2196 = vand.u32 %v2107, 4294901760
        %v2197 = vsub.f32 %v2107, %v2196
        %2198 = vmatmul.f32.gmra.mxu0 %v2197
        %v2199 = vpop.f32.mrf.mxu0
        %v2200 = vadd.f32 %v2171, %v2199
        %2201 = vdwg.mxu0
        %2202 = vmatpush.msra.mxu0 0.0
        %2203 = vmatpush.msra.mxu0 0.0
        %2204 = vmatpush.msra.mxu0 0.0
        %2205 = vmatpush.msra.mxu0 0.0
        %2206 = vmatpush.msra.mxu0 0.0
        %2207 = vmatpush.msra.mxu0 0.0
        %2208 = vmatpush.msra.mxu0 0.0
        %2209 = vmatpush.msra.mxu0 0.0
        %2210 = vmatpush.msra.mxu0 0.0
        %2211 = vmatpush.msra.mxu0 0.0
        %2212 = vmatpush.msra.mxu0 0.0
        %2213 = vmatpush.msra.mxu0 0.0
        %2214 = vmatpush.msra.mxu0 0.0
        %2215 = vmatpush.msra.mxu0 0.0
        %2216 = vmatpush.msra.mxu0 0.0
        %v2217 = vand.u32 %v1909, 4294901760
        %2218 = vmatpush.msra.mxu0 %v2217
        %v2219 = vand.u32 %v2104, 4294901760
        %v2220 = vsub.f32 %v2104, %v2219
        %v2221 = vand.u32 %v2220, 4294901760
        %2222 = vmatmul.f32.gmra.mxu0 %v2221
        %v2223 = vpop.f32.mrf.mxu0
        %v2224 = vadd.f32 %v2195, %v2223
        %v2225 = vand.u32 %v2107, 4294901760
        %v2226 = vsub.f32 %v2107, %v2225
        %v2227 = vand.u32 %v2226, 4294901760
        %2228 = vmatmul.f32.gmra.mxu0 %v2227
        %v2229 = vpop.f32.mrf.mxu0
        %v2230 = vadd.f32 %v2200, %v2229
        %2231 = vdwg.mxu0
        %2232 = vmatpush.msra.mxu0 0.0
        %2233 = vmatpush.msra.mxu0 0.0
        %2234 = vmatpush.msra.mxu0 0.0
        %2235 = vmatpush.msra.mxu0 0.0
        %2236 = vmatpush.msra.mxu0 0.0
        %2237 = vmatpush.msra.mxu0 0.0
        %2238 = vmatpush.msra.mxu0 0.0
        %2239 = vmatpush.msra.mxu0 0.0
        %2240 = vmatpush.msra.mxu0 0.0
        %2241 = vmatpush.msra.mxu0 0.0
        %2242 = vmatpush.msra.mxu0 0.0
        %2243 = vmatpush.msra.mxu0 0.0
        %2244 = vmatpush.msra.mxu0 0.0
        %2245 = vmatpush.msra.mxu0 0.0
        %2246 = vmatpush.msra.mxu0 0.0
        %v2247 = vand.u32 %v1909, 4294901760
        %v2248 = vsub.f32 %v1909, %v2247
        %v2249 = vand.u32 %v2248, 4294901760
        %2250 = vmatpush.msra.mxu0 %v2249
        %v2251 = vand.u32 %v2104, 4294901760
        %2252 = vmatmul.f32.gmra.mxu0 %v2251
        %v2253 = vpop.f32.mrf.mxu0
        %v2254 = vadd.f32 %v2224, %v2253
        %v2255 = vand.u32 %v2107, 4294901760
        %2256 = vmatmul.f32.gmra.mxu0 %v2255
        %v2257 = vpop.f32.mrf.mxu0
        %v2258 = vadd.f32 %v2230, %v2257
        %2259 = vdwg.mxu0
        %2260 = vmatpush.msra.mxu0 0.0
        %2261 = vmatpush.msra.mxu0 0.0
        %2262 = vmatpush.msra.mxu0 0.0
        %2263 = vmatpush.msra.mxu0 0.0
        %2264 = vmatpush.msra.mxu0 0.0
        %2265 = vmatpush.msra.mxu0 0.0
        %2266 = vmatpush.msra.mxu0 0.0
        %2267 = vmatpush.msra.mxu0 0.0
        %2268 = vmatpush.msra.mxu0 0.0
        %2269 = vmatpush.msra.mxu0 0.0
        %2270 = vmatpush.msra.mxu0 0.0
        %2271 = vmatpush.msra.mxu0 0.0
        %2272 = vmatpush.msra.mxu0 0.0
        %2273 = vmatpush.msra.mxu0 0.0
        %2274 = vmatpush.msra.mxu0 0.0
        %v2275 = vand.u32 %v1909, 4294901760
        %2276 = vmatpush.msra.mxu0 %v2275
        %v2277 = vand.u32 %v2104, 4294901760
        %2278 = vmatmul.f32.gmra.mxu0 %v2277
        %v2279 = vpop.f32.mrf.mxu0
        %v2280 = vadd.f32 %v2254, %v2279
        %v2281 = vand.u32 %v2107, 4294901760
        %2282 = vmatmul.f32.gmra.mxu0 %v2281
        %v2283 = vpop.f32.mrf.mxu0
        %v2284 = vadd.f32 %v2258, %v2283
        %2285 = vdwg.mxu0
        %v2286 = vld [vmem:[%s13] sm:$0xff]
        %2287 = vrot.lane.b32.xlu0 %v716, 120
        %v2288 = vpop.permute.xlu0 %2287
        %2289 = vrot.lane.b32.xlu0 %v720, 120
        %v2290 = vpop.permute.xlu0 %2289
        %v2291 = vsel %vm972, %v2288, 0
        %v2293 = vsel %vm972, %v2290, 0
        %2295 = vmatpush.msra.mxu0 0.0
        %2296 = vmatpush.msra.mxu0 0.0
        %2297 = vmatpush.msra.mxu0 0.0
        %2298 = vmatpush.msra.mxu0 0.0
        %2299 = vmatpush.msra.mxu0 0.0
        %2300 = vmatpush.msra.mxu0 0.0
        %2301 = vmatpush.msra.mxu0 0.0
        %2302 = vmatpush.msra.mxu0 0.0
        %2303 = vmatpush.msra.mxu0 0.0
        %2304 = vmatpush.msra.mxu0 0.0
        %2305 = vmatpush.msra.mxu0 0.0
        %2306 = vmatpush.msra.mxu0 0.0
        %2307 = vmatpush.msra.mxu0 0.0
        %2308 = vmatpush.msra.mxu0 0.0
        %2309 = vmatpush.msra.mxu0 0.0
        %v2310 = vand.u32 %v948, 4294901760
        %2311 = vmatpush.msra.mxu0 %v2310
        %v2312 = vand.u32 %v2291, 4294901760
        %v2313 = vsub.f32 %v2291, %v2312
        %v2314 = vand.u32 %v2313, 4294901760
        %v2315 = vsub.f32 %v2313, %v2314
        %v2316 = vand.u32 %v2315, 4294901760
        %2317 = vmatmul.f32.gmra.mxu0 %v2316
        %v2318 = vpop.f32.mrf.mxu0
        %v2319 = vadd.f32 %v970, %v2318
        %v2320 = vand.u32 %v2293, 4294901760
        %v2321 = vsub.f32 %v2293, %v2320
        %v2322 = vand.u32 %v2321, 4294901760
        %v2323 = vsub.f32 %v2321, %v2322
        %v2324 = vand.u32 %v2323, 4294901760
        %2325 = vmatmul.f32.gmra.mxu0 %v2324
        %v2326 = vpop.f32.mrf.mxu0
        %v2327 = vadd.f32 %v970, %v2326
        %2328 = vdwg.mxu0
        %2329 = vmatpush.msra.mxu0 0.0
        %2330 = vmatpush.msra.mxu0 0.0
        %2331 = vmatpush.msra.mxu0 0.0
        %2332 = vmatpush.msra.mxu0 0.0
        %2333 = vmatpush.msra.mxu0 0.0
        %2334 = vmatpush.msra.mxu0 0.0
        %2335 = vmatpush.msra.mxu0 0.0
        %2336 = vmatpush.msra.mxu0 0.0
        %2337 = vmatpush.msra.mxu0 0.0
        %2338 = vmatpush.msra.mxu0 0.0
        %2339 = vmatpush.msra.mxu0 0.0
        %2340 = vmatpush.msra.mxu0 0.0
        %2341 = vmatpush.msra.mxu0 0.0
        %2342 = vmatpush.msra.mxu0 0.0
        %2343 = vmatpush.msra.mxu0 0.0
        %v2344 = vand.u32 %v948, 4294901760
        %v2345 = vsub.f32 %v948, %v2344
        %v2346 = vand.u32 %v2345, 4294901760
        %v2347 = vsub.f32 %v2345, %v2346
        %v2348 = vand.u32 %v2347, 4294901760
        %2349 = vmatpush.msra.mxu0 %v2348
        %v2350 = vand.u32 %v2291, 4294901760
        %2351 = vmatmul.f32.gmra.mxu0 %v2350
        %v2352 = vpop.f32.mrf.mxu0
        %v2353 = vadd.f32 %v2319, %v2352
        %v2354 = vand.u32 %v2293, 4294901760
        %2355 = vmatmul.f32.gmra.mxu0 %v2354
        %v2356 = vpop.f32.mrf.mxu0
        %v2357 = vadd.f32 %v2327, %v2356
        %2358 = vdwg.mxu0
        %2359 = vmatpush.msra.mxu0 0.0
        %2360 = vmatpush.msra.mxu0 0.0
        %2361 = vmatpush.msra.mxu0 0.0
        %2362 = vmatpush.msra.mxu0 0.0
        %2363 = vmatpush.msra.mxu0 0.0
        %2364 = vmatpush.msra.mxu0 0.0
        %2365 = vmatpush.msra.mxu0 0.0
        %2366 = vmatpush.msra.mxu0 0.0
        %2367 = vmatpush.msra.mxu0 0.0
        %2368 = vmatpush.msra.mxu0 0.0
        %2369 = vmatpush.msra.mxu0 0.0
        %2370 = vmatpush.msra.mxu0 0.0
        %2371 = vmatpush.msra.mxu0 0.0
        %2372 = vmatpush.msra.mxu0 0.0
        %2373 = vmatpush.msra.mxu0 0.0
        %v2374 = vand.u32 %v948, 4294901760
        %v2375 = vsub.f32 %v948, %v2374
        %2376 = vmatpush.msra.mxu0 %v2375
        %v2377 = vand.u32 %v2291, 4294901760
        %v2378 = vsub.f32 %v2291, %v2377
        %2379 = vmatmul.f32.gmra.mxu0 %v2378
        %v2380 = vpop.f32.mrf.mxu0
        %v2381 = vadd.f32 %v2353, %v2380
        %v2382 = vand.u32 %v2293, 4294901760
        %v2383 = vsub.f32 %v2293, %v2382
        %2384 = vmatmul.f32.gmra.mxu0 %v2383
        %v2385 = vpop.f32.mrf.mxu0
        %v2386 = vadd.f32 %v2357, %v2385
        %2387 = vdwg.mxu0
        %2388 = vmatpush.msra.mxu0 0.0
        %2389 = vmatpush.msra.mxu0 0.0
        %2390 = vmatpush.msra.mxu0 0.0
        %2391 = vmatpush.msra.mxu0 0.0
        %2392 = vmatpush.msra.mxu0 0.0
        %2393 = vmatpush.msra.mxu0 0.0
        %2394 = vmatpush.msra.mxu0 0.0
        %2395 = vmatpush.msra.mxu0 0.0
        %2396 = vmatpush.msra.mxu0 0.0
        %2397 = vmatpush.msra.mxu0 0.0
        %2398 = vmatpush.msra.mxu0 0.0
        %2399 = vmatpush.msra.mxu0 0.0
        %2400 = vmatpush.msra.mxu0 0.0
        %2401 = vmatpush.msra.mxu0 0.0
        %2402 = vmatpush.msra.mxu0 0.0
        %v2403 = vand.u32 %v948, 4294901760
        %2404 = vmatpush.msra.mxu0 %v2403
        %v2405 = vand.u32 %v2291, 4294901760
        %v2406 = vsub.f32 %v2291, %v2405
        %v2407 = vand.u32 %v2406, 4294901760
        %2408 = vmatmul.f32.gmra.mxu0 %v2407
        %v2409 = vpop.f32.mrf.mxu0
        %v2410 = vadd.f32 %v2381, %v2409
        %v2411 = vand.u32 %v2293, 4294901760
        %v2412 = vsub.f32 %v2293, %v2411
        %v2413 = vand.u32 %v2412, 4294901760
        %2414 = vmatmul.f32.gmra.mxu0 %v2413
        %v2415 = vpop.f32.mrf.mxu0
        %v2416 = vadd.f32 %v2386, %v2415
        %2417 = vdwg.mxu0
        %2418 = vmatpush.msra.mxu0 0.0
        %2419 = vmatpush.msra.mxu0 0.0
        %2420 = vmatpush.msra.mxu0 0.0
        %2421 = vmatpush.msra.mxu0 0.0
        %2422 = vmatpush.msra.mxu0 0.0
        %2423 = vmatpush.msra.mxu0 0.0
        %2424 = vmatpush.msra.mxu0 0.0
        %2425 = vmatpush.msra.mxu0 0.0
        %2426 = vmatpush.msra.mxu0 0.0
        %2427 = vmatpush.msra.mxu0 0.0
        %2428 = vmatpush.msra.mxu0 0.0
        %2429 = vmatpush.msra.mxu0 0.0
        %2430 = vmatpush.msra.mxu0 0.0
        %2431 = vmatpush.msra.mxu0 0.0
        %2432 = vmatpush.msra.mxu0 0.0
        %v2433 = vand.u32 %v948, 4294901760
        %v2434 = vsub.f32 %v948, %v2433
        %v2435 = vand.u32 %v2434, 4294901760
        %2436 = vmatpush.msra.mxu0 %v2435
        %v2437 = vand.u32 %v2291, 4294901760
        %2438 = vmatmul.f32.gmra.mxu0 %v2437
        %v2439 = vpop.f32.mrf.mxu0
        %v2440 = vadd.f32 %v2410, %v2439
        %v2441 = vand.u32 %v2293, 4294901760
        %2442 = vmatmul.f32.gmra.mxu0 %v2441
        %v2443 = vpop.f32.mrf.mxu0
        %v2444 = vadd.f32 %v2416, %v2443
        %2445 = vdwg.mxu0
        %2446 = vmatpush.msra.mxu0 0.0
        %2447 = vmatpush.msra.mxu0 0.0
        %2448 = vmatpush.msra.mxu0 0.0
        %2449 = vmatpush.msra.mxu0 0.0
        %2450 = vmatpush.msra.mxu0 0.0
        %2451 = vmatpush.msra.mxu0 0.0
        %2452 = vmatpush.msra.mxu0 0.0
        %2453 = vmatpush.msra.mxu0 0.0
        %2454 = vmatpush.msra.mxu0 0.0
        %2455 = vmatpush.msra.mxu0 0.0
        %2456 = vmatpush.msra.mxu0 0.0
        %2457 = vmatpush.msra.mxu0 0.0
        %2458 = vmatpush.msra.mxu0 0.0
        %2459 = vmatpush.msra.mxu0 0.0
        %2460 = vmatpush.msra.mxu0 0.0
        %v2461 = vand.u32 %v948, 4294901760
        %2462 = vmatpush.msra.mxu0 %v2461
        %v2463 = vand.u32 %v2291, 4294901760
        %2464 = vmatmul.f32.gmra.mxu0 %v2463
        %v2465 = vpop.f32.mrf.mxu0
        %v2466 = vadd.f32 %v2440, %v2465
        %v2467 = vand.u32 %v2293, 4294901760
        %2468 = vmatmul.f32.gmra.mxu0 %v2467
        %v2469 = vpop.f32.mrf.mxu0
        %v2470 = vadd.f32 %v2444, %v2469
        %2471 = vdwg.mxu0
        %v2472 = vsel %vm1154, %v2466, -inf
        %v2473 = vsel %vm1154, %v2470, -inf
        %v2474 = vmax.f32 %v2472, %v2473
        %v2475 = vrot.slane %v2474, 4
        %v2476 = vmax.f32 %v2474, %v2475
        %v2477 = vrot.slane %v2476, 2
        %v2478 = vmax.f32 %v2476, %v2477
        %v2479 = vrot.slane %v2478, 1
        %v2480 = vmax.f32 %v2478, %v2479
        %v2481 = vsub.f32 %v2466, %v2480
        %v2482 = vsub.f32 %v2470, %v2480
        %v2483 = vmul.f32 %v2481, 1.442695
        %v2484 = vpow.pop %v2483
        %v2485 = vmul.f32 %v2482, 1.442695
        %v2486 = vpow.pop %v2485
        %v2487 = vsel %vm1154, %v2484, 0.0
        %v2488 = vsel %vm1154, %v2486, 0.0
        %v2489 = vadd.f32 %v2487, %v2488
        %v2490 = vrot.slane %v2489, 4
        %v2491 = vadd.f32 %v2489, %v2490
        %v2492 = vrot.slane %v2491, 2
        %v2493 = vadd.f32 %v2491, %v2492
        %v2494 = vrot.slane %v2493, 1
        %v2495 = vadd.f32 %v2493, %v2494
        %v2496 = vrcp.pop %v2495
        %v2497 = vmul.f32 %v2495, %v2496
        %v2498 = vsub.f32 1.0, %v2497
        %v2499 = vmul.f32 %v2496, %v2498
        %v2500 = vadd.f32 %v2496, %v2499
        %vm2501 = vweird.f32 %v2495
        %vm2502 = vweird.f32 %v2496
        %vm2503 = vmor %vm2501, %vm2502
        %v2504 = vsel %vm2503, %v2496, %v2500
        %v2505 = vand.u32 2147483647, %v2495
        %vm2506 = vcmp.eq.f32.partialorder %v2505, 8.507059e+37
        %v2507 = vand.u32 %v2495, 2147483648
        %v2508 = vor.u32 1.1754944e-38, %v2507
        %v2509 = vsel %vm2506, %v2508, %v2504
        %v2510 = vmul.f32 %v2484, %v2509
        %v2511 = vmul.f32 %v2486, %v2509
        %v2512 = vsel %vm1154, %v2510, 0.0
        %2513 = vadd.xlane.f32.xlu0 %v2512
        %v2514 = vpop.xlane.xlu0 %2513
        %v2515 = vsel %vm1154, %v2511, 0.0
        %2516 = vadd.xlane.f32.xlu0 %v2515
        %v2517 = vpop.xlane.xlu0 %2516
        %v2518 = vadd.f32 %v2514, 1e-09
        %v2519 = vadd.f32 %v2517, 1e-09
        %v2520 = vrcp.pop %v2518
        %v2521 = vmul.f32 %v2518, %v2520
        %v2522 = vsub.f32 1.0, %v2521
        %v2523 = vmul.f32 %v2520, %v2522
        %v2524 = vadd.f32 %v2520, %v2523
        %vm2525 = vweird.f32 %v2518
        %vm2526 = vweird.f32 %v2520
        %vm2527 = vmor %vm2525, %vm2526
        %v2528 = vsel %vm2527, %v2520, %v2524
        %v2529 = vand.u32 2147483647, %v2518
        %vm2530 = vcmp.eq.f32.partialorder %v2529, 8.507059e+37
        %v2531 = vand.u32 %v2518, 2147483648
        %v2532 = vor.u32 1.1754944e-38, %v2531
        %v2533 = vsel %vm2530, %v2532, %v2528
        %v2534 = vmul.f32 %v2510, %v2533
        %v2535 = vrcp.pop %v2519
        %v2536 = vmul.f32 %v2519, %v2535
        %v2537 = vsub.f32 1.0, %v2536
        %v2538 = vmul.f32 %v2535, %v2537
        %v2539 = vadd.f32 %v2535, %v2538
        %vm2540 = vweird.f32 %v2519
        %vm2541 = vweird.f32 %v2535
        %vm2542 = vmor %vm2540, %vm2541
        %v2543 = vsel %vm2542, %v2535, %v2539
        %v2544 = vand.u32 2147483647, %v2519
        %vm2545 = vcmp.eq.f32.partialorder %v2544, 8.507059e+37
        %v2546 = vand.u32 %v2519, 2147483648
        %v2547 = vor.u32 1.1754944e-38, %v2546
        %v2548 = vsel %vm2545, %v2547, %v2543
        %v2549 = vmul.f32 %v2511, %v2548
        %v2551 = vsel %vm1154, %v2534, 0
        %v2554 = vsel %vm1154, %v2549, 0
        %2556 = vmatpush.msra.mxu0 0.0
        %2557 = vmatpush.msra.mxu0 0.0
        %2558 = vmatpush.msra.mxu0 0.0
        %2559 = vmatpush.msra.mxu0 0.0
        %2560 = vmatpush.msra.mxu0 0.0
        %2561 = vmatpush.msra.mxu0 0.0
        %2562 = vmatpush.msra.mxu0 0.0
        %2563 = vmatpush.msra.mxu0 0.0
        %v2564 = vand.u32 %v957, 4294901760
        %2565 = vmatpush.msra.mxu0 %v2564
        %v2566 = vand.u32 %v956, 4294901760
        %2567 = vmatpush.msra.mxu0 %v2566
        %v2568 = vand.u32 %v955, 4294901760
        %2569 = vmatpush.msra.mxu0 %v2568
        %v2570 = vand.u32 %v954, 4294901760
        %2571 = vmatpush.msra.mxu0 %v2570
        %v2572 = vand.u32 %v953, 4294901760
        %2573 = vmatpush.msra.mxu0 %v2572
        %v2574 = vand.u32 %v952, 4294901760
        %2575 = vmatpush.msra.mxu0 %v2574
        %v2576 = vand.u32 %v951, 4294901760
        %2577 = vmatpush.msra.mxu0 %v2576
        %v2578 = vand.u32 %v950, 4294901760
        %2579 = vmatpush.msra.mxu0 %v2578
        %v2580 = vand.u32 %v2551, 4294901760
        %v2581 = vsub.f32 %v2551, %v2580
        %v2582 = vand.u32 %v2581, 4294901760
        %v2583 = vsub.f32 %v2581, %v2582
        %v2584 = vand.u32 %v2583, 4294901760
        %2585 = vmatmul.f32.gmra.mxu0 %v2584
        %v2586 = vpop.f32.mrf.mxu0
        %v2587 = vadd.f32 %v1234, %v2586
        %v2588 = vand.u32 %v2554, 4294901760
        %v2589 = vsub.f32 %v2554, %v2588
        %v2590 = vand.u32 %v2589, 4294901760
        %v2591 = vsub.f32 %v2589, %v2590
        %v2592 = vand.u32 %v2591, 4294901760
        %2593 = vmatmul.f32.gmra.mxu0 %v2592
        %v2594 = vpop.f32.mrf.mxu0
        %v2595 = vadd.f32 %v1234, %v2594
        %2596 = vdwg.mxu0
        %2597 = vmatpush.msra.mxu0 0.0
        %2598 = vmatpush.msra.mxu0 0.0
        %2599 = vmatpush.msra.mxu0 0.0
        %2600 = vmatpush.msra.mxu0 0.0
        %2601 = vmatpush.msra.mxu0 0.0
        %2602 = vmatpush.msra.mxu0 0.0
        %2603 = vmatpush.msra.mxu0 0.0
        %2604 = vmatpush.msra.mxu0 0.0
        %v2605 = vand.u32 %v957, 4294901760
        %v2606 = vsub.f32 %v957, %v2605
        %v2607 = vand.u32 %v2606, 4294901760
        %v2608 = vsub.f32 %v2606, %v2607
        %v2609 = vand.u32 %v2608, 4294901760
        %2610 = vmatpush.msra.mxu0 %v2609
        %v2611 = vand.u32 %v956, 4294901760
        %v2612 = vsub.f32 %v956, %v2611
        %v2613 = vand.u32 %v2612, 4294901760
        %v2614 = vsub.f32 %v2612, %v2613
        %v2615 = vand.u32 %v2614, 4294901760
        %2616 = vmatpush.msra.mxu0 %v2615
        %v2617 = vand.u32 %v955, 4294901760
        %v2618 = vsub.f32 %v955, %v2617
        %v2619 = vand.u32 %v2618, 4294901760
        %v2620 = vsub.f32 %v2618, %v2619
        %v2621 = vand.u32 %v2620, 4294901760
        %2622 = vmatpush.msra.mxu0 %v2621
        %v2623 = vand.u32 %v954, 4294901760
        %v2624 = vsub.f32 %v954, %v2623
        %v2625 = vand.u32 %v2624, 4294901760
        %v2626 = vsub.f32 %v2624, %v2625
        %v2627 = vand.u32 %v2626, 4294901760
        %2628 = vmatpush.msra.mxu0 %v2627
        %v2629 = vand.u32 %v953, 4294901760
        %v2630 = vsub.f32 %v953, %v2629
        %v2631 = vand.u32 %v2630, 4294901760
        %v2632 = vsub.f32 %v2630, %v2631
        %v2633 = vand.u32 %v2632, 4294901760
        %2634 = vmatpush.msra.mxu0 %v2633
        %v2635 = vand.u32 %v952, 4294901760
        %v2636 = vsub.f32 %v952, %v2635
        %v2637 = vand.u32 %v2636, 4294901760
        %v2638 = vsub.f32 %v2636, %v2637
        %v2639 = vand.u32 %v2638, 4294901760
        %2640 = vmatpush.msra.mxu0 %v2639
        %v2641 = vand.u32 %v951, 4294901760
        %v2642 = vsub.f32 %v951, %v2641
        %v2643 = vand.u32 %v2642, 4294901760
        %v2644 = vsub.f32 %v2642, %v2643
        %v2645 = vand.u32 %v2644, 4294901760
        %2646 = vmatpush.msra.mxu0 %v2645
        %v2647 = vand.u32 %v950, 4294901760
        %v2648 = vsub.f32 %v950, %v2647
        %v2649 = vand.u32 %v2648, 4294901760
        %v2650 = vsub.f32 %v2648, %v2649
        %v2651 = vand.u32 %v2650, 4294901760
        %2652 = vmatpush.msra.mxu0 %v2651
        %v2653 = vand.u32 %v2551, 4294901760
        %2654 = vmatmul.f32.gmra.mxu0 %v2653
        %v2655 = vpop.f32.mrf.mxu0
        %v2656 = vadd.f32 %v2587, %v2655
        %v2657 = vand.u32 %v2554, 4294901760
        %2658 = vmatmul.f32.gmra.mxu0 %v2657
        %v2659 = vpop.f32.mrf.mxu0
        %v2660 = vadd.f32 %v2595, %v2659
        %2661 = vdwg.mxu0
        %2662 = vmatpush.msra.mxu0 0.0
        %2663 = vmatpush.msra.mxu0 0.0
        %2664 = vmatpush.msra.mxu0 0.0
        %2665 = vmatpush.msra.mxu0 0.0
        %2666 = vmatpush.msra.mxu0 0.0
        %2667 = vmatpush.msra.mxu0 0.0
        %2668 = vmatpush.msra.mxu0 0.0
        %2669 = vmatpush.msra.mxu0 0.0
        %v2670 = vand.u32 %v957, 4294901760
        %v2671 = vsub.f32 %v957, %v2670
        %2672 = vmatpush.msra.mxu0 %v2671
        %v2673 = vand.u32 %v956, 4294901760
        %v2674 = vsub.f32 %v956, %v2673
        %2675 = vmatpush.msra.mxu0 %v2674
        %v2676 = vand.u32 %v955, 4294901760
        %v2677 = vsub.f32 %v955, %v2676
        %2678 = vmatpush.msra.mxu0 %v2677
        %v2679 = vand.u32 %v954, 4294901760
        %v2680 = vsub.f32 %v954, %v2679
        %2681 = vmatpush.msra.mxu0 %v2680
        %v2682 = vand.u32 %v953, 4294901760
        %v2683 = vsub.f32 %v953, %v2682
        %2684 = vmatpush.msra.mxu0 %v2683
        %v2685 = vand.u32 %v952, 4294901760
        %v2686 = vsub.f32 %v952, %v2685
        %2687 = vmatpush.msra.mxu0 %v2686
        %v2688 = vand.u32 %v951, 4294901760
        %v2689 = vsub.f32 %v951, %v2688
        %2690 = vmatpush.msra.mxu0 %v2689
        %v2691 = vand.u32 %v950, 4294901760
        %v2692 = vsub.f32 %v950, %v2691
        %2693 = vmatpush.msra.mxu0 %v2692
        %v2694 = vand.u32 %v2551, 4294901760
        %v2695 = vsub.f32 %v2551, %v2694
        %2696 = vmatmul.f32.gmra.mxu0 %v2695
        %v2697 = vpop.f32.mrf.mxu0
        %v2698 = vadd.f32 %v2656, %v2697
        %v2699 = vand.u32 %v2554, 4294901760
        %v2700 = vsub.f32 %v2554, %v2699
        %2701 = vmatmul.f32.gmra.mxu0 %v2700
        %v2702 = vpop.f32.mrf.mxu0
        %v2703 = vadd.f32 %v2660, %v2702
        %2704 = vdwg.mxu0
        %2705 = vmatpush.msra.mxu0 0.0
        %2706 = vmatpush.msra.mxu0 0.0
        %2707 = vmatpush.msra.mxu0 0.0
        %2708 = vmatpush.msra.mxu0 0.0
        %2709 = vmatpush.msra.mxu0 0.0
        %2710 = vmatpush.msra.mxu0 0.0
        %2711 = vmatpush.msra.mxu0 0.0
        %2712 = vmatpush.msra.mxu0 0.0
        %v2713 = vand.u32 %v957, 4294901760
        %2714 = vmatpush.msra.mxu0 %v2713
        %v2715 = vand.u32 %v956, 4294901760
        %2716 = vmatpush.msra.mxu0 %v2715
        %v2717 = vand.u32 %v955, 4294901760
        %2718 = vmatpush.msra.mxu0 %v2717
        %v2719 = vand.u32 %v954, 4294901760
        %2720 = vmatpush.msra.mxu0 %v2719
        %v2721 = vand.u32 %v953, 4294901760
        %2722 = vmatpush.msra.mxu0 %v2721
        %v2723 = vand.u32 %v952, 4294901760
        %2724 = vmatpush.msra.mxu0 %v2723
        %v2725 = vand.u32 %v951, 4294901760
        %2726 = vmatpush.msra.mxu0 %v2725
        %v2727 = vand.u32 %v950, 4294901760
        %2728 = vmatpush.msra.mxu0 %v2727
        %v2729 = vand.u32 %v2551, 4294901760
        %v2730 = vsub.f32 %v2551, %v2729
        %v2731 = vand.u32 %v2730, 4294901760
        %2732 = vmatmul.f32.gmra.mxu0 %v2731
        %v2733 = vpop.f32.mrf.mxu0
        %v2734 = vadd.f32 %v2698, %v2733
        %v2735 = vand.u32 %v2554, 4294901760
        %v2736 = vsub.f32 %v2554, %v2735
        %v2737 = vand.u32 %v2736, 4294901760
        %2738 = vmatmul.f32.gmra.mxu0 %v2737
        %v2739 = vpop.f32.mrf.mxu0
        %v2740 = vadd.f32 %v2703, %v2739
        %2741 = vdwg.mxu0
        %2742 = vmatpush.msra.mxu0 0.0
        %2743 = vmatpush.msra.mxu0 0.0
        %2744 = vmatpush.msra.mxu0 0.0
        %2745 = vmatpush.msra.mxu0 0.0
        %2746 = vmatpush.msra.mxu0 0.0
        %2747 = vmatpush.msra.mxu0 0.0
        %2748 = vmatpush.msra.mxu0 0.0
        %2749 = vmatpush.msra.mxu0 0.0
        %v2750 = vand.u32 %v957, 4294901760
        %v2751 = vsub.f32 %v957, %v2750
        %v2752 = vand.u32 %v2751, 4294901760
        %2753 = vmatpush.msra.mxu0 %v2752
        %v2754 = vand.u32 %v956, 4294901760
        %v2755 = vsub.f32 %v956, %v2754
        %v2756 = vand.u32 %v2755, 4294901760
        %2757 = vmatpush.msra.mxu0 %v2756
        %v2758 = vand.u32 %v955, 4294901760
        %v2759 = vsub.f32 %v955, %v2758
        %v2760 = vand.u32 %v2759, 4294901760
        %2761 = vmatpush.msra.mxu0 %v2760
        %v2762 = vand.u32 %v954, 4294901760
        %v2763 = vsub.f32 %v954, %v2762
        %v2764 = vand.u32 %v2763, 4294901760
        %2765 = vmatpush.msra.mxu0 %v2764
        %v2766 = vand.u32 %v953, 4294901760
        %v2767 = vsub.f32 %v953, %v2766
        %v2768 = vand.u32 %v2767, 4294901760
        %2769 = vmatpush.msra.mxu0 %v2768
        %v2770 = vand.u32 %v952, 4294901760
        %v2771 = vsub.f32 %v952, %v2770
        %v2772 = vand.u32 %v2771, 4294901760
        %2773 = vmatpush.msra.mxu0 %v2772
        %v2774 = vand.u32 %v951, 4294901760
        %v2775 = vsub.f32 %v951, %v2774
        %v2776 = vand.u32 %v2775, 4294901760
        %2777 = vmatpush.msra.mxu0 %v2776
        %v2778 = vand.u32 %v950, 4294901760
        %v2779 = vsub.f32 %v950, %v2778
        %v2780 = vand.u32 %v2779, 4294901760
        %2781 = vmatpush.msra.mxu0 %v2780
        %v2782 = vand.u32 %v2551, 4294901760
        %2783 = vmatmul.f32.gmra.mxu0 %v2782
        %v2784 = vpop.f32.mrf.mxu0
        %v2785 = vadd.f32 %v2734, %v2784
        %v2786 = vand.u32 %v2554, 4294901760
        %2787 = vmatmul.f32.gmra.mxu0 %v2786
        %v2788 = vpop.f32.mrf.mxu0
        %v2789 = vadd.f32 %v2740, %v2788
        %2790 = vdwg.mxu0
        %2791 = vmatpush.msra.mxu0 0.0
        %2792 = vmatpush.msra.mxu0 0.0
        %2793 = vmatpush.msra.mxu0 0.0
        %2794 = vmatpush.msra.mxu0 0.0
        %2795 = vmatpush.msra.mxu0 0.0
        %2796 = vmatpush.msra.mxu0 0.0
        %2797 = vmatpush.msra.mxu0 0.0
        %2798 = vmatpush.msra.mxu0 0.0
        %v2799 = vand.u32 %v957, 4294901760
        %2800 = vmatpush.msra.mxu0 %v2799
        %v2801 = vand.u32 %v956, 4294901760
        %2802 = vmatpush.msra.mxu0 %v2801
        %v2803 = vand.u32 %v955, 4294901760
        %2804 = vmatpush.msra.mxu0 %v2803
        %v2805 = vand.u32 %v954, 4294901760
        %2806 = vmatpush.msra.mxu0 %v2805
        %v2807 = vand.u32 %v953, 4294901760
        %2808 = vmatpush.msra.mxu0 %v2807
        %v2809 = vand.u32 %v952, 4294901760
        %2810 = vmatpush.msra.mxu0 %v2809
        %v2811 = vand.u32 %v951, 4294901760
        %2812 = vmatpush.msra.mxu0 %v2811
        %v2813 = vand.u32 %v950, 4294901760
        %2814 = vmatpush.msra.mxu0 %v2813
        %v2815 = vand.u32 %v2551, 4294901760
        %2816 = vmatmul.f32.gmra.mxu0 %v2815
        %v2817 = vpop.f32.mrf.mxu0
        %v2818 = vadd.f32 %v2785, %v2817
        %v2819 = vand.u32 %v2554, 4294901760
        %2820 = vmatmul.f32.gmra.mxu0 %v2819
        %v2821 = vpop.f32.mrf.mxu0
        %v2822 = vadd.f32 %v2789, %v2821
        %2823 = vdwg.mxu0
        %v2825 = vsel %vm972, %v2818, 0
        %v2828 = vsel %vm972, %v2822, 0
        %2830 = vmatpush.msra.mxu0 0.0
        %2831 = vmatpush.msra.mxu0 0.0
        %2832 = vmatpush.msra.mxu0 0.0
        %2833 = vmatpush.msra.mxu0 0.0
        %2834 = vmatpush.msra.mxu0 0.0
        %2835 = vmatpush.msra.mxu0 0.0
        %2836 = vmatpush.msra.mxu0 0.0
        %2837 = vmatpush.msra.mxu0 0.0
        %2838 = vmatpush.msra.mxu0 0.0
        %2839 = vmatpush.msra.mxu0 0.0
        %2840 = vmatpush.msra.mxu0 0.0
        %2841 = vmatpush.msra.mxu0 0.0
        %2842 = vmatpush.msra.mxu0 0.0
        %2843 = vmatpush.msra.mxu0 0.0
        %2844 = vmatpush.msra.mxu0 0.0
        %v2845 = vand.u32 %v965, 4294901760
        %2846 = vmatpush.msra.mxu0 %v2845
        %v2847 = vand.u32 %v2825, 4294901760
        %v2848 = vsub.f32 %v2825, %v2847
        %v2849 = vand.u32 %v2848, 4294901760
        %v2850 = vsub.f32 %v2848, %v2849
        %v2851 = vand.u32 %v2850, 4294901760
        %2852 = vmatmul.f32.gmra.mxu0 %v2851
        %v2853 = vpop.f32.mrf.mxu0
        %v2854 = vadd.f32 0.0, %v2853
        %v2855 = vand.u32 %v2828, 4294901760
        %v2856 = vsub.f32 %v2828, %v2855
        %v2857 = vand.u32 %v2856, 4294901760
        %v2858 = vsub.f32 %v2856, %v2857
        %v2859 = vand.u32 %v2858, 4294901760
        %2860 = vmatmul.f32.gmra.mxu0 %v2859
        %v2861 = vpop.f32.mrf.mxu0
        %v2862 = vadd.f32 0.0, %v2861
        %2863 = vdwg.mxu0
        %2864 = vmatpush.msra.mxu0 0.0
        %2865 = vmatpush.msra.mxu0 0.0
        %2866 = vmatpush.msra.mxu0 0.0
        %2867 = vmatpush.msra.mxu0 0.0
        %2868 = vmatpush.msra.mxu0 0.0
        %2869 = vmatpush.msra.mxu0 0.0
        %2870 = vmatpush.msra.mxu0 0.0
        %2871 = vmatpush.msra.mxu0 0.0
        %2872 = vmatpush.msra.mxu0 0.0
        %2873 = vmatpush.msra.mxu0 0.0
        %2874 = vmatpush.msra.mxu0 0.0
        %2875 = vmatpush.msra.mxu0 0.0
        %2876 = vmatpush.msra.mxu0 0.0
        %2877 = vmatpush.msra.mxu0 0.0
        %2878 = vmatpush.msra.mxu0 0.0
        %v2879 = vand.u32 %v965, 4294901760
        %v2880 = vsub.f32 %v965, %v2879
        %v2881 = vand.u32 %v2880, 4294901760
        %v2882 = vsub.f32 %v2880, %v2881
        %v2883 = vand.u32 %v2882, 4294901760
        %2884 = vmatpush.msra.mxu0 %v2883
        %v2885 = vand.u32 %v2825, 4294901760
        %2886 = vmatmul.f32.gmra.mxu0 %v2885
        %v2887 = vpop.f32.mrf.mxu0
        %v2888 = vadd.f32 %v2854, %v2887
        %v2889 = vand.u32 %v2828, 4294901760
        %2890 = vmatmul.f32.gmra.mxu0 %v2889
        %v2891 = vpop.f32.mrf.mxu0
        %v2892 = vadd.f32 %v2862, %v2891
        %2893 = vdwg.mxu0
        %2894 = vmatpush.msra.mxu0 0.0
        %2895 = vmatpush.msra.mxu0 0.0
        %2896 = vmatpush.msra.mxu0 0.0
        %2897 = vmatpush.msra.mxu0 0.0
        %2898 = vmatpush.msra.mxu0 0.0
        %2899 = vmatpush.msra.mxu0 0.0
        %2900 = vmatpush.msra.mxu0 0.0
        %2901 = vmatpush.msra.mxu0 0.0
        %2902 = vmatpush.msra.mxu0 0.0
        %2903 = vmatpush.msra.mxu0 0.0
        %2904 = vmatpush.msra.mxu0 0.0
        %2905 = vmatpush.msra.mxu0 0.0
        %2906 = vmatpush.msra.mxu0 0.0
        %2907 = vmatpush.msra.mxu0 0.0
        %2908 = vmatpush.msra.mxu0 0.0
        %v2909 = vand.u32 %v965, 4294901760
        %v2910 = vsub.f32 %v965, %v2909
        %2911 = vmatpush.msra.mxu0 %v2910
        %v2912 = vand.u32 %v2825, 4294901760
        %v2913 = vsub.f32 %v2825, %v2912
        %2914 = vmatmul.f32.gmra.mxu0 %v2913
        %v2915 = vpop.f32.mrf.mxu0
        %v2916 = vadd.f32 %v2888, %v2915
        %v2917 = vand.u32 %v2828, 4294901760
        %v2918 = vsub.f32 %v2828, %v2917
        %2919 = vmatmul.f32.gmra.mxu0 %v2918
        %v2920 = vpop.f32.mrf.mxu0
        %v2921 = vadd.f32 %v2892, %v2920
        %2922 = vdwg.mxu0
        %2923 = vmatpush.msra.mxu0 0.0
        %2924 = vmatpush.msra.mxu0 0.0
        %2925 = vmatpush.msra.mxu0 0.0
        %2926 = vmatpush.msra.mxu0 0.0
        %2927 = vmatpush.msra.mxu0 0.0
        %2928 = vmatpush.msra.mxu0 0.0
        %2929 = vmatpush.msra.mxu0 0.0
        %2930 = vmatpush.msra.mxu0 0.0
        %2931 = vmatpush.msra.mxu0 0.0
        %2932 = vmatpush.msra.mxu0 0.0
        %2933 = vmatpush.msra.mxu0 0.0
        %2934 = vmatpush.msra.mxu0 0.0
        %2935 = vmatpush.msra.mxu0 0.0
        %2936 = vmatpush.msra.mxu0 0.0
        %2937 = vmatpush.msra.mxu0 0.0
        %v2938 = vand.u32 %v965, 4294901760
        %2939 = vmatpush.msra.mxu0 %v2938
        %v2940 = vand.u32 %v2825, 4294901760
        %v2941 = vsub.f32 %v2825, %v2940
        %v2942 = vand.u32 %v2941, 4294901760
        %2943 = vmatmul.f32.gmra.mxu0 %v2942
        %v2944 = vpop.f32.mrf.mxu0
        %v2945 = vadd.f32 %v2916, %v2944
        %v2946 = vand.u32 %v2828, 4294901760
        %v2947 = vsub.f32 %v2828, %v2946
        %v2948 = vand.u32 %v2947, 4294901760
        %2949 = vmatmul.f32.gmra.mxu0 %v2948
        %v2950 = vpop.f32.mrf.mxu0
        %v2951 = vadd.f32 %v2921, %v2950
        %2952 = vdwg.mxu0
        %2953 = vmatpush.msra.mxu0 0.0
        %2954 = vmatpush.msra.mxu0 0.0
        %2955 = vmatpush.msra.mxu0 0.0
        %2956 = vmatpush.msra.mxu0 0.0
        %2957 = vmatpush.msra.mxu0 0.0
        %2958 = vmatpush.msra.mxu0 0.0
        %2959 = vmatpush.msra.mxu0 0.0
        %2960 = vmatpush.msra.mxu0 0.0
        %2961 = vmatpush.msra.mxu0 0.0
        %2962 = vmatpush.msra.mxu0 0.0
        %2963 = vmatpush.msra.mxu0 0.0
        %2964 = vmatpush.msra.mxu0 0.0
        %2965 = vmatpush.msra.mxu0 0.0
        %2966 = vmatpush.msra.mxu0 0.0
        %2967 = vmatpush.msra.mxu0 0.0
        %v2968 = vand.u32 %v965, 4294901760
        %v2969 = vsub.f32 %v965, %v2968
        %v2970 = vand.u32 %v2969, 4294901760
        %2971 = vmatpush.msra.mxu0 %v2970
        %v2972 = vand.u32 %v2825, 4294901760
        %2973 = vmatmul.f32.gmra.mxu0 %v2972
        %v2974 = vpop.f32.mrf.mxu0
        %v2975 = vadd.f32 %v2945, %v2974
        %v2976 = vand.u32 %v2828, 4294901760
        %2977 = vmatmul.f32.gmra.mxu0 %v2976
        %v2978 = vpop.f32.mrf.mxu0
        %v2979 = vadd.f32 %v2951, %v2978
        %2980 = vdwg.mxu0
        %2981 = vmatpush.msra.mxu0 0.0
        %2982 = vmatpush.msra.mxu0 0.0
        %2983 = vmatpush.msra.mxu0 0.0
        %2984 = vmatpush.msra.mxu0 0.0
        %2985 = vmatpush.msra.mxu0 0.0
        %2986 = vmatpush.msra.mxu0 0.0
        %2987 = vmatpush.msra.mxu0 0.0
        %2988 = vmatpush.msra.mxu0 0.0
        %2989 = vmatpush.msra.mxu0 0.0
        %2990 = vmatpush.msra.mxu0 0.0
        %2991 = vmatpush.msra.mxu0 0.0
        %2992 = vmatpush.msra.mxu0 0.0
        %2993 = vmatpush.msra.mxu0 0.0
        %2994 = vmatpush.msra.mxu0 0.0
        %2995 = vmatpush.msra.mxu0 0.0
        %v2996 = vand.u32 %v965, 4294901760
        %2997 = vmatpush.msra.mxu0 %v2996
        %v2998 = vand.u32 %v2825, 4294901760
        %2999 = vmatmul.f32.gmra.mxu0 %v2998
        %v3000 = vpop.f32.mrf.mxu0
        %v3001 = vadd.f32 %v2975, %v3000
        %v3002 = vand.u32 %v2828, 4294901760
        %3003 = vmatmul.f32.gmra.mxu0 %v3002
        %v3004 = vpop.f32.mrf.mxu0
        %v3005 = vadd.f32 %v2979, %v3004
        %3006 = vdwg.mxu0
        %v3008 = vsel %vm972, %v1504, 0
        %v3011 = vsel %vm972, %v1508, 0
        %3013 = vmatpush.msra.mxu0 0.0
        %3014 = vmatpush.msra.mxu0 0.0
        %3015 = vmatpush.msra.mxu0 0.0
        %3016 = vmatpush.msra.mxu0 0.0
        %3017 = vmatpush.msra.mxu0 0.0
        %3018 = vmatpush.msra.mxu0 0.0
        %3019 = vmatpush.msra.mxu0 0.0
        %3020 = vmatpush.msra.mxu0 0.0
        %3021 = vmatpush.msra.mxu0 0.0
        %3022 = vmatpush.msra.mxu0 0.0
        %3023 = vmatpush.msra.mxu0 0.0
        %3024 = vmatpush.msra.mxu0 0.0
        %3025 = vmatpush.msra.mxu0 0.0
        %3026 = vmatpush.msra.mxu0 0.0
        %3027 = vmatpush.msra.mxu0 0.0
        %v3028 = vand.u32 %v964, 4294901760
        %3029 = vmatpush.msra.mxu0 %v3028
        %v3030 = vand.u32 %v3008, 4294901760
        %v3031 = vsub.f32 %v3008, %v3030
        %v3032 = vand.u32 %v3031, 4294901760
        %v3033 = vsub.f32 %v3031, %v3032
        %v3034 = vand.u32 %v3033, 4294901760
        %3035 = vmatmul.f32.gmra.mxu0 %v3034
        %v3036 = vpop.f32.mrf.mxu0
        %v3037 = vadd.f32 %v3001, %v3036
        %v3038 = vand.u32 %v3011, 4294901760
        %v3039 = vsub.f32 %v3011, %v3038
        %v3040 = vand.u32 %v3039, 4294901760
        %v3041 = vsub.f32 %v3039, %v3040
        %v3042 = vand.u32 %v3041, 4294901760
        %3043 = vmatmul.f32.gmra.mxu0 %v3042
        %v3044 = vpop.f32.mrf.mxu0
        %v3045 = vadd.f32 %v3005, %v3044
        %3046 = vdwg.mxu0
        %3047 = vmatpush.msra.mxu0 0.0
        %3048 = vmatpush.msra.mxu0 0.0
        %3049 = vmatpush.msra.mxu0 0.0
        %3050 = vmatpush.msra.mxu0 0.0
        %3051 = vmatpush.msra.mxu0 0.0
        %3052 = vmatpush.msra.mxu0 0.0
        %3053 = vmatpush.msra.mxu0 0.0
        %3054 = vmatpush.msra.mxu0 0.0
        %3055 = vmatpush.msra.mxu0 0.0
        %3056 = vmatpush.msra.mxu0 0.0
        %3057 = vmatpush.msra.mxu0 0.0
        %3058 = vmatpush.msra.mxu0 0.0
        %3059 = vmatpush.msra.mxu0 0.0
        %3060 = vmatpush.msra.mxu0 0.0
        %3061 = vmatpush.msra.mxu0 0.0
        %v3062 = vand.u32 %v964, 4294901760
        %v3063 = vsub.f32 %v964, %v3062
        %v3064 = vand.u32 %v3063, 4294901760
        %v3065 = vsub.f32 %v3063, %v3064
        %v3066 = vand.u32 %v3065, 4294901760
        %3067 = vmatpush.msra.mxu0 %v3066
        %v3068 = vand.u32 %v3008, 4294901760
        %3069 = vmatmul.f32.gmra.mxu0 %v3068
        %v3070 = vpop.f32.mrf.mxu0
        %v3071 = vadd.f32 %v3037, %v3070
        %v3072 = vand.u32 %v3011, 4294901760
        %3073 = vmatmul.f32.gmra.mxu0 %v3072
        %v3074 = vpop.f32.mrf.mxu0
        %v3075 = vadd.f32 %v3045, %v3074
        %3076 = vdwg.mxu0
        %3077 = vmatpush.msra.mxu0 0.0
        %3078 = vmatpush.msra.mxu0 0.0
        %3079 = vmatpush.msra.mxu0 0.0
        %3080 = vmatpush.msra.mxu0 0.0
        %3081 = vmatpush.msra.mxu0 0.0
        %3082 = vmatpush.msra.mxu0 0.0
        %3083 = vmatpush.msra.mxu0 0.0
        %3084 = vmatpush.msra.mxu0 0.0
        %3085 = vmatpush.msra.mxu0 0.0
        %3086 = vmatpush.msra.mxu0 0.0
        %3087 = vmatpush.msra.mxu0 0.0
        %3088 = vmatpush.msra.mxu0 0.0
        %3089 = vmatpush.msra.mxu0 0.0
        %3090 = vmatpush.msra.mxu0 0.0
        %3091 = vmatpush.msra.mxu0 0.0
        %v3092 = vand.u32 %v964, 4294901760
        %v3093 = vsub.f32 %v964, %v3092
        %3094 = vmatpush.msra.mxu0 %v3093
        %v3095 = vand.u32 %v3008, 4294901760
        %v3096 = vsub.f32 %v3008, %v3095
        %3097 = vmatmul.f32.gmra.mxu0 %v3096
        %v3098 = vpop.f32.mrf.mxu0
        %v3099 = vadd.f32 %v3071, %v3098
        %v3100 = vand.u32 %v3011, 4294901760
        %v3101 = vsub.f32 %v3011, %v3100
        %3102 = vmatmul.f32.gmra.mxu0 %v3101
        %v3103 = vpop.f32.mrf.mxu0
        %v3104 = vadd.f32 %v3075, %v3103
        %3105 = vdwg.mxu0
        %3106 = vmatpush.msra.mxu0 0.0
        %3107 = vmatpush.msra.mxu0 0.0
        %3108 = vmatpush.msra.mxu0 0.0
        %3109 = vmatpush.msra.mxu0 0.0
        %3110 = vmatpush.msra.mxu0 0.0
        %3111 = vmatpush.msra.mxu0 0.0
        %3112 = vmatpush.msra.mxu0 0.0
        %3113 = vmatpush.msra.mxu0 0.0
        %3114 = vmatpush.msra.mxu0 0.0
        %3115 = vmatpush.msra.mxu0 0.0
        %3116 = vmatpush.msra.mxu0 0.0
        %3117 = vmatpush.msra.mxu0 0.0
        %3118 = vmatpush.msra.mxu0 0.0
        %3119 = vmatpush.msra.mxu0 0.0
        %3120 = vmatpush.msra.mxu0 0.0
        %v3121 = vand.u32 %v964, 4294901760
        %3122 = vmatpush.msra.mxu0 %v3121
        %v3123 = vand.u32 %v3008, 4294901760
        %v3124 = vsub.f32 %v3008, %v3123
        %v3125 = vand.u32 %v3124, 4294901760
        %3126 = vmatmul.f32.gmra.mxu0 %v3125
        %v3127 = vpop.f32.mrf.mxu0
        %v3128 = vadd.f32 %v3099, %v3127
        %v3129 = vand.u32 %v3011, 4294901760
        %v3130 = vsub.f32 %v3011, %v3129
        %v3131 = vand.u32 %v3130, 4294901760
        %3132 = vmatmul.f32.gmra.mxu0 %v3131
        %v3133 = vpop.f32.mrf.mxu0
        %v3134 = vadd.f32 %v3104, %v3133
        %3135 = vdwg.mxu0
        %3136 = vmatpush.msra.mxu0 0.0
        %3137 = vmatpush.msra.mxu0 0.0
        %3138 = vmatpush.msra.mxu0 0.0
        %3139 = vmatpush.msra.mxu0 0.0
        %3140 = vmatpush.msra.mxu0 0.0
        %3141 = vmatpush.msra.mxu0 0.0
        %3142 = vmatpush.msra.mxu0 0.0
        %3143 = vmatpush.msra.mxu0 0.0
        %3144 = vmatpush.msra.mxu0 0.0
        %3145 = vmatpush.msra.mxu0 0.0
        %3146 = vmatpush.msra.mxu0 0.0
        %3147 = vmatpush.msra.mxu0 0.0
        %3148 = vmatpush.msra.mxu0 0.0
        %3149 = vmatpush.msra.mxu0 0.0
        %3150 = vmatpush.msra.mxu0 0.0
        %v3151 = vand.u32 %v964, 4294901760
        %v3152 = vsub.f32 %v964, %v3151
        %v3153 = vand.u32 %v3152, 4294901760
        %3154 = vmatpush.msra.mxu0 %v3153
        %v3155 = vand.u32 %v3008, 4294901760
        %3156 = vmatmul.f32.gmra.mxu0 %v3155
        %v3157 = vpop.f32.mrf.mxu0
        %v3158 = vadd.f32 %v3128, %v3157
        %v3159 = vand.u32 %v3011, 4294901760
        %3160 = vmatmul.f32.gmra.mxu0 %v3159
        %v3161 = vpop.f32.mrf.mxu0
        %v3162 = vadd.f32 %v3134, %v3161
        %3163 = vdwg.mxu0
        %3164 = vmatpush.msra.mxu0 0.0
        %3165 = vmatpush.msra.mxu0 0.0
        %3166 = vmatpush.msra.mxu0 0.0
        %3167 = vmatpush.msra.mxu0 0.0
        %3168 = vmatpush.msra.mxu0 0.0
        %3169 = vmatpush.msra.mxu0 0.0
        %3170 = vmatpush.msra.mxu0 0.0
        %3171 = vmatpush.msra.mxu0 0.0
        %3172 = vmatpush.msra.mxu0 0.0
        %3173 = vmatpush.msra.mxu0 0.0
        %3174 = vmatpush.msra.mxu0 0.0
        %3175 = vmatpush.msra.mxu0 0.0
        %3176 = vmatpush.msra.mxu0 0.0
        %3177 = vmatpush.msra.mxu0 0.0
        %3178 = vmatpush.msra.mxu0 0.0
        %v3179 = vand.u32 %v964, 4294901760
        %3180 = vmatpush.msra.mxu0 %v3179
        %v3181 = vand.u32 %v3008, 4294901760
        %3182 = vmatmul.f32.gmra.mxu0 %v3181
        %v3183 = vpop.f32.mrf.mxu0
        %v3184 = vadd.f32 %v3158, %v3183
        %v3185 = vand.u32 %v3011, 4294901760
        %3186 = vmatmul.f32.gmra.mxu0 %v3185
        %v3187 = vpop.f32.mrf.mxu0
        %v3188 = vadd.f32 %v3162, %v3187
        %3189 = vdwg.mxu0
        %3192 = vrot.lane.b32.xlu0 %v942, 120
        %v3193 = vpop.permute.xlu0 %3192
        %3194 = vrot.lane.b32.xlu0 %v946, 120
        %v3195 = vpop.permute.xlu0 %3194
        %3198 = vxpose.xlu0.b32.start [1/16] %v3193, 128
        %3199 = vxpose.xlu0.b32.cont [2/16] %v3195, 128
        %3200 = vxpose.xlu0.b32.cont [3/16] 0.0, 128
        %3201 = vxpose.xlu0.b32.cont [4/16] 0.0, 128
        %3202 = vxpose.xlu0.b32.cont [5/16] 0.0, 128
        %3203 = vxpose.xlu0.b32.cont [6/16] 0.0, 128
        %3204 = vxpose.xlu0.b32.cont [7/16] 0.0, 128
        %3205 = vxpose.xlu0.b32.cont [8/16] 0.0, 128
        %3206 = vxpose.xlu0.b32.cont [9/16] 0.0, 128
        %3207 = vxpose.xlu0.b32.cont [10/16] 0.0, 128
        %3208 = vxpose.xlu0.b32.cont [11/16] 0.0, 128
        %3209 = vxpose.xlu0.b32.cont [12/16] 0.0, 128
        %3210 = vxpose.xlu0.b32.cont [13/16] 0.0, 128
        %3211 = vxpose.xlu0.b32.cont [14/16] 0.0, 128
        %3212 = vxpose.xlu0.b32.cont [15/16] 0.0, 128
        %3213 = vxpose.xlu0.b32.end [16/16] 0.0, 128
        %v3214 = vpop.trf.xlu0
        %v3215 = vpop.trf.xlu0
        %v3216 = vpop.trf.xlu0
        %v3217 = vpop.trf.xlu0
        %v3218 = vpop.trf.xlu0
        %v3219 = vpop.trf.xlu0
        %v3220 = vpop.trf.xlu0
        %v3221 = vpop.trf.xlu0
        %v3222 = vpop.trf.xlu0
        %v3223 = vpop.trf.xlu0
        %v3224 = vpop.trf.xlu0
        %v3225 = vpop.trf.xlu0
        %v3226 = vpop.trf.xlu0
        %v3227 = vpop.trf.xlu0
        %v3228 = vpop.trf.xlu0
        %v3229 = vpop.trf.xlu0
        %v3231 = vsel %vm1545, %v3214, 0
        %3233 = vmatpush.msra.mxu0 0.0
        %3234 = vmatpush.msra.mxu0 0.0
        %3235 = vmatpush.msra.mxu0 0.0
        %3236 = vmatpush.msra.mxu0 0.0
        %3237 = vmatpush.msra.mxu0 0.0
        %3238 = vmatpush.msra.mxu0 0.0
        %3239 = vmatpush.msra.mxu0 0.0
        %3240 = vmatpush.msra.mxu0 0.0
        %3241 = vmatpush.msra.mxu0 0.0
        %3242 = vmatpush.msra.mxu0 0.0
        %3243 = vmatpush.msra.mxu0 0.0
        %3244 = vmatpush.msra.mxu0 0.0
        %3245 = vmatpush.msra.mxu0 0.0
        %3246 = vmatpush.msra.mxu0 0.0
        %v3247 = vand.u32 %v960, 4294901760
        %3248 = vmatpush.msra.mxu0 %v3247
        %v3249 = vand.u32 %v959, 4294901760
        %3250 = vmatpush.msra.mxu0 %v3249
        %v3251 = vand.u32 %v3231, 4294901760
        %v3252 = vsub.f32 %v3231, %v3251
        %v3253 = vand.u32 %v3252, 4294901760
        %v3254 = vsub.f32 %v3252, %v3253
        %v3255 = vand.u32 %v3254, 4294901760
        %3256 = vmatmul.f32.gmra.mxu0 %v3255
        %v3257 = vpop.f32.mrf.mxu0
        %v3258 = vadd.f32 %v1511, %v3257
        %3259 = vdwg.mxu0
        %3260 = vmatpush.msra.mxu0 0.0
        %3261 = vmatpush.msra.mxu0 0.0
        %3262 = vmatpush.msra.mxu0 0.0
        %3263 = vmatpush.msra.mxu0 0.0
        %3264 = vmatpush.msra.mxu0 0.0
        %3265 = vmatpush.msra.mxu0 0.0
        %3266 = vmatpush.msra.mxu0 0.0
        %3267 = vmatpush.msra.mxu0 0.0
        %3268 = vmatpush.msra.mxu0 0.0
        %3269 = vmatpush.msra.mxu0 0.0
        %3270 = vmatpush.msra.mxu0 0.0
        %3271 = vmatpush.msra.mxu0 0.0
        %3272 = vmatpush.msra.mxu0 0.0
        %3273 = vmatpush.msra.mxu0 0.0
        %v3274 = vand.u32 %v960, 4294901760
        %v3275 = vsub.f32 %v960, %v3274
        %v3276 = vand.u32 %v3275, 4294901760
        %v3277 = vsub.f32 %v3275, %v3276
        %v3278 = vand.u32 %v3277, 4294901760
        %3279 = vmatpush.msra.mxu0 %v3278
        %v3280 = vand.u32 %v959, 4294901760
        %v3281 = vsub.f32 %v959, %v3280
        %v3282 = vand.u32 %v3281, 4294901760
        %v3283 = vsub.f32 %v3281, %v3282
        %v3284 = vand.u32 %v3283, 4294901760
        %3285 = vmatpush.msra.mxu0 %v3284
        %v3286 = vand.u32 %v3231, 4294901760
        %3287 = vmatmul.f32.gmra.mxu0 %v3286
        %v3288 = vpop.f32.mrf.mxu0
        %v3289 = vadd.f32 %v3258, %v3288
        %3290 = vdwg.mxu0
        %3291 = vmatpush.msra.mxu0 0.0
        %3292 = vmatpush.msra.mxu0 0.0
        %3293 = vmatpush.msra.mxu0 0.0
        %3294 = vmatpush.msra.mxu0 0.0
        %3295 = vmatpush.msra.mxu0 0.0
        %3296 = vmatpush.msra.mxu0 0.0
        %3297 = vmatpush.msra.mxu0 0.0
        %3298 = vmatpush.msra.mxu0 0.0
        %3299 = vmatpush.msra.mxu0 0.0
        %3300 = vmatpush.msra.mxu0 0.0
        %3301 = vmatpush.msra.mxu0 0.0
        %3302 = vmatpush.msra.mxu0 0.0
        %3303 = vmatpush.msra.mxu0 0.0
        %3304 = vmatpush.msra.mxu0 0.0
        %v3305 = vand.u32 %v960, 4294901760
        %v3306 = vsub.f32 %v960, %v3305
        %3307 = vmatpush.msra.mxu0 %v3306
        %v3308 = vand.u32 %v959, 4294901760
        %v3309 = vsub.f32 %v959, %v3308
        %3310 = vmatpush.msra.mxu0 %v3309
        %v3311 = vand.u32 %v3231, 4294901760
        %v3312 = vsub.f32 %v3231, %v3311
        %3313 = vmatmul.f32.gmra.mxu0 %v3312
        %v3314 = vpop.f32.mrf.mxu0
        %v3315 = vadd.f32 %v3289, %v3314
        %3316 = vdwg.mxu0
        %3317 = vmatpush.msra.mxu0 0.0
        %3318 = vmatpush.msra.mxu0 0.0
        %3319 = vmatpush.msra.mxu0 0.0
        %3320 = vmatpush.msra.mxu0 0.0
        %3321 = vmatpush.msra.mxu0 0.0
        %3322 = vmatpush.msra.mxu0 0.0
        %3323 = vmatpush.msra.mxu0 0.0
        %3324 = vmatpush.msra.mxu0 0.0
        %3325 = vmatpush.msra.mxu0 0.0
        %3326 = vmatpush.msra.mxu0 0.0
        %3327 = vmatpush.msra.mxu0 0.0
        %3328 = vmatpush.msra.mxu0 0.0
        %3329 = vmatpush.msra.mxu0 0.0
        %3330 = vmatpush.msra.mxu0 0.0
        %v3331 = vand.u32 %v960, 4294901760
        %3332 = vmatpush.msra.mxu0 %v3331
        %v3333 = vand.u32 %v959, 4294901760
        %3334 = vmatpush.msra.mxu0 %v3333
        %v3335 = vand.u32 %v3231, 4294901760
        %v3336 = vsub.f32 %v3231, %v3335
        %v3337 = vand.u32 %v3336, 4294901760
        %3338 = vmatmul.f32.gmra.mxu0 %v3337
        %v3339 = vpop.f32.mrf.mxu0
        %v3340 = vadd.f32 %v3315, %v3339
        %3341 = vdwg.mxu0
        %3342 = vmatpush.msra.mxu0 0.0
        %3343 = vmatpush.msra.mxu0 0.0
        %3344 = vmatpush.msra.mxu0 0.0
        %3345 = vmatpush.msra.mxu0 0.0
        %3346 = vmatpush.msra.mxu0 0.0
        %3347 = vmatpush.msra.mxu0 0.0
        %3348 = vmatpush.msra.mxu0 0.0
        %3349 = vmatpush.msra.mxu0 0.0
        %3350 = vmatpush.msra.mxu0 0.0
        %3351 = vmatpush.msra.mxu0 0.0
        %3352 = vmatpush.msra.mxu0 0.0
        %3353 = vmatpush.msra.mxu0 0.0
        %3354 = vmatpush.msra.mxu0 0.0
        %3355 = vmatpush.msra.mxu0 0.0
        %v3356 = vand.u32 %v960, 4294901760
        %v3357 = vsub.f32 %v960, %v3356
        %v3358 = vand.u32 %v3357, 4294901760
        %3359 = vmatpush.msra.mxu0 %v3358
        %v3360 = vand.u32 %v959, 4294901760
        %v3361 = vsub.f32 %v959, %v3360
        %v3362 = vand.u32 %v3361, 4294901760
        %3363 = vmatpush.msra.mxu0 %v3362
        %v3364 = vand.u32 %v3231, 4294901760
        %3365 = vmatmul.f32.gmra.mxu0 %v3364
        %v3366 = vpop.f32.mrf.mxu0
        %v3367 = vadd.f32 %v3340, %v3366
        %3368 = vdwg.mxu0
        %3369 = vmatpush.msra.mxu0 0.0
        %3370 = vmatpush.msra.mxu0 0.0
        %3371 = vmatpush.msra.mxu0 0.0
        %3372 = vmatpush.msra.mxu0 0.0
        %3373 = vmatpush.msra.mxu0 0.0
        %3374 = vmatpush.msra.mxu0 0.0
        %3375 = vmatpush.msra.mxu0 0.0
        %3376 = vmatpush.msra.mxu0 0.0
        %3377 = vmatpush.msra.mxu0 0.0
        %3378 = vmatpush.msra.mxu0 0.0
        %3379 = vmatpush.msra.mxu0 0.0
        %3380 = vmatpush.msra.mxu0 0.0
        %3381 = vmatpush.msra.mxu0 0.0
        %3382 = vmatpush.msra.mxu0 0.0
        %v3383 = vand.u32 %v960, 4294901760
        %3384 = vmatpush.msra.mxu0 %v3383
        %v3385 = vand.u32 %v959, 4294901760
        %3386 = vmatpush.msra.mxu0 %v3385
        %v3387 = vand.u32 %v3231, 4294901760
        %3388 = vmatmul.f32.gmra.mxu0 %v3387
        %v3389 = vpop.f32.mrf.mxu0
        %v3390 = vadd.f32 %v3367, %v3389
        %3391 = vdwg.mxu0
        %v3392 = vsel %vm972, %v3390, -inf
        %v3393 = vrot.slane %v3392, 4
        %v3394 = vmax.f32 %v3392, %v3393
        %v3395 = vrot.slane %v3394, 2
        %v3396 = vmax.f32 %v3394, %v3395
        %v3397 = vrot.slane %v3396, 1
        %v3398 = vmax.f32 %v3396, %v3397
        %v3399 = vsub.f32 %v3390, %v3398
        %v3400 = vmul.f32 %v3399, 1.442695
        %v3401 = vpow.pop %v3400
        %v3402 = vsel %vm972, %v3401, 0.0
        %v3403 = vrot.slane %v3402, 4
        %v3404 = vadd.f32 %v3402, %v3403
        %v3405 = vrot.slane %v3404, 2
        %v3406 = vadd.f32 %v3404, %v3405
        %v3407 = vrot.slane %v3406, 1
        %v3408 = vadd.f32 %v3406, %v3407
        %v3409 = vrcp.pop %v3408
        %v3410 = vmul.f32 %v3408, %v3409
        %v3411 = vsub.f32 1.0, %v3410
        %v3412 = vmul.f32 %v3409, %v3411
        %v3413 = vadd.f32 %v3409, %v3412
        %vm3414 = vweird.f32 %v3408
        %vm3415 = vweird.f32 %v3409
        %vm3416 = vmor %vm3414, %vm3415
        %v3417 = vsel %vm3416, %v3409, %v3413
        %v3418 = vand.u32 2147483647, %v3408
        %vm3419 = vcmp.eq.f32.partialorder %v3418, 8.507059e+37
        %v3420 = vand.u32 %v3408, 2147483648
        %v3421 = vor.u32 1.1754944e-38, %v3420
        %v3422 = vsel %vm3419, %v3421, %v3417
        %v3423 = vmul.f32 %v3401, %v3422
        %v3424 = vsel %vm972, %v3423, 0.0
        %3425 = vadd.xlane.f32.xlu0 %v3424
        %v3426 = vpop.xlane.xlu0 %3425
        %v3427 = vadd.f32 %v3426, 1e-09
        %v3428 = vrcp.pop %v3427
        %v3429 = vmul.f32 %v3427, %v3428
        %v3430 = vsub.f32 1.0, %v3429
        %v3431 = vmul.f32 %v3428, %v3430
        %v3432 = vadd.f32 %v3428, %v3431
        %vm3433 = vweird.f32 %v3427
        %vm3434 = vweird.f32 %v3428
        %vm3435 = vmor %vm3433, %vm3434
        %v3436 = vsel %vm3435, %v3428, %v3432
        %v3437 = vand.u32 2147483647, %v3427
        %vm3438 = vcmp.eq.f32.partialorder %v3437, 8.507059e+37
        %v3439 = vand.u32 %v3427, 2147483648
        %v3440 = vor.u32 1.1754944e-38, %v3439
        %v3441 = vsel %vm3438, %v3440, %v3436
        %v3442 = vmul.f32 %v3423, %v3441
        %v3444 = vsel %vm972, %v3442, 0
        %3446 = vmatpush.msra.mxu0 0.0
        %3447 = vmatpush.msra.mxu0 0.0
        %3448 = vmatpush.msra.mxu0 0.0
        %3449 = vmatpush.msra.mxu0 0.0
        %3450 = vmatpush.msra.mxu0 0.0
        %3451 = vmatpush.msra.mxu0 0.0
        %3452 = vmatpush.msra.mxu0 0.0
        %3453 = vmatpush.msra.mxu0 0.0
        %3454 = vmatpush.msra.mxu0 0.0
        %3455 = vmatpush.msra.mxu0 0.0
        %3456 = vmatpush.msra.mxu0 0.0
        %3457 = vmatpush.msra.mxu0 0.0
        %3458 = vmatpush.msra.mxu0 0.0
        %3459 = vmatpush.msra.mxu0 0.0
        %3460 = vmatpush.msra.mxu0 0.0
        %v3461 = vand.u32 %v962, 4294901760
        %3462 = vmatpush.msra.mxu0 %v3461
        %v3463 = vand.u32 %v3444, 4294901760
        %v3464 = vsub.f32 %v3444, %v3463
        %v3465 = vand.u32 %v3464, 4294901760
        %v3466 = vsub.f32 %v3464, %v3465
        %v3467 = vand.u32 %v3466, 4294901760
        %3468 = vmatmul.f32.gmra.mxu0 %v3467
        %v3469 = vpop.f32.mrf.mxu0
        %v3470 = vadd.f32 %v1760, %v3469
        %3471 = vdwg.mxu0
        %3472 = vmatpush.msra.mxu0 0.0
        %3473 = vmatpush.msra.mxu0 0.0
        %3474 = vmatpush.msra.mxu0 0.0
        %3475 = vmatpush.msra.mxu0 0.0
        %3476 = vmatpush.msra.mxu0 0.0
        %3477 = vmatpush.msra.mxu0 0.0
        %3478 = vmatpush.msra.mxu0 0.0
        %3479 = vmatpush.msra.mxu0 0.0
        %3480 = vmatpush.msra.mxu0 0.0
        %3481 = vmatpush.msra.mxu0 0.0
        %3482 = vmatpush.msra.mxu0 0.0
        %3483 = vmatpush.msra.mxu0 0.0
        %3484 = vmatpush.msra.mxu0 0.0
        %3485 = vmatpush.msra.mxu0 0.0
        %3486 = vmatpush.msra.mxu0 0.0
        %v3487 = vand.u32 %v962, 4294901760
        %v3488 = vsub.f32 %v962, %v3487
        %v3489 = vand.u32 %v3488, 4294901760
        %v3490 = vsub.f32 %v3488, %v3489
        %v3491 = vand.u32 %v3490, 4294901760
        %3492 = vmatpush.msra.mxu0 %v3491
        %v3493 = vand.u32 %v3444, 4294901760
        %3494 = vmatmul.f32.gmra.mxu0 %v3493
        %v3495 = vpop.f32.mrf.mxu0
        %v3496 = vadd.f32 %v3470, %v3495
        %3497 = vdwg.mxu0
        %3498 = vmatpush.msra.mxu0 0.0
        %3499 = vmatpush.msra.mxu0 0.0
        %3500 = vmatpush.msra.mxu0 0.0
        %3501 = vmatpush.msra.mxu0 0.0
        %3502 = vmatpush.msra.mxu0 0.0
        %3503 = vmatpush.msra.mxu0 0.0
        %3504 = vmatpush.msra.mxu0 0.0
        %3505 = vmatpush.msra.mxu0 0.0
        %3506 = vmatpush.msra.mxu0 0.0
        %3507 = vmatpush.msra.mxu0 0.0
        %3508 = vmatpush.msra.mxu0 0.0
        %3509 = vmatpush.msra.mxu0 0.0
        %3510 = vmatpush.msra.mxu0 0.0
        %3511 = vmatpush.msra.mxu0 0.0
        %3512 = vmatpush.msra.mxu0 0.0
        %v3513 = vand.u32 %v962, 4294901760
        %v3514 = vsub.f32 %v962, %v3513
        %3515 = vmatpush.msra.mxu0 %v3514
        %v3516 = vand.u32 %v3444, 4294901760
        %v3517 = vsub.f32 %v3444, %v3516
        %3518 = vmatmul.f32.gmra.mxu0 %v3517
        %v3519 = vpop.f32.mrf.mxu0
        %v3520 = vadd.f32 %v3496, %v3519
        %3521 = vdwg.mxu0
        %3522 = vmatpush.msra.mxu0 0.0
        %3523 = vmatpush.msra.mxu0 0.0
        %3524 = vmatpush.msra.mxu0 0.0
        %3525 = vmatpush.msra.mxu0 0.0
        %3526 = vmatpush.msra.mxu0 0.0
        %3527 = vmatpush.msra.mxu0 0.0
        %3528 = vmatpush.msra.mxu0 0.0
        %3529 = vmatpush.msra.mxu0 0.0
        %3530 = vmatpush.msra.mxu0 0.0
        %3531 = vmatpush.msra.mxu0 0.0
        %3532 = vmatpush.msra.mxu0 0.0
        %3533 = vmatpush.msra.mxu0 0.0
        %3534 = vmatpush.msra.mxu0 0.0
        %3535 = vmatpush.msra.mxu0 0.0
        %3536 = vmatpush.msra.mxu0 0.0
        %v3537 = vand.u32 %v962, 4294901760
        %3538 = vmatpush.msra.mxu0 %v3537
        %v3539 = vand.u32 %v3444, 4294901760
        %v3540 = vsub.f32 %v3444, %v3539
        %v3541 = vand.u32 %v3540, 4294901760
        %3542 = vmatmul.f32.gmra.mxu0 %v3541
        %v3543 = vpop.f32.mrf.mxu0
        %v3544 = vadd.f32 %v3520, %v3543
        %3545 = vdwg.mxu0
        %3546 = vmatpush.msra.mxu0 0.0
        %3547 = vmatpush.msra.mxu0 0.0
        %3548 = vmatpush.msra.mxu0 0.0
        %3549 = vmatpush.msra.mxu0 0.0
        %3550 = vmatpush.msra.mxu0 0.0
        %3551 = vmatpush.msra.mxu0 0.0
        %3552 = vmatpush.msra.mxu0 0.0
        %3553 = vmatpush.msra.mxu0 0.0
        %3554 = vmatpush.msra.mxu0 0.0
        %3555 = vmatpush.msra.mxu0 0.0
        %3556 = vmatpush.msra.mxu0 0.0
        %3557 = vmatpush.msra.mxu0 0.0
        %3558 = vmatpush.msra.mxu0 0.0
        %3559 = vmatpush.msra.mxu0 0.0
        %3560 = vmatpush.msra.mxu0 0.0
        %v3561 = vand.u32 %v962, 4294901760
        %v3562 = vsub.f32 %v962, %v3561
        %v3563 = vand.u32 %v3562, 4294901760
        %3564 = vmatpush.msra.mxu0 %v3563
        %v3565 = vand.u32 %v3444, 4294901760
        %3566 = vmatmul.f32.gmra.mxu0 %v3565
        %v3567 = vpop.f32.mrf.mxu0
        %v3568 = vadd.f32 %v3544, %v3567
        %3569 = vdwg.mxu0
        %3570 = vmatpush.msra.mxu0 0.0
        %3571 = vmatpush.msra.mxu0 0.0
        %3572 = vmatpush.msra.mxu0 0.0
        %3573 = vmatpush.msra.mxu0 0.0
        %3574 = vmatpush.msra.mxu0 0.0
        %3575 = vmatpush.msra.mxu0 0.0
        %3576 = vmatpush.msra.mxu0 0.0
        %3577 = vmatpush.msra.mxu0 0.0
        %3578 = vmatpush.msra.mxu0 0.0
        %3579 = vmatpush.msra.mxu0 0.0
        %3580 = vmatpush.msra.mxu0 0.0
        %3581 = vmatpush.msra.mxu0 0.0
        %3582 = vmatpush.msra.mxu0 0.0
        %3583 = vmatpush.msra.mxu0 0.0
        %3584 = vmatpush.msra.mxu0 0.0
        %v3585 = vand.u32 %v962, 4294901760
        %3586 = vmatpush.msra.mxu0 %v3585
        %v3587 = vand.u32 %v3444, 4294901760
        %3588 = vmatmul.f32.gmra.mxu0 %v3587
        %v3589 = vpop.f32.mrf.mxu0
        %v3590 = vadd.f32 %v3568, %v3589
        %3591 = vdwg.mxu0
        %3593 = vrot.lane.b32.xlu0 %v3590, 120
        %v3594 = vpop.permute.xlu0 %3593
        %3596 = vmatpush.msra.mxu0 0.0
        %3597 = vmatpush.msra.mxu0 0.0
        %3598 = vmatpush.msra.mxu0 0.0
        %3599 = vmatpush.msra.mxu0 0.0
        %3600 = vmatpush.msra.mxu0 0.0
        %3601 = vmatpush.msra.mxu0 0.0
        %3602 = vmatpush.msra.mxu0 0.0
        %3603 = vmatpush.msra.mxu0 0.0
        %3604 = vmatpush.msra.mxu0 0.0
        %3605 = vmatpush.msra.mxu0 0.0
        %3606 = vmatpush.msra.mxu0 0.0
        %3607 = vmatpush.msra.mxu0 0.0
        %3608 = vmatpush.msra.mxu0 0.0
        %3609 = vmatpush.msra.mxu0 0.0
        %3610 = vmatpush.msra.mxu0 0.0
        %v3611 = vand.u32 %v3594, 4294901760
        %3612 = vmatpush.msra.mxu0 %v3611
        %v3613 = vand.u32 %v1921, 4294901760
        %v3614 = vsub.f32 %v1921, %v3613
        %v3615 = vand.u32 %v3614, 4294901760
        %v3616 = vsub.f32 %v3614, %v3615
        %v3617 = vand.u32 %v3616, 4294901760
        %3618 = vmatmul.f32.gmra.mxu0 %v3617
        %v3619 = vpop.f32.mrf.mxu0
        %v3620 = vadd.f32 0.0, %v3619
        %v3621 = vand.u32 %v1924, 4294901760
        %v3622 = vsub.f32 %v1924, %v3621
        %v3623 = vand.u32 %v3622, 4294901760
        %v3624 = vsub.f32 %v3622, %v3623
        %v3625 = vand.u32 %v3624, 4294901760
        %3626 = vmatmul.f32.gmra.mxu0 %v3625
        %v3627 = vpop.f32.mrf.mxu0
        %v3628 = vadd.f32 0.0, %v3627
        %3629 = vdwg.mxu0
        %3630 = vmatpush.msra.mxu0 0.0
        %3631 = vmatpush.msra.mxu0 0.0
        %3632 = vmatpush.msra.mxu0 0.0
        %3633 = vmatpush.msra.mxu0 0.0
        %3634 = vmatpush.msra.mxu0 0.0
        %3635 = vmatpush.msra.mxu0 0.0
        %3636 = vmatpush.msra.mxu0 0.0
        %3637 = vmatpush.msra.mxu0 0.0
        %3638 = vmatpush.msra.mxu0 0.0
        %3639 = vmatpush.msra.mxu0 0.0
        %3640 = vmatpush.msra.mxu0 0.0
        %3641 = vmatpush.msra.mxu0 0.0
        %3642 = vmatpush.msra.mxu0 0.0
        %3643 = vmatpush.msra.mxu0 0.0
        %3644 = vmatpush.msra.mxu0 0.0
        %v3645 = vand.u32 %v3594, 4294901760
        %v3646 = vsub.f32 %v3594, %v3645
        %v3647 = vand.u32 %v3646, 4294901760
        %v3648 = vsub.f32 %v3646, %v3647
        %v3649 = vand.u32 %v3648, 4294901760
        %3650 = vmatpush.msra.mxu0 %v3649
        %v3651 = vand.u32 %v1921, 4294901760
        %3652 = vmatmul.f32.gmra.mxu0 %v3651
        %v3653 = vpop.f32.mrf.mxu0
        %v3654 = vadd.f32 %v3620, %v3653
        %v3655 = vand.u32 %v1924, 4294901760
        %3656 = vmatmul.f32.gmra.mxu0 %v3655
        %v3657 = vpop.f32.mrf.mxu0
        %v3658 = vadd.f32 %v3628, %v3657
        %3659 = vdwg.mxu0
        %3660 = vmatpush.msra.mxu0 0.0
        %3661 = vmatpush.msra.mxu0 0.0
        %3662 = vmatpush.msra.mxu0 0.0
        %3663 = vmatpush.msra.mxu0 0.0
        %3664 = vmatpush.msra.mxu0 0.0
        %3665 = vmatpush.msra.mxu0 0.0
        %3666 = vmatpush.msra.mxu0 0.0
        %3667 = vmatpush.msra.mxu0 0.0
        %3668 = vmatpush.msra.mxu0 0.0
        %3669 = vmatpush.msra.mxu0 0.0
        %3670 = vmatpush.msra.mxu0 0.0
        %3671 = vmatpush.msra.mxu0 0.0
        %3672 = vmatpush.msra.mxu0 0.0
        %3673 = vmatpush.msra.mxu0 0.0
        %3674 = vmatpush.msra.mxu0 0.0
        %v3675 = vand.u32 %v3594, 4294901760
        %v3676 = vsub.f32 %v3594, %v3675
        %3677 = vmatpush.msra.mxu0 %v3676
        %v3678 = vand.u32 %v1921, 4294901760
        %v3679 = vsub.f32 %v1921, %v3678
        %3680 = vmatmul.f32.gmra.mxu0 %v3679
        %v3681 = vpop.f32.mrf.mxu0
        %v3682 = vadd.f32 %v3654, %v3681
        %v3683 = vand.u32 %v1924, 4294901760
        %v3684 = vsub.f32 %v1924, %v3683
        %3685 = vmatmul.f32.gmra.mxu0 %v3684
        %v3686 = vpop.f32.mrf.mxu0
        %v3687 = vadd.f32 %v3658, %v3686
        %3688 = vdwg.mxu0
        %3689 = vmatpush.msra.mxu0 0.0
        %3690 = vmatpush.msra.mxu0 0.0
        %3691 = vmatpush.msra.mxu0 0.0
        %3692 = vmatpush.msra.mxu0 0.0
        %3693 = vmatpush.msra.mxu0 0.0
        %3694 = vmatpush.msra.mxu0 0.0
        %3695 = vmatpush.msra.mxu0 0.0
        %3696 = vmatpush.msra.mxu0 0.0
        %3697 = vmatpush.msra.mxu0 0.0
        %3698 = vmatpush.msra.mxu0 0.0
        %3699 = vmatpush.msra.mxu0 0.0
        %3700 = vmatpush.msra.mxu0 0.0
        %3701 = vmatpush.msra.mxu0 0.0
        %3702 = vmatpush.msra.mxu0 0.0
        %3703 = vmatpush.msra.mxu0 0.0
        %v3704 = vand.u32 %v3594, 4294901760
        %3705 = vmatpush.msra.mxu0 %v3704
        %v3706 = vand.u32 %v1921, 4294901760
        %v3707 = vsub.f32 %v1921, %v3706
        %v3708 = vand.u32 %v3707, 4294901760
        %3709 = vmatmul.f32.gmra.mxu0 %v3708
        %v3710 = vpop.f32.mrf.mxu0
        %v3711 = vadd.f32 %v3682, %v3710
        %v3712 = vand.u32 %v1924, 4294901760
        %v3713 = vsub.f32 %v1924, %v3712
        %v3714 = vand.u32 %v3713, 4294901760
        %3715 = vmatmul.f32.gmra.mxu0 %v3714
        %v3716 = vpop.f32.mrf.mxu0
        %v3717 = vadd.f32 %v3687, %v3716
        %3718 = vdwg.mxu0
        %3719 = vmatpush.msra.mxu0 0.0
        %3720 = vmatpush.msra.mxu0 0.0
        %3721 = vmatpush.msra.mxu0 0.0
        %3722 = vmatpush.msra.mxu0 0.0
        %3723 = vmatpush.msra.mxu0 0.0
        %3724 = vmatpush.msra.mxu0 0.0
        %3725 = vmatpush.msra.mxu0 0.0
        %3726 = vmatpush.msra.mxu0 0.0
        %3727 = vmatpush.msra.mxu0 0.0
        %3728 = vmatpush.msra.mxu0 0.0
        %3729 = vmatpush.msra.mxu0 0.0
        %3730 = vmatpush.msra.mxu0 0.0
        %3731 = vmatpush.msra.mxu0 0.0
        %3732 = vmatpush.msra.mxu0 0.0
        %3733 = vmatpush.msra.mxu0 0.0
        %v3734 = vand.u32 %v3594, 4294901760
        %v3735 = vsub.f32 %v3594, %v3734
        %v3736 = vand.u32 %v3735, 4294901760
        %3737 = vmatpush.msra.mxu0 %v3736
        %v3738 = vand.u32 %v1921, 4294901760
        %3739 = vmatmul.f32.gmra.mxu0 %v3738
        %v3740 = vpop.f32.mrf.mxu0
        %v3741 = vadd.f32 %v3711, %v3740
        %v3742 = vand.u32 %v1924, 4294901760
        %3743 = vmatmul.f32.gmra.mxu0 %v3742
        %v3744 = vpop.f32.mrf.mxu0
        %v3745 = vadd.f32 %v3717, %v3744
        %3746 = vdwg.mxu0
        %3747 = vmatpush.msra.mxu0 0.0
        %3748 = vmatpush.msra.mxu0 0.0
        %3749 = vmatpush.msra.mxu0 0.0
        %3750 = vmatpush.msra.mxu0 0.0
        %3751 = vmatpush.msra.mxu0 0.0
        %3752 = vmatpush.msra.mxu0 0.0
        %3753 = vmatpush.msra.mxu0 0.0
        %3754 = vmatpush.msra.mxu0 0.0
        %3755 = vmatpush.msra.mxu0 0.0
        %3756 = vmatpush.msra.mxu0 0.0
        %3757 = vmatpush.msra.mxu0 0.0
        %3758 = vmatpush.msra.mxu0 0.0
        %3759 = vmatpush.msra.mxu0 0.0
        %3760 = vmatpush.msra.mxu0 0.0
        %3761 = vmatpush.msra.mxu0 0.0
        %v3762 = vand.u32 %v3594, 4294901760
        %3763 = vmatpush.msra.mxu0 %v3762
        %v3764 = vand.u32 %v1921, 4294901760
        %3765 = vmatmul.f32.gmra.mxu0 %v3764
        %v3766 = vpop.f32.mrf.mxu0
        %v3767 = vadd.f32 %v3741, %v3766
        %v3768 = vand.u32 %v1924, 4294901760
        %3769 = vmatmul.f32.gmra.mxu0 %v3768
        %v3770 = vpop.f32.mrf.mxu0
        %v3771 = vadd.f32 %v3745, %v3770
        %3772 = vdwg.mxu0
        %3773 = vmatpush.msra.mxu0 0.0
        %3774 = vmatpush.msra.mxu0 0.0
        %3775 = vmatpush.msra.mxu0 0.0
        %3776 = vmatpush.msra.mxu0 0.0
        %3777 = vmatpush.msra.mxu0 0.0
        %3778 = vmatpush.msra.mxu0 0.0
        %3779 = vmatpush.msra.mxu0 0.0
        %3780 = vmatpush.msra.mxu0 0.0
        %3781 = vmatpush.msra.mxu0 0.0
        %3782 = vmatpush.msra.mxu0 0.0
        %3783 = vmatpush.msra.mxu0 0.0
        %3784 = vmatpush.msra.mxu0 0.0
        %3785 = vmatpush.msra.mxu0 0.0
        %3786 = vmatpush.msra.mxu0 0.0
        %3787 = vmatpush.msra.mxu0 0.0
        %v3788 = vand.u32 %v3590, 4294901760
        %3789 = vmatpush.msra.mxu0 %v3788
        %v3790 = vand.u32 %v2104, 4294901760
        %v3791 = vsub.f32 %v2104, %v3790
        %v3792 = vand.u32 %v3791, 4294901760
        %v3793 = vsub.f32 %v3791, %v3792
        %v3794 = vand.u32 %v3793, 4294901760
        %3795 = vmatmul.f32.gmra.mxu0 %v3794
        %v3796 = vpop.f32.mrf.mxu0
        %v3797 = vadd.f32 %v3767, %v3796
        %v3798 = vand.u32 %v2107, 4294901760
        %v3799 = vsub.f32 %v2107, %v3798
        %v3800 = vand.u32 %v3799, 4294901760
        %v3801 = vsub.f32 %v3799, %v3800
        %v3802 = vand.u32 %v3801, 4294901760
        %3803 = vmatmul.f32.gmra.mxu0 %v3802
        %v3804 = vpop.f32.mrf.mxu0
        %v3805 = vadd.f32 %v3771, %v3804
        %3806 = vdwg.mxu0
        %3807 = vmatpush.msra.mxu0 0.0
        %3808 = vmatpush.msra.mxu0 0.0
        %3809 = vmatpush.msra.mxu0 0.0
        %3810 = vmatpush.msra.mxu0 0.0
        %3811 = vmatpush.msra.mxu0 0.0
        %3812 = vmatpush.msra.mxu0 0.0
        %3813 = vmatpush.msra.mxu0 0.0
        %3814 = vmatpush.msra.mxu0 0.0
        %3815 = vmatpush.msra.mxu0 0.0
        %3816 = vmatpush.msra.mxu0 0.0
        %3817 = vmatpush.msra.mxu0 0.0
        %3818 = vmatpush.msra.mxu0 0.0
        %3819 = vmatpush.msra.mxu0 0.0
        %3820 = vmatpush.msra.mxu0 0.0
        %3821 = vmatpush.msra.mxu0 0.0
        %v3822 = vand.u32 %v3590, 4294901760
        %v3823 = vsub.f32 %v3590, %v3822
        %v3824 = vand.u32 %v3823, 4294901760
        %v3825 = vsub.f32 %v3823, %v3824
        %v3826 = vand.u32 %v3825, 4294901760
        %3827 = vmatpush.msra.mxu0 %v3826
        %v3828 = vand.u32 %v2104, 4294901760
        %3829 = vmatmul.f32.gmra.mxu0 %v3828
        %v3830 = vpop.f32.mrf.mxu0
        %v3831 = vadd.f32 %v3797, %v3830
        %v3832 = vand.u32 %v2107, 4294901760
        %3833 = vmatmul.f32.gmra.mxu0 %v3832
        %v3834 = vpop.f32.mrf.mxu0
        %v3835 = vadd.f32 %v3805, %v3834
        %3836 = vdwg.mxu0
        %3837 = vmatpush.msra.mxu0 0.0
        %3838 = vmatpush.msra.mxu0 0.0
        %3839 = vmatpush.msra.mxu0 0.0
        %3840 = vmatpush.msra.mxu0 0.0
        %3841 = vmatpush.msra.mxu0 0.0
        %3842 = vmatpush.msra.mxu0 0.0
        %3843 = vmatpush.msra.mxu0 0.0
        %3844 = vmatpush.msra.mxu0 0.0
        %3845 = vmatpush.msra.mxu0 0.0
        %3846 = vmatpush.msra.mxu0 0.0
        %3847 = vmatpush.msra.mxu0 0.0
        %3848 = vmatpush.msra.mxu0 0.0
        %3849 = vmatpush.msra.mxu0 0.0
        %3850 = vmatpush.msra.mxu0 0.0
        %3851 = vmatpush.msra.mxu0 0.0
        %v3852 = vand.u32 %v3590, 4294901760
        %v3853 = vsub.f32 %v3590, %v3852
        %3854 = vmatpush.msra.mxu0 %v3853
        %v3855 = vand.u32 %v2104, 4294901760
        %v3856 = vsub.f32 %v2104, %v3855
        %3857 = vmatmul.f32.gmra.mxu0 %v3856
        %v3858 = vpop.f32.mrf.mxu0
        %v3859 = vadd.f32 %v3831, %v3858
        %v3860 = vand.u32 %v2107, 4294901760
        %v3861 = vsub.f32 %v2107, %v3860
        %3862 = vmatmul.f32.gmra.mxu0 %v3861
        %v3863 = vpop.f32.mrf.mxu0
        %v3864 = vadd.f32 %v3835, %v3863
        %3865 = vdwg.mxu0
        %3866 = vmatpush.msra.mxu0 0.0
        %3867 = vmatpush.msra.mxu0 0.0
        %3868 = vmatpush.msra.mxu0 0.0
        %3869 = vmatpush.msra.mxu0 0.0
        %3870 = vmatpush.msra.mxu0 0.0
        %3871 = vmatpush.msra.mxu0 0.0
        %3872 = vmatpush.msra.mxu0 0.0
        %3873 = vmatpush.msra.mxu0 0.0
        %3874 = vmatpush.msra.mxu0 0.0
        %3875 = vmatpush.msra.mxu0 0.0
        %3876 = vmatpush.msra.mxu0 0.0
        %3877 = vmatpush.msra.mxu0 0.0
        %3878 = vmatpush.msra.mxu0 0.0
        %3879 = vmatpush.msra.mxu0 0.0
        %3880 = vmatpush.msra.mxu0 0.0
        %v3881 = vand.u32 %v3590, 4294901760
        %3882 = vmatpush.msra.mxu0 %v3881
        %v3883 = vand.u32 %v2104, 4294901760
        %v3884 = vsub.f32 %v2104, %v3883
        %v3885 = vand.u32 %v3884, 4294901760
        %3886 = vmatmul.f32.gmra.mxu0 %v3885
        %v3887 = vpop.f32.mrf.mxu0
        %v3888 = vadd.f32 %v3859, %v3887
        %v3889 = vand.u32 %v2107, 4294901760
        %v3890 = vsub.f32 %v2107, %v3889
        %v3891 = vand.u32 %v3890, 4294901760
        %3892 = vmatmul.f32.gmra.mxu0 %v3891
        %v3893 = vpop.f32.mrf.mxu0
        %v3894 = vadd.f32 %v3864, %v3893
        %3895 = vdwg.mxu0
        %3896 = vmatpush.msra.mxu0 0.0
        %3897 = vmatpush.msra.mxu0 0.0
        %3898 = vmatpush.msra.mxu0 0.0
        %3899 = vmatpush.msra.mxu0 0.0
        %3900 = vmatpush.msra.mxu0 0.0
        %3901 = vmatpush.msra.mxu0 0.0
        %3902 = vmatpush.msra.mxu0 0.0
        %3903 = vmatpush.msra.mxu0 0.0
        %3904 = vmatpush.msra.mxu0 0.0
        %3905 = vmatpush.msra.mxu0 0.0
        %3906 = vmatpush.msra.mxu0 0.0
        %3907 = vmatpush.msra.mxu0 0.0
        %3908 = vmatpush.msra.mxu0 0.0
        %3909 = vmatpush.msra.mxu0 0.0
        %3910 = vmatpush.msra.mxu0 0.0
        %v3911 = vand.u32 %v3590, 4294901760
        %v3912 = vsub.f32 %v3590, %v3911
        %v3913 = vand.u32 %v3912, 4294901760
        %3914 = vmatpush.msra.mxu0 %v3913
        %v3915 = vand.u32 %v2104, 4294901760
        %3916 = vmatmul.f32.gmra.mxu0 %v3915
        %v3917 = vpop.f32.mrf.mxu0
        %v3918 = vadd.f32 %v3888, %v3917
        %v3919 = vand.u32 %v2107, 4294901760
        %3920 = vmatmul.f32.gmra.mxu0 %v3919
        %v3921 = vpop.f32.mrf.mxu0
        %v3922 = vadd.f32 %v3894, %v3921
        %3923 = vdwg.mxu0
        %3924 = vmatpush.msra.mxu0 0.0
        %3925 = vmatpush.msra.mxu0 0.0
        %3926 = vmatpush.msra.mxu0 0.0
        %3927 = vmatpush.msra.mxu0 0.0
        %3928 = vmatpush.msra.mxu0 0.0
        %3929 = vmatpush.msra.mxu0 0.0
        %3930 = vmatpush.msra.mxu0 0.0
        %3931 = vmatpush.msra.mxu0 0.0
        %3932 = vmatpush.msra.mxu0 0.0
        %3933 = vmatpush.msra.mxu0 0.0
        %3934 = vmatpush.msra.mxu0 0.0
        %3935 = vmatpush.msra.mxu0 0.0
        %3936 = vmatpush.msra.mxu0 0.0
        %3937 = vmatpush.msra.mxu0 0.0
        %3938 = vmatpush.msra.mxu0 0.0
        %v3939 = vand.u32 %v3590, 4294901760
        %3940 = vmatpush.msra.mxu0 %v3939
        %v3941 = vand.u32 %v2104, 4294901760
        %3942 = vmatmul.f32.gmra.mxu0 %v3941
        %v3943 = vpop.f32.mrf.mxu0
        %v3944 = vadd.f32 %v3918, %v3943
        %v3945 = vand.u32 %v2107, 4294901760
        %3946 = vmatmul.f32.gmra.mxu0 %v3945
        %v3947 = vpop.f32.mrf.mxu0
        %v3948 = vadd.f32 %v3922, %v3947
        %3949 = vdwg.mxu0
        %s3950 = scalar_lea.vmem %s13, 8
        %v3951 = vld [vmem:[%s3950] sm:$0xff]
        %v3953 = vsel %vm972, %v3944, 0
        %v3956 = vsel %vm972, %v3948, 0
        %3958 = vmatpush.msra.mxu0 0.0
        %3959 = vmatpush.msra.mxu0 0.0
        %3960 = vmatpush.msra.mxu0 0.0
        %3961 = vmatpush.msra.mxu0 0.0
        %3962 = vmatpush.msra.mxu0 0.0
        %3963 = vmatpush.msra.mxu0 0.0
        %3964 = vmatpush.msra.mxu0 0.0
        %3965 = vmatpush.msra.mxu0 0.0
        %3966 = vmatpush.msra.mxu0 0.0
        %3967 = vmatpush.msra.mxu0 0.0
        %3968 = vmatpush.msra.mxu0 0.0
        %3969 = vmatpush.msra.mxu0 0.0
        %3970 = vmatpush.msra.mxu0 0.0
        %3971 = vmatpush.msra.mxu0 0.0
        %3972 = vmatpush.msra.mxu0 0.0
        %v3973 = vand.u32 %v3951, 4294901760
        %3974 = vmatpush.msra.mxu0 %v3973
        %v3975 = vand.u32 %v3953, 4294901760
        %v3976 = vsub.f32 %v3953, %v3975
        %v3977 = vand.u32 %v3976, 4294901760
        %v3978 = vsub.f32 %v3976, %v3977
        %v3979 = vand.u32 %v3978, 4294901760
        %3980 = vmatmul.f32.gmra.mxu0 %v3979
        %v3981 = vpop.f32.mrf.mxu0
        %v3982 = vadd.f32 0.0, %v3981
        %v3983 = vand.u32 %v3956, 4294901760
        %v3984 = vsub.f32 %v3956, %v3983
        %v3985 = vand.u32 %v3984, 4294901760
        %v3986 = vsub.f32 %v3984, %v3985
        %v3987 = vand.u32 %v3986, 4294901760
        %3988 = vmatmul.f32.gmra.mxu0 %v3987
        %v3989 = vpop.f32.mrf.mxu0
        %v3990 = vadd.f32 0.0, %v3989
        %3991 = vdwg.mxu0
        %3992 = vmatpush.msra.mxu0 0.0
        %3993 = vmatpush.msra.mxu0 0.0
        %3994 = vmatpush.msra.mxu0 0.0
        %3995 = vmatpush.msra.mxu0 0.0
        %3996 = vmatpush.msra.mxu0 0.0
        %3997 = vmatpush.msra.mxu0 0.0
        %3998 = vmatpush.msra.mxu0 0.0
        %3999 = vmatpush.msra.mxu0 0.0
        %4000 = vmatpush.msra.mxu0 0.0
        %4001 = vmatpush.msra.mxu0 0.0
        %4002 = vmatpush.msra.mxu0 0.0
        %4003 = vmatpush.msra.mxu0 0.0
        %4004 = vmatpush.msra.mxu0 0.0
        %4005 = vmatpush.msra.mxu0 0.0
        %4006 = vmatpush.msra.mxu0 0.0
        %v4007 = vand.u32 %v3951, 4294901760
        %v4008 = vsub.f32 %v3951, %v4007
        %v4009 = vand.u32 %v4008, 4294901760
        %v4010 = vsub.f32 %v4008, %v4009
        %v4011 = vand.u32 %v4010, 4294901760
        %4012 = vmatpush.msra.mxu0 %v4011
        %v4013 = vand.u32 %v3953, 4294901760
        %4014 = vmatmul.f32.gmra.mxu0 %v4013
        %v4015 = vpop.f32.mrf.mxu0
        %v4016 = vadd.f32 %v3982, %v4015
        %v4017 = vand.u32 %v3956, 4294901760
        %4018 = vmatmul.f32.gmra.mxu0 %v4017
        %v4019 = vpop.f32.mrf.mxu0
        %v4020 = vadd.f32 %v3990, %v4019
        %4021 = vdwg.mxu0
        %4022 = vmatpush.msra.mxu0 0.0
        %4023 = vmatpush.msra.mxu0 0.0
        %4024 = vmatpush.msra.mxu0 0.0
        %4025 = vmatpush.msra.mxu0 0.0
        %4026 = vmatpush.msra.mxu0 0.0
        %4027 = vmatpush.msra.mxu0 0.0
        %4028 = vmatpush.msra.mxu0 0.0
        %4029 = vmatpush.msra.mxu0 0.0
        %4030 = vmatpush.msra.mxu0 0.0
        %4031 = vmatpush.msra.mxu0 0.0
        %4032 = vmatpush.msra.mxu0 0.0
        %4033 = vmatpush.msra.mxu0 0.0
        %4034 = vmatpush.msra.mxu0 0.0
        %4035 = vmatpush.msra.mxu0 0.0
        %4036 = vmatpush.msra.mxu0 0.0
        %v4037 = vand.u32 %v3951, 4294901760
        %v4038 = vsub.f32 %v3951, %v4037
        %4039 = vmatpush.msra.mxu0 %v4038
        %v4040 = vand.u32 %v3953, 4294901760
        %v4041 = vsub.f32 %v3953, %v4040
        %4042 = vmatmul.f32.gmra.mxu0 %v4041
        %v4043 = vpop.f32.mrf.mxu0
        %v4044 = vadd.f32 %v4016, %v4043
        %v4045 = vand.u32 %v3956, 4294901760
        %v4046 = vsub.f32 %v3956, %v4045
        %4047 = vmatmul.f32.gmra.mxu0 %v4046
        %v4048 = vpop.f32.mrf.mxu0
        %v4049 = vadd.f32 %v4020, %v4048
        %4050 = vdwg.mxu0
        %4051 = vmatpush.msra.mxu0 0.0
        %4052 = vmatpush.msra.mxu0 0.0
        %4053 = vmatpush.msra.mxu0 0.0
        %4054 = vmatpush.msra.mxu0 0.0
        %4055 = vmatpush.msra.mxu0 0.0
        %4056 = vmatpush.msra.mxu0 0.0
        %4057 = vmatpush.msra.mxu0 0.0
        %4058 = vmatpush.msra.mxu0 0.0
        %4059 = vmatpush.msra.mxu0 0.0
        %4060 = vmatpush.msra.mxu0 0.0
        %4061 = vmatpush.msra.mxu0 0.0
        %4062 = vmatpush.msra.mxu0 0.0
        %4063 = vmatpush.msra.mxu0 0.0
        %4064 = vmatpush.msra.mxu0 0.0
        %4065 = vmatpush.msra.mxu0 0.0
        %v4066 = vand.u32 %v3951, 4294901760
        %4067 = vmatpush.msra.mxu0 %v4066
        %v4068 = vand.u32 %v3953, 4294901760
        %v4069 = vsub.f32 %v3953, %v4068
        %v4070 = vand.u32 %v4069, 4294901760
        %4071 = vmatmul.f32.gmra.mxu0 %v4070
        %v4072 = vpop.f32.mrf.mxu0
        %v4073 = vadd.f32 %v4044, %v4072
        %v4074 = vand.u32 %v3956, 4294901760
        %v4075 = vsub.f32 %v3956, %v4074
        %v4076 = vand.u32 %v4075, 4294901760
        %4077 = vmatmul.f32.gmra.mxu0 %v4076
        %v4078 = vpop.f32.mrf.mxu0
        %v4079 = vadd.f32 %v4049, %v4078
        %4080 = vdwg.mxu0
        %4081 = vmatpush.msra.mxu0 0.0
        %4082 = vmatpush.msra.mxu0 0.0
        %4083 = vmatpush.msra.mxu0 0.0
        %4084 = vmatpush.msra.mxu0 0.0
        %4085 = vmatpush.msra.mxu0 0.0
        %4086 = vmatpush.msra.mxu0 0.0
        %4087 = vmatpush.msra.mxu0 0.0
        %4088 = vmatpush.msra.mxu0 0.0
        %4089 = vmatpush.msra.mxu0 0.0
        %4090 = vmatpush.msra.mxu0 0.0
        %4091 = vmatpush.msra.mxu0 0.0
        %4092 = vmatpush.msra.mxu0 0.0
        %4093 = vmatpush.msra.mxu0 0.0
        %4094 = vmatpush.msra.mxu0 0.0
        %4095 = vmatpush.msra.mxu0 0.0
        %v4096 = vand.u32 %v3951, 4294901760
        %v4097 = vsub.f32 %v3951, %v4096
        %v4098 = vand.u32 %v4097, 4294901760
        %4099 = vmatpush.msra.mxu0 %v4098
        %v4100 = vand.u32 %v3953, 4294901760
        %4101 = vmatmul.f32.gmra.mxu0 %v4100
        %v4102 = vpop.f32.mrf.mxu0
        %v4103 = vadd.f32 %v4073, %v4102
        %v4104 = vand.u32 %v3956, 4294901760
        %4105 = vmatmul.f32.gmra.mxu0 %v4104
        %v4106 = vpop.f32.mrf.mxu0
        %v4107 = vadd.f32 %v4079, %v4106
        %4108 = vdwg.mxu0
        %4109 = vmatpush.msra.mxu0 0.0
        %4110 = vmatpush.msra.mxu0 0.0
        %4111 = vmatpush.msra.mxu0 0.0
        %4112 = vmatpush.msra.mxu0 0.0
        %4113 = vmatpush.msra.mxu0 0.0
        %4114 = vmatpush.msra.mxu0 0.0
        %4115 = vmatpush.msra.mxu0 0.0
        %4116 = vmatpush.msra.mxu0 0.0
        %4117 = vmatpush.msra.mxu0 0.0
        %4118 = vmatpush.msra.mxu0 0.0
        %4119 = vmatpush.msra.mxu0 0.0
        %4120 = vmatpush.msra.mxu0 0.0
        %4121 = vmatpush.msra.mxu0 0.0
        %4122 = vmatpush.msra.mxu0 0.0
        %4123 = vmatpush.msra.mxu0 0.0
        %v4124 = vand.u32 %v3951, 4294901760
        %4125 = vmatpush.msra.mxu0 %v4124
        %v4126 = vand.u32 %v3953, 4294901760
        %4127 = vmatmul.f32.gmra.mxu0 %v4126
        %v4128 = vpop.f32.mrf.mxu0
        %v4129 = vadd.f32 %v4103, %v4128
        %v4130 = vand.u32 %v3956, 4294901760
        %4131 = vmatmul.f32.gmra.mxu0 %v4130
        %v4132 = vpop.f32.mrf.mxu0
        %v4133 = vadd.f32 %v4107, %v4132
        %4134 = vdwg.mxu0
        %v4136 = vsel %vm972, %v2280, 0
        %v4139 = vsel %vm972, %v2284, 0
        %4141 = vmatpush.msra.mxu0 0.0
        %4142 = vmatpush.msra.mxu0 0.0
        %4143 = vmatpush.msra.mxu0 0.0
        %4144 = vmatpush.msra.mxu0 0.0
        %4145 = vmatpush.msra.mxu0 0.0
        %4146 = vmatpush.msra.mxu0 0.0
        %4147 = vmatpush.msra.mxu0 0.0
        %4148 = vmatpush.msra.mxu0 0.0
        %4149 = vmatpush.msra.mxu0 0.0
        %4150 = vmatpush.msra.mxu0 0.0
        %4151 = vmatpush.msra.mxu0 0.0
        %4152 = vmatpush.msra.mxu0 0.0
        %4153 = vmatpush.msra.mxu0 0.0
        %4154 = vmatpush.msra.mxu0 0.0
        %4155 = vmatpush.msra.mxu0 0.0
        %v4156 = vand.u32 %v2286, 4294901760
        %4157 = vmatpush.msra.mxu0 %v4156
        %v4158 = vand.u32 %v4136, 4294901760
        %v4159 = vsub.f32 %v4136, %v4158
        %v4160 = vand.u32 %v4159, 4294901760
        %v4161 = vsub.f32 %v4159, %v4160
        %v4162 = vand.u32 %v4161, 4294901760
        %4163 = vmatmul.f32.gmra.mxu0 %v4162
        %v4164 = vpop.f32.mrf.mxu0
        %v4165 = vadd.f32 %v4129, %v4164
        %v4166 = vand.u32 %v4139, 4294901760
        %v4167 = vsub.f32 %v4139, %v4166
        %v4168 = vand.u32 %v4167, 4294901760
        %v4169 = vsub.f32 %v4167, %v4168
        %v4170 = vand.u32 %v4169, 4294901760
        %4171 = vmatmul.f32.gmra.mxu0 %v4170
        %v4172 = vpop.f32.mrf.mxu0
        %v4173 = vadd.f32 %v4133, %v4172
        %4174 = vdwg.mxu0
        %4175 = vmatpush.msra.mxu0 0.0
        %4176 = vmatpush.msra.mxu0 0.0
        %4177 = vmatpush.msra.mxu0 0.0
        %4178 = vmatpush.msra.mxu0 0.0
        %4179 = vmatpush.msra.mxu0 0.0
        %4180 = vmatpush.msra.mxu0 0.0
        %4181 = vmatpush.msra.mxu0 0.0
        %4182 = vmatpush.msra.mxu0 0.0
        %4183 = vmatpush.msra.mxu0 0.0
        %4184 = vmatpush.msra.mxu0 0.0
        %4185 = vmatpush.msra.mxu0 0.0
        %4186 = vmatpush.msra.mxu0 0.0
        %4187 = vmatpush.msra.mxu0 0.0
        %4188 = vmatpush.msra.mxu0 0.0
        %4189 = vmatpush.msra.mxu0 0.0
        %v4190 = vand.u32 %v2286, 4294901760
        %v4191 = vsub.f32 %v2286, %v4190
        %v4192 = vand.u32 %v4191, 4294901760
        %v4193 = vsub.f32 %v4191, %v4192
        %v4194 = vand.u32 %v4193, 4294901760
        %4195 = vmatpush.msra.mxu0 %v4194
        %v4196 = vand.u32 %v4136, 4294901760
        %4197 = vmatmul.f32.gmra.mxu0 %v4196
        %v4198 = vpop.f32.mrf.mxu0
        %v4199 = vadd.f32 %v4165, %v4198
        %v4200 = vand.u32 %v4139, 4294901760
        %4201 = vmatmul.f32.gmra.mxu0 %v4200
        %v4202 = vpop.f32.mrf.mxu0
        %v4203 = vadd.f32 %v4173, %v4202
        %4204 = vdwg.mxu0
        %4205 = vmatpush.msra.mxu0 0.0
        %4206 = vmatpush.msra.mxu0 0.0
        %4207 = vmatpush.msra.mxu0 0.0
        %4208 = vmatpush.msra.mxu0 0.0
        %4209 = vmatpush.msra.mxu0 0.0
        %4210 = vmatpush.msra.mxu0 0.0
        %4211 = vmatpush.msra.mxu0 0.0
        %4212 = vmatpush.msra.mxu0 0.0
        %4213 = vmatpush.msra.mxu0 0.0
        %4214 = vmatpush.msra.mxu0 0.0
        %4215 = vmatpush.msra.mxu0 0.0
        %4216 = vmatpush.msra.mxu0 0.0
        %4217 = vmatpush.msra.mxu0 0.0
        %4218 = vmatpush.msra.mxu0 0.0
        %4219 = vmatpush.msra.mxu0 0.0
        %v4220 = vand.u32 %v2286, 4294901760
        %v4221 = vsub.f32 %v2286, %v4220
        %4222 = vmatpush.msra.mxu0 %v4221
        %v4223 = vand.u32 %v4136, 4294901760
        %v4224 = vsub.f32 %v4136, %v4223
        %4225 = vmatmul.f32.gmra.mxu0 %v4224
        %v4226 = vpop.f32.mrf.mxu0
        %v4227 = vadd.f32 %v4199, %v4226
        %v4228 = vand.u32 %v4139, 4294901760
        %v4229 = vsub.f32 %v4139, %v4228
        %4230 = vmatmul.f32.gmra.mxu0 %v4229
        %v4231 = vpop.f32.mrf.mxu0
        %v4232 = vadd.f32 %v4203, %v4231
        %4233 = vdwg.mxu0
        %4234 = vmatpush.msra.mxu0 0.0
        %4235 = vmatpush.msra.mxu0 0.0
        %4236 = vmatpush.msra.mxu0 0.0
        %4237 = vmatpush.msra.mxu0 0.0
        %4238 = vmatpush.msra.mxu0 0.0
        %4239 = vmatpush.msra.mxu0 0.0
        %4240 = vmatpush.msra.mxu0 0.0
        %4241 = vmatpush.msra.mxu0 0.0
        %4242 = vmatpush.msra.mxu0 0.0
        %4243 = vmatpush.msra.mxu0 0.0
        %4244 = vmatpush.msra.mxu0 0.0
        %4245 = vmatpush.msra.mxu0 0.0
        %4246 = vmatpush.msra.mxu0 0.0
        %4247 = vmatpush.msra.mxu0 0.0
        %4248 = vmatpush.msra.mxu0 0.0
        %v4249 = vand.u32 %v2286, 4294901760
        %4250 = vmatpush.msra.mxu0 %v4249
        %v4251 = vand.u32 %v4136, 4294901760
        %v4252 = vsub.f32 %v4136, %v4251
        %v4253 = vand.u32 %v4252, 4294901760
        %4254 = vmatmul.f32.gmra.mxu0 %v4253
        %v4255 = vpop.f32.mrf.mxu0
        %v4256 = vadd.f32 %v4227, %v4255
        %v4257 = vand.u32 %v4139, 4294901760
        %v4258 = vsub.f32 %v4139, %v4257
        %v4259 = vand.u32 %v4258, 4294901760
        %4260 = vmatmul.f32.gmra.mxu0 %v4259
        %v4261 = vpop.f32.mrf.mxu0
        %v4262 = vadd.f32 %v4232, %v4261
        %4263 = vdwg.mxu0
        %4264 = vmatpush.msra.mxu0 0.0
        %4265 = vmatpush.msra.mxu0 0.0
        %4266 = vmatpush.msra.mxu0 0.0
        %4267 = vmatpush.msra.mxu0 0.0
        %4268 = vmatpush.msra.mxu0 0.0
        %4269 = vmatpush.msra.mxu0 0.0
        %4270 = vmatpush.msra.mxu0 0.0
        %4271 = vmatpush.msra.mxu0 0.0
        %4272 = vmatpush.msra.mxu0 0.0
        %4273 = vmatpush.msra.mxu0 0.0
        %4274 = vmatpush.msra.mxu0 0.0
        %4275 = vmatpush.msra.mxu0 0.0
        %4276 = vmatpush.msra.mxu0 0.0
        %4277 = vmatpush.msra.mxu0 0.0
        %4278 = vmatpush.msra.mxu0 0.0
        %v4279 = vand.u32 %v2286, 4294901760
        %v4280 = vsub.f32 %v2286, %v4279
        %v4281 = vand.u32 %v4280, 4294901760
        %4282 = vmatpush.msra.mxu0 %v4281
        %v4283 = vand.u32 %v4136, 4294901760
        %4284 = vmatmul.f32.gmra.mxu0 %v4283
        %v4285 = vpop.f32.mrf.mxu0
        %v4286 = vadd.f32 %v4256, %v4285
        %v4287 = vand.u32 %v4139, 4294901760
        %4288 = vmatmul.f32.gmra.mxu0 %v4287
        %v4289 = vpop.f32.mrf.mxu0
        %v4290 = vadd.f32 %v4262, %v4289
        %4291 = vdwg.mxu0
        %4292 = vmatpush.msra.mxu0 0.0
        %4293 = vmatpush.msra.mxu0 0.0
        %4294 = vmatpush.msra.mxu0 0.0
        %4295 = vmatpush.msra.mxu0 0.0
        %4296 = vmatpush.msra.mxu0 0.0
        %4297 = vmatpush.msra.mxu0 0.0
        %4298 = vmatpush.msra.mxu0 0.0
        %4299 = vmatpush.msra.mxu0 0.0
        %4300 = vmatpush.msra.mxu0 0.0
        %4301 = vmatpush.msra.mxu0 0.0
        %4302 = vmatpush.msra.mxu0 0.0
        %4303 = vmatpush.msra.mxu0 0.0
        %4304 = vmatpush.msra.mxu0 0.0
        %4305 = vmatpush.msra.mxu0 0.0
        %4306 = vmatpush.msra.mxu0 0.0
        %v4307 = vand.u32 %v2286, 4294901760
        %4308 = vmatpush.msra.mxu0 %v4307
        %v4309 = vand.u32 %v4136, 4294901760
        %4310 = vmatmul.f32.gmra.mxu0 %v4309
        %v4311 = vpop.f32.mrf.mxu0
        %v4312 = vadd.f32 %v4286, %v4311
        %v4313 = vand.u32 %v4139, 4294901760
        %4314 = vmatmul.f32.gmra.mxu0 %v4313
        %v4315 = vpop.f32.mrf.mxu0
        %v4316 = vadd.f32 %v4290, %v4315
        %4317 = vdwg.mxu0
        %4318 = vrot.lane.b32.xlu0 %v716, 112
        %v4319 = vpop.permute.xlu0 %4318
        %4320 = vrot.lane.b32.xlu0 %v720, 112
        %v4321 = vpop.permute.xlu0 %4320
        %v4322 = vsel %vm972, %v4319, 0
        %v4324 = vsel %vm972, %v4321, 0
        %4326 = vmatpush.msra.mxu0 0.0
        %4327 = vmatpush.msra.mxu0 0.0
        %4328 = vmatpush.msra.mxu0 0.0
        %4329 = vmatpush.msra.mxu0 0.0
        %4330 = vmatpush.msra.mxu0 0.0
        %4331 = vmatpush.msra.mxu0 0.0
        %4332 = vmatpush.msra.mxu0 0.0
        %4333 = vmatpush.msra.mxu0 0.0
        %4334 = vmatpush.msra.mxu0 0.0
        %4335 = vmatpush.msra.mxu0 0.0
        %4336 = vmatpush.msra.mxu0 0.0
        %4337 = vmatpush.msra.mxu0 0.0
        %4338 = vmatpush.msra.mxu0 0.0
        %4339 = vmatpush.msra.mxu0 0.0
        %4340 = vmatpush.msra.mxu0 0.0
        %v4341 = vand.u32 %v948, 4294901760
        %4342 = vmatpush.msra.mxu0 %v4341
        %v4343 = vand.u32 %v4322, 4294901760
        %v4344 = vsub.f32 %v4322, %v4343
        %v4345 = vand.u32 %v4344, 4294901760
        %v4346 = vsub.f32 %v4344, %v4345
        %v4347 = vand.u32 %v4346, 4294901760
        %4348 = vmatmul.f32.gmra.mxu0 %v4347
        %v4349 = vpop.f32.mrf.mxu0
        %v4350 = vadd.f32 %v970, %v4349
        %v4351 = vand.u32 %v4324, 4294901760
        %v4352 = vsub.f32 %v4324, %v4351
        %v4353 = vand.u32 %v4352, 4294901760
        %v4354 = vsub.f32 %v4352, %v4353
        %v4355 = vand.u32 %v4354, 4294901760
        %4356 = vmatmul.f32.gmra.mxu0 %v4355
        %v4357 = vpop.f32.mrf.mxu0
        %v4358 = vadd.f32 %v970, %v4357
        %4359 = vdwg.mxu0
        %4360 = vmatpush.msra.mxu0 0.0
        %4361 = vmatpush.msra.mxu0 0.0
        %4362 = vmatpush.msra.mxu0 0.0
        %4363 = vmatpush.msra.mxu0 0.0
        %4364 = vmatpush.msra.mxu0 0.0
        %4365 = vmatpush.msra.mxu0 0.0
        %4366 = vmatpush.msra.mxu0 0.0
        %4367 = vmatpush.msra.mxu0 0.0
        %4368 = vmatpush.msra.mxu0 0.0
        %4369 = vmatpush.msra.mxu0 0.0
        %4370 = vmatpush.msra.mxu0 0.0
        %4371 = vmatpush.msra.mxu0 0.0
        %4372 = vmatpush.msra.mxu0 0.0
        %4373 = vmatpush.msra.mxu0 0.0
        %4374 = vmatpush.msra.mxu0 0.0
        %v4375 = vand.u32 %v948, 4294901760
        %v4376 = vsub.f32 %v948, %v4375
        %v4377 = vand.u32 %v4376, 4294901760
        %v4378 = vsub.f32 %v4376, %v4377
        %v4379 = vand.u32 %v4378, 4294901760
        %4380 = vmatpush.msra.mxu0 %v4379
        %v4381 = vand.u32 %v4322, 4294901760
        %4382 = vmatmul.f32.gmra.mxu0 %v4381
        %v4383 = vpop.f32.mrf.mxu0
        %v4384 = vadd.f32 %v4350, %v4383
        %v4385 = vand.u32 %v4324, 4294901760
        %4386 = vmatmul.f32.gmra.mxu0 %v4385
        %v4387 = vpop.f32.mrf.mxu0
        %v4388 = vadd.f32 %v4358, %v4387
        %4389 = vdwg.mxu0
        %4390 = vmatpush.msra.mxu0 0.0
        %4391 = vmatpush.msra.mxu0 0.0
        %4392 = vmatpush.msra.mxu0 0.0
        %4393 = vmatpush.msra.mxu0 0.0
        %4394 = vmatpush.msra.mxu0 0.0
        %4395 = vmatpush.msra.mxu0 0.0
        %4396 = vmatpush.msra.mxu0 0.0
        %4397 = vmatpush.msra.mxu0 0.0
        %4398 = vmatpush.msra.mxu0 0.0
        %4399 = vmatpush.msra.mxu0 0.0
        %4400 = vmatpush.msra.mxu0 0.0
        %4401 = vmatpush.msra.mxu0 0.0
        %4402 = vmatpush.msra.mxu0 0.0
        %4403 = vmatpush.msra.mxu0 0.0
        %4404 = vmatpush.msra.mxu0 0.0
        %v4405 = vand.u32 %v948, 4294901760
        %v4406 = vsub.f32 %v948, %v4405
        %4407 = vmatpush.msra.mxu0 %v4406
        %v4408 = vand.u32 %v4322, 4294901760
        %v4409 = vsub.f32 %v4322, %v4408
        %4410 = vmatmul.f32.gmra.mxu0 %v4409
        %v4411 = vpop.f32.mrf.mxu0
        %v4412 = vadd.f32 %v4384, %v4411
        %v4413 = vand.u32 %v4324, 4294901760
        %v4414 = vsub.f32 %v4324, %v4413
        %4415 = vmatmul.f32.gmra.mxu0 %v4414
        %v4416 = vpop.f32.mrf.mxu0
        %v4417 = vadd.f32 %v4388, %v4416
        %4418 = vdwg.mxu0
        %4419 = vmatpush.msra.mxu0 0.0
        %4420 = vmatpush.msra.mxu0 0.0
        %4421 = vmatpush.msra.mxu0 0.0
        %4422 = vmatpush.msra.mxu0 0.0
        %4423 = vmatpush.msra.mxu0 0.0
        %4424 = vmatpush.msra.mxu0 0.0
        %4425 = vmatpush.msra.mxu0 0.0
        %4426 = vmatpush.msra.mxu0 0.0
        %4427 = vmatpush.msra.mxu0 0.0
        %4428 = vmatpush.msra.mxu0 0.0
        %4429 = vmatpush.msra.mxu0 0.0
        %4430 = vmatpush.msra.mxu0 0.0
        %4431 = vmatpush.msra.mxu0 0.0
        %4432 = vmatpush.msra.mxu0 0.0
        %4433 = vmatpush.msra.mxu0 0.0
        %v4434 = vand.u32 %v948, 4294901760
        %4435 = vmatpush.msra.mxu0 %v4434
        %v4436 = vand.u32 %v4322, 4294901760
        %v4437 = vsub.f32 %v4322, %v4436
        %v4438 = vand.u32 %v4437, 4294901760
        %4439 = vmatmul.f32.gmra.mxu0 %v4438
        %v4440 = vpop.f32.mrf.mxu0
        %v4441 = vadd.f32 %v4412, %v4440
        %v4442 = vand.u32 %v4324, 4294901760
        %v4443 = vsub.f32 %v4324, %v4442
        %v4444 = vand.u32 %v4443, 4294901760
        %4445 = vmatmul.f32.gmra.mxu0 %v4444
        %v4446 = vpop.f32.mrf.mxu0
        %v4447 = vadd.f32 %v4417, %v4446
        %4448 = vdwg.mxu0
        %4449 = vmatpush.msra.mxu0 0.0
        %4450 = vmatpush.msra.mxu0 0.0
        %4451 = vmatpush.msra.mxu0 0.0
        %4452 = vmatpush.msra.mxu0 0.0
        %4453 = vmatpush.msra.mxu0 0.0
        %4454 = vmatpush.msra.mxu0 0.0
        %4455 = vmatpush.msra.mxu0 0.0
        %4456 = vmatpush.msra.mxu0 0.0
        %4457 = vmatpush.msra.mxu0 0.0
        %4458 = vmatpush.msra.mxu0 0.0
        %4459 = vmatpush.msra.mxu0 0.0
        %4460 = vmatpush.msra.mxu0 0.0
        %4461 = vmatpush.msra.mxu0 0.0
        %4462 = vmatpush.msra.mxu0 0.0
        %4463 = vmatpush.msra.mxu0 0.0
        %v4464 = vand.u32 %v948, 4294901760
        %v4465 = vsub.f32 %v948, %v4464
        %v4466 = vand.u32 %v4465, 4294901760
        %4467 = vmatpush.msra.mxu0 %v4466
        %v4468 = vand.u32 %v4322, 4294901760
        %4469 = vmatmul.f32.gmra.mxu0 %v4468
        %v4470 = vpop.f32.mrf.mxu0
        %v4471 = vadd.f32 %v4441, %v4470
        %v4472 = vand.u32 %v4324, 4294901760
        %4473 = vmatmul.f32.gmra.mxu0 %v4472
        %v4474 = vpop.f32.mrf.mxu0
        %v4475 = vadd.f32 %v4447, %v4474
        %4476 = vdwg.mxu0
        %4477 = vmatpush.msra.mxu0 0.0
        %4478 = vmatpush.msra.mxu0 0.0
        %4479 = vmatpush.msra.mxu0 0.0
        %4480 = vmatpush.msra.mxu0 0.0
        %4481 = vmatpush.msra.mxu0 0.0
        %4482 = vmatpush.msra.mxu0 0.0
        %4483 = vmatpush.msra.mxu0 0.0
        %4484 = vmatpush.msra.mxu0 0.0
        %4485 = vmatpush.msra.mxu0 0.0
        %4486 = vmatpush.msra.mxu0 0.0
        %4487 = vmatpush.msra.mxu0 0.0
        %4488 = vmatpush.msra.mxu0 0.0
        %4489 = vmatpush.msra.mxu0 0.0
        %4490 = vmatpush.msra.mxu0 0.0
        %4491 = vmatpush.msra.mxu0 0.0
        %v4492 = vand.u32 %v948, 4294901760
        %4493 = vmatpush.msra.mxu0 %v4492
        %v4494 = vand.u32 %v4322, 4294901760
        %4495 = vmatmul.f32.gmra.mxu0 %v4494
        %v4496 = vpop.f32.mrf.mxu0
        %v4497 = vadd.f32 %v4471, %v4496
        %v4498 = vand.u32 %v4324, 4294901760
        %4499 = vmatmul.f32.gmra.mxu0 %v4498
        %v4500 = vpop.f32.mrf.mxu0
        %v4501 = vadd.f32 %v4475, %v4500
        %4502 = vdwg.mxu0
        %v4503 = vsel %vm1154, %v4497, -inf
        %v4504 = vsel %vm1154, %v4501, -inf
        %v4505 = vmax.f32 %v4503, %v4504
        %v4506 = vrot.slane %v4505, 4
        %v4507 = vmax.f32 %v4505, %v4506
        %v4508 = vrot.slane %v4507, 2
        %v4509 = vmax.f32 %v4507, %v4508
        %v4510 = vrot.slane %v4509, 1
        %v4511 = vmax.f32 %v4509, %v4510
        %v4512 = vsub.f32 %v4497, %v4511
        %v4513 = vsub.f32 %v4501, %v4511
        %v4514 = vmul.f32 %v4512, 1.442695
        %v4515 = vpow.pop %v4514
        %v4516 = vmul.f32 %v4513, 1.442695
        %v4517 = vpow.pop %v4516
        %v4518 = vsel %vm1154, %v4515, 0.0
        %v4519 = vsel %vm1154, %v4517, 0.0
        %v4520 = vadd.f32 %v4518, %v4519
        %v4521 = vrot.slane %v4520, 4
        %v4522 = vadd.f32 %v4520, %v4521
        %v4523 = vrot.slane %v4522, 2
        %v4524 = vadd.f32 %v4522, %v4523
        %v4525 = vrot.slane %v4524, 1
        %v4526 = vadd.f32 %v4524, %v4525
        %v4527 = vrcp.pop %v4526
        %v4528 = vmul.f32 %v4526, %v4527
        %v4529 = vsub.f32 1.0, %v4528
        %v4530 = vmul.f32 %v4527, %v4529
        %v4531 = vadd.f32 %v4527, %v4530
        %vm4532 = vweird.f32 %v4526
        %vm4533 = vweird.f32 %v4527
        %vm4534 = vmor %vm4532, %vm4533
        %v4535 = vsel %vm4534, %v4527, %v4531
        %v4536 = vand.u32 2147483647, %v4526
        %vm4537 = vcmp.eq.f32.partialorder %v4536, 8.507059e+37
        %v4538 = vand.u32 %v4526, 2147483648
        %v4539 = vor.u32 1.1754944e-38, %v4538
        %v4540 = vsel %vm4537, %v4539, %v4535
        %v4541 = vmul.f32 %v4515, %v4540
        %v4542 = vmul.f32 %v4517, %v4540
        %v4543 = vsel %vm1154, %v4541, 0.0
        %4544 = vadd.xlane.f32.xlu0 %v4543
        %v4545 = vpop.xlane.xlu0 %4544
        %v4546 = vsel %vm1154, %v4542, 0.0
        %4547 = vadd.xlane.f32.xlu0 %v4546
        %v4548 = vpop.xlane.xlu0 %4547
        %v4549 = vadd.f32 %v4545, 1e-09
        %v4550 = vadd.f32 %v4548, 1e-09
        %v4551 = vrcp.pop %v4549
        %v4552 = vmul.f32 %v4549, %v4551
        %v4553 = vsub.f32 1.0, %v4552
        %v4554 = vmul.f32 %v4551, %v4553
        %v4555 = vadd.f32 %v4551, %v4554
        %vm4556 = vweird.f32 %v4549
        %vm4557 = vweird.f32 %v4551
        %vm4558 = vmor %vm4556, %vm4557
        %v4559 = vsel %vm4558, %v4551, %v4555
        %v4560 = vand.u32 2147483647, %v4549
        %vm4561 = vcmp.eq.f32.partialorder %v4560, 8.507059e+37
        %v4562 = vand.u32 %v4549, 2147483648
        %v4563 = vor.u32 1.1754944e-38, %v4562
        %v4564 = vsel %vm4561, %v4563, %v4559
        %v4565 = vmul.f32 %v4541, %v4564
        %v4566 = vrcp.pop %v4550
        %v4567 = vmul.f32 %v4550, %v4566
        %v4568 = vsub.f32 1.0, %v4567
        %v4569 = vmul.f32 %v4566, %v4568
        %v4570 = vadd.f32 %v4566, %v4569
        %vm4571 = vweird.f32 %v4550
        %vm4572 = vweird.f32 %v4566
        %vm4573 = vmor %vm4571, %vm4572
        %v4574 = vsel %vm4573, %v4566, %v4570
        %v4575 = vand.u32 2147483647, %v4550
        %vm4576 = vcmp.eq.f32.partialorder %v4575, 8.507059e+37
        %v4577 = vand.u32 %v4550, 2147483648
        %v4578 = vor.u32 1.1754944e-38, %v4577
        %v4579 = vsel %vm4576, %v4578, %v4574
        %v4580 = vmul.f32 %v4542, %v4579
        %v4582 = vsel %vm1154, %v4565, 0
        %v4585 = vsel %vm1154, %v4580, 0
        %4587 = vmatpush.msra.mxu0 0.0
        %4588 = vmatpush.msra.mxu0 0.0
        %4589 = vmatpush.msra.mxu0 0.0
        %4590 = vmatpush.msra.mxu0 0.0
        %4591 = vmatpush.msra.mxu0 0.0
        %4592 = vmatpush.msra.mxu0 0.0
        %4593 = vmatpush.msra.mxu0 0.0
        %4594 = vmatpush.msra.mxu0 0.0
        %v4595 = vand.u32 %v957, 4294901760
        %4596 = vmatpush.msra.mxu0 %v4595
        %v4597 = vand.u32 %v956, 4294901760
        %4598 = vmatpush.msra.mxu0 %v4597
        %v4599 = vand.u32 %v955, 4294901760
        %4600 = vmatpush.msra.mxu0 %v4599
        %v4601 = vand.u32 %v954, 4294901760
        %4602 = vmatpush.msra.mxu0 %v4601
        %v4603 = vand.u32 %v953, 4294901760
        %4604 = vmatpush.msra.mxu0 %v4603
        %v4605 = vand.u32 %v952, 4294901760
        %4606 = vmatpush.msra.mxu0 %v4605
        %v4607 = vand.u32 %v951, 4294901760
        %4608 = vmatpush.msra.mxu0 %v4607
        %v4609 = vand.u32 %v950, 4294901760
        %4610 = vmatpush.msra.mxu0 %v4609
        %v4611 = vand.u32 %v4582, 4294901760
        %v4612 = vsub.f32 %v4582, %v4611
        %v4613 = vand.u32 %v4612, 4294901760
        %v4614 = vsub.f32 %v4612, %v4613
        %v4615 = vand.u32 %v4614, 4294901760
        %4616 = vmatmul.f32.gmra.mxu0 %v4615
        %v4617 = vpop.f32.mrf.mxu0
        %v4618 = vadd.f32 %v1234, %v4617
        %v4619 = vand.u32 %v4585, 4294901760
        %v4620 = vsub.f32 %v4585, %v4619
        %v4621 = vand.u32 %v4620, 4294901760
        %v4622 = vsub.f32 %v4620, %v4621
        %v4623 = vand.u32 %v4622, 4294901760
        %4624 = vmatmul.f32.gmra.mxu0 %v4623
        %v4625 = vpop.f32.mrf.mxu0
        %v4626 = vadd.f32 %v1234, %v4625
        %4627 = vdwg.mxu0
        %4628 = vmatpush.msra.mxu0 0.0
        %4629 = vmatpush.msra.mxu0 0.0
        %4630 = vmatpush.msra.mxu0 0.0
        %4631 = vmatpush.msra.mxu0 0.0
        %4632 = vmatpush.msra.mxu0 0.0
        %4633 = vmatpush.msra.mxu0 0.0
        %4634 = vmatpush.msra.mxu0 0.0
        %4635 = vmatpush.msra.mxu0 0.0
        %v4636 = vand.u32 %v957, 4294901760
        %v4637 = vsub.f32 %v957, %v4636
        %v4638 = vand.u32 %v4637, 4294901760
        %v4639 = vsub.f32 %v4637, %v4638
        %v4640 = vand.u32 %v4639, 4294901760
        %4641 = vmatpush.msra.mxu0 %v4640
        %v4642 = vand.u32 %v956, 4294901760
        %v4643 = vsub.f32 %v956, %v4642
        %v4644 = vand.u32 %v4643, 4294901760
        %v4645 = vsub.f32 %v4643, %v4644
        %v4646 = vand.u32 %v4645, 4294901760
        %4647 = vmatpush.msra.mxu0 %v4646
        %v4648 = vand.u32 %v955, 4294901760
        %v4649 = vsub.f32 %v955, %v4648
        %v4650 = vand.u32 %v4649, 4294901760
        %v4651 = vsub.f32 %v4649, %v4650
        %v4652 = vand.u32 %v4651, 4294901760
        %4653 = vmatpush.msra.mxu0 %v4652
        %v4654 = vand.u32 %v954, 4294901760
        %v4655 = vsub.f32 %v954, %v4654
        %v4656 = vand.u32 %v4655, 4294901760
        %v4657 = vsub.f32 %v4655, %v4656
        %v4658 = vand.u32 %v4657, 4294901760
        %4659 = vmatpush.msra.mxu0 %v4658
        %v4660 = vand.u32 %v953, 4294901760
        %v4661 = vsub.f32 %v953, %v4660
        %v4662 = vand.u32 %v4661, 4294901760
        %v4663 = vsub.f32 %v4661, %v4662
        %v4664 = vand.u32 %v4663, 4294901760
        %4665 = vmatpush.msra.mxu0 %v4664
        %v4666 = vand.u32 %v952, 4294901760
        %v4667 = vsub.f32 %v952, %v4666
        %v4668 = vand.u32 %v4667, 4294901760
        %v4669 = vsub.f32 %v4667, %v4668
        %v4670 = vand.u32 %v4669, 4294901760
        %4671 = vmatpush.msra.mxu0 %v4670
        %v4672 = vand.u32 %v951, 4294901760
        %v4673 = vsub.f32 %v951, %v4672
        %v4674 = vand.u32 %v4673, 4294901760
        %v4675 = vsub.f32 %v4673, %v4674
        %v4676 = vand.u32 %v4675, 4294901760
        %4677 = vmatpush.msra.mxu0 %v4676
        %v4678 = vand.u32 %v950, 4294901760
        %v4679 = vsub.f32 %v950, %v4678
        %v4680 = vand.u32 %v4679, 4294901760
        %v4681 = vsub.f32 %v4679, %v4680
        %v4682 = vand.u32 %v4681, 4294901760
        %4683 = vmatpush.msra.mxu0 %v4682
        %v4684 = vand.u32 %v4582, 4294901760
        %4685 = vmatmul.f32.gmra.mxu0 %v4684
        %v4686 = vpop.f32.mrf.mxu0
        %v4687 = vadd.f32 %v4618, %v4686
        %v4688 = vand.u32 %v4585, 4294901760
        %4689 = vmatmul.f32.gmra.mxu0 %v4688
        %v4690 = vpop.f32.mrf.mxu0
        %v4691 = vadd.f32 %v4626, %v4690
        %4692 = vdwg.mxu0
        %4693 = vmatpush.msra.mxu0 0.0
        %4694 = vmatpush.msra.mxu0 0.0
        %4695 = vmatpush.msra.mxu0 0.0
        %4696 = vmatpush.msra.mxu0 0.0
        %4697 = vmatpush.msra.mxu0 0.0
        %4698 = vmatpush.msra.mxu0 0.0
        %4699 = vmatpush.msra.mxu0 0.0
        %4700 = vmatpush.msra.mxu0 0.0
        %v4701 = vand.u32 %v957, 4294901760
        %v4702 = vsub.f32 %v957, %v4701
        %4703 = vmatpush.msra.mxu0 %v4702
        %v4704 = vand.u32 %v956, 4294901760
        %v4705 = vsub.f32 %v956, %v4704
        %4706 = vmatpush.msra.mxu0 %v4705
        %v4707 = vand.u32 %v955, 4294901760
        %v4708 = vsub.f32 %v955, %v4707
        %4709 = vmatpush.msra.mxu0 %v4708
        %v4710 = vand.u32 %v954, 4294901760
        %v4711 = vsub.f32 %v954, %v4710
        %4712 = vmatpush.msra.mxu0 %v4711
        %v4713 = vand.u32 %v953, 4294901760
        %v4714 = vsub.f32 %v953, %v4713
        %4715 = vmatpush.msra.mxu0 %v4714
        %v4716 = vand.u32 %v952, 4294901760
        %v4717 = vsub.f32 %v952, %v4716
        %4718 = vmatpush.msra.mxu0 %v4717
        %v4719 = vand.u32 %v951, 4294901760
        %v4720 = vsub.f32 %v951, %v4719
        %4721 = vmatpush.msra.mxu0 %v4720
        %v4722 = vand.u32 %v950, 4294901760
        %v4723 = vsub.f32 %v950, %v4722
        %4724 = vmatpush.msra.mxu0 %v4723
        %v4725 = vand.u32 %v4582, 4294901760
        %v4726 = vsub.f32 %v4582, %v4725
        %4727 = vmatmul.f32.gmra.mxu0 %v4726
        %v4728 = vpop.f32.mrf.mxu0
        %v4729 = vadd.f32 %v4687, %v4728
        %v4730 = vand.u32 %v4585, 4294901760
        %v4731 = vsub.f32 %v4585, %v4730
        %4732 = vmatmul.f32.gmra.mxu0 %v4731
        %v4733 = vpop.f32.mrf.mxu0
        %v4734 = vadd.f32 %v4691, %v4733
        %4735 = vdwg.mxu0
        %4736 = vmatpush.msra.mxu0 0.0
        %4737 = vmatpush.msra.mxu0 0.0
        %4738 = vmatpush.msra.mxu0 0.0
        %4739 = vmatpush.msra.mxu0 0.0
        %4740 = vmatpush.msra.mxu0 0.0
        %4741 = vmatpush.msra.mxu0 0.0
        %4742 = vmatpush.msra.mxu0 0.0
        %4743 = vmatpush.msra.mxu0 0.0
        %v4744 = vand.u32 %v957, 4294901760
        %4745 = vmatpush.msra.mxu0 %v4744
        %v4746 = vand.u32 %v956, 4294901760
        %4747 = vmatpush.msra.mxu0 %v4746
        %v4748 = vand.u32 %v955, 4294901760
        %4749 = vmatpush.msra.mxu0 %v4748
        %v4750 = vand.u32 %v954, 4294901760
        %4751 = vmatpush.msra.mxu0 %v4750
        %v4752 = vand.u32 %v953, 4294901760
        %4753 = vmatpush.msra.mxu0 %v4752
        %v4754 = vand.u32 %v952, 4294901760
        %4755 = vmatpush.msra.mxu0 %v4754
        %v4756 = vand.u32 %v951, 4294901760
        %4757 = vmatpush.msra.mxu0 %v4756
        %v4758 = vand.u32 %v950, 4294901760
        %4759 = vmatpush.msra.mxu0 %v4758
        %v4760 = vand.u32 %v4582, 4294901760
        %v4761 = vsub.f32 %v4582, %v4760
        %v4762 = vand.u32 %v4761, 4294901760
        %4763 = vmatmul.f32.gmra.mxu0 %v4762
        %v4764 = vpop.f32.mrf.mxu0
        %v4765 = vadd.f32 %v4729, %v4764
        %v4766 = vand.u32 %v4585, 4294901760
        %v4767 = vsub.f32 %v4585, %v4766
        %v4768 = vand.u32 %v4767, 4294901760
        %4769 = vmatmul.f32.gmra.mxu0 %v4768
        %v4770 = vpop.f32.mrf.mxu0
        %v4771 = vadd.f32 %v4734, %v4770
        %4772 = vdwg.mxu0
        %4773 = vmatpush.msra.mxu0 0.0
        %4774 = vmatpush.msra.mxu0 0.0
        %4775 = vmatpush.msra.mxu0 0.0
        %4776 = vmatpush.msra.mxu0 0.0
        %4777 = vmatpush.msra.mxu0 0.0
        %4778 = vmatpush.msra.mxu0 0.0
        %4779 = vmatpush.msra.mxu0 0.0
        %4780 = vmatpush.msra.mxu0 0.0
        %v4781 = vand.u32 %v957, 4294901760
        %v4782 = vsub.f32 %v957, %v4781
        %v4783 = vand.u32 %v4782, 4294901760
        %4784 = vmatpush.msra.mxu0 %v4783
        %v4785 = vand.u32 %v956, 4294901760
        %v4786 = vsub.f32 %v956, %v4785
        %v4787 = vand.u32 %v4786, 4294901760
        %4788 = vmatpush.msra.mxu0 %v4787
        %v4789 = vand.u32 %v955, 4294901760
        %v4790 = vsub.f32 %v955, %v4789
        %v4791 = vand.u32 %v4790, 4294901760
        %4792 = vmatpush.msra.mxu0 %v4791
        %v4793 = vand.u32 %v954, 4294901760
        %v4794 = vsub.f32 %v954, %v4793
        %v4795 = vand.u32 %v4794, 4294901760
        %4796 = vmatpush.msra.mxu0 %v4795
        %v4797 = vand.u32 %v953, 4294901760
        %v4798 = vsub.f32 %v953, %v4797
        %v4799 = vand.u32 %v4798, 4294901760
        %4800 = vmatpush.msra.mxu0 %v4799
        %v4801 = vand.u32 %v952, 4294901760
        %v4802 = vsub.f32 %v952, %v4801
        %v4803 = vand.u32 %v4802, 4294901760
        %4804 = vmatpush.msra.mxu0 %v4803
        %v4805 = vand.u32 %v951, 4294901760
        %v4806 = vsub.f32 %v951, %v4805
        %v4807 = vand.u32 %v4806, 4294901760
        %4808 = vmatpush.msra.mxu0 %v4807
        %v4809 = vand.u32 %v950, 4294901760
        %v4810 = vsub.f32 %v950, %v4809
        %v4811 = vand.u32 %v4810, 4294901760
        %4812 = vmatpush.msra.mxu0 %v4811
        %v4813 = vand.u32 %v4582, 4294901760
        %4814 = vmatmul.f32.gmra.mxu0 %v4813
        %v4815 = vpop.f32.mrf.mxu0
        %v4816 = vadd.f32 %v4765, %v4815
        %v4817 = vand.u32 %v4585, 4294901760
        %4818 = vmatmul.f32.gmra.mxu0 %v4817
        %v4819 = vpop.f32.mrf.mxu0
        %v4820 = vadd.f32 %v4771, %v4819
        %4821 = vdwg.mxu0
        %4822 = vmatpush.msra.mxu0 0.0
        %4823 = vmatpush.msra.mxu0 0.0
        %4824 = vmatpush.msra.mxu0 0.0
        %4825 = vmatpush.msra.mxu0 0.0
        %4826 = vmatpush.msra.mxu0 0.0
        %4827 = vmatpush.msra.mxu0 0.0
        %4828 = vmatpush.msra.mxu0 0.0
        %4829 = vmatpush.msra.mxu0 0.0
        %v4830 = vand.u32 %v957, 4294901760
        %4831 = vmatpush.msra.mxu0 %v4830
        %v4832 = vand.u32 %v956, 4294901760
        %4833 = vmatpush.msra.mxu0 %v4832
        %v4834 = vand.u32 %v955, 4294901760
        %4835 = vmatpush.msra.mxu0 %v4834
        %v4836 = vand.u32 %v954, 4294901760
        %4837 = vmatpush.msra.mxu0 %v4836
        %v4838 = vand.u32 %v953, 4294901760
        %4839 = vmatpush.msra.mxu0 %v4838
        %v4840 = vand.u32 %v952, 4294901760
        %4841 = vmatpush.msra.mxu0 %v4840
        %v4842 = vand.u32 %v951, 4294901760
        %4843 = vmatpush.msra.mxu0 %v4842
        %v4844 = vand.u32 %v950, 4294901760
        %4845 = vmatpush.msra.mxu0 %v4844
        %v4846 = vand.u32 %v4582, 4294901760
        %4847 = vmatmul.f32.gmra.mxu0 %v4846
        %v4848 = vpop.f32.mrf.mxu0
        %v4849 = vadd.f32 %v4816, %v4848
        %v4850 = vand.u32 %v4585, 4294901760
        %4851 = vmatmul.f32.gmra.mxu0 %v4850
        %v4852 = vpop.f32.mrf.mxu0
        %v4853 = vadd.f32 %v4820, %v4852
        %4854 = vdwg.mxu0
        %v4856 = vsel %vm972, %v4849, 0
        %v4859 = vsel %vm972, %v4853, 0
        %4861 = vmatpush.msra.mxu0 0.0
        %4862 = vmatpush.msra.mxu0 0.0
        %4863 = vmatpush.msra.mxu0 0.0
        %4864 = vmatpush.msra.mxu0 0.0
        %4865 = vmatpush.msra.mxu0 0.0
        %4866 = vmatpush.msra.mxu0 0.0
        %4867 = vmatpush.msra.mxu0 0.0
        %4868 = vmatpush.msra.mxu0 0.0
        %4869 = vmatpush.msra.mxu0 0.0
        %4870 = vmatpush.msra.mxu0 0.0
        %4871 = vmatpush.msra.mxu0 0.0
        %4872 = vmatpush.msra.mxu0 0.0
        %4873 = vmatpush.msra.mxu0 0.0
        %4874 = vmatpush.msra.mxu0 0.0
        %4875 = vmatpush.msra.mxu0 0.0
        %v4876 = vand.u32 %v966, 4294901760
        %4877 = vmatpush.msra.mxu0 %v4876
        %v4878 = vand.u32 %v4856, 4294901760
        %v4879 = vsub.f32 %v4856, %v4878
        %v4880 = vand.u32 %v4879, 4294901760
        %v4881 = vsub.f32 %v4879, %v4880
        %v4882 = vand.u32 %v4881, 4294901760
        %4883 = vmatmul.f32.gmra.mxu0 %v4882
        %v4884 = vpop.f32.mrf.mxu0
        %v4885 = vadd.f32 0.0, %v4884
        %v4886 = vand.u32 %v4859, 4294901760
        %v4887 = vsub.f32 %v4859, %v4886
        %v4888 = vand.u32 %v4887, 4294901760
        %v4889 = vsub.f32 %v4887, %v4888
        %v4890 = vand.u32 %v4889, 4294901760
        %4891 = vmatmul.f32.gmra.mxu0 %v4890
        %v4892 = vpop.f32.mrf.mxu0
        %v4893 = vadd.f32 0.0, %v4892
        %4894 = vdwg.mxu0
        %4895 = vmatpush.msra.mxu0 0.0
        %4896 = vmatpush.msra.mxu0 0.0
        %4897 = vmatpush.msra.mxu0 0.0
        %4898 = vmatpush.msra.mxu0 0.0
        %4899 = vmatpush.msra.mxu0 0.0
        %4900 = vmatpush.msra.mxu0 0.0
        %4901 = vmatpush.msra.mxu0 0.0
        %4902 = vmatpush.msra.mxu0 0.0
        %4903 = vmatpush.msra.mxu0 0.0
        %4904 = vmatpush.msra.mxu0 0.0
        %4905 = vmatpush.msra.mxu0 0.0
        %4906 = vmatpush.msra.mxu0 0.0
        %4907 = vmatpush.msra.mxu0 0.0
        %4908 = vmatpush.msra.mxu0 0.0
        %4909 = vmatpush.msra.mxu0 0.0
        %v4910 = vand.u32 %v966, 4294901760
        %v4911 = vsub.f32 %v966, %v4910
        %v4912 = vand.u32 %v4911, 4294901760
        %v4913 = vsub.f32 %v4911, %v4912
        %v4914 = vand.u32 %v4913, 4294901760
        %4915 = vmatpush.msra.mxu0 %v4914
        %v4916 = vand.u32 %v4856, 4294901760
        %4917 = vmatmul.f32.gmra.mxu0 %v4916
        %v4918 = vpop.f32.mrf.mxu0
        %v4919 = vadd.f32 %v4885, %v4918
        %v4920 = vand.u32 %v4859, 4294901760
        %4921 = vmatmul.f32.gmra.mxu0 %v4920
        %v4922 = vpop.f32.mrf.mxu0
        %v4923 = vadd.f32 %v4893, %v4922
        %4924 = vdwg.mxu0
        %4925 = vmatpush.msra.mxu0 0.0
        %4926 = vmatpush.msra.mxu0 0.0
        %4927 = vmatpush.msra.mxu0 0.0
        %4928 = vmatpush.msra.mxu0 0.0
        %4929 = vmatpush.msra.mxu0 0.0
        %4930 = vmatpush.msra.mxu0 0.0
        %4931 = vmatpush.msra.mxu0 0.0
        %4932 = vmatpush.msra.mxu0 0.0
        %4933 = vmatpush.msra.mxu0 0.0
        %4934 = vmatpush.msra.mxu0 0.0
        %4935 = vmatpush.msra.mxu0 0.0
        %4936 = vmatpush.msra.mxu0 0.0
        %4937 = vmatpush.msra.mxu0 0.0
        %4938 = vmatpush.msra.mxu0 0.0
        %4939 = vmatpush.msra.mxu0 0.0
        %v4940 = vand.u32 %v966, 4294901760
        %v4941 = vsub.f32 %v966, %v4940
        %4942 = vmatpush.msra.mxu0 %v4941
        %v4943 = vand.u32 %v4856, 4294901760
        %v4944 = vsub.f32 %v4856, %v4943
        %4945 = vmatmul.f32.gmra.mxu0 %v4944
        %v4946 = vpop.f32.mrf.mxu0
        %v4947 = vadd.f32 %v4919, %v4946
        %v4948 = vand.u32 %v4859, 4294901760
        %v4949 = vsub.f32 %v4859, %v4948
        %4950 = vmatmul.f32.gmra.mxu0 %v4949
        %v4951 = vpop.f32.mrf.mxu0
        %v4952 = vadd.f32 %v4923, %v4951
        %4953 = vdwg.mxu0
        %4954 = vmatpush.msra.mxu0 0.0
        %4955 = vmatpush.msra.mxu0 0.0
        %4956 = vmatpush.msra.mxu0 0.0
        %4957 = vmatpush.msra.mxu0 0.0
        %4958 = vmatpush.msra.mxu0 0.0
        %4959 = vmatpush.msra.mxu0 0.0
        %4960 = vmatpush.msra.mxu0 0.0
        %4961 = vmatpush.msra.mxu0 0.0
        %4962 = vmatpush.msra.mxu0 0.0
        %4963 = vmatpush.msra.mxu0 0.0
        %4964 = vmatpush.msra.mxu0 0.0
        %4965 = vmatpush.msra.mxu0 0.0
        %4966 = vmatpush.msra.mxu0 0.0
        %4967 = vmatpush.msra.mxu0 0.0
        %4968 = vmatpush.msra.mxu0 0.0
        %v4969 = vand.u32 %v966, 4294901760
        %4970 = vmatpush.msra.mxu0 %v4969
        %v4971 = vand.u32 %v4856, 4294901760
        %v4972 = vsub.f32 %v4856, %v4971
        %v4973 = vand.u32 %v4972, 4294901760
        %4974 = vmatmul.f32.gmra.mxu0 %v4973
        %v4975 = vpop.f32.mrf.mxu0
        %v4976 = vadd.f32 %v4947, %v4975
        %v4977 = vand.u32 %v4859, 4294901760
        %v4978 = vsub.f32 %v4859, %v4977
        %v4979 = vand.u32 %v4978, 4294901760
        %4980 = vmatmul.f32.gmra.mxu0 %v4979
        %v4981 = vpop.f32.mrf.mxu0
        %v4982 = vadd.f32 %v4952, %v4981
        %4983 = vdwg.mxu0
        %4984 = vmatpush.msra.mxu0 0.0
        %4985 = vmatpush.msra.mxu0 0.0
        %4986 = vmatpush.msra.mxu0 0.0
        %4987 = vmatpush.msra.mxu0 0.0
        %4988 = vmatpush.msra.mxu0 0.0
        %4989 = vmatpush.msra.mxu0 0.0
        %4990 = vmatpush.msra.mxu0 0.0
        %4991 = vmatpush.msra.mxu0 0.0
        %4992 = vmatpush.msra.mxu0 0.0
        %4993 = vmatpush.msra.mxu0 0.0
        %4994 = vmatpush.msra.mxu0 0.0
        %4995 = vmatpush.msra.mxu0 0.0
        %4996 = vmatpush.msra.mxu0 0.0
        %4997 = vmatpush.msra.mxu0 0.0
        %4998 = vmatpush.msra.mxu0 0.0
        %v4999 = vand.u32 %v966, 4294901760
        %v5000 = vsub.f32 %v966, %v4999
        %v5001 = vand.u32 %v5000, 4294901760
        %5002 = vmatpush.msra.mxu0 %v5001
        %v5003 = vand.u32 %v4856, 4294901760
        %5004 = vmatmul.f32.gmra.mxu0 %v5003
        %v5005 = vpop.f32.mrf.mxu0
        %v5006 = vadd.f32 %v4976, %v5005
        %v5007 = vand.u32 %v4859, 4294901760
        %5008 = vmatmul.f32.gmra.mxu0 %v5007
        %v5009 = vpop.f32.mrf.mxu0
        %v5010 = vadd.f32 %v4982, %v5009
        %5011 = vdwg.mxu0
        %5012 = vmatpush.msra.mxu0 0.0
        %5013 = vmatpush.msra.mxu0 0.0
        %5014 = vmatpush.msra.mxu0 0.0
        %5015 = vmatpush.msra.mxu0 0.0
        %5016 = vmatpush.msra.mxu0 0.0
        %5017 = vmatpush.msra.mxu0 0.0
        %5018 = vmatpush.msra.mxu0 0.0
        %5019 = vmatpush.msra.mxu0 0.0
        %5020 = vmatpush.msra.mxu0 0.0
        %5021 = vmatpush.msra.mxu0 0.0
        %5022 = vmatpush.msra.mxu0 0.0
        %5023 = vmatpush.msra.mxu0 0.0
        %5024 = vmatpush.msra.mxu0 0.0
        %5025 = vmatpush.msra.mxu0 0.0
        %5026 = vmatpush.msra.mxu0 0.0
        %v5027 = vand.u32 %v966, 4294901760
        %5028 = vmatpush.msra.mxu0 %v5027
        %v5029 = vand.u32 %v4856, 4294901760
        %5030 = vmatmul.f32.gmra.mxu0 %v5029
        %v5031 = vpop.f32.mrf.mxu0
        %v5032 = vadd.f32 %v5006, %v5031
        %v5033 = vand.u32 %v4859, 4294901760
        %5034 = vmatmul.f32.gmra.mxu0 %v5033
        %v5035 = vpop.f32.mrf.mxu0
        %v5036 = vadd.f32 %v5010, %v5035
        %5037 = vdwg.mxu0
        %v5038 = vadd.f32 %v3184, %v5032
        %v5039 = vadd.f32 %v3188, %v5036
        %5040 = vrot.lane.b32.xlu0 %v942, 112
        %v5041 = vpop.permute.xlu0 %5040
        %5042 = vrot.lane.b32.xlu0 %v946, 112
        %v5043 = vpop.permute.xlu0 %5042
        %5046 = vxpose.xlu0.b32.start [1/16] %v5041, 128
        %5047 = vxpose.xlu0.b32.cont [2/16] %v5043, 128
        %5048 = vxpose.xlu0.b32.cont [3/16] 0.0, 128
        %5049 = vxpose.xlu0.b32.cont [4/16] 0.0, 128
        %5050 = vxpose.xlu0.b32.cont [5/16] 0.0, 128
        %5051 = vxpose.xlu0.b32.cont [6/16] 0.0, 128
        %5052 = vxpose.xlu0.b32.cont [7/16] 0.0, 128
        %5053 = vxpose.xlu0.b32.cont [8/16] 0.0, 128
        %5054 = vxpose.xlu0.b32.cont [9/16] 0.0, 128
        %5055 = vxpose.xlu0.b32.cont [10/16] 0.0, 128
        %5056 = vxpose.xlu0.b32.cont [11/16] 0.0, 128
        %5057 = vxpose.xlu0.b32.cont [12/16] 0.0, 128
        %5058 = vxpose.xlu0.b32.cont [13/16] 0.0, 128
        %5059 = vxpose.xlu0.b32.cont [14/16] 0.0, 128
        %5060 = vxpose.xlu0.b32.cont [15/16] 0.0, 128
        %5061 = vxpose.xlu0.b32.end [16/16] 0.0, 128
        %v5062 = vpop.trf.xlu0
        %v5063 = vpop.trf.xlu0
        %v5064 = vpop.trf.xlu0
        %v5065 = vpop.trf.xlu0
        %v5066 = vpop.trf.xlu0
        %v5067 = vpop.trf.xlu0
        %v5068 = vpop.trf.xlu0
        %v5069 = vpop.trf.xlu0
        %v5070 = vpop.trf.xlu0
        %v5071 = vpop.trf.xlu0
        %v5072 = vpop.trf.xlu0
        %v5073 = vpop.trf.xlu0
        %v5074 = vpop.trf.xlu0
        %v5075 = vpop.trf.xlu0
        %v5076 = vpop.trf.xlu0
        %v5077 = vpop.trf.xlu0
        %v5079 = vsel %vm1545, %v5062, 0
        %5081 = vmatpush.msra.mxu0 0.0
        %5082 = vmatpush.msra.mxu0 0.0
        %5083 = vmatpush.msra.mxu0 0.0
        %5084 = vmatpush.msra.mxu0 0.0
        %5085 = vmatpush.msra.mxu0 0.0
        %5086 = vmatpush.msra.mxu0 0.0
        %5087 = vmatpush.msra.mxu0 0.0
        %5088 = vmatpush.msra.mxu0 0.0
        %5089 = vmatpush.msra.mxu0 0.0
        %5090 = vmatpush.msra.mxu0 0.0
        %5091 = vmatpush.msra.mxu0 0.0
        %5092 = vmatpush.msra.mxu0 0.0
        %5093 = vmatpush.msra.mxu0 0.0
        %5094 = vmatpush.msra.mxu0 0.0
        %v5095 = vand.u32 %v960, 4294901760
        %5096 = vmatpush.msra.mxu0 %v5095
        %v5097 = vand.u32 %v959, 4294901760
        %5098 = vmatpush.msra.mxu0 %v5097
        %v5099 = vand.u32 %v5079, 4294901760
        %v5100 = vsub.f32 %v5079, %v5099
        %v5101 = vand.u32 %v5100, 4294901760
        %v5102 = vsub.f32 %v5100, %v5101
        %v5103 = vand.u32 %v5102, 4294901760
        %5104 = vmatmul.f32.gmra.mxu0 %v5103
        %v5105 = vpop.f32.mrf.mxu0
        %v5106 = vadd.f32 %v1511, %v5105
        %5107 = vdwg.mxu0
        %5108 = vmatpush.msra.mxu0 0.0
        %5109 = vmatpush.msra.mxu0 0.0
        %5110 = vmatpush.msra.mxu0 0.0
        %5111 = vmatpush.msra.mxu0 0.0
        %5112 = vmatpush.msra.mxu0 0.0
        %5113 = vmatpush.msra.mxu0 0.0
        %5114 = vmatpush.msra.mxu0 0.0
        %5115 = vmatpush.msra.mxu0 0.0
        %5116 = vmatpush.msra.mxu0 0.0
        %5117 = vmatpush.msra.mxu0 0.0
        %5118 = vmatpush.msra.mxu0 0.0
        %5119 = vmatpush.msra.mxu0 0.0
        %5120 = vmatpush.msra.mxu0 0.0
        %5121 = vmatpush.msra.mxu0 0.0
        %v5122 = vand.u32 %v960, 4294901760
        %v5123 = vsub.f32 %v960, %v5122
        %v5124 = vand.u32 %v5123, 4294901760
        %v5125 = vsub.f32 %v5123, %v5124
        %v5126 = vand.u32 %v5125, 4294901760
        %5127 = vmatpush.msra.mxu0 %v5126
        %v5128 = vand.u32 %v959, 4294901760
        %v5129 = vsub.f32 %v959, %v5128
        %v5130 = vand.u32 %v5129, 4294901760
        %v5131 = vsub.f32 %v5129, %v5130
        %v5132 = vand.u32 %v5131, 4294901760
        %5133 = vmatpush.msra.mxu0 %v5132
        %v5134 = vand.u32 %v5079, 4294901760
        %5135 = vmatmul.f32.gmra.mxu0 %v5134
        %v5136 = vpop.f32.mrf.mxu0
        %v5137 = vadd.f32 %v5106, %v5136
        %5138 = vdwg.mxu0
        %5139 = vmatpush.msra.mxu0 0.0
        %5140 = vmatpush.msra.mxu0 0.0
        %5141 = vmatpush.msra.mxu0 0.0
        %5142 = vmatpush.msra.mxu0 0.0
        %5143 = vmatpush.msra.mxu0 0.0
        %5144 = vmatpush.msra.mxu0 0.0
        %5145 = vmatpush.msra.mxu0 0.0
        %5146 = vmatpush.msra.mxu0 0.0
        %5147 = vmatpush.msra.mxu0 0.0
        %5148 = vmatpush.msra.mxu0 0.0
        %5149 = vmatpush.msra.mxu0 0.0
        %5150 = vmatpush.msra.mxu0 0.0
        %5151 = vmatpush.msra.mxu0 0.0
        %5152 = vmatpush.msra.mxu0 0.0
        %v5153 = vand.u32 %v960, 4294901760
        %v5154 = vsub.f32 %v960, %v5153
        %5155 = vmatpush.msra.mxu0 %v5154
        %v5156 = vand.u32 %v959, 4294901760
        %v5157 = vsub.f32 %v959, %v5156
        %5158 = vmatpush.msra.mxu0 %v5157
        %v5159 = vand.u32 %v5079, 4294901760
        %v5160 = vsub.f32 %v5079, %v5159
        %5161 = vmatmul.f32.gmra.mxu0 %v5160
        %v5162 = vpop.f32.mrf.mxu0
        %v5163 = vadd.f32 %v5137, %v5162
        %5164 = vdwg.mxu0
        %5165 = vmatpush.msra.mxu0 0.0
        %5166 = vmatpush.msra.mxu0 0.0
        %5167 = vmatpush.msra.mxu0 0.0
        %5168 = vmatpush.msra.mxu0 0.0
        %5169 = vmatpush.msra.mxu0 0.0
        %5170 = vmatpush.msra.mxu0 0.0
        %5171 = vmatpush.msra.mxu0 0.0
        %5172 = vmatpush.msra.mxu0 0.0
        %5173 = vmatpush.msra.mxu0 0.0
        %5174 = vmatpush.msra.mxu0 0.0
        %5175 = vmatpush.msra.mxu0 0.0
        %5176 = vmatpush.msra.mxu0 0.0
        %5177 = vmatpush.msra.mxu0 0.0
        %5178 = vmatpush.msra.mxu0 0.0
        %v5179 = vand.u32 %v960, 4294901760
        %5180 = vmatpush.msra.mxu0 %v5179
        %v5181 = vand.u32 %v959, 4294901760
        %5182 = vmatpush.msra.mxu0 %v5181
        %v5183 = vand.u32 %v5079, 4294901760
        %v5184 = vsub.f32 %v5079, %v5183
        %v5185 = vand.u32 %v5184, 4294901760
        %5186 = vmatmul.f32.gmra.mxu0 %v5185
        %v5187 = vpop.f32.mrf.mxu0
        %v5188 = vadd.f32 %v5163, %v5187
        %5189 = vdwg.mxu0
        %5190 = vmatpush.msra.mxu0 0.0
        %5191 = vmatpush.msra.mxu0 0.0
        %5192 = vmatpush.msra.mxu0 0.0
        %5193 = vmatpush.msra.mxu0 0.0
        %5194 = vmatpush.msra.mxu0 0.0
        %5195 = vmatpush.msra.mxu0 0.0
        %5196 = vmatpush.msra.mxu0 0.0
        %5197 = vmatpush.msra.mxu0 0.0
        %5198 = vmatpush.msra.mxu0 0.0
        %5199 = vmatpush.msra.mxu0 0.0
        %5200 = vmatpush.msra.mxu0 0.0
        %5201 = vmatpush.msra.mxu0 0.0
        %5202 = vmatpush.msra.mxu0 0.0
        %5203 = vmatpush.msra.mxu0 0.0
        %v5204 = vand.u32 %v960, 4294901760
        %v5205 = vsub.f32 %v960, %v5204
        %v5206 = vand.u32 %v5205, 4294901760
        %5207 = vmatpush.msra.mxu0 %v5206
        %v5208 = vand.u32 %v959, 4294901760
        %v5209 = vsub.f32 %v959, %v5208
        %v5210 = vand.u32 %v5209, 4294901760
        %5211 = vmatpush.msra.mxu0 %v5210
        %v5212 = vand.u32 %v5079, 4294901760
        %5213 = vmatmul.f32.gmra.mxu0 %v5212
        %v5214 = vpop.f32.mrf.mxu0
        %v5215 = vadd.f32 %v5188, %v5214
        %5216 = vdwg.mxu0
        %5217 = vmatpush.msra.mxu0 0.0
        %5218 = vmatpush.msra.mxu0 0.0
        %5219 = vmatpush.msra.mxu0 0.0
        %5220 = vmatpush.msra.mxu0 0.0
        %5221 = vmatpush.msra.mxu0 0.0
        %5222 = vmatpush.msra.mxu0 0.0
        %5223 = vmatpush.msra.mxu0 0.0
        %5224 = vmatpush.msra.mxu0 0.0
        %5225 = vmatpush.msra.mxu0 0.0
        %5226 = vmatpush.msra.mxu0 0.0
        %5227 = vmatpush.msra.mxu0 0.0
        %5228 = vmatpush.msra.mxu0 0.0
        %5229 = vmatpush.msra.mxu0 0.0
        %5230 = vmatpush.msra.mxu0 0.0
        %v5231 = vand.u32 %v960, 4294901760
        %5232 = vmatpush.msra.mxu0 %v5231
        %v5233 = vand.u32 %v959, 4294901760
        %5234 = vmatpush.msra.mxu0 %v5233
        %v5235 = vand.u32 %v5079, 4294901760
        %5236 = vmatmul.f32.gmra.mxu0 %v5235
        %v5237 = vpop.f32.mrf.mxu0
        %v5238 = vadd.f32 %v5215, %v5237
        %5239 = vdwg.mxu0
        %v5240 = vsel %vm972, %v5238, -inf
        %v5241 = vrot.slane %v5240, 4
        %v5242 = vmax.f32 %v5240, %v5241
        %v5243 = vrot.slane %v5242, 2
        %v5244 = vmax.f32 %v5242, %v5243
        %v5245 = vrot.slane %v5244, 1
        %v5246 = vmax.f32 %v5244, %v5245
        %v5247 = vsub.f32 %v5238, %v5246
        %v5248 = vmul.f32 %v5247, 1.442695
        %v5249 = vpow.pop %v5248
        %v5250 = vsel %vm972, %v5249, 0.0
        %v5251 = vrot.slane %v5250, 4
        %v5252 = vadd.f32 %v5250, %v5251
        %v5253 = vrot.slane %v5252, 2
        %v5254 = vadd.f32 %v5252, %v5253
        %v5255 = vrot.slane %v5254, 1
        %v5256 = vadd.f32 %v5254, %v5255
        %v5257 = vrcp.pop %v5256
        %v5258 = vmul.f32 %v5256, %v5257
        %v5259 = vsub.f32 1.0, %v5258
        %v5260 = vmul.f32 %v5257, %v5259
        %v5261 = vadd.f32 %v5257, %v5260
        %vm5262 = vweird.f32 %v5256
        %vm5263 = vweird.f32 %v5257
        %vm5264 = vmor %vm5262, %vm5263
        %v5265 = vsel %vm5264, %v5257, %v5261
        %v5266 = vand.u32 2147483647, %v5256
        %vm5267 = vcmp.eq.f32.partialorder %v5266, 8.507059e+37
        %v5268 = vand.u32 %v5256, 2147483648
        %v5269 = vor.u32 1.1754944e-38, %v5268
        %v5270 = vsel %vm5267, %v5269, %v5265
        %v5271 = vmul.f32 %v5249, %v5270
        %v5272 = vsel %vm972, %v5271, 0.0
        %5273 = vadd.xlane.f32.xlu0 %v5272
        %v5274 = vpop.xlane.xlu0 %5273
        %v5275 = vadd.f32 %v5274, 1e-09
        %v5276 = vrcp.pop %v5275
        %v5277 = vmul.f32 %v5275, %v5276
        %v5278 = vsub.f32 1.0, %v5277
        %v5279 = vmul.f32 %v5276, %v5278
        %v5280 = vadd.f32 %v5276, %v5279
        %vm5281 = vweird.f32 %v5275
        %vm5282 = vweird.f32 %v5276
        %vm5283 = vmor %vm5281, %vm5282
        %v5284 = vsel %vm5283, %v5276, %v5280
        %v5285 = vand.u32 2147483647, %v5275
        %vm5286 = vcmp.eq.f32.partialorder %v5285, 8.507059e+37
        %v5287 = vand.u32 %v5275, 2147483648
        %v5288 = vor.u32 1.1754944e-38, %v5287
        %v5289 = vsel %vm5286, %v5288, %v5284
        %v5290 = vmul.f32 %v5271, %v5289
        %v5292 = vsel %vm972, %v5290, 0
        %5294 = vmatpush.msra.mxu0 0.0
        %5295 = vmatpush.msra.mxu0 0.0
        %5296 = vmatpush.msra.mxu0 0.0
        %5297 = vmatpush.msra.mxu0 0.0
        %5298 = vmatpush.msra.mxu0 0.0
        %5299 = vmatpush.msra.mxu0 0.0
        %5300 = vmatpush.msra.mxu0 0.0
        %5301 = vmatpush.msra.mxu0 0.0
        %5302 = vmatpush.msra.mxu0 0.0
        %5303 = vmatpush.msra.mxu0 0.0
        %5304 = vmatpush.msra.mxu0 0.0
        %5305 = vmatpush.msra.mxu0 0.0
        %5306 = vmatpush.msra.mxu0 0.0
        %5307 = vmatpush.msra.mxu0 0.0
        %5308 = vmatpush.msra.mxu0 0.0
        %v5309 = vand.u32 %v962, 4294901760
        %5310 = vmatpush.msra.mxu0 %v5309
        %v5311 = vand.u32 %v5292, 4294901760
        %v5312 = vsub.f32 %v5292, %v5311
        %v5313 = vand.u32 %v5312, 4294901760
        %v5314 = vsub.f32 %v5312, %v5313
        %v5315 = vand.u32 %v5314, 4294901760
        %5316 = vmatmul.f32.gmra.mxu0 %v5315
        %v5317 = vpop.f32.mrf.mxu0
        %v5318 = vadd.f32 %v1760, %v5317
        %5319 = vdwg.mxu0
        %5320 = vmatpush.msra.mxu0 0.0
        %5321 = vmatpush.msra.mxu0 0.0
        %5322 = vmatpush.msra.mxu0 0.0
        %5323 = vmatpush.msra.mxu0 0.0
        %5324 = vmatpush.msra.mxu0 0.0
        %5325 = vmatpush.msra.mxu0 0.0
        %5326 = vmatpush.msra.mxu0 0.0
        %5327 = vmatpush.msra.mxu0 0.0
        %5328 = vmatpush.msra.mxu0 0.0
        %5329 = vmatpush.msra.mxu0 0.0
        %5330 = vmatpush.msra.mxu0 0.0
        %5331 = vmatpush.msra.mxu0 0.0
        %5332 = vmatpush.msra.mxu0 0.0
        %5333 = vmatpush.msra.mxu0 0.0
        %5334 = vmatpush.msra.mxu0 0.0
        %v5335 = vand.u32 %v962, 4294901760
        %v5336 = vsub.f32 %v962, %v5335
        %v5337 = vand.u32 %v5336, 4294901760
        %v5338 = vsub.f32 %v5336, %v5337
        %v5339 = vand.u32 %v5338, 4294901760
        %5340 = vmatpush.msra.mxu0 %v5339
        %v5341 = vand.u32 %v5292, 4294901760
        %5342 = vmatmul.f32.gmra.mxu0 %v5341
        %v5343 = vpop.f32.mrf.mxu0
        %v5344 = vadd.f32 %v5318, %v5343
        %5345 = vdwg.mxu0
        %5346 = vmatpush.msra.mxu0 0.0
        %5347 = vmatpush.msra.mxu0 0.0
        %5348 = vmatpush.msra.mxu0 0.0
        %5349 = vmatpush.msra.mxu0 0.0
        %5350 = vmatpush.msra.mxu0 0.0
        %5351 = vmatpush.msra.mxu0 0.0
        %5352 = vmatpush.msra.mxu0 0.0
        %5353 = vmatpush.msra.mxu0 0.0
        %5354 = vmatpush.msra.mxu0 0.0
        %5355 = vmatpush.msra.mxu0 0.0
        %5356 = vmatpush.msra.mxu0 0.0
        %5357 = vmatpush.msra.mxu0 0.0
        %5358 = vmatpush.msra.mxu0 0.0
        %5359 = vmatpush.msra.mxu0 0.0
        %5360 = vmatpush.msra.mxu0 0.0
        %v5361 = vand.u32 %v962, 4294901760
        %v5362 = vsub.f32 %v962, %v5361
        %5363 = vmatpush.msra.mxu0 %v5362
        %v5364 = vand.u32 %v5292, 4294901760
        %v5365 = vsub.f32 %v5292, %v5364
        %5366 = vmatmul.f32.gmra.mxu0 %v5365
        %v5367 = vpop.f32.mrf.mxu0
        %v5368 = vadd.f32 %v5344, %v5367
        %5369 = vdwg.mxu0
        %5370 = vmatpush.msra.mxu0 0.0
        %5371 = vmatpush.msra.mxu0 0.0
        %5372 = vmatpush.msra.mxu0 0.0
        %5373 = vmatpush.msra.mxu0 0.0
        %5374 = vmatpush.msra.mxu0 0.0
        %5375 = vmatpush.msra.mxu0 0.0
        %5376 = vmatpush.msra.mxu0 0.0
        %5377 = vmatpush.msra.mxu0 0.0
        %5378 = vmatpush.msra.mxu0 0.0
        %5379 = vmatpush.msra.mxu0 0.0
        %5380 = vmatpush.msra.mxu0 0.0
        %5381 = vmatpush.msra.mxu0 0.0
        %5382 = vmatpush.msra.mxu0 0.0
        %5383 = vmatpush.msra.mxu0 0.0
        %5384 = vmatpush.msra.mxu0 0.0
        %v5385 = vand.u32 %v962, 4294901760
        %5386 = vmatpush.msra.mxu0 %v5385
        %v5387 = vand.u32 %v5292, 4294901760
        %v5388 = vsub.f32 %v5292, %v5387
        %v5389 = vand.u32 %v5388, 4294901760
        %5390 = vmatmul.f32.gmra.mxu0 %v5389
        %v5391 = vpop.f32.mrf.mxu0
        %v5392 = vadd.f32 %v5368, %v5391
        %5393 = vdwg.mxu0
        %5394 = vmatpush.msra.mxu0 0.0
        %5395 = vmatpush.msra.mxu0 0.0
        %5396 = vmatpush.msra.mxu0 0.0
        %5397 = vmatpush.msra.mxu0 0.0
        %5398 = vmatpush.msra.mxu0 0.0
        %5399 = vmatpush.msra.mxu0 0.0
        %5400 = vmatpush.msra.mxu0 0.0
        %5401 = vmatpush.msra.mxu0 0.0
        %5402 = vmatpush.msra.mxu0 0.0
        %5403 = vmatpush.msra.mxu0 0.0
        %5404 = vmatpush.msra.mxu0 0.0
        %5405 = vmatpush.msra.mxu0 0.0
        %5406 = vmatpush.msra.mxu0 0.0
        %5407 = vmatpush.msra.mxu0 0.0
        %5408 = vmatpush.msra.mxu0 0.0
        %v5409 = vand.u32 %v962, 4294901760
        %v5410 = vsub.f32 %v962, %v5409
        %v5411 = vand.u32 %v5410, 4294901760
        %5412 = vmatpush.msra.mxu0 %v5411
        %v5413 = vand.u32 %v5292, 4294901760
        %5414 = vmatmul.f32.gmra.mxu0 %v5413
        %v5415 = vpop.f32.mrf.mxu0
        %v5416 = vadd.f32 %v5392, %v5415
        %5417 = vdwg.mxu0
        %5418 = vmatpush.msra.mxu0 0.0
        %5419 = vmatpush.msra.mxu0 0.0
        %5420 = vmatpush.msra.mxu0 0.0
        %5421 = vmatpush.msra.mxu0 0.0
        %5422 = vmatpush.msra.mxu0 0.0
        %5423 = vmatpush.msra.mxu0 0.0
        %5424 = vmatpush.msra.mxu0 0.0
        %5425 = vmatpush.msra.mxu0 0.0
        %5426 = vmatpush.msra.mxu0 0.0
        %5427 = vmatpush.msra.mxu0 0.0
        %5428 = vmatpush.msra.mxu0 0.0
        %5429 = vmatpush.msra.mxu0 0.0
        %5430 = vmatpush.msra.mxu0 0.0
        %5431 = vmatpush.msra.mxu0 0.0
        %5432 = vmatpush.msra.mxu0 0.0
        %v5433 = vand.u32 %v962, 4294901760
        %5434 = vmatpush.msra.mxu0 %v5433
        %v5435 = vand.u32 %v5292, 4294901760
        %5436 = vmatmul.f32.gmra.mxu0 %v5435
        %v5437 = vpop.f32.mrf.mxu0
        %v5438 = vadd.f32 %v5416, %v5437
        %5439 = vdwg.mxu0
        %5441 = vrot.lane.b32.xlu0 %v5438, 120
        %v5442 = vpop.permute.xlu0 %5441
        %5444 = vmatpush.msra.mxu0 0.0
        %5445 = vmatpush.msra.mxu0 0.0
        %5446 = vmatpush.msra.mxu0 0.0
        %5447 = vmatpush.msra.mxu0 0.0
        %5448 = vmatpush.msra.mxu0 0.0
        %5449 = vmatpush.msra.mxu0 0.0
        %5450 = vmatpush.msra.mxu0 0.0
        %5451 = vmatpush.msra.mxu0 0.0
        %5452 = vmatpush.msra.mxu0 0.0
        %5453 = vmatpush.msra.mxu0 0.0
        %5454 = vmatpush.msra.mxu0 0.0
        %5455 = vmatpush.msra.mxu0 0.0
        %5456 = vmatpush.msra.mxu0 0.0
        %5457 = vmatpush.msra.mxu0 0.0
        %5458 = vmatpush.msra.mxu0 0.0
        %v5459 = vand.u32 %v5442, 4294901760
        %5460 = vmatpush.msra.mxu0 %v5459
        %v5461 = vand.u32 %v1921, 4294901760
        %v5462 = vsub.f32 %v1921, %v5461
        %v5463 = vand.u32 %v5462, 4294901760
        %v5464 = vsub.f32 %v5462, %v5463
        %v5465 = vand.u32 %v5464, 4294901760
        %5466 = vmatmul.f32.gmra.mxu0 %v5465
        %v5467 = vpop.f32.mrf.mxu0
        %v5468 = vadd.f32 0.0, %v5467
        %v5469 = vand.u32 %v1924, 4294901760
        %v5470 = vsub.f32 %v1924, %v5469
        %v5471 = vand.u32 %v5470, 4294901760
        %v5472 = vsub.f32 %v5470, %v5471
        %v5473 = vand.u32 %v5472, 4294901760
        %5474 = vmatmul.f32.gmra.mxu0 %v5473
        %v5475 = vpop.f32.mrf.mxu0
        %v5476 = vadd.f32 0.0, %v5475
        %5477 = vdwg.mxu0
        %5478 = vmatpush.msra.mxu0 0.0
        %5479 = vmatpush.msra.mxu0 0.0
        %5480 = vmatpush.msra.mxu0 0.0
        %5481 = vmatpush.msra.mxu0 0.0
        %5482 = vmatpush.msra.mxu0 0.0
        %5483 = vmatpush.msra.mxu0 0.0
        %5484 = vmatpush.msra.mxu0 0.0
        %5485 = vmatpush.msra.mxu0 0.0
        %5486 = vmatpush.msra.mxu0 0.0
        %5487 = vmatpush.msra.mxu0 0.0
        %5488 = vmatpush.msra.mxu0 0.0
        %5489 = vmatpush.msra.mxu0 0.0
        %5490 = vmatpush.msra.mxu0 0.0
        %5491 = vmatpush.msra.mxu0 0.0
        %5492 = vmatpush.msra.mxu0 0.0
        %v5493 = vand.u32 %v5442, 4294901760
        %v5494 = vsub.f32 %v5442, %v5493
        %v5495 = vand.u32 %v5494, 4294901760
        %v5496 = vsub.f32 %v5494, %v5495
        %v5497 = vand.u32 %v5496, 4294901760
        %5498 = vmatpush.msra.mxu0 %v5497
        %v5499 = vand.u32 %v1921, 4294901760
        %5500 = vmatmul.f32.gmra.mxu0 %v5499
        %v5501 = vpop.f32.mrf.mxu0
        %v5502 = vadd.f32 %v5468, %v5501
        %v5503 = vand.u32 %v1924, 4294901760
        %5504 = vmatmul.f32.gmra.mxu0 %v5503
        %v5505 = vpop.f32.mrf.mxu0
        %v5506 = vadd.f32 %v5476, %v5505
        %5507 = vdwg.mxu0
        %5508 = vmatpush.msra.mxu0 0.0
        %5509 = vmatpush.msra.mxu0 0.0
        %5510 = vmatpush.msra.mxu0 0.0
        %5511 = vmatpush.msra.mxu0 0.0
        %5512 = vmatpush.msra.mxu0 0.0
        %5513 = vmatpush.msra.mxu0 0.0
        %5514 = vmatpush.msra.mxu0 0.0
        %5515 = vmatpush.msra.mxu0 0.0
        %5516 = vmatpush.msra.mxu0 0.0
        %5517 = vmatpush.msra.mxu0 0.0
        %5518 = vmatpush.msra.mxu0 0.0
        %5519 = vmatpush.msra.mxu0 0.0
        %5520 = vmatpush.msra.mxu0 0.0
        %5521 = vmatpush.msra.mxu0 0.0
        %5522 = vmatpush.msra.mxu0 0.0
        %v5523 = vand.u32 %v5442, 4294901760
        %v5524 = vsub.f32 %v5442, %v5523
        %5525 = vmatpush.msra.mxu0 %v5524
        %v5526 = vand.u32 %v1921, 4294901760
        %v5527 = vsub.f32 %v1921, %v5526
        %5528 = vmatmul.f32.gmra.mxu0 %v5527
        %v5529 = vpop.f32.mrf.mxu0
        %v5530 = vadd.f32 %v5502, %v5529
        %v5531 = vand.u32 %v1924, 4294901760
        %v5532 = vsub.f32 %v1924, %v5531
        %5533 = vmatmul.f32.gmra.mxu0 %v5532
        %v5534 = vpop.f32.mrf.mxu0
        %v5535 = vadd.f32 %v5506, %v5534
        %5536 = vdwg.mxu0
        %5537 = vmatpush.msra.mxu0 0.0
        %5538 = vmatpush.msra.mxu0 0.0
        %5539 = vmatpush.msra.mxu0 0.0
        %5540 = vmatpush.msra.mxu0 0.0
        %5541 = vmatpush.msra.mxu0 0.0
        %5542 = vmatpush.msra.mxu0 0.0
        %5543 = vmatpush.msra.mxu0 0.0
        %5544 = vmatpush.msra.mxu0 0.0
        %5545 = vmatpush.msra.mxu0 0.0
        %5546 = vmatpush.msra.mxu0 0.0
        %5547 = vmatpush.msra.mxu0 0.0
        %5548 = vmatpush.msra.mxu0 0.0
        %5549 = vmatpush.msra.mxu0 0.0
        %5550 = vmatpush.msra.mxu0 0.0
        %5551 = vmatpush.msra.mxu0 0.0
        %v5552 = vand.u32 %v5442, 4294901760
        %5553 = vmatpush.msra.mxu0 %v5552
        %v5554 = vand.u32 %v1921, 4294901760
        %v5555 = vsub.f32 %v1921, %v5554
        %v5556 = vand.u32 %v5555, 4294901760
        %5557 = vmatmul.f32.gmra.mxu0 %v5556
        %v5558 = vpop.f32.mrf.mxu0
        %v5559 = vadd.f32 %v5530, %v5558
        %v5560 = vand.u32 %v1924, 4294901760
        %v5561 = vsub.f32 %v1924, %v5560
        %v5562 = vand.u32 %v5561, 4294901760
        %5563 = vmatmul.f32.gmra.mxu0 %v5562
        %v5564 = vpop.f32.mrf.mxu0
        %v5565 = vadd.f32 %v5535, %v5564
        %5566 = vdwg.mxu0
        %5567 = vmatpush.msra.mxu0 0.0
        %5568 = vmatpush.msra.mxu0 0.0
        %5569 = vmatpush.msra.mxu0 0.0
        %5570 = vmatpush.msra.mxu0 0.0
        %5571 = vmatpush.msra.mxu0 0.0
        %5572 = vmatpush.msra.mxu0 0.0
        %5573 = vmatpush.msra.mxu0 0.0
        %5574 = vmatpush.msra.mxu0 0.0
        %5575 = vmatpush.msra.mxu0 0.0
        %5576 = vmatpush.msra.mxu0 0.0
        %5577 = vmatpush.msra.mxu0 0.0
        %5578 = vmatpush.msra.mxu0 0.0
        %5579 = vmatpush.msra.mxu0 0.0
        %5580 = vmatpush.msra.mxu0 0.0
        %5581 = vmatpush.msra.mxu0 0.0
        %v5582 = vand.u32 %v5442, 4294901760
        %v5583 = vsub.f32 %v5442, %v5582
        %v5584 = vand.u32 %v5583, 4294901760
        %5585 = vmatpush.msra.mxu0 %v5584
        %v5586 = vand.u32 %v1921, 4294901760
        %5587 = vmatmul.f32.gmra.mxu0 %v5586
        %v5588 = vpop.f32.mrf.mxu0
        %v5589 = vadd.f32 %v5559, %v5588
        %v5590 = vand.u32 %v1924, 4294901760
        %5591 = vmatmul.f32.gmra.mxu0 %v5590
        %v5592 = vpop.f32.mrf.mxu0
        %v5593 = vadd.f32 %v5565, %v5592
        %5594 = vdwg.mxu0
        %5595 = vmatpush.msra.mxu0 0.0
        %5596 = vmatpush.msra.mxu0 0.0
        %5597 = vmatpush.msra.mxu0 0.0
        %5598 = vmatpush.msra.mxu0 0.0
        %5599 = vmatpush.msra.mxu0 0.0
        %5600 = vmatpush.msra.mxu0 0.0
        %5601 = vmatpush.msra.mxu0 0.0
        %5602 = vmatpush.msra.mxu0 0.0
        %5603 = vmatpush.msra.mxu0 0.0
        %5604 = vmatpush.msra.mxu0 0.0
        %5605 = vmatpush.msra.mxu0 0.0
        %5606 = vmatpush.msra.mxu0 0.0
        %5607 = vmatpush.msra.mxu0 0.0
        %5608 = vmatpush.msra.mxu0 0.0
        %5609 = vmatpush.msra.mxu0 0.0
        %v5610 = vand.u32 %v5442, 4294901760
        %5611 = vmatpush.msra.mxu0 %v5610
        %v5612 = vand.u32 %v1921, 4294901760
        %5613 = vmatmul.f32.gmra.mxu0 %v5612
        %v5614 = vpop.f32.mrf.mxu0
        %v5615 = vadd.f32 %v5589, %v5614
        %v5616 = vand.u32 %v1924, 4294901760
        %5617 = vmatmul.f32.gmra.mxu0 %v5616
        %v5618 = vpop.f32.mrf.mxu0
        %v5619 = vadd.f32 %v5593, %v5618
        %5620 = vdwg.mxu0
        %5621 = vmatpush.msra.mxu0 0.0
        %5622 = vmatpush.msra.mxu0 0.0
        %5623 = vmatpush.msra.mxu0 0.0
        %5624 = vmatpush.msra.mxu0 0.0
        %5625 = vmatpush.msra.mxu0 0.0
        %5626 = vmatpush.msra.mxu0 0.0
        %5627 = vmatpush.msra.mxu0 0.0
        %5628 = vmatpush.msra.mxu0 0.0
        %5629 = vmatpush.msra.mxu0 0.0
        %5630 = vmatpush.msra.mxu0 0.0
        %5631 = vmatpush.msra.mxu0 0.0
        %5632 = vmatpush.msra.mxu0 0.0
        %5633 = vmatpush.msra.mxu0 0.0
        %5634 = vmatpush.msra.mxu0 0.0
        %5635 = vmatpush.msra.mxu0 0.0
        %v5636 = vand.u32 %v5438, 4294901760
        %5637 = vmatpush.msra.mxu0 %v5636
        %v5638 = vand.u32 %v2104, 4294901760
        %v5639 = vsub.f32 %v2104, %v5638
        %v5640 = vand.u32 %v5639, 4294901760
        %v5641 = vsub.f32 %v5639, %v5640
        %v5642 = vand.u32 %v5641, 4294901760
        %5643 = vmatmul.f32.gmra.mxu0 %v5642
        %v5644 = vpop.f32.mrf.mxu0
        %v5645 = vadd.f32 %v5615, %v5644
        %v5646 = vand.u32 %v2107, 4294901760
        %v5647 = vsub.f32 %v2107, %v5646
        %v5648 = vand.u32 %v5647, 4294901760
        %v5649 = vsub.f32 %v5647, %v5648
        %v5650 = vand.u32 %v5649, 4294901760
        %5651 = vmatmul.f32.gmra.mxu0 %v5650
        %v5652 = vpop.f32.mrf.mxu0
        %v5653 = vadd.f32 %v5619, %v5652
        %5654 = vdwg.mxu0
        %5655 = vmatpush.msra.mxu0 0.0
        %5656 = vmatpush.msra.mxu0 0.0
        %5657 = vmatpush.msra.mxu0 0.0
        %5658 = vmatpush.msra.mxu0 0.0
        %5659 = vmatpush.msra.mxu0 0.0
        %5660 = vmatpush.msra.mxu0 0.0
        %5661 = vmatpush.msra.mxu0 0.0
        %5662 = vmatpush.msra.mxu0 0.0
        %5663 = vmatpush.msra.mxu0 0.0
        %5664 = vmatpush.msra.mxu0 0.0
        %5665 = vmatpush.msra.mxu0 0.0
        %5666 = vmatpush.msra.mxu0 0.0
        %5667 = vmatpush.msra.mxu0 0.0
        %5668 = vmatpush.msra.mxu0 0.0
        %5669 = vmatpush.msra.mxu0 0.0
        %v5670 = vand.u32 %v5438, 4294901760
        %v5671 = vsub.f32 %v5438, %v5670
        %v5672 = vand.u32 %v5671, 4294901760
        %v5673 = vsub.f32 %v5671, %v5672
        %v5674 = vand.u32 %v5673, 4294901760
        %5675 = vmatpush.msra.mxu0 %v5674
        %v5676 = vand.u32 %v2104, 4294901760
        %5677 = vmatmul.f32.gmra.mxu0 %v5676
        %v5678 = vpop.f32.mrf.mxu0
        %v5679 = vadd.f32 %v5645, %v5678
        %v5680 = vand.u32 %v2107, 4294901760
        %5681 = vmatmul.f32.gmra.mxu0 %v5680
        %v5682 = vpop.f32.mrf.mxu0
        %v5683 = vadd.f32 %v5653, %v5682
        %5684 = vdwg.mxu0
        %5685 = vmatpush.msra.mxu0 0.0
        %5686 = vmatpush.msra.mxu0 0.0
        %5687 = vmatpush.msra.mxu0 0.0
        %5688 = vmatpush.msra.mxu0 0.0
        %5689 = vmatpush.msra.mxu0 0.0
        %5690 = vmatpush.msra.mxu0 0.0
        %5691 = vmatpush.msra.mxu0 0.0
        %5692 = vmatpush.msra.mxu0 0.0
        %5693 = vmatpush.msra.mxu0 0.0
        %5694 = vmatpush.msra.mxu0 0.0
        %5695 = vmatpush.msra.mxu0 0.0
        %5696 = vmatpush.msra.mxu0 0.0
        %5697 = vmatpush.msra.mxu0 0.0
        %5698 = vmatpush.msra.mxu0 0.0
        %5699 = vmatpush.msra.mxu0 0.0
        %v5700 = vand.u32 %v5438, 4294901760
        %v5701 = vsub.f32 %v5438, %v5700
        %5702 = vmatpush.msra.mxu0 %v5701
        %v5703 = vand.u32 %v2104, 4294901760
        %v5704 = vsub.f32 %v2104, %v5703
        %5705 = vmatmul.f32.gmra.mxu0 %v5704
        %v5706 = vpop.f32.mrf.mxu0
        %v5707 = vadd.f32 %v5679, %v5706
        %v5708 = vand.u32 %v2107, 4294901760
        %v5709 = vsub.f32 %v2107, %v5708
        %5710 = vmatmul.f32.gmra.mxu0 %v5709
        %v5711 = vpop.f32.mrf.mxu0
        %v5712 = vadd.f32 %v5683, %v5711
        %5713 = vdwg.mxu0
        %5714 = vmatpush.msra.mxu0 0.0
        %5715 = vmatpush.msra.mxu0 0.0
        %5716 = vmatpush.msra.mxu0 0.0
        %5717 = vmatpush.msra.mxu0 0.0
        %5718 = vmatpush.msra.mxu0 0.0
        %5719 = vmatpush.msra.mxu0 0.0
        %5720 = vmatpush.msra.mxu0 0.0
        %5721 = vmatpush.msra.mxu0 0.0
        %5722 = vmatpush.msra.mxu0 0.0
        %5723 = vmatpush.msra.mxu0 0.0
        %5724 = vmatpush.msra.mxu0 0.0
        %5725 = vmatpush.msra.mxu0 0.0
        %5726 = vmatpush.msra.mxu0 0.0
        %5727 = vmatpush.msra.mxu0 0.0
        %5728 = vmatpush.msra.mxu0 0.0
        %v5729 = vand.u32 %v5438, 4294901760
        %5730 = vmatpush.msra.mxu0 %v5729
        %v5731 = vand.u32 %v2104, 4294901760
        %v5732 = vsub.f32 %v2104, %v5731
        %v5733 = vand.u32 %v5732, 4294901760
        %5734 = vmatmul.f32.gmra.mxu0 %v5733
        %v5735 = vpop.f32.mrf.mxu0
        %v5736 = vadd.f32 %v5707, %v5735
        %v5737 = vand.u32 %v2107, 4294901760
        %v5738 = vsub.f32 %v2107, %v5737
        %v5739 = vand.u32 %v5738, 4294901760
        %5740 = vmatmul.f32.gmra.mxu0 %v5739
        %v5741 = vpop.f32.mrf.mxu0
        %v5742 = vadd.f32 %v5712, %v5741
        %5743 = vdwg.mxu0
        %5744 = vmatpush.msra.mxu0 0.0
        %5745 = vmatpush.msra.mxu0 0.0
        %5746 = vmatpush.msra.mxu0 0.0
        %5747 = vmatpush.msra.mxu0 0.0
        %5748 = vmatpush.msra.mxu0 0.0
        %5749 = vmatpush.msra.mxu0 0.0
        %5750 = vmatpush.msra.mxu0 0.0
        %5751 = vmatpush.msra.mxu0 0.0
        %5752 = vmatpush.msra.mxu0 0.0
        %5753 = vmatpush.msra.mxu0 0.0
        %5754 = vmatpush.msra.mxu0 0.0
        %5755 = vmatpush.msra.mxu0 0.0
        %5756 = vmatpush.msra.mxu0 0.0
        %5757 = vmatpush.msra.mxu0 0.0
        %5758 = vmatpush.msra.mxu0 0.0
        %v5759 = vand.u32 %v5438, 4294901760
        %v5760 = vsub.f32 %v5438, %v5759
        %v5761 = vand.u32 %v5760, 4294901760
        %5762 = vmatpush.msra.mxu0 %v5761
        %v5763 = vand.u32 %v2104, 4294901760
        %5764 = vmatmul.f32.gmra.mxu0 %v5763
        %v5765 = vpop.f32.mrf.mxu0
        %v5766 = vadd.f32 %v5736, %v5765
        %v5767 = vand.u32 %v2107, 4294901760
        %5768 = vmatmul.f32.gmra.mxu0 %v5767
        %v5769 = vpop.f32.mrf.mxu0
        %v5770 = vadd.f32 %v5742, %v5769
        %5771 = vdwg.mxu0
        %5772 = vmatpush.msra.mxu0 0.0
        %5773 = vmatpush.msra.mxu0 0.0
        %5774 = vmatpush.msra.mxu0 0.0
        %5775 = vmatpush.msra.mxu0 0.0
        %5776 = vmatpush.msra.mxu0 0.0
        %5777 = vmatpush.msra.mxu0 0.0
        %5778 = vmatpush.msra.mxu0 0.0
        %5779 = vmatpush.msra.mxu0 0.0
        %5780 = vmatpush.msra.mxu0 0.0
        %5781 = vmatpush.msra.mxu0 0.0
        %5782 = vmatpush.msra.mxu0 0.0
        %5783 = vmatpush.msra.mxu0 0.0
        %5784 = vmatpush.msra.mxu0 0.0
        %5785 = vmatpush.msra.mxu0 0.0
        %5786 = vmatpush.msra.mxu0 0.0
        %v5787 = vand.u32 %v5438, 4294901760
        %5788 = vmatpush.msra.mxu0 %v5787
        %v5789 = vand.u32 %v2104, 4294901760
        %5790 = vmatmul.f32.gmra.mxu0 %v5789
        %v5791 = vpop.f32.mrf.mxu0
        %v5792 = vadd.f32 %v5766, %v5791
        %v5793 = vand.u32 %v2107, 4294901760
        %5794 = vmatmul.f32.gmra.mxu0 %v5793
        %v5795 = vpop.f32.mrf.mxu0
        %v5796 = vadd.f32 %v5770, %v5795
        %5797 = vdwg.mxu0
        %s5798 = scalar_lea.vmem %s13, 16
        %v5799 = vld [vmem:[%s5798] sm:$0xff]
        %v5801 = vsel %vm972, %v5792, 0
        %v5804 = vsel %vm972, %v5796, 0
        %5806 = vmatpush.msra.mxu0 0.0
        %5807 = vmatpush.msra.mxu0 0.0
        %5808 = vmatpush.msra.mxu0 0.0
        %5809 = vmatpush.msra.mxu0 0.0
        %5810 = vmatpush.msra.mxu0 0.0
        %5811 = vmatpush.msra.mxu0 0.0
        %5812 = vmatpush.msra.mxu0 0.0
        %5813 = vmatpush.msra.mxu0 0.0
        %5814 = vmatpush.msra.mxu0 0.0
        %5815 = vmatpush.msra.mxu0 0.0
        %5816 = vmatpush.msra.mxu0 0.0
        %5817 = vmatpush.msra.mxu0 0.0
        %5818 = vmatpush.msra.mxu0 0.0
        %5819 = vmatpush.msra.mxu0 0.0
        %5820 = vmatpush.msra.mxu0 0.0
        %v5821 = vand.u32 %v5799, 4294901760
        %5822 = vmatpush.msra.mxu0 %v5821
        %v5823 = vand.u32 %v5801, 4294901760
        %v5824 = vsub.f32 %v5801, %v5823
        %v5825 = vand.u32 %v5824, 4294901760
        %v5826 = vsub.f32 %v5824, %v5825
        %v5827 = vand.u32 %v5826, 4294901760
        %5828 = vmatmul.f32.gmra.mxu0 %v5827
        %v5829 = vpop.f32.mrf.mxu0
        %v5830 = vadd.f32 0.0, %v5829
        %v5831 = vand.u32 %v5804, 4294901760
        %v5832 = vsub.f32 %v5804, %v5831
        %v5833 = vand.u32 %v5832, 4294901760
        %v5834 = vsub.f32 %v5832, %v5833
        %v5835 = vand.u32 %v5834, 4294901760
        %5836 = vmatmul.f32.gmra.mxu0 %v5835
        %v5837 = vpop.f32.mrf.mxu0
        %v5838 = vadd.f32 0.0, %v5837
        %5839 = vdwg.mxu0
        %5840 = vmatpush.msra.mxu0 0.0
        %5841 = vmatpush.msra.mxu0 0.0
        %5842 = vmatpush.msra.mxu0 0.0
        %5843 = vmatpush.msra.mxu0 0.0
        %5844 = vmatpush.msra.mxu0 0.0
        %5845 = vmatpush.msra.mxu0 0.0
        %5846 = vmatpush.msra.mxu0 0.0
        %5847 = vmatpush.msra.mxu0 0.0
        %5848 = vmatpush.msra.mxu0 0.0
        %5849 = vmatpush.msra.mxu0 0.0
        %5850 = vmatpush.msra.mxu0 0.0
        %5851 = vmatpush.msra.mxu0 0.0
        %5852 = vmatpush.msra.mxu0 0.0
        %5853 = vmatpush.msra.mxu0 0.0
        %5854 = vmatpush.msra.mxu0 0.0
        %v5855 = vand.u32 %v5799, 4294901760
        %v5856 = vsub.f32 %v5799, %v5855
        %v5857 = vand.u32 %v5856, 4294901760
        %v5858 = vsub.f32 %v5856, %v5857
        %v5859 = vand.u32 %v5858, 4294901760
        %5860 = vmatpush.msra.mxu0 %v5859
        %v5861 = vand.u32 %v5801, 4294901760
        %5862 = vmatmul.f32.gmra.mxu0 %v5861
        %v5863 = vpop.f32.mrf.mxu0
        %v5864 = vadd.f32 %v5830, %v5863
        %v5865 = vand.u32 %v5804, 4294901760
        %5866 = vmatmul.f32.gmra.mxu0 %v5865
        %v5867 = vpop.f32.mrf.mxu0
        %v5868 = vadd.f32 %v5838, %v5867
        %5869 = vdwg.mxu0
        %5870 = vmatpush.msra.mxu0 0.0
        %5871 = vmatpush.msra.mxu0 0.0
        %5872 = vmatpush.msra.mxu0 0.0
        %5873 = vmatpush.msra.mxu0 0.0
        %5874 = vmatpush.msra.mxu0 0.0
        %5875 = vmatpush.msra.mxu0 0.0
        %5876 = vmatpush.msra.mxu0 0.0
        %5877 = vmatpush.msra.mxu0 0.0
        %5878 = vmatpush.msra.mxu0 0.0
        %5879 = vmatpush.msra.mxu0 0.0
        %5880 = vmatpush.msra.mxu0 0.0
        %5881 = vmatpush.msra.mxu0 0.0
        %5882 = vmatpush.msra.mxu0 0.0
        %5883 = vmatpush.msra.mxu0 0.0
        %5884 = vmatpush.msra.mxu0 0.0
        %v5885 = vand.u32 %v5799, 4294901760
        %v5886 = vsub.f32 %v5799, %v5885
        %5887 = vmatpush.msra.mxu0 %v5886
        %v5888 = vand.u32 %v5801, 4294901760
        %v5889 = vsub.f32 %v5801, %v5888
        %5890 = vmatmul.f32.gmra.mxu0 %v5889
        %v5891 = vpop.f32.mrf.mxu0
        %v5892 = vadd.f32 %v5864, %v5891
        %v5893 = vand.u32 %v5804, 4294901760
        %v5894 = vsub.f32 %v5804, %v5893
        %5895 = vmatmul.f32.gmra.mxu0 %v5894
        %v5896 = vpop.f32.mrf.mxu0
        %v5897 = vadd.f32 %v5868, %v5896
        %5898 = vdwg.mxu0
        %5899 = vmatpush.msra.mxu0 0.0
        %5900 = vmatpush.msra.mxu0 0.0
        %5901 = vmatpush.msra.mxu0 0.0
        %5902 = vmatpush.msra.mxu0 0.0
        %5903 = vmatpush.msra.mxu0 0.0
        %5904 = vmatpush.msra.mxu0 0.0
        %5905 = vmatpush.msra.mxu0 0.0
        %5906 = vmatpush.msra.mxu0 0.0
        %5907 = vmatpush.msra.mxu0 0.0
        %5908 = vmatpush.msra.mxu0 0.0
        %5909 = vmatpush.msra.mxu0 0.0
        %5910 = vmatpush.msra.mxu0 0.0
        %5911 = vmatpush.msra.mxu0 0.0
        %5912 = vmatpush.msra.mxu0 0.0
        %5913 = vmatpush.msra.mxu0 0.0
        %v5914 = vand.u32 %v5799, 4294901760
        %5915 = vmatpush.msra.mxu0 %v5914
        %v5916 = vand.u32 %v5801, 4294901760
        %v5917 = vsub.f32 %v5801, %v5916
        %v5918 = vand.u32 %v5917, 4294901760
        %5919 = vmatmul.f32.gmra.mxu0 %v5918
        %v5920 = vpop.f32.mrf.mxu0
        %v5921 = vadd.f32 %v5892, %v5920
        %v5922 = vand.u32 %v5804, 4294901760
        %v5923 = vsub.f32 %v5804, %v5922
        %v5924 = vand.u32 %v5923, 4294901760
        %5925 = vmatmul.f32.gmra.mxu0 %v5924
        %v5926 = vpop.f32.mrf.mxu0
        %v5927 = vadd.f32 %v5897, %v5926
        %5928 = vdwg.mxu0
        %5929 = vmatpush.msra.mxu0 0.0
        %5930 = vmatpush.msra.mxu0 0.0
        %5931 = vmatpush.msra.mxu0 0.0
        %5932 = vmatpush.msra.mxu0 0.0
        %5933 = vmatpush.msra.mxu0 0.0
        %5934 = vmatpush.msra.mxu0 0.0
        %5935 = vmatpush.msra.mxu0 0.0
        %5936 = vmatpush.msra.mxu0 0.0
        %5937 = vmatpush.msra.mxu0 0.0
        %5938 = vmatpush.msra.mxu0 0.0
        %5939 = vmatpush.msra.mxu0 0.0
        %5940 = vmatpush.msra.mxu0 0.0
        %5941 = vmatpush.msra.mxu0 0.0
        %5942 = vmatpush.msra.mxu0 0.0
        %5943 = vmatpush.msra.mxu0 0.0
        %v5944 = vand.u32 %v5799, 4294901760
        %v5945 = vsub.f32 %v5799, %v5944
        %v5946 = vand.u32 %v5945, 4294901760
        %5947 = vmatpush.msra.mxu0 %v5946
        %v5948 = vand.u32 %v5801, 4294901760
        %5949 = vmatmul.f32.gmra.mxu0 %v5948
        %v5950 = vpop.f32.mrf.mxu0
        %v5951 = vadd.f32 %v5921, %v5950
        %v5952 = vand.u32 %v5804, 4294901760
        %5953 = vmatmul.f32.gmra.mxu0 %v5952
        %v5954 = vpop.f32.mrf.mxu0
        %v5955 = vadd.f32 %v5927, %v5954
        %5956 = vdwg.mxu0
        %5957 = vmatpush.msra.mxu0 0.0
        %5958 = vmatpush.msra.mxu0 0.0
        %5959 = vmatpush.msra.mxu0 0.0
        %5960 = vmatpush.msra.mxu0 0.0
        %5961 = vmatpush.msra.mxu0 0.0
        %5962 = vmatpush.msra.mxu0 0.0
        %5963 = vmatpush.msra.mxu0 0.0
        %5964 = vmatpush.msra.mxu0 0.0
        %5965 = vmatpush.msra.mxu0 0.0
        %5966 = vmatpush.msra.mxu0 0.0
        %5967 = vmatpush.msra.mxu0 0.0
        %5968 = vmatpush.msra.mxu0 0.0
        %5969 = vmatpush.msra.mxu0 0.0
        %5970 = vmatpush.msra.mxu0 0.0
        %5971 = vmatpush.msra.mxu0 0.0
        %v5972 = vand.u32 %v5799, 4294901760
        %5973 = vmatpush.msra.mxu0 %v5972
        %v5974 = vand.u32 %v5801, 4294901760
        %5975 = vmatmul.f32.gmra.mxu0 %v5974
        %v5976 = vpop.f32.mrf.mxu0
        %v5977 = vadd.f32 %v5951, %v5976
        %v5978 = vand.u32 %v5804, 4294901760
        %5979 = vmatmul.f32.gmra.mxu0 %v5978
        %v5980 = vpop.f32.mrf.mxu0
        %v5981 = vadd.f32 %v5955, %v5980
        %5982 = vdwg.mxu0
        %v5983 = vadd.f32 %v4312, %v5977
        %v5984 = vadd.f32 %v4316, %v5981
        %5985 = vrot.lane.b32.xlu0 %v716, 104
        %v5986 = vpop.permute.xlu0 %5985
        %5987 = vrot.lane.b32.xlu0 %v720, 104
        %v5988 = vpop.permute.xlu0 %5987
        %v5989 = vsel %vm972, %v5986, 0
        %v5991 = vsel %vm972, %v5988, 0
        %5993 = vmatpush.msra.mxu0 0.0
        %5994 = vmatpush.msra.mxu0 0.0
        %5995 = vmatpush.msra.mxu0 0.0
        %5996 = vmatpush.msra.mxu0 0.0
        %5997 = vmatpush.msra.mxu0 0.0
        %5998 = vmatpush.msra.mxu0 0.0
        %5999 = vmatpush.msra.mxu0 0.0
        %6000 = vmatpush.msra.mxu0 0.0
        %6001 = vmatpush.msra.mxu0 0.0
        %6002 = vmatpush.msra.mxu0 0.0
        %6003 = vmatpush.msra.mxu0 0.0
        %6004 = vmatpush.msra.mxu0 0.0
        %6005 = vmatpush.msra.mxu0 0.0
        %6006 = vmatpush.msra.mxu0 0.0
        %6007 = vmatpush.msra.mxu0 0.0
        %v6008 = vand.u32 %v948, 4294901760
        %6009 = vmatpush.msra.mxu0 %v6008
        %v6010 = vand.u32 %v5989, 4294901760
        %v6011 = vsub.f32 %v5989, %v6010
        %v6012 = vand.u32 %v6011, 4294901760
        %v6013 = vsub.f32 %v6011, %v6012
        %v6014 = vand.u32 %v6013, 4294901760
        %6015 = vmatmul.f32.gmra.mxu0 %v6014
        %v6016 = vpop.f32.mrf.mxu0
        %v6017 = vadd.f32 %v970, %v6016
        %v6018 = vand.u32 %v5991, 4294901760
        %v6019 = vsub.f32 %v5991, %v6018
        %v6020 = vand.u32 %v6019, 4294901760
        %v6021 = vsub.f32 %v6019, %v6020
        %v6022 = vand.u32 %v6021, 4294901760
        %6023 = vmatmul.f32.gmra.mxu0 %v6022
        %v6024 = vpop.f32.mrf.mxu0
        %v6025 = vadd.f32 %v970, %v6024
        %6026 = vdwg.mxu0
        %6027 = vmatpush.msra.mxu0 0.0
        %6028 = vmatpush.msra.mxu0 0.0
        %6029 = vmatpush.msra.mxu0 0.0
        %6030 = vmatpush.msra.mxu0 0.0
        %6031 = vmatpush.msra.mxu0 0.0
        %6032 = vmatpush.msra.mxu0 0.0
        %6033 = vmatpush.msra.mxu0 0.0
        %6034 = vmatpush.msra.mxu0 0.0
        %6035 = vmatpush.msra.mxu0 0.0
        %6036 = vmatpush.msra.mxu0 0.0
        %6037 = vmatpush.msra.mxu0 0.0
        %6038 = vmatpush.msra.mxu0 0.0
        %6039 = vmatpush.msra.mxu0 0.0
        %6040 = vmatpush.msra.mxu0 0.0
        %6041 = vmatpush.msra.mxu0 0.0
        %v6042 = vand.u32 %v948, 4294901760
        %v6043 = vsub.f32 %v948, %v6042
        %v6044 = vand.u32 %v6043, 4294901760
        %v6045 = vsub.f32 %v6043, %v6044
        %v6046 = vand.u32 %v6045, 4294901760
        %6047 = vmatpush.msra.mxu0 %v6046
        %v6048 = vand.u32 %v5989, 4294901760
        %6049 = vmatmul.f32.gmra.mxu0 %v6048
        %v6050 = vpop.f32.mrf.mxu0
        %v6051 = vadd.f32 %v6017, %v6050
        %v6052 = vand.u32 %v5991, 4294901760
        %6053 = vmatmul.f32.gmra.mxu0 %v6052
        %v6054 = vpop.f32.mrf.mxu0
        %v6055 = vadd.f32 %v6025, %v6054
        %6056 = vdwg.mxu0
        %6057 = vmatpush.msra.mxu0 0.0
        %6058 = vmatpush.msra.mxu0 0.0
        %6059 = vmatpush.msra.mxu0 0.0
        %6060 = vmatpush.msra.mxu0 0.0
        %6061 = vmatpush.msra.mxu0 0.0
        %6062 = vmatpush.msra.mxu0 0.0
        %6063 = vmatpush.msra.mxu0 0.0
        %6064 = vmatpush.msra.mxu0 0.0
        %6065 = vmatpush.msra.mxu0 0.0
        %6066 = vmatpush.msra.mxu0 0.0
        %6067 = vmatpush.msra.mxu0 0.0
        %6068 = vmatpush.msra.mxu0 0.0
        %6069 = vmatpush.msra.mxu0 0.0
        %6070 = vmatpush.msra.mxu0 0.0
        %6071 = vmatpush.msra.mxu0 0.0
        %v6072 = vand.u32 %v948, 4294901760
        %v6073 = vsub.f32 %v948, %v6072
        %6074 = vmatpush.msra.mxu0 %v6073
        %v6075 = vand.u32 %v5989, 4294901760
        %v6076 = vsub.f32 %v5989, %v6075
        %6077 = vmatmul.f32.gmra.mxu0 %v6076
        %v6078 = vpop.f32.mrf.mxu0
        %v6079 = vadd.f32 %v6051, %v6078
        %v6080 = vand.u32 %v5991, 4294901760
        %v6081 = vsub.f32 %v5991, %v6080
        %6082 = vmatmul.f32.gmra.mxu0 %v6081
        %v6083 = vpop.f32.mrf.mxu0
        %v6084 = vadd.f32 %v6055, %v6083
        %6085 = vdwg.mxu0
        %6086 = vmatpush.msra.mxu0 0.0
        %6087 = vmatpush.msra.mxu0 0.0
        %6088 = vmatpush.msra.mxu0 0.0
        %6089 = vmatpush.msra.mxu0 0.0
        %6090 = vmatpush.msra.mxu0 0.0
        %6091 = vmatpush.msra.mxu0 0.0
        %6092 = vmatpush.msra.mxu0 0.0
        %6093 = vmatpush.msra.mxu0 0.0
        %6094 = vmatpush.msra.mxu0 0.0
        %6095 = vmatpush.msra.mxu0 0.0
        %6096 = vmatpush.msra.mxu0 0.0
        %6097 = vmatpush.msra.mxu0 0.0
        %6098 = vmatpush.msra.mxu0 0.0
        %6099 = vmatpush.msra.mxu0 0.0
        %6100 = vmatpush.msra.mxu0 0.0
        %v6101 = vand.u32 %v948, 4294901760
        %6102 = vmatpush.msra.mxu0 %v6101
        %v6103 = vand.u32 %v5989, 4294901760
        %v6104 = vsub.f32 %v5989, %v6103
        %v6105 = vand.u32 %v6104, 4294901760
        %6106 = vmatmul.f32.gmra.mxu0 %v6105
        %v6107 = vpop.f32.mrf.mxu0
        %v6108 = vadd.f32 %v6079, %v6107
        %v6109 = vand.u32 %v5991, 4294901760
        %v6110 = vsub.f32 %v5991, %v6109
        %v6111 = vand.u32 %v6110, 4294901760
        %6112 = vmatmul.f32.gmra.mxu0 %v6111
        %v6113 = vpop.f32.mrf.mxu0
        %v6114 = vadd.f32 %v6084, %v6113
        %6115 = vdwg.mxu0
        %6116 = vmatpush.msra.mxu0 0.0
        %6117 = vmatpush.msra.mxu0 0.0
        %6118 = vmatpush.msra.mxu0 0.0
        %6119 = vmatpush.msra.mxu0 0.0
        %6120 = vmatpush.msra.mxu0 0.0
        %6121 = vmatpush.msra.mxu0 0.0
        %6122 = vmatpush.msra.mxu0 0.0
        %6123 = vmatpush.msra.mxu0 0.0
        %6124 = vmatpush.msra.mxu0 0.0
        %6125 = vmatpush.msra.mxu0 0.0
        %6126 = vmatpush.msra.mxu0 0.0
        %6127 = vmatpush.msra.mxu0 0.0
        %6128 = vmatpush.msra.mxu0 0.0
        %6129 = vmatpush.msra.mxu0 0.0
        %6130 = vmatpush.msra.mxu0 0.0
        %v6131 = vand.u32 %v948, 4294901760
        %v6132 = vsub.f32 %v948, %v6131
        %v6133 = vand.u32 %v6132, 4294901760
        %6134 = vmatpush.msra.mxu0 %v6133
        %v6135 = vand.u32 %v5989, 4294901760
        %6136 = vmatmul.f32.gmra.mxu0 %v6135
        %v6137 = vpop.f32.mrf.mxu0
        %v6138 = vadd.f32 %v6108, %v6137
        %v6139 = vand.u32 %v5991, 4294901760
        %6140 = vmatmul.f32.gmra.mxu0 %v6139
        %v6141 = vpop.f32.mrf.mxu0
        %v6142 = vadd.f32 %v6114, %v6141
        %6143 = vdwg.mxu0
        %6144 = vmatpush.msra.mxu0 0.0
        %6145 = vmatpush.msra.mxu0 0.0
        %6146 = vmatpush.msra.mxu0 0.0
        %6147 = vmatpush.msra.mxu0 0.0
        %6148 = vmatpush.msra.mxu0 0.0
        %6149 = vmatpush.msra.mxu0 0.0
        %6150 = vmatpush.msra.mxu0 0.0
        %6151 = vmatpush.msra.mxu0 0.0
        %6152 = vmatpush.msra.mxu0 0.0
        %6153 = vmatpush.msra.mxu0 0.0
        %6154 = vmatpush.msra.mxu0 0.0
        %6155 = vmatpush.msra.mxu0 0.0
        %6156 = vmatpush.msra.mxu0 0.0
        %6157 = vmatpush.msra.mxu0 0.0
        %6158 = vmatpush.msra.mxu0 0.0
        %v6159 = vand.u32 %v948, 4294901760
        %6160 = vmatpush.msra.mxu0 %v6159
        %v6161 = vand.u32 %v5989, 4294901760
        %6162 = vmatmul.f32.gmra.mxu0 %v6161
        %v6163 = vpop.f32.mrf.mxu0
        %v6164 = vadd.f32 %v6138, %v6163
        %v6165 = vand.u32 %v5991, 4294901760
        %6166 = vmatmul.f32.gmra.mxu0 %v6165
        %v6167 = vpop.f32.mrf.mxu0
        %v6168 = vadd.f32 %v6142, %v6167
        %6169 = vdwg.mxu0
        %v6170 = vsel %vm1154, %v6164, -inf
        %v6171 = vsel %vm1154, %v6168, -inf
        %v6172 = vmax.f32 %v6170, %v6171
        %v6173 = vrot.slane %v6172, 4
        %v6174 = vmax.f32 %v6172, %v6173
        %v6175 = vrot.slane %v6174, 2
        %v6176 = vmax.f32 %v6174, %v6175
        %v6177 = vrot.slane %v6176, 1
        %v6178 = vmax.f32 %v6176, %v6177
        %v6179 = vsub.f32 %v6164, %v6178
        %v6180 = vsub.f32 %v6168, %v6178
        %v6181 = vmul.f32 %v6179, 1.442695
        %v6182 = vpow.pop %v6181
        %v6183 = vmul.f32 %v6180, 1.442695
        %v6184 = vpow.pop %v6183
        %v6185 = vsel %vm1154, %v6182, 0.0
        %v6186 = vsel %vm1154, %v6184, 0.0
        %v6187 = vadd.f32 %v6185, %v6186
        %v6188 = vrot.slane %v6187, 4
        %v6189 = vadd.f32 %v6187, %v6188
        %v6190 = vrot.slane %v6189, 2
        %v6191 = vadd.f32 %v6189, %v6190
        %v6192 = vrot.slane %v6191, 1
        %v6193 = vadd.f32 %v6191, %v6192
        %v6194 = vrcp.pop %v6193
        %v6195 = vmul.f32 %v6193, %v6194
        %v6196 = vsub.f32 1.0, %v6195
        %v6197 = vmul.f32 %v6194, %v6196
        %v6198 = vadd.f32 %v6194, %v6197
        %vm6199 = vweird.f32 %v6193
        %vm6200 = vweird.f32 %v6194
        %vm6201 = vmor %vm6199, %vm6200
        %v6202 = vsel %vm6201, %v6194, %v6198
        %v6203 = vand.u32 2147483647, %v6193
        %vm6204 = vcmp.eq.f32.partialorder %v6203, 8.507059e+37
        %v6205 = vand.u32 %v6193, 2147483648
        %v6206 = vor.u32 1.1754944e-38, %v6205
        %v6207 = vsel %vm6204, %v6206, %v6202
        %v6208 = vmul.f32 %v6182, %v6207
        %v6209 = vmul.f32 %v6184, %v6207
        %v6210 = vsel %vm1154, %v6208, 0.0
        %6211 = vadd.xlane.f32.xlu0 %v6210
        %v6212 = vpop.xlane.xlu0 %6211
        %v6213 = vsel %vm1154, %v6209, 0.0
        %6214 = vadd.xlane.f32.xlu0 %v6213
        %v6215 = vpop.xlane.xlu0 %6214
        %v6216 = vadd.f32 %v6212, 1e-09
        %v6217 = vadd.f32 %v6215, 1e-09
        %v6218 = vrcp.pop %v6216
        %v6219 = vmul.f32 %v6216, %v6218
        %v6220 = vsub.f32 1.0, %v6219
        %v6221 = vmul.f32 %v6218, %v6220
        %v6222 = vadd.f32 %v6218, %v6221
        %vm6223 = vweird.f32 %v6216
        %vm6224 = vweird.f32 %v6218
        %vm6225 = vmor %vm6223, %vm6224
        %v6226 = vsel %vm6225, %v6218, %v6222
        %v6227 = vand.u32 2147483647, %v6216
        %vm6228 = vcmp.eq.f32.partialorder %v6227, 8.507059e+37
        %v6229 = vand.u32 %v6216, 2147483648
        %v6230 = vor.u32 1.1754944e-38, %v6229
        %v6231 = vsel %vm6228, %v6230, %v6226
        %v6232 = vmul.f32 %v6208, %v6231
        %v6233 = vrcp.pop %v6217
        %v6234 = vmul.f32 %v6217, %v6233
        %v6235 = vsub.f32 1.0, %v6234
        %v6236 = vmul.f32 %v6233, %v6235
        %v6237 = vadd.f32 %v6233, %v6236
        %vm6238 = vweird.f32 %v6217
        %vm6239 = vweird.f32 %v6233
        %vm6240 = vmor %vm6238, %vm6239
        %v6241 = vsel %vm6240, %v6233, %v6237
        %v6242 = vand.u32 2147483647, %v6217
        %vm6243 = vcmp.eq.f32.partialorder %v6242, 8.507059e+37
        %v6244 = vand.u32 %v6217, 2147483648
        %v6245 = vor.u32 1.1754944e-38, %v6244
        %v6246 = vsel %vm6243, %v6245, %v6241
        %v6247 = vmul.f32 %v6209, %v6246
        %v6249 = vsel %vm1154, %v6232, 0
        %v6252 = vsel %vm1154, %v6247, 0
        %6254 = vmatpush.msra.mxu0 0.0
        %6255 = vmatpush.msra.mxu0 0.0
        %6256 = vmatpush.msra.mxu0 0.0
        %6257 = vmatpush.msra.mxu0 0.0
        %6258 = vmatpush.msra.mxu0 0.0
        %6259 = vmatpush.msra.mxu0 0.0
        %6260 = vmatpush.msra.mxu0 0.0
        %6261 = vmatpush.msra.mxu0 0.0
        %v6262 = vand.u32 %v957, 4294901760
        %6263 = vmatpush.msra.mxu0 %v6262
        %v6264 = vand.u32 %v956, 4294901760
        %6265 = vmatpush.msra.mxu0 %v6264
        %v6266 = vand.u32 %v955, 4294901760
        %6267 = vmatpush.msra.mxu0 %v6266
        %v6268 = vand.u32 %v954, 4294901760
        %6269 = vmatpush.msra.mxu0 %v6268
        %v6270 = vand.u32 %v953, 4294901760
        %6271 = vmatpush.msra.mxu0 %v6270
        %v6272 = vand.u32 %v952, 4294901760
        %6273 = vmatpush.msra.mxu0 %v6272
        %v6274 = vand.u32 %v951, 4294901760
        %6275 = vmatpush.msra.mxu0 %v6274
        %v6276 = vand.u32 %v950, 4294901760
        %6277 = vmatpush.msra.mxu0 %v6276
        %v6278 = vand.u32 %v6249, 4294901760
        %v6279 = vsub.f32 %v6249, %v6278
        %v6280 = vand.u32 %v6279, 4294901760
        %v6281 = vsub.f32 %v6279, %v6280
        %v6282 = vand.u32 %v6281, 4294901760
        %6283 = vmatmul.f32.gmra.mxu0 %v6282
        %v6284 = vpop.f32.mrf.mxu0
        %v6285 = vadd.f32 %v1234, %v6284
        %v6286 = vand.u32 %v6252, 4294901760
        %v6287 = vsub.f32 %v6252, %v6286
        %v6288 = vand.u32 %v6287, 4294901760
        %v6289 = vsub.f32 %v6287, %v6288
        %v6290 = vand.u32 %v6289, 4294901760
        %6291 = vmatmul.f32.gmra.mxu0 %v6290
        %v6292 = vpop.f32.mrf.mxu0
        %v6293 = vadd.f32 %v1234, %v6292
        %6294 = vdwg.mxu0
        %6295 = vmatpush.msra.mxu0 0.0
        %6296 = vmatpush.msra.mxu0 0.0
        %6297 = vmatpush.msra.mxu0 0.0
        %6298 = vmatpush.msra.mxu0 0.0
        %6299 = vmatpush.msra.mxu0 0.0
        %6300 = vmatpush.msra.mxu0 0.0
        %6301 = vmatpush.msra.mxu0 0.0
        %6302 = vmatpush.msra.mxu0 0.0
        %v6303 = vand.u32 %v957, 4294901760
        %v6304 = vsub.f32 %v957, %v6303
        %v6305 = vand.u32 %v6304, 4294901760
        %v6306 = vsub.f32 %v6304, %v6305
        %v6307 = vand.u32 %v6306, 4294901760
        %6308 = vmatpush.msra.mxu0 %v6307
        %v6309 = vand.u32 %v956, 4294901760
        %v6310 = vsub.f32 %v956, %v6309
        %v6311 = vand.u32 %v6310, 4294901760
        %v6312 = vsub.f32 %v6310, %v6311
        %v6313 = vand.u32 %v6312, 4294901760
        %6314 = vmatpush.msra.mxu0 %v6313
        %v6315 = vand.u32 %v955, 4294901760
        %v6316 = vsub.f32 %v955, %v6315
        %v6317 = vand.u32 %v6316, 4294901760
        %v6318 = vsub.f32 %v6316, %v6317
        %v6319 = vand.u32 %v6318, 4294901760
        %6320 = vmatpush.msra.mxu0 %v6319
        %v6321 = vand.u32 %v954, 4294901760
        %v6322 = vsub.f32 %v954, %v6321
        %v6323 = vand.u32 %v6322, 4294901760
        %v6324 = vsub.f32 %v6322, %v6323
        %v6325 = vand.u32 %v6324, 4294901760
        %6326 = vmatpush.msra.mxu0 %v6325
        %v6327 = vand.u32 %v953, 4294901760
        %v6328 = vsub.f32 %v953, %v6327
        %v6329 = vand.u32 %v6328, 4294901760
        %v6330 = vsub.f32 %v6328, %v6329
        %v6331 = vand.u32 %v6330, 4294901760
        %6332 = vmatpush.msra.mxu0 %v6331
        %v6333 = vand.u32 %v952, 4294901760
        %v6334 = vsub.f32 %v952, %v6333
        %v6335 = vand.u32 %v6334, 4294901760
        %v6336 = vsub.f32 %v6334, %v6335
        %v6337 = vand.u32 %v6336, 4294901760
        %6338 = vmatpush.msra.mxu0 %v6337
        %v6339 = vand.u32 %v951, 4294901760
        %v6340 = vsub.f32 %v951, %v6339
        %v6341 = vand.u32 %v6340, 4294901760
        %v6342 = vsub.f32 %v6340, %v6341
        %v6343 = vand.u32 %v6342, 4294901760
        %6344 = vmatpush.msra.mxu0 %v6343
        %v6345 = vand.u32 %v950, 4294901760
        %v6346 = vsub.f32 %v950, %v6345
        %v6347 = vand.u32 %v6346, 4294901760
        %v6348 = vsub.f32 %v6346, %v6347
        %v6349 = vand.u32 %v6348, 4294901760
        %6350 = vmatpush.msra.mxu0 %v6349
        %v6351 = vand.u32 %v6249, 4294901760
        %6352 = vmatmul.f32.gmra.mxu0 %v6351
        %v6353 = vpop.f32.mrf.mxu0
        %v6354 = vadd.f32 %v6285, %v6353
        %v6355 = vand.u32 %v6252, 4294901760
        %6356 = vmatmul.f32.gmra.mxu0 %v6355
        %v6357 = vpop.f32.mrf.mxu0
        %v6358 = vadd.f32 %v6293, %v6357
        %6359 = vdwg.mxu0
        %6360 = vmatpush.msra.mxu0 0.0
        %6361 = vmatpush.msra.mxu0 0.0
        %6362 = vmatpush.msra.mxu0 0.0
        %6363 = vmatpush.msra.mxu0 0.0
        %6364 = vmatpush.msra.mxu0 0.0
        %6365 = vmatpush.msra.mxu0 0.0
        %6366 = vmatpush.msra.mxu0 0.0
        %6367 = vmatpush.msra.mxu0 0.0
        %v6368 = vand.u32 %v957, 4294901760
        %v6369 = vsub.f32 %v957, %v6368
        %6370 = vmatpush.msra.mxu0 %v6369
        %v6371 = vand.u32 %v956, 4294901760
        %v6372 = vsub.f32 %v956, %v6371
        %6373 = vmatpush.msra.mxu0 %v6372
        %v6374 = vand.u32 %v955, 4294901760
        %v6375 = vsub.f32 %v955, %v6374
        %6376 = vmatpush.msra.mxu0 %v6375
        %v6377 = vand.u32 %v954, 4294901760
        %v6378 = vsub.f32 %v954, %v6377
        %6379 = vmatpush.msra.mxu0 %v6378
        %v6380 = vand.u32 %v953, 4294901760
        %v6381 = vsub.f32 %v953, %v6380
        %6382 = vmatpush.msra.mxu0 %v6381
        %v6383 = vand.u32 %v952, 4294901760
        %v6384 = vsub.f32 %v952, %v6383
        %6385 = vmatpush.msra.mxu0 %v6384
        %v6386 = vand.u32 %v951, 4294901760
        %v6387 = vsub.f32 %v951, %v6386
        %6388 = vmatpush.msra.mxu0 %v6387
        %v6389 = vand.u32 %v950, 4294901760
        %v6390 = vsub.f32 %v950, %v6389
        %6391 = vmatpush.msra.mxu0 %v6390
        %v6392 = vand.u32 %v6249, 4294901760
        %v6393 = vsub.f32 %v6249, %v6392
        %6394 = vmatmul.f32.gmra.mxu0 %v6393
        %v6395 = vpop.f32.mrf.mxu0
        %v6396 = vadd.f32 %v6354, %v6395
        %v6397 = vand.u32 %v6252, 4294901760
        %v6398 = vsub.f32 %v6252, %v6397
        %6399 = vmatmul.f32.gmra.mxu0 %v6398
        %v6400 = vpop.f32.mrf.mxu0
        %v6401 = vadd.f32 %v6358, %v6400
        %6402 = vdwg.mxu0
        %6403 = vmatpush.msra.mxu0 0.0
        %6404 = vmatpush.msra.mxu0 0.0
        %6405 = vmatpush.msra.mxu0 0.0
        %6406 = vmatpush.msra.mxu0 0.0
        %6407 = vmatpush.msra.mxu0 0.0
        %6408 = vmatpush.msra.mxu0 0.0
        %6409 = vmatpush.msra.mxu0 0.0
        %6410 = vmatpush.msra.mxu0 0.0
        %v6411 = vand.u32 %v957, 4294901760
        %6412 = vmatpush.msra.mxu0 %v6411
        %v6413 = vand.u32 %v956, 4294901760
        %6414 = vmatpush.msra.mxu0 %v6413
        %v6415 = vand.u32 %v955, 4294901760
        %6416 = vmatpush.msra.mxu0 %v6415
        %v6417 = vand.u32 %v954, 4294901760
        %6418 = vmatpush.msra.mxu0 %v6417
        %v6419 = vand.u32 %v953, 4294901760
        %6420 = vmatpush.msra.mxu0 %v6419
        %v6421 = vand.u32 %v952, 4294901760
        %6422 = vmatpush.msra.mxu0 %v6421
        %v6423 = vand.u32 %v951, 4294901760
        %6424 = vmatpush.msra.mxu0 %v6423
        %v6425 = vand.u32 %v950, 4294901760
        %6426 = vmatpush.msra.mxu0 %v6425
        %v6427 = vand.u32 %v6249, 4294901760
        %v6428 = vsub.f32 %v6249, %v6427
        %v6429 = vand.u32 %v6428, 4294901760
        %6430 = vmatmul.f32.gmra.mxu0 %v6429
        %v6431 = vpop.f32.mrf.mxu0
        %v6432 = vadd.f32 %v6396, %v6431
        %v6433 = vand.u32 %v6252, 4294901760
        %v6434 = vsub.f32 %v6252, %v6433
        %v6435 = vand.u32 %v6434, 4294901760
        %6436 = vmatmul.f32.gmra.mxu0 %v6435
        %v6437 = vpop.f32.mrf.mxu0
        %v6438 = vadd.f32 %v6401, %v6437
        %6439 = vdwg.mxu0
        %6440 = vmatpush.msra.mxu0 0.0
        %6441 = vmatpush.msra.mxu0 0.0
        %6442 = vmatpush.msra.mxu0 0.0
        %6443 = vmatpush.msra.mxu0 0.0
        %6444 = vmatpush.msra.mxu0 0.0
        %6445 = vmatpush.msra.mxu0 0.0
        %6446 = vmatpush.msra.mxu0 0.0
        %6447 = vmatpush.msra.mxu0 0.0
        %v6448 = vand.u32 %v957, 4294901760
        %v6449 = vsub.f32 %v957, %v6448
        %v6450 = vand.u32 %v6449, 4294901760
        %6451 = vmatpush.msra.mxu0 %v6450
        %v6452 = vand.u32 %v956, 4294901760
        %v6453 = vsub.f32 %v956, %v6452
        %v6454 = vand.u32 %v6453, 4294901760
        %6455 = vmatpush.msra.mxu0 %v6454
        %v6456 = vand.u32 %v955, 4294901760
        %v6457 = vsub.f32 %v955, %v6456
        %v6458 = vand.u32 %v6457, 4294901760
        %6459 = vmatpush.msra.mxu0 %v6458
        %v6460 = vand.u32 %v954, 4294901760
        %v6461 = vsub.f32 %v954, %v6460
        %v6462 = vand.u32 %v6461, 4294901760
        %6463 = vmatpush.msra.mxu0 %v6462
        %v6464 = vand.u32 %v953, 4294901760
        %v6465 = vsub.f32 %v953, %v6464
        %v6466 = vand.u32 %v6465, 4294901760
        %6467 = vmatpush.msra.mxu0 %v6466
        %v6468 = vand.u32 %v952, 4294901760
        %v6469 = vsub.f32 %v952, %v6468
        %v6470 = vand.u32 %v6469, 4294901760
        %6471 = vmatpush.msra.mxu0 %v6470
        %v6472 = vand.u32 %v951, 4294901760
        %v6473 = vsub.f32 %v951, %v6472
        %v6474 = vand.u32 %v6473, 4294901760
        %6475 = vmatpush.msra.mxu0 %v6474
        %v6476 = vand.u32 %v950, 4294901760
        %v6477 = vsub.f32 %v950, %v6476
        %v6478 = vand.u32 %v6477, 4294901760
        %6479 = vmatpush.msra.mxu0 %v6478
        %v6480 = vand.u32 %v6249, 4294901760
        %6481 = vmatmul.f32.gmra.mxu0 %v6480
        %v6482 = vpop.f32.mrf.mxu0
        %v6483 = vadd.f32 %v6432, %v6482
        %v6484 = vand.u32 %v6252, 4294901760
        %6485 = vmatmul.f32.gmra.mxu0 %v6484
        %v6486 = vpop.f32.mrf.mxu0
        %v6487 = vadd.f32 %v6438, %v6486
        %6488 = vdwg.mxu0
        %6489 = vmatpush.msra.mxu0 0.0
        %6490 = vmatpush.msra.mxu0 0.0
        %6491 = vmatpush.msra.mxu0 0.0
        %6492 = vmatpush.msra.mxu0 0.0
        %6493 = vmatpush.msra.mxu0 0.0
        %6494 = vmatpush.msra.mxu0 0.0
        %6495 = vmatpush.msra.mxu0 0.0
        %6496 = vmatpush.msra.mxu0 0.0
        %v6497 = vand.u32 %v957, 4294901760
        %6498 = vmatpush.msra.mxu0 %v6497
        %v6499 = vand.u32 %v956, 4294901760
        %6500 = vmatpush.msra.mxu0 %v6499
        %v6501 = vand.u32 %v955, 4294901760
        %6502 = vmatpush.msra.mxu0 %v6501
        %v6503 = vand.u32 %v954, 4294901760
        %6504 = vmatpush.msra.mxu0 %v6503
        %v6505 = vand.u32 %v953, 4294901760
        %6506 = vmatpush.msra.mxu0 %v6505
        %v6507 = vand.u32 %v952, 4294901760
        %6508 = vmatpush.msra.mxu0 %v6507
        %v6509 = vand.u32 %v951, 4294901760
        %6510 = vmatpush.msra.mxu0 %v6509
        %v6511 = vand.u32 %v950, 4294901760
        %6512 = vmatpush.msra.mxu0 %v6511
        %v6513 = vand.u32 %v6249, 4294901760
        %6514 = vmatmul.f32.gmra.mxu0 %v6513
        %v6515 = vpop.f32.mrf.mxu0
        %v6516 = vadd.f32 %v6483, %v6515
        %v6517 = vand.u32 %v6252, 4294901760
        %6518 = vmatmul.f32.gmra.mxu0 %v6517
        %v6519 = vpop.f32.mrf.mxu0
        %v6520 = vadd.f32 %v6487, %v6519
        %6521 = vdwg.mxu0
        %v6523 = vsel %vm972, %v6516, 0
        %v6526 = vsel %vm972, %v6520, 0
        %6528 = vmatpush.msra.mxu0 0.0
        %6529 = vmatpush.msra.mxu0 0.0
        %6530 = vmatpush.msra.mxu0 0.0
        %6531 = vmatpush.msra.mxu0 0.0
        %6532 = vmatpush.msra.mxu0 0.0
        %6533 = vmatpush.msra.mxu0 0.0
        %6534 = vmatpush.msra.mxu0 0.0
        %6535 = vmatpush.msra.mxu0 0.0
        %6536 = vmatpush.msra.mxu0 0.0
        %6537 = vmatpush.msra.mxu0 0.0
        %6538 = vmatpush.msra.mxu0 0.0
        %6539 = vmatpush.msra.mxu0 0.0
        %6540 = vmatpush.msra.mxu0 0.0
        %6541 = vmatpush.msra.mxu0 0.0
        %6542 = vmatpush.msra.mxu0 0.0
        %v6543 = vand.u32 %v967, 4294901760
        %6544 = vmatpush.msra.mxu0 %v6543
        %v6545 = vand.u32 %v6523, 4294901760
        %v6546 = vsub.f32 %v6523, %v6545
        %v6547 = vand.u32 %v6546, 4294901760
        %v6548 = vsub.f32 %v6546, %v6547
        %v6549 = vand.u32 %v6548, 4294901760
        %6550 = vmatmul.f32.gmra.mxu0 %v6549
        %v6551 = vpop.f32.mrf.mxu0
        %v6552 = vadd.f32 0.0, %v6551
        %v6553 = vand.u32 %v6526, 4294901760
        %v6554 = vsub.f32 %v6526, %v6553
        %v6555 = vand.u32 %v6554, 4294901760
        %v6556 = vsub.f32 %v6554, %v6555
        %v6557 = vand.u32 %v6556, 4294901760
        %6558 = vmatmul.f32.gmra.mxu0 %v6557
        %v6559 = vpop.f32.mrf.mxu0
        %v6560 = vadd.f32 0.0, %v6559
        %6561 = vdwg.mxu0
        %6562 = vmatpush.msra.mxu0 0.0
        %6563 = vmatpush.msra.mxu0 0.0
        %6564 = vmatpush.msra.mxu0 0.0
        %6565 = vmatpush.msra.mxu0 0.0
        %6566 = vmatpush.msra.mxu0 0.0
        %6567 = vmatpush.msra.mxu0 0.0
        %6568 = vmatpush.msra.mxu0 0.0
        %6569 = vmatpush.msra.mxu0 0.0
        %6570 = vmatpush.msra.mxu0 0.0
        %6571 = vmatpush.msra.mxu0 0.0
        %6572 = vmatpush.msra.mxu0 0.0
        %6573 = vmatpush.msra.mxu0 0.0
        %6574 = vmatpush.msra.mxu0 0.0
        %6575 = vmatpush.msra.mxu0 0.0
        %6576 = vmatpush.msra.mxu0 0.0
        %v6577 = vand.u32 %v967, 4294901760
        %v6578 = vsub.f32 %v967, %v6577
        %v6579 = vand.u32 %v6578, 4294901760
        %v6580 = vsub.f32 %v6578, %v6579
        %v6581 = vand.u32 %v6580, 4294901760
        %6582 = vmatpush.msra.mxu0 %v6581
        %v6583 = vand.u32 %v6523, 4294901760
        %6584 = vmatmul.f32.gmra.mxu0 %v6583
        %v6585 = vpop.f32.mrf.mxu0
        %v6586 = vadd.f32 %v6552, %v6585
        %v6587 = vand.u32 %v6526, 4294901760
        %6588 = vmatmul.f32.gmra.mxu0 %v6587
        %v6589 = vpop.f32.mrf.mxu0
        %v6590 = vadd.f32 %v6560, %v6589
        %6591 = vdwg.mxu0
        %6592 = vmatpush.msra.mxu0 0.0
        %6593 = vmatpush.msra.mxu0 0.0
        %6594 = vmatpush.msra.mxu0 0.0
        %6595 = vmatpush.msra.mxu0 0.0
        %6596 = vmatpush.msra.mxu0 0.0
        %6597 = vmatpush.msra.mxu0 0.0
        %6598 = vmatpush.msra.mxu0 0.0
        %6599 = vmatpush.msra.mxu0 0.0
        %6600 = vmatpush.msra.mxu0 0.0
        %6601 = vmatpush.msra.mxu0 0.0
        %6602 = vmatpush.msra.mxu0 0.0
        %6603 = vmatpush.msra.mxu0 0.0
        %6604 = vmatpush.msra.mxu0 0.0
        %6605 = vmatpush.msra.mxu0 0.0
        %6606 = vmatpush.msra.mxu0 0.0
        %v6607 = vand.u32 %v967, 4294901760
        %v6608 = vsub.f32 %v967, %v6607
        %6609 = vmatpush.msra.mxu0 %v6608
        %v6610 = vand.u32 %v6523, 4294901760
        %v6611 = vsub.f32 %v6523, %v6610
        %6612 = vmatmul.f32.gmra.mxu0 %v6611
        %v6613 = vpop.f32.mrf.mxu0
        %v6614 = vadd.f32 %v6586, %v6613
        %v6615 = vand.u32 %v6526, 4294901760
        %v6616 = vsub.f32 %v6526, %v6615
        %6617 = vmatmul.f32.gmra.mxu0 %v6616
        %v6618 = vpop.f32.mrf.mxu0
        %v6619 = vadd.f32 %v6590, %v6618
        %6620 = vdwg.mxu0
        %6621 = vmatpush.msra.mxu0 0.0
        %6622 = vmatpush.msra.mxu0 0.0
        %6623 = vmatpush.msra.mxu0 0.0
        %6624 = vmatpush.msra.mxu0 0.0
        %6625 = vmatpush.msra.mxu0 0.0
        %6626 = vmatpush.msra.mxu0 0.0
        %6627 = vmatpush.msra.mxu0 0.0
        %6628 = vmatpush.msra.mxu0 0.0
        %6629 = vmatpush.msra.mxu0 0.0
        %6630 = vmatpush.msra.mxu0 0.0
        %6631 = vmatpush.msra.mxu0 0.0
        %6632 = vmatpush.msra.mxu0 0.0
        %6633 = vmatpush.msra.mxu0 0.0
        %6634 = vmatpush.msra.mxu0 0.0
        %6635 = vmatpush.msra.mxu0 0.0
        %v6636 = vand.u32 %v967, 4294901760
        %6637 = vmatpush.msra.mxu0 %v6636
        %v6638 = vand.u32 %v6523, 4294901760
        %v6639 = vsub.f32 %v6523, %v6638
        %v6640 = vand.u32 %v6639, 4294901760
        %6641 = vmatmul.f32.gmra.mxu0 %v6640
        %v6642 = vpop.f32.mrf.mxu0
        %v6643 = vadd.f32 %v6614, %v6642
        %v6644 = vand.u32 %v6526, 4294901760
        %v6645 = vsub.f32 %v6526, %v6644
        %v6646 = vand.u32 %v6645, 4294901760
        %6647 = vmatmul.f32.gmra.mxu0 %v6646
        %v6648 = vpop.f32.mrf.mxu0
        %v6649 = vadd.f32 %v6619, %v6648
        %6650 = vdwg.mxu0
        %6651 = vmatpush.msra.mxu0 0.0
        %6652 = vmatpush.msra.mxu0 0.0
        %6653 = vmatpush.msra.mxu0 0.0
        %6654 = vmatpush.msra.mxu0 0.0
        %6655 = vmatpush.msra.mxu0 0.0
        %6656 = vmatpush.msra.mxu0 0.0
        %6657 = vmatpush.msra.mxu0 0.0
        %6658 = vmatpush.msra.mxu0 0.0
        %6659 = vmatpush.msra.mxu0 0.0
        %6660 = vmatpush.msra.mxu0 0.0
        %6661 = vmatpush.msra.mxu0 0.0
        %6662 = vmatpush.msra.mxu0 0.0
        %6663 = vmatpush.msra.mxu0 0.0
        %6664 = vmatpush.msra.mxu0 0.0
        %6665 = vmatpush.msra.mxu0 0.0
        %v6666 = vand.u32 %v967, 4294901760
        %v6667 = vsub.f32 %v967, %v6666
        %v6668 = vand.u32 %v6667, 4294901760
        %6669 = vmatpush.msra.mxu0 %v6668
        %v6670 = vand.u32 %v6523, 4294901760
        %6671 = vmatmul.f32.gmra.mxu0 %v6670
        %v6672 = vpop.f32.mrf.mxu0
        %v6673 = vadd.f32 %v6643, %v6672
        %v6674 = vand.u32 %v6526, 4294901760
        %6675 = vmatmul.f32.gmra.mxu0 %v6674
        %v6676 = vpop.f32.mrf.mxu0
        %v6677 = vadd.f32 %v6649, %v6676
        %6678 = vdwg.mxu0
        %6679 = vmatpush.msra.mxu0 0.0
        %6680 = vmatpush.msra.mxu0 0.0
        %6681 = vmatpush.msra.mxu0 0.0
        %6682 = vmatpush.msra.mxu0 0.0
        %6683 = vmatpush.msra.mxu0 0.0
        %6684 = vmatpush.msra.mxu0 0.0
        %6685 = vmatpush.msra.mxu0 0.0
        %6686 = vmatpush.msra.mxu0 0.0
        %6687 = vmatpush.msra.mxu0 0.0
        %6688 = vmatpush.msra.mxu0 0.0
        %6689 = vmatpush.msra.mxu0 0.0
        %6690 = vmatpush.msra.mxu0 0.0
        %6691 = vmatpush.msra.mxu0 0.0
        %6692 = vmatpush.msra.mxu0 0.0
        %6693 = vmatpush.msra.mxu0 0.0
        %v6694 = vand.u32 %v967, 4294901760
        %6695 = vmatpush.msra.mxu0 %v6694
        %v6696 = vand.u32 %v6523, 4294901760
        %6697 = vmatmul.f32.gmra.mxu0 %v6696
        %v6698 = vpop.f32.mrf.mxu0
        %v6699 = vadd.f32 %v6673, %v6698
        %v6700 = vand.u32 %v6526, 4294901760
        %6701 = vmatmul.f32.gmra.mxu0 %v6700
        %v6702 = vpop.f32.mrf.mxu0
        %v6703 = vadd.f32 %v6677, %v6702
        %6704 = vdwg.mxu0
        %v6705 = vadd.f32 %v5038, %v6699
        %v6706 = vadd.f32 %v5039, %v6703
        %6707 = vrot.lane.b32.xlu0 %v942, 104
        %v6708 = vpop.permute.xlu0 %6707
        %6709 = vrot.lane.b32.xlu0 %v946, 104
        %v6710 = vpop.permute.xlu0 %6709
        %6713 = vxpose.xlu0.b32.start [1/16] %v6708, 128
        %6714 = vxpose.xlu0.b32.cont [2/16] %v6710, 128
        %6715 = vxpose.xlu0.b32.cont [3/16] 0.0, 128
        %6716 = vxpose.xlu0.b32.cont [4/16] 0.0, 128
        %6717 = vxpose.xlu0.b32.cont [5/16] 0.0, 128
        %6718 = vxpose.xlu0.b32.cont [6/16] 0.0, 128
        %6719 = vxpose.xlu0.b32.cont [7/16] 0.0, 128
        %6720 = vxpose.xlu0.b32.cont [8/16] 0.0, 128
        %6721 = vxpose.xlu0.b32.cont [9/16] 0.0, 128
        %6722 = vxpose.xlu0.b32.cont [10/16] 0.0, 128
        %6723 = vxpose.xlu0.b32.cont [11/16] 0.0, 128
        %6724 = vxpose.xlu0.b32.cont [12/16] 0.0, 128
        %6725 = vxpose.xlu0.b32.cont [13/16] 0.0, 128
        %6726 = vxpose.xlu0.b32.cont [14/16] 0.0, 128
        %6727 = vxpose.xlu0.b32.cont [15/16] 0.0, 128
        %6728 = vxpose.xlu0.b32.end [16/16] 0.0, 128
        %v6729 = vpop.trf.xlu0
        %v6730 = vpop.trf.xlu0
        %v6731 = vpop.trf.xlu0
        %v6732 = vpop.trf.xlu0
        %v6733 = vpop.trf.xlu0
        %v6734 = vpop.trf.xlu0
        %v6735 = vpop.trf.xlu0
        %v6736 = vpop.trf.xlu0
        %v6737 = vpop.trf.xlu0
        %v6738 = vpop.trf.xlu0
        %v6739 = vpop.trf.xlu0
        %v6740 = vpop.trf.xlu0
        %v6741 = vpop.trf.xlu0
        %v6742 = vpop.trf.xlu0
        %v6743 = vpop.trf.xlu0
        %v6744 = vpop.trf.xlu0
        %v6746 = vsel %vm1545, %v6729, 0
        %6748 = vmatpush.msra.mxu0 0.0
        %6749 = vmatpush.msra.mxu0 0.0
        %6750 = vmatpush.msra.mxu0 0.0
        %6751 = vmatpush.msra.mxu0 0.0
        %6752 = vmatpush.msra.mxu0 0.0
        %6753 = vmatpush.msra.mxu0 0.0
        %6754 = vmatpush.msra.mxu0 0.0
        %6755 = vmatpush.msra.mxu0 0.0
        %6756 = vmatpush.msra.mxu0 0.0
        %6757 = vmatpush.msra.mxu0 0.0
        %6758 = vmatpush.msra.mxu0 0.0
        %6759 = vmatpush.msra.mxu0 0.0
        %6760 = vmatpush.msra.mxu0 0.0
        %6761 = vmatpush.msra.mxu0 0.0
        %v6762 = vand.u32 %v960, 4294901760
        %6763 = vmatpush.msra.mxu0 %v6762
        %v6764 = vand.u32 %v959, 4294901760
        %6765 = vmatpush.msra.mxu0 %v6764
        %v6766 = vand.u32 %v6746, 4294901760
        %v6767 = vsub.f32 %v6746, %v6766
        %v6768 = vand.u32 %v6767, 4294901760
        %v6769 = vsub.f32 %v6767, %v6768
        %v6770 = vand.u32 %v6769, 4294901760
        %6771 = vmatmul.f32.gmra.mxu0 %v6770
        %v6772 = vpop.f32.mrf.mxu0
        %v6773 = vadd.f32 %v1511, %v6772
        %6774 = vdwg.mxu0
        %6775 = vmatpush.msra.mxu0 0.0
        %6776 = vmatpush.msra.mxu0 0.0
        %6777 = vmatpush.msra.mxu0 0.0
        %6778 = vmatpush.msra.mxu0 0.0
        %6779 = vmatpush.msra.mxu0 0.0
        %6780 = vmatpush.msra.mxu0 0.0
        %6781 = vmatpush.msra.mxu0 0.0
        %6782 = vmatpush.msra.mxu0 0.0
        %6783 = vmatpush.msra.mxu0 0.0
        %6784 = vmatpush.msra.mxu0 0.0
        %6785 = vmatpush.msra.mxu0 0.0
        %6786 = vmatpush.msra.mxu0 0.0
        %6787 = vmatpush.msra.mxu0 0.0
        %6788 = vmatpush.msra.mxu0 0.0
        %v6789 = vand.u32 %v960, 4294901760
        %v6790 = vsub.f32 %v960, %v6789
        %v6791 = vand.u32 %v6790, 4294901760
        %v6792 = vsub.f32 %v6790, %v6791
        %v6793 = vand.u32 %v6792, 4294901760
        %6794 = vmatpush.msra.mxu0 %v6793
        %v6795 = vand.u32 %v959, 4294901760
        %v6796 = vsub.f32 %v959, %v6795
        %v6797 = vand.u32 %v6796, 4294901760
        %v6798 = vsub.f32 %v6796, %v6797
        %v6799 = vand.u32 %v6798, 4294901760
        %6800 = vmatpush.msra.mxu0 %v6799
        %v6801 = vand.u32 %v6746, 4294901760
        %6802 = vmatmul.f32.gmra.mxu0 %v6801
        %v6803 = vpop.f32.mrf.mxu0
        %v6804 = vadd.f32 %v6773, %v6803
        %6805 = vdwg.mxu0
        %6806 = vmatpush.msra.mxu0 0.0
        %6807 = vmatpush.msra.mxu0 0.0
        %6808 = vmatpush.msra.mxu0 0.0
        %6809 = vmatpush.msra.mxu0 0.0
        %6810 = vmatpush.msra.mxu0 0.0
        %6811 = vmatpush.msra.mxu0 0.0
        %6812 = vmatpush.msra.mxu0 0.0
        %6813 = vmatpush.msra.mxu0 0.0
        %6814 = vmatpush.msra.mxu0 0.0
        %6815 = vmatpush.msra.mxu0 0.0
        %6816 = vmatpush.msra.mxu0 0.0
        %6817 = vmatpush.msra.mxu0 0.0
        %6818 = vmatpush.msra.mxu0 0.0
        %6819 = vmatpush.msra.mxu0 0.0
        %v6820 = vand.u32 %v960, 4294901760
        %v6821 = vsub.f32 %v960, %v6820
        %6822 = vmatpush.msra.mxu0 %v6821
        %v6823 = vand.u32 %v959, 4294901760
        %v6824 = vsub.f32 %v959, %v6823
        %6825 = vmatpush.msra.mxu0 %v6824
        %v6826 = vand.u32 %v6746, 4294901760
        %v6827 = vsub.f32 %v6746, %v6826
        %6828 = vmatmul.f32.gmra.mxu0 %v6827
        %v6829 = vpop.f32.mrf.mxu0
        %v6830 = vadd.f32 %v6804, %v6829
        %6831 = vdwg.mxu0
        %6832 = vmatpush.msra.mxu0 0.0
        %6833 = vmatpush.msra.mxu0 0.0
        %6834 = vmatpush.msra.mxu0 0.0
        %6835 = vmatpush.msra.mxu0 0.0
        %6836 = vmatpush.msra.mxu0 0.0
        %6837 = vmatpush.msra.mxu0 0.0
        %6838 = vmatpush.msra.mxu0 0.0
        %6839 = vmatpush.msra.mxu0 0.0
        %6840 = vmatpush.msra.mxu0 0.0
        %6841 = vmatpush.msra.mxu0 0.0
        %6842 = vmatpush.msra.mxu0 0.0
        %6843 = vmatpush.msra.mxu0 0.0
        %6844 = vmatpush.msra.mxu0 0.0
        %6845 = vmatpush.msra.mxu0 0.0
        %v6846 = vand.u32 %v960, 4294901760
        %6847 = vmatpush.msra.mxu0 %v6846
        %v6848 = vand.u32 %v959, 4294901760
        %6849 = vmatpush.msra.mxu0 %v6848
        %v6850 = vand.u32 %v6746, 4294901760
        %v6851 = vsub.f32 %v6746, %v6850
        %v6852 = vand.u32 %v6851, 4294901760
        %6853 = vmatmul.f32.gmra.mxu0 %v6852
        %v6854 = vpop.f32.mrf.mxu0
        %v6855 = vadd.f32 %v6830, %v6854
        %6856 = vdwg.mxu0
        %6857 = vmatpush.msra.mxu0 0.0
        %6858 = vmatpush.msra.mxu0 0.0
        %6859 = vmatpush.msra.mxu0 0.0
        %6860 = vmatpush.msra.mxu0 0.0
        %6861 = vmatpush.msra.mxu0 0.0
        %6862 = vmatpush.msra.mxu0 0.0
        %6863 = vmatpush.msra.mxu0 0.0
        %6864 = vmatpush.msra.mxu0 0.0
        %6865 = vmatpush.msra.mxu0 0.0
        %6866 = vmatpush.msra.mxu0 0.0
        %6867 = vmatpush.msra.mxu0 0.0
        %6868 = vmatpush.msra.mxu0 0.0
        %6869 = vmatpush.msra.mxu0 0.0
        %6870 = vmatpush.msra.mxu0 0.0
        %v6871 = vand.u32 %v960, 4294901760
        %v6872 = vsub.f32 %v960, %v6871
        %v6873 = vand.u32 %v6872, 4294901760
        %6874 = vmatpush.msra.mxu0 %v6873
        %v6875 = vand.u32 %v959, 4294901760
        %v6876 = vsub.f32 %v959, %v6875
        %v6877 = vand.u32 %v6876, 4294901760
        %6878 = vmatpush.msra.mxu0 %v6877
        %v6879 = vand.u32 %v6746, 4294901760
        %6880 = vmatmul.f32.gmra.mxu0 %v6879
        %v6881 = vpop.f32.mrf.mxu0
        %v6882 = vadd.f32 %v6855, %v6881
        %6883 = vdwg.mxu0
        %6884 = vmatpush.msra.mxu0 0.0
        %6885 = vmatpush.msra.mxu0 0.0
        %6886 = vmatpush.msra.mxu0 0.0
        %6887 = vmatpush.msra.mxu0 0.0
        %6888 = vmatpush.msra.mxu0 0.0
        %6889 = vmatpush.msra.mxu0 0.0
        %6890 = vmatpush.msra.mxu0 0.0
        %6891 = vmatpush.msra.mxu0 0.0
        %6892 = vmatpush.msra.mxu0 0.0
        %6893 = vmatpush.msra.mxu0 0.0
        %6894 = vmatpush.msra.mxu0 0.0
        %6895 = vmatpush.msra.mxu0 0.0
        %6896 = vmatpush.msra.mxu0 0.0
        %6897 = vmatpush.msra.mxu0 0.0
        %v6898 = vand.u32 %v960, 4294901760
        %6899 = vmatpush.msra.mxu0 %v6898
        %v6900 = vand.u32 %v959, 4294901760
        %6901 = vmatpush.msra.mxu0 %v6900
        %v6902 = vand.u32 %v6746, 4294901760
        %6903 = vmatmul.f32.gmra.mxu0 %v6902
        %v6904 = vpop.f32.mrf.mxu0
        %v6905 = vadd.f32 %v6882, %v6904
        %6906 = vdwg.mxu0
        %v6907 = vsel %vm972, %v6905, -inf
        %v6908 = vrot.slane %v6907, 4
        %v6909 = vmax.f32 %v6907, %v6908
        %v6910 = vrot.slane %v6909, 2
        %v6911 = vmax.f32 %v6909, %v6910
        %v6912 = vrot.slane %v6911, 1
        %v6913 = vmax.f32 %v6911, %v6912
        %v6914 = vsub.f32 %v6905, %v6913
        %v6915 = vmul.f32 %v6914, 1.442695
        %v6916 = vpow.pop %v6915
        %v6917 = vsel %vm972, %v6916, 0.0
        %v6918 = vrot.slane %v6917, 4
        %v6919 = vadd.f32 %v6917, %v6918
        %v6920 = vrot.slane %v6919, 2
        %v6921 = vadd.f32 %v6919, %v6920
        %v6922 = vrot.slane %v6921, 1
        %v6923 = vadd.f32 %v6921, %v6922
        %v6924 = vrcp.pop %v6923
        %v6925 = vmul.f32 %v6923, %v6924
        %v6926 = vsub.f32 1.0, %v6925
        %v6927 = vmul.f32 %v6924, %v6926
        %v6928 = vadd.f32 %v6924, %v6927
        %vm6929 = vweird.f32 %v6923
        %vm6930 = vweird.f32 %v6924
        %vm6931 = vmor %vm6929, %vm6930
        %v6932 = vsel %vm6931, %v6924, %v6928
        %v6933 = vand.u32 2147483647, %v6923
        %vm6934 = vcmp.eq.f32.partialorder %v6933, 8.507059e+37
        %v6935 = vand.u32 %v6923, 2147483648
        %v6936 = vor.u32 1.1754944e-38, %v6935
        %v6937 = vsel %vm6934, %v6936, %v6932
        %v6938 = vmul.f32 %v6916, %v6937
        %v6939 = vsel %vm972, %v6938, 0.0
        %6940 = vadd.xlane.f32.xlu0 %v6939
        %v6941 = vpop.xlane.xlu0 %6940
        %v6942 = vadd.f32 %v6941, 1e-09
        %v6943 = vrcp.pop %v6942
        %v6944 = vmul.f32 %v6942, %v6943
        %v6945 = vsub.f32 1.0, %v6944
        %v6946 = vmul.f32 %v6943, %v6945
        %v6947 = vadd.f32 %v6943, %v6946
        %vm6948 = vweird.f32 %v6942
        %vm6949 = vweird.f32 %v6943
        %vm6950 = vmor %vm6948, %vm6949
        %v6951 = vsel %vm6950, %v6943, %v6947
        %v6952 = vand.u32 2147483647, %v6942
        %vm6953 = vcmp.eq.f32.partialorder %v6952, 8.507059e+37
        %v6954 = vand.u32 %v6942, 2147483648
        %v6955 = vor.u32 1.1754944e-38, %v6954
        %v6956 = vsel %vm6953, %v6955, %v6951
        %v6957 = vmul.f32 %v6938, %v6956
        %v6959 = vsel %vm972, %v6957, 0
        %6961 = vmatpush.msra.mxu0 0.0
        %6962 = vmatpush.msra.mxu0 0.0
        %6963 = vmatpush.msra.mxu0 0.0
        %6964 = vmatpush.msra.mxu0 0.0
        %6965 = vmatpush.msra.mxu0 0.0
        %6966 = vmatpush.msra.mxu0 0.0
        %6967 = vmatpush.msra.mxu0 0.0
        %6968 = vmatpush.msra.mxu0 0.0
        %6969 = vmatpush.msra.mxu0 0.0
        %6970 = vmatpush.msra.mxu0 0.0
        %6971 = vmatpush.msra.mxu0 0.0
        %6972 = vmatpush.msra.mxu0 0.0
        %6973 = vmatpush.msra.mxu0 0.0
        %6974 = vmatpush.msra.mxu0 0.0
        %6975 = vmatpush.msra.mxu0 0.0
        %v6976 = vand.u32 %v962, 4294901760
        %6977 = vmatpush.msra.mxu0 %v6976
        %v6978 = vand.u32 %v6959, 4294901760
        %v6979 = vsub.f32 %v6959, %v6978
        %v6980 = vand.u32 %v6979, 4294901760
        %v6981 = vsub.f32 %v6979, %v6980
        %v6982 = vand.u32 %v6981, 4294901760
        %6983 = vmatmul.f32.gmra.mxu0 %v6982
        %v6984 = vpop.f32.mrf.mxu0
        %v6985 = vadd.f32 %v1760, %v6984
        %6986 = vdwg.mxu0
        %6987 = vmatpush.msra.mxu0 0.0
        %6988 = vmatpush.msra.mxu0 0.0
        %6989 = vmatpush.msra.mxu0 0.0
        %6990 = vmatpush.msra.mxu0 0.0
        %6991 = vmatpush.msra.mxu0 0.0
        %6992 = vmatpush.msra.mxu0 0.0
        %6993 = vmatpush.msra.mxu0 0.0
        %6994 = vmatpush.msra.mxu0 0.0
        %6995 = vmatpush.msra.mxu0 0.0
        %6996 = vmatpush.msra.mxu0 0.0
        %6997 = vmatpush.msra.mxu0 0.0
        %6998 = vmatpush.msra.mxu0 0.0
        %6999 = vmatpush.msra.mxu0 0.0
        %7000 = vmatpush.msra.mxu0 0.0
        %7001 = vmatpush.msra.mxu0 0.0
        %v7002 = vand.u32 %v962, 4294901760
        %v7003 = vsub.f32 %v962, %v7002
        %v7004 = vand.u32 %v7003, 4294901760
        %v7005 = vsub.f32 %v7003, %v7004
        %v7006 = vand.u32 %v7005, 4294901760
        %7007 = vmatpush.msra.mxu0 %v7006
        %v7008 = vand.u32 %v6959, 4294901760
        %7009 = vmatmul.f32.gmra.mxu0 %v7008
        %v7010 = vpop.f32.mrf.mxu0
        %v7011 = vadd.f32 %v6985, %v7010
        %7012 = vdwg.mxu0
        %7013 = vmatpush.msra.mxu0 0.0
        %7014 = vmatpush.msra.mxu0 0.0
        %7015 = vmatpush.msra.mxu0 0.0
        %7016 = vmatpush.msra.mxu0 0.0
        %7017 = vmatpush.msra.mxu0 0.0
        %7018 = vmatpush.msra.mxu0 0.0
        %7019 = vmatpush.msra.mxu0 0.0
        %7020 = vmatpush.msra.mxu0 0.0
        %7021 = vmatpush.msra.mxu0 0.0
        %7022 = vmatpush.msra.mxu0 0.0
        %7023 = vmatpush.msra.mxu0 0.0
        %7024 = vmatpush.msra.mxu0 0.0
        %7025 = vmatpush.msra.mxu0 0.0
        %7026 = vmatpush.msra.mxu0 0.0
        %7027 = vmatpush.msra.mxu0 0.0
        %v7028 = vand.u32 %v962, 4294901760
        %v7029 = vsub.f32 %v962, %v7028
        %7030 = vmatpush.msra.mxu0 %v7029
        %v7031 = vand.u32 %v6959, 4294901760
        %v7032 = vsub.f32 %v6959, %v7031
        %7033 = vmatmul.f32.gmra.mxu0 %v7032
        %v7034 = vpop.f32.mrf.mxu0
        %v7035 = vadd.f32 %v7011, %v7034
        %7036 = vdwg.mxu0
        %7037 = vmatpush.msra.mxu0 0.0
        %7038 = vmatpush.msra.mxu0 0.0
        %7039 = vmatpush.msra.mxu0 0.0
        %7040 = vmatpush.msra.mxu0 0.0
        %7041 = vmatpush.msra.mxu0 0.0
        %7042 = vmatpush.msra.mxu0 0.0
        %7043 = vmatpush.msra.mxu0 0.0
        %7044 = vmatpush.msra.mxu0 0.0
        %7045 = vmatpush.msra.mxu0 0.0
        %7046 = vmatpush.msra.mxu0 0.0
        %7047 = vmatpush.msra.mxu0 0.0
        %7048 = vmatpush.msra.mxu0 0.0
        %7049 = vmatpush.msra.mxu0 0.0
        %7050 = vmatpush.msra.mxu0 0.0
        %7051 = vmatpush.msra.mxu0 0.0
        %v7052 = vand.u32 %v962, 4294901760
        %7053 = vmatpush.msra.mxu0 %v7052
        %v7054 = vand.u32 %v6959, 4294901760
        %v7055 = vsub.f32 %v6959, %v7054
        %v7056 = vand.u32 %v7055, 4294901760
        %7057 = vmatmul.f32.gmra.mxu0 %v7056
        %v7058 = vpop.f32.mrf.mxu0
        %v7059 = vadd.f32 %v7035, %v7058
        %7060 = vdwg.mxu0
        %7061 = vmatpush.msra.mxu0 0.0
        %7062 = vmatpush.msra.mxu0 0.0
        %7063 = vmatpush.msra.mxu0 0.0
        %7064 = vmatpush.msra.mxu0 0.0
        %7065 = vmatpush.msra.mxu0 0.0
        %7066 = vmatpush.msra.mxu0 0.0
        %7067 = vmatpush.msra.mxu0 0.0
        %7068 = vmatpush.msra.mxu0 0.0
        %7069 = vmatpush.msra.mxu0 0.0
        %7070 = vmatpush.msra.mxu0 0.0
        %7071 = vmatpush.msra.mxu0 0.0
        %7072 = vmatpush.msra.mxu0 0.0
        %7073 = vmatpush.msra.mxu0 0.0
        %7074 = vmatpush.msra.mxu0 0.0
        %7075 = vmatpush.msra.mxu0 0.0
        %v7076 = vand.u32 %v962, 4294901760
        %v7077 = vsub.f32 %v962, %v7076
        %v7078 = vand.u32 %v7077, 4294901760
        %7079 = vmatpush.msra.mxu0 %v7078
        %v7080 = vand.u32 %v6959, 4294901760
        %7081 = vmatmul.f32.gmra.mxu0 %v7080
        %v7082 = vpop.f32.mrf.mxu0
        %v7083 = vadd.f32 %v7059, %v7082
        %7084 = vdwg.mxu0
        %7085 = vmatpush.msra.mxu0 0.0
        %7086 = vmatpush.msra.mxu0 0.0
        %7087 = vmatpush.msra.mxu0 0.0
        %7088 = vmatpush.msra.mxu0 0.0
        %7089 = vmatpush.msra.mxu0 0.0
        %7090 = vmatpush.msra.mxu0 0.0
        %7091 = vmatpush.msra.mxu0 0.0
        %7092 = vmatpush.msra.mxu0 0.0
        %7093 = vmatpush.msra.mxu0 0.0
        %7094 = vmatpush.msra.mxu0 0.0
        %7095 = vmatpush.msra.mxu0 0.0
        %7096 = vmatpush.msra.mxu0 0.0
        %7097 = vmatpush.msra.mxu0 0.0
        %7098 = vmatpush.msra.mxu0 0.0
        %7099 = vmatpush.msra.mxu0 0.0
        %v7100 = vand.u32 %v962, 4294901760
        %7101 = vmatpush.msra.mxu0 %v7100
        %v7102 = vand.u32 %v6959, 4294901760
        %7103 = vmatmul.f32.gmra.mxu0 %v7102
        %v7104 = vpop.f32.mrf.mxu0
        %v7105 = vadd.f32 %v7083, %v7104
        %7106 = vdwg.mxu0
        %7108 = vrot.lane.b32.xlu0 %v7105, 120
        %v7109 = vpop.permute.xlu0 %7108
        %7111 = vmatpush.msra.mxu0 0.0
        %7112 = vmatpush.msra.mxu0 0.0
        %7113 = vmatpush.msra.mxu0 0.0
        %7114 = vmatpush.msra.mxu0 0.0
        %7115 = vmatpush.msra.mxu0 0.0
        %7116 = vmatpush.msra.mxu0 0.0
        %7117 = vmatpush.msra.mxu0 0.0
        %7118 = vmatpush.msra.mxu0 0.0
        %7119 = vmatpush.msra.mxu0 0.0
        %7120 = vmatpush.msra.mxu0 0.0
        %7121 = vmatpush.msra.mxu0 0.0
        %7122 = vmatpush.msra.mxu0 0.0
        %7123 = vmatpush.msra.mxu0 0.0
        %7124 = vmatpush.msra.mxu0 0.0
        %7125 = vmatpush.msra.mxu0 0.0
        %v7126 = vand.u32 %v7109, 4294901760
        %7127 = vmatpush.msra.mxu0 %v7126
        %v7128 = vand.u32 %v1921, 4294901760
        %v7129 = vsub.f32 %v1921, %v7128
        %v7130 = vand.u32 %v7129, 4294901760
        %v7131 = vsub.f32 %v7129, %v7130
        %v7132 = vand.u32 %v7131, 4294901760
        %7133 = vmatmul.f32.gmra.mxu0 %v7132
        %v7134 = vpop.f32.mrf.mxu0
        %v7135 = vadd.f32 0.0, %v7134
        %v7136 = vand.u32 %v1924, 4294901760
        %v7137 = vsub.f32 %v1924, %v7136
        %v7138 = vand.u32 %v7137, 4294901760
        %v7139 = vsub.f32 %v7137, %v7138
        %v7140 = vand.u32 %v7139, 4294901760
        %7141 = vmatmul.f32.gmra.mxu0 %v7140
        %v7142 = vpop.f32.mrf.mxu0
        %v7143 = vadd.f32 0.0, %v7142
        %7144 = vdwg.mxu0
        %7145 = vmatpush.msra.mxu0 0.0
        %7146 = vmatpush.msra.mxu0 0.0
        %7147 = vmatpush.msra.mxu0 0.0
        %7148 = vmatpush.msra.mxu0 0.0
        %7149 = vmatpush.msra.mxu0 0.0
        %7150 = vmatpush.msra.mxu0 0.0
        %7151 = vmatpush.msra.mxu0 0.0
        %7152 = vmatpush.msra.mxu0 0.0
        %7153 = vmatpush.msra.mxu0 0.0
        %7154 = vmatpush.msra.mxu0 0.0
        %7155 = vmatpush.msra.mxu0 0.0
        %7156 = vmatpush.msra.mxu0 0.0
        %7157 = vmatpush.msra.mxu0 0.0
        %7158 = vmatpush.msra.mxu0 0.0
        %7159 = vmatpush.msra.mxu0 0.0
        %v7160 = vand.u32 %v7109, 4294901760
        %v7161 = vsub.f32 %v7109, %v7160
        %v7162 = vand.u32 %v7161, 4294901760
        %v7163 = vsub.f32 %v7161, %v7162
        %v7164 = vand.u32 %v7163, 4294901760
        %7165 = vmatpush.msra.mxu0 %v7164
        %v7166 = vand.u32 %v1921, 4294901760
        %7167 = vmatmul.f32.gmra.mxu0 %v7166
        %v7168 = vpop.f32.mrf.mxu0
        %v7169 = vadd.f32 %v7135, %v7168
        %v7170 = vand.u32 %v1924, 4294901760
        %7171 = vmatmul.f32.gmra.mxu0 %v7170
        %v7172 = vpop.f32.mrf.mxu0
        %v7173 = vadd.f32 %v7143, %v7172
        %7174 = vdwg.mxu0
        %7175 = vmatpush.msra.mxu0 0.0
        %7176 = vmatpush.msra.mxu0 0.0
        %7177 = vmatpush.msra.mxu0 0.0
        %7178 = vmatpush.msra.mxu0 0.0
        %7179 = vmatpush.msra.mxu0 0.0
        %7180 = vmatpush.msra.mxu0 0.0
        %7181 = vmatpush.msra.mxu0 0.0
        %7182 = vmatpush.msra.mxu0 0.0
        %7183 = vmatpush.msra.mxu0 0.0
        %7184 = vmatpush.msra.mxu0 0.0
        %7185 = vmatpush.msra.mxu0 0.0
        %7186 = vmatpush.msra.mxu0 0.0
        %7187 = vmatpush.msra.mxu0 0.0
        %7188 = vmatpush.msra.mxu0 0.0
        %7189 = vmatpush.msra.mxu0 0.0
        %v7190 = vand.u32 %v7109, 4294901760
        %v7191 = vsub.f32 %v7109, %v7190
        %7192 = vmatpush.msra.mxu0 %v7191
        %v7193 = vand.u32 %v1921, 4294901760
        %v7194 = vsub.f32 %v1921, %v7193
        %7195 = vmatmul.f32.gmra.mxu0 %v7194
        %v7196 = vpop.f32.mrf.mxu0
        %v7197 = vadd.f32 %v7169, %v7196
        %v7198 = vand.u32 %v1924, 4294901760
        %v7199 = vsub.f32 %v1924, %v7198
        %7200 = vmatmul.f32.gmra.mxu0 %v7199
        %v7201 = vpop.f32.mrf.mxu0
        %v7202 = vadd.f32 %v7173, %v7201
        %7203 = vdwg.mxu0
        %7204 = vmatpush.msra.mxu0 0.0
        %7205 = vmatpush.msra.mxu0 0.0
        %7206 = vmatpush.msra.mxu0 0.0
        %7207 = vmatpush.msra.mxu0 0.0
        %7208 = vmatpush.msra.mxu0 0.0
        %7209 = vmatpush.msra.mxu0 0.0
        %7210 = vmatpush.msra.mxu0 0.0
        %7211 = vmatpush.msra.mxu0 0.0
        %7212 = vmatpush.msra.mxu0 0.0
        %7213 = vmatpush.msra.mxu0 0.0
        %7214 = vmatpush.msra.mxu0 0.0
        %7215 = vmatpush.msra.mxu0 0.0
        %7216 = vmatpush.msra.mxu0 0.0
        %7217 = vmatpush.msra.mxu0 0.0
        %7218 = vmatpush.msra.mxu0 0.0
        %v7219 = vand.u32 %v7109, 4294901760
        %7220 = vmatpush.msra.mxu0 %v7219
        %v7221 = vand.u32 %v1921, 4294901760
        %v7222 = vsub.f32 %v1921, %v7221
        %v7223 = vand.u32 %v7222, 4294901760
        %7224 = vmatmul.f32.gmra.mxu0 %v7223
        %v7225 = vpop.f32.mrf.mxu0
        %v7226 = vadd.f32 %v7197, %v7225
        %v7227 = vand.u32 %v1924, 4294901760
        %v7228 = vsub.f32 %v1924, %v7227
        %v7229 = vand.u32 %v7228, 4294901760
        %7230 = vmatmul.f32.gmra.mxu0 %v7229
        %v7231 = vpop.f32.mrf.mxu0
        %v7232 = vadd.f32 %v7202, %v7231
        %7233 = vdwg.mxu0
        %7234 = vmatpush.msra.mxu0 0.0
        %7235 = vmatpush.msra.mxu0 0.0
        %7236 = vmatpush.msra.mxu0 0.0
        %7237 = vmatpush.msra.mxu0 0.0
        %7238 = vmatpush.msra.mxu0 0.0
        %7239 = vmatpush.msra.mxu0 0.0
        %7240 = vmatpush.msra.mxu0 0.0
        %7241 = vmatpush.msra.mxu0 0.0
        %7242 = vmatpush.msra.mxu0 0.0
        %7243 = vmatpush.msra.mxu0 0.0
        %7244 = vmatpush.msra.mxu0 0.0
        %7245 = vmatpush.msra.mxu0 0.0
        %7246 = vmatpush.msra.mxu0 0.0
        %7247 = vmatpush.msra.mxu0 0.0
        %7248 = vmatpush.msra.mxu0 0.0
        %v7249 = vand.u32 %v7109, 4294901760
        %v7250 = vsub.f32 %v7109, %v7249
        %v7251 = vand.u32 %v7250, 4294901760
        %7252 = vmatpush.msra.mxu0 %v7251
        %v7253 = vand.u32 %v1921, 4294901760
        %7254 = vmatmul.f32.gmra.mxu0 %v7253
        %v7255 = vpop.f32.mrf.mxu0
        %v7256 = vadd.f32 %v7226, %v7255
        %v7257 = vand.u32 %v1924, 4294901760
        %7258 = vmatmul.f32.gmra.mxu0 %v7257
        %v7259 = vpop.f32.mrf.mxu0
        %v7260 = vadd.f32 %v7232, %v7259
        %7261 = vdwg.mxu0
        %7262 = vmatpush.msra.mxu0 0.0
        %7263 = vmatpush.msra.mxu0 0.0
        %7264 = vmatpush.msra.mxu0 0.0
        %7265 = vmatpush.msra.mxu0 0.0
        %7266 = vmatpush.msra.mxu0 0.0
        %7267 = vmatpush.msra.mxu0 0.0
        %7268 = vmatpush.msra.mxu0 0.0
        %7269 = vmatpush.msra.mxu0 0.0
        %7270 = vmatpush.msra.mxu0 0.0
        %7271 = vmatpush.msra.mxu0 0.0
        %7272 = vmatpush.msra.mxu0 0.0
        %7273 = vmatpush.msra.mxu0 0.0
        %7274 = vmatpush.msra.mxu0 0.0
        %7275 = vmatpush.msra.mxu0 0.0
        %7276 = vmatpush.msra.mxu0 0.0
        %v7277 = vand.u32 %v7109, 4294901760
        %7278 = vmatpush.msra.mxu0 %v7277
        %v7279 = vand.u32 %v1921, 4294901760
        %7280 = vmatmul.f32.gmra.mxu0 %v7279
        %v7281 = vpop.f32.mrf.mxu0
        %v7282 = vadd.f32 %v7256, %v7281
        %v7283 = vand.u32 %v1924, 4294901760
        %7284 = vmatmul.f32.gmra.mxu0 %v7283
        %v7285 = vpop.f32.mrf.mxu0
        %v7286 = vadd.f32 %v7260, %v7285
        %7287 = vdwg.mxu0
        %7288 = vmatpush.msra.mxu0 0.0
        %7289 = vmatpush.msra.mxu0 0.0
        %7290 = vmatpush.msra.mxu0 0.0
        %7291 = vmatpush.msra.mxu0 0.0
        %7292 = vmatpush.msra.mxu0 0.0
        %7293 = vmatpush.msra.mxu0 0.0
        %7294 = vmatpush.msra.mxu0 0.0
        %7295 = vmatpush.msra.mxu0 0.0
        %7296 = vmatpush.msra.mxu0 0.0
        %7297 = vmatpush.msra.mxu0 0.0
        %7298 = vmatpush.msra.mxu0 0.0
        %7299 = vmatpush.msra.mxu0 0.0
        %7300 = vmatpush.msra.mxu0 0.0
        %7301 = vmatpush.msra.mxu0 0.0
        %7302 = vmatpush.msra.mxu0 0.0
        %v7303 = vand.u32 %v7105, 4294901760
        %7304 = vmatpush.msra.mxu0 %v7303
        %v7305 = vand.u32 %v2104, 4294901760
        %v7306 = vsub.f32 %v2104, %v7305
        %v7307 = vand.u32 %v7306, 4294901760
        %v7308 = vsub.f32 %v7306, %v7307
        %v7309 = vand.u32 %v7308, 4294901760
        %7310 = vmatmul.f32.gmra.mxu0 %v7309
        %v7311 = vpop.f32.mrf.mxu0
        %v7312 = vadd.f32 %v7282, %v7311
        %v7313 = vand.u32 %v2107, 4294901760
        %v7314 = vsub.f32 %v2107, %v7313
        %v7315 = vand.u32 %v7314, 4294901760
        %v7316 = vsub.f32 %v7314, %v7315
        %v7317 = vand.u32 %v7316, 4294901760
        %7318 = vmatmul.f32.gmra.mxu0 %v7317
        %v7319 = vpop.f32.mrf.mxu0
        %v7320 = vadd.f32 %v7286, %v7319
        %7321 = vdwg.mxu0
        %7322 = vmatpush.msra.mxu0 0.0
        %7323 = vmatpush.msra.mxu0 0.0
        %7324 = vmatpush.msra.mxu0 0.0
        %7325 = vmatpush.msra.mxu0 0.0
        %7326 = vmatpush.msra.mxu0 0.0
        %7327 = vmatpush.msra.mxu0 0.0
        %7328 = vmatpush.msra.mxu0 0.0
        %7329 = vmatpush.msra.mxu0 0.0
        %7330 = vmatpush.msra.mxu0 0.0
        %7331 = vmatpush.msra.mxu0 0.0
        %7332 = vmatpush.msra.mxu0 0.0
        %7333 = vmatpush.msra.mxu0 0.0
        %7334 = vmatpush.msra.mxu0 0.0
        %7335 = vmatpush.msra.mxu0 0.0
        %7336 = vmatpush.msra.mxu0 0.0
        %v7337 = vand.u32 %v7105, 4294901760
        %v7338 = vsub.f32 %v7105, %v7337
        %v7339 = vand.u32 %v7338, 4294901760
        %v7340 = vsub.f32 %v7338, %v7339
        %v7341 = vand.u32 %v7340, 4294901760
        %7342 = vmatpush.msra.mxu0 %v7341
        %v7343 = vand.u32 %v2104, 4294901760
        %7344 = vmatmul.f32.gmra.mxu0 %v7343
        %v7345 = vpop.f32.mrf.mxu0
        %v7346 = vadd.f32 %v7312, %v7345
        %v7347 = vand.u32 %v2107, 4294901760
        %7348 = vmatmul.f32.gmra.mxu0 %v7347
        %v7349 = vpop.f32.mrf.mxu0
        %v7350 = vadd.f32 %v7320, %v7349
        %7351 = vdwg.mxu0
        %7352 = vmatpush.msra.mxu0 0.0
        %7353 = vmatpush.msra.mxu0 0.0
        %7354 = vmatpush.msra.mxu0 0.0
        %7355 = vmatpush.msra.mxu0 0.0
        %7356 = vmatpush.msra.mxu0 0.0
        %7357 = vmatpush.msra.mxu0 0.0
        %7358 = vmatpush.msra.mxu0 0.0
        %7359 = vmatpush.msra.mxu0 0.0
        %7360 = vmatpush.msra.mxu0 0.0
        %7361 = vmatpush.msra.mxu0 0.0
        %7362 = vmatpush.msra.mxu0 0.0
        %7363 = vmatpush.msra.mxu0 0.0
        %7364 = vmatpush.msra.mxu0 0.0
        %7365 = vmatpush.msra.mxu0 0.0
        %7366 = vmatpush.msra.mxu0 0.0
        %v7367 = vand.u32 %v7105, 4294901760
        %v7368 = vsub.f32 %v7105, %v7367
        %7369 = vmatpush.msra.mxu0 %v7368
        %v7370 = vand.u32 %v2104, 4294901760
        %v7371 = vsub.f32 %v2104, %v7370
        %7372 = vmatmul.f32.gmra.mxu0 %v7371
        %v7373 = vpop.f32.mrf.mxu0
        %v7374 = vadd.f32 %v7346, %v7373
        %v7375 = vand.u32 %v2107, 4294901760
        %v7376 = vsub.f32 %v2107, %v7375
        %7377 = vmatmul.f32.gmra.mxu0 %v7376
        %v7378 = vpop.f32.mrf.mxu0
        %v7379 = vadd.f32 %v7350, %v7378
        %7380 = vdwg.mxu0
        %7381 = vmatpush.msra.mxu0 0.0
        %7382 = vmatpush.msra.mxu0 0.0
        %7383 = vmatpush.msra.mxu0 0.0
        %7384 = vmatpush.msra.mxu0 0.0
        %7385 = vmatpush.msra.mxu0 0.0
        %7386 = vmatpush.msra.mxu0 0.0
        %7387 = vmatpush.msra.mxu0 0.0
        %7388 = vmatpush.msra.mxu0 0.0
        %7389 = vmatpush.msra.mxu0 0.0
        %7390 = vmatpush.msra.mxu0 0.0
        %7391 = vmatpush.msra.mxu0 0.0
        %7392 = vmatpush.msra.mxu0 0.0
        %7393 = vmatpush.msra.mxu0 0.0
        %7394 = vmatpush.msra.mxu0 0.0
        %7395 = vmatpush.msra.mxu0 0.0
        %v7396 = vand.u32 %v7105, 4294901760
        %7397 = vmatpush.msra.mxu0 %v7396
        %v7398 = vand.u32 %v2104, 4294901760
        %v7399 = vsub.f32 %v2104, %v7398
        %v7400 = vand.u32 %v7399, 4294901760
        %7401 = vmatmul.f32.gmra.mxu0 %v7400
        %v7402 = vpop.f32.mrf.mxu0
        %v7403 = vadd.f32 %v7374, %v7402
        %v7404 = vand.u32 %v2107, 4294901760
        %v7405 = vsub.f32 %v2107, %v7404
        %v7406 = vand.u32 %v7405, 4294901760
        %7407 = vmatmul.f32.gmra.mxu0 %v7406
        %v7408 = vpop.f32.mrf.mxu0
        %v7409 = vadd.f32 %v7379, %v7408
        %7410 = vdwg.mxu0
        %7411 = vmatpush.msra.mxu0 0.0
        %7412 = vmatpush.msra.mxu0 0.0
        %7413 = vmatpush.msra.mxu0 0.0
        %7414 = vmatpush.msra.mxu0 0.0
        %7415 = vmatpush.msra.mxu0 0.0
        %7416 = vmatpush.msra.mxu0 0.0
        %7417 = vmatpush.msra.mxu0 0.0
        %7418 = vmatpush.msra.mxu0 0.0
        %7419 = vmatpush.msra.mxu0 0.0
        %7420 = vmatpush.msra.mxu0 0.0
        %7421 = vmatpush.msra.mxu0 0.0
        %7422 = vmatpush.msra.mxu0 0.0
        %7423 = vmatpush.msra.mxu0 0.0
        %7424 = vmatpush.msra.mxu0 0.0
        %7425 = vmatpush.msra.mxu0 0.0
        %v7426 = vand.u32 %v7105, 4294901760
        %v7427 = vsub.f32 %v7105, %v7426
        %v7428 = vand.u32 %v7427, 4294901760
        %7429 = vmatpush.msra.mxu0 %v7428
        %v7430 = vand.u32 %v2104, 4294901760
        %7431 = vmatmul.f32.gmra.mxu0 %v7430
        %v7432 = vpop.f32.mrf.mxu0
        %v7433 = vadd.f32 %v7403, %v7432
        %v7434 = vand.u32 %v2107, 4294901760
        %7435 = vmatmul.f32.gmra.mxu0 %v7434
        %v7436 = vpop.f32.mrf.mxu0
        %v7437 = vadd.f32 %v7409, %v7436
        %7438 = vdwg.mxu0
        %7439 = vmatpush.msra.mxu0 0.0
        %7440 = vmatpush.msra.mxu0 0.0
        %7441 = vmatpush.msra.mxu0 0.0
        %7442 = vmatpush.msra.mxu0 0.0
        %7443 = vmatpush.msra.mxu0 0.0
        %7444 = vmatpush.msra.mxu0 0.0
        %7445 = vmatpush.msra.mxu0 0.0
        %7446 = vmatpush.msra.mxu0 0.0
        %7447 = vmatpush.msra.mxu0 0.0
        %7448 = vmatpush.msra.mxu0 0.0
        %7449 = vmatpush.msra.mxu0 0.0
        %7450 = vmatpush.msra.mxu0 0.0
        %7451 = vmatpush.msra.mxu0 0.0
        %7452 = vmatpush.msra.mxu0 0.0
        %7453 = vmatpush.msra.mxu0 0.0
        %v7454 = vand.u32 %v7105, 4294901760
        %7455 = vmatpush.msra.mxu0 %v7454
        %v7456 = vand.u32 %v2104, 4294901760
        %7457 = vmatmul.f32.gmra.mxu0 %v7456
        %v7458 = vpop.f32.mrf.mxu0
        %v7459 = vadd.f32 %v7433, %v7458
        %v7460 = vand.u32 %v2107, 4294901760
        %7461 = vmatmul.f32.gmra.mxu0 %v7460
        %v7462 = vpop.f32.mrf.mxu0
        %v7463 = vadd.f32 %v7437, %v7462
        %7464 = vdwg.mxu0
        %s7465 = scalar_lea.vmem %s13, 24
        %v7466 = vld [vmem:[%s7465] sm:$0xff]
        %v7468 = vsel %vm972, %v7459, 0
        %v7471 = vsel %vm972, %v7463, 0
        %7473 = vmatpush.msra.mxu0 0.0
        %7474 = vmatpush.msra.mxu0 0.0
        %7475 = vmatpush.msra.mxu0 0.0
        %7476 = vmatpush.msra.mxu0 0.0
        %7477 = vmatpush.msra.mxu0 0.0
        %7478 = vmatpush.msra.mxu0 0.0
        %7479 = vmatpush.msra.mxu0 0.0
        %7480 = vmatpush.msra.mxu0 0.0
        %7481 = vmatpush.msra.mxu0 0.0
        %7482 = vmatpush.msra.mxu0 0.0
        %7483 = vmatpush.msra.mxu0 0.0
        %7484 = vmatpush.msra.mxu0 0.0
        %7485 = vmatpush.msra.mxu0 0.0
        %7486 = vmatpush.msra.mxu0 0.0
        %7487 = vmatpush.msra.mxu0 0.0
        %v7488 = vand.u32 %v7466, 4294901760
        %7489 = vmatpush.msra.mxu0 %v7488
        %v7490 = vand.u32 %v7468, 4294901760
        %v7491 = vsub.f32 %v7468, %v7490
        %v7492 = vand.u32 %v7491, 4294901760
        %v7493 = vsub.f32 %v7491, %v7492
        %v7494 = vand.u32 %v7493, 4294901760
        %7495 = vmatmul.f32.gmra.mxu0 %v7494
        %v7496 = vpop.f32.mrf.mxu0
        %v7497 = vadd.f32 0.0, %v7496
        %v7498 = vand.u32 %v7471, 4294901760
        %v7499 = vsub.f32 %v7471, %v7498
        %v7500 = vand.u32 %v7499, 4294901760
        %v7501 = vsub.f32 %v7499, %v7500
        %v7502 = vand.u32 %v7501, 4294901760
        %7503 = vmatmul.f32.gmra.mxu0 %v7502
        %v7504 = vpop.f32.mrf.mxu0
        %v7505 = vadd.f32 0.0, %v7504
        %7506 = vdwg.mxu0
        %7507 = vmatpush.msra.mxu0 0.0
        %7508 = vmatpush.msra.mxu0 0.0
        %7509 = vmatpush.msra.mxu0 0.0
        %7510 = vmatpush.msra.mxu0 0.0
        %7511 = vmatpush.msra.mxu0 0.0
        %7512 = vmatpush.msra.mxu0 0.0
        %7513 = vmatpush.msra.mxu0 0.0
        %7514 = vmatpush.msra.mxu0 0.0
        %7515 = vmatpush.msra.mxu0 0.0
        %7516 = vmatpush.msra.mxu0 0.0
        %7517 = vmatpush.msra.mxu0 0.0
        %7518 = vmatpush.msra.mxu0 0.0
        %7519 = vmatpush.msra.mxu0 0.0
        %7520 = vmatpush.msra.mxu0 0.0
        %7521 = vmatpush.msra.mxu0 0.0
        %v7522 = vand.u32 %v7466, 4294901760
        %v7523 = vsub.f32 %v7466, %v7522
        %v7524 = vand.u32 %v7523, 4294901760
        %v7525 = vsub.f32 %v7523, %v7524
        %v7526 = vand.u32 %v7525, 4294901760
        %7527 = vmatpush.msra.mxu0 %v7526
        %v7528 = vand.u32 %v7468, 4294901760
        %7529 = vmatmul.f32.gmra.mxu0 %v7528
        %v7530 = vpop.f32.mrf.mxu0
        %v7531 = vadd.f32 %v7497, %v7530
        %v7532 = vand.u32 %v7471, 4294901760
        %7533 = vmatmul.f32.gmra.mxu0 %v7532
        %v7534 = vpop.f32.mrf.mxu0
        %v7535 = vadd.f32 %v7505, %v7534
        %7536 = vdwg.mxu0
        %7537 = vmatpush.msra.mxu0 0.0
        %7538 = vmatpush.msra.mxu0 0.0
        %7539 = vmatpush.msra.mxu0 0.0
        %7540 = vmatpush.msra.mxu0 0.0
        %7541 = vmatpush.msra.mxu0 0.0
        %7542 = vmatpush.msra.mxu0 0.0
        %7543 = vmatpush.msra.mxu0 0.0
        %7544 = vmatpush.msra.mxu0 0.0
        %7545 = vmatpush.msra.mxu0 0.0
        %7546 = vmatpush.msra.mxu0 0.0
        %7547 = vmatpush.msra.mxu0 0.0
        %7548 = vmatpush.msra.mxu0 0.0
        %7549 = vmatpush.msra.mxu0 0.0
        %7550 = vmatpush.msra.mxu0 0.0
        %7551 = vmatpush.msra.mxu0 0.0
        %v7552 = vand.u32 %v7466, 4294901760
        %v7553 = vsub.f32 %v7466, %v7552
        %7554 = vmatpush.msra.mxu0 %v7553
        %v7555 = vand.u32 %v7468, 4294901760
        %v7556 = vsub.f32 %v7468, %v7555
        %7557 = vmatmul.f32.gmra.mxu0 %v7556
        %v7558 = vpop.f32.mrf.mxu0
        %v7559 = vadd.f32 %v7531, %v7558
        %v7560 = vand.u32 %v7471, 4294901760
        %v7561 = vsub.f32 %v7471, %v7560
        %7562 = vmatmul.f32.gmra.mxu0 %v7561
        %v7563 = vpop.f32.mrf.mxu0
        %v7564 = vadd.f32 %v7535, %v7563
        %7565 = vdwg.mxu0
        %7566 = vmatpush.msra.mxu0 0.0
        %7567 = vmatpush.msra.mxu0 0.0
        %7568 = vmatpush.msra.mxu0 0.0
        %7569 = vmatpush.msra.mxu0 0.0
        %7570 = vmatpush.msra.mxu0 0.0
        %7571 = vmatpush.msra.mxu0 0.0
        %7572 = vmatpush.msra.mxu0 0.0
        %7573 = vmatpush.msra.mxu0 0.0
        %7574 = vmatpush.msra.mxu0 0.0
        %7575 = vmatpush.msra.mxu0 0.0
        %7576 = vmatpush.msra.mxu0 0.0
        %7577 = vmatpush.msra.mxu0 0.0
        %7578 = vmatpush.msra.mxu0 0.0
        %7579 = vmatpush.msra.mxu0 0.0
        %7580 = vmatpush.msra.mxu0 0.0
        %v7581 = vand.u32 %v7466, 4294901760
        %7582 = vmatpush.msra.mxu0 %v7581
        %v7583 = vand.u32 %v7468, 4294901760
        %v7584 = vsub.f32 %v7468, %v7583
        %v7585 = vand.u32 %v7584, 4294901760
        %7586 = vmatmul.f32.gmra.mxu0 %v7585
        %v7587 = vpop.f32.mrf.mxu0
        %v7588 = vadd.f32 %v7559, %v7587
        %v7589 = vand.u32 %v7471, 4294901760
        %v7590 = vsub.f32 %v7471, %v7589
        %v7591 = vand.u32 %v7590, 4294901760
        %7592 = vmatmul.f32.gmra.mxu0 %v7591
        %v7593 = vpop.f32.mrf.mxu0
        %v7594 = vadd.f32 %v7564, %v7593
        %7595 = vdwg.mxu0
        %7596 = vmatpush.msra.mxu0 0.0
        %7597 = vmatpush.msra.mxu0 0.0
        %7598 = vmatpush.msra.mxu0 0.0
        %7599 = vmatpush.msra.mxu0 0.0
        %7600 = vmatpush.msra.mxu0 0.0
        %7601 = vmatpush.msra.mxu0 0.0
        %7602 = vmatpush.msra.mxu0 0.0
        %7603 = vmatpush.msra.mxu0 0.0
        %7604 = vmatpush.msra.mxu0 0.0
        %7605 = vmatpush.msra.mxu0 0.0
        %7606 = vmatpush.msra.mxu0 0.0
        %7607 = vmatpush.msra.mxu0 0.0
        %7608 = vmatpush.msra.mxu0 0.0
        %7609 = vmatpush.msra.mxu0 0.0
        %7610 = vmatpush.msra.mxu0 0.0
        %v7611 = vand.u32 %v7466, 4294901760
        %v7612 = vsub.f32 %v7466, %v7611
        %v7613 = vand.u32 %v7612, 4294901760
        %7614 = vmatpush.msra.mxu0 %v7613
        %v7615 = vand.u32 %v7468, 4294901760
        %7616 = vmatmul.f32.gmra.mxu0 %v7615
        %v7617 = vpop.f32.mrf.mxu0
        %v7618 = vadd.f32 %v7588, %v7617
        %v7619 = vand.u32 %v7471, 4294901760
        %7620 = vmatmul.f32.gmra.mxu0 %v7619
        %v7621 = vpop.f32.mrf.mxu0
        %v7622 = vadd.f32 %v7594, %v7621
        %7623 = vdwg.mxu0
        %7624 = vmatpush.msra.mxu0 0.0
        %7625 = vmatpush.msra.mxu0 0.0
        %7626 = vmatpush.msra.mxu0 0.0
        %7627 = vmatpush.msra.mxu0 0.0
        %7628 = vmatpush.msra.mxu0 0.0
        %7629 = vmatpush.msra.mxu0 0.0
        %7630 = vmatpush.msra.mxu0 0.0
        %7631 = vmatpush.msra.mxu0 0.0
        %7632 = vmatpush.msra.mxu0 0.0
        %7633 = vmatpush.msra.mxu0 0.0
        %7634 = vmatpush.msra.mxu0 0.0
        %7635 = vmatpush.msra.mxu0 0.0
        %7636 = vmatpush.msra.mxu0 0.0
        %7637 = vmatpush.msra.mxu0 0.0
        %7638 = vmatpush.msra.mxu0 0.0
        %v7639 = vand.u32 %v7466, 4294901760
        %7640 = vmatpush.msra.mxu0 %v7639
        %v7641 = vand.u32 %v7468, 4294901760
        %7642 = vmatmul.f32.gmra.mxu0 %v7641
        %v7643 = vpop.f32.mrf.mxu0
        %v7644 = vadd.f32 %v7618, %v7643
        %v7645 = vand.u32 %v7471, 4294901760
        %7646 = vmatmul.f32.gmra.mxu0 %v7645
        %v7647 = vpop.f32.mrf.mxu0
        %v7648 = vadd.f32 %v7622, %v7647
        %7649 = vdwg.mxu0
        %v7650 = vadd.f32 %v5983, %v7644
        %v7651 = vadd.f32 %v5984, %v7648
        %v7653 = vperm.slane %v968, 0
        %v7655 = vadd.f32 %v6705, %v7653
        %v7656 = vadd.f32 %v6706, %v7653
        %v7657 = vadd.f32 %v7650, %v7653
        %v7658 = vadd.f32 %v7651, %v7653
        %7661 = vrot.lane.b32.xlu0 %v7657, 16
        %v7662 = vpop.permute.xlu0 %7661
        %7663 = vrot.lane.b32.xlu0 %v7658, 16
        %v7664 = vpop.permute.xlu0 %7663
        %v7667 = vsel %vm1545, %v7655, %v7662
        %v7668 = vsel %vm1545, %v7656, %v7664
        %7669 = vst.msk [vmem:[%s487] sm:$0xff] %vm499, %v7667
        %7670 = vst.msk [vmem:[%s487 + $0x8] sm:$0xff] %vm499, %v7668
        %s7671 = sand.u32 %s357, 1
        %s7672 = scalar_lea.sflag [#allocation3], %s7671
        %s7673 = sand.u32 %s357, 1
        %s7674 = smul.addr %s7673, 16
        %s7675 = scalar_lea.vmem [#allocation2], %s7674
        // Predicated region
        $region81: #{mul_external_attention.1} parent=79 // pred_check
          %p7676 = pneg %p367
        $region82: #{mul_external_attention.1} parent=79 // pred_check_branch
          %7678 = sbr.rel (%p7676) target = $region84
        $region83: #{mul_external_attention.1} parent=79 // pred_region
          %7680 = vsyncadd %s7672, 0
          %s7681 = smul.addr %s29, 2
          %s7682 = smul.addr %s7681, 8
          %s7683 = scalar_lea.hbm %s15, %s7682
          %s7684 = sshll.u32 %s7675, 4
          %s7685 = int_to_ptr.vmem [resolvable:$true] %s7684
          %s7686 = sshll.u32 %s7683, 4
          %s7687 = int_to_ptr.hbm [resolvable:$true] %s7686
          %7692 = dma.vmem_to_hbm [thread:$0]  %s7685, 256, %s7687, %s7672, 128, 128, 8
        $region84: #{mul_external_attention.1} parent=79 // pred_fallthru
          _
      $region80: #{mul_external_attention.1} parent=5 // pred_fallthru
        _
      %p7693 = scmp.le.s32.totalorder 2, %s24
      // Predicated region
      $region85: #{mul_external_attention.1} parent=5 // pred_check
        %p7694 = pneg %p7693
      $region86: #{mul_external_attention.1} parent=5 // pred_check_branch
        %7696 = sbr.rel (%p7694) target = $region88
      $region87: #{mul_external_attention.1} parent=5 // pred_region
        %s7697 = ssub.s32 %s24, 2
        // Predicated region
        $region89: #{mul_external_attention.1} parent=87 // pred_check
          %p7698 = pneg %p373
        $region90: #{mul_external_attention.1} parent=87 // pred_check_branch
          %7700 = sbr.rel (%p7698) target = $region92
        $region91: #{mul_external_attention.1} parent=87 // pred_region
          %s7701 = sand.u32 %s358, 1
          %s7702 = scalar_lea.sflag [#allocation3], %s7701
          %s7703 = sand.u32 %s358, 1
          %s7704 = smul.addr %s7703, 16
          %s7705 = scalar_lea.vmem [#allocation2], %s7704
          %7707 = dma.done %s7702, 256
        $region92: #{mul_external_attention.1} parent=87 // pred_fallthru
          _
      $region88: #{mul_external_attention.1} parent=5 // pred_fallthru
        _
    $region6: #{mul_external_attention.1} parent=1 // loop_footer
      %s28 = sadd.s32 1, %s24
    $region7: #{mul_external_attention.1} parent=1 // loop_footer_branch
      %23 = sbr.rel target = $region3
    $region8: #{mul_external_attention.1} parent=1 // loop_exit
      _
    %7708 = vsyncpa [#allocation3], 1
    %s7709 = scalar_lea.sflag [#allocation3], 1
    %7710 = vsyncpa %s7709, 1

</llo_original>
